<compile_context>
chip_gen: v7x
topology: tpu7x:2x2x1
jax: 0.10.0
libtpu: 0.0.40
codegen_flags: <defaults>
</compile_context>

<pallas_src>
import jax
import jax.numpy as jnp
from jax.experimental import pallas as pl
from jax.experimental.pallas import tpu as pltpu

BERT_DIM = 768             # rnn1 input size (BERT hidden size)
HIDDEN = 200               # lstm_hidden_size
HPAD = 256                 # gate block padded to 2 x 128 lanes
GP = 4 * HPAD              # 1024: padded [i|f|g|o] gate width per direction
NUM_CLASSES = 3
OUT_PAD = 128              # lane-dense FC output slab; sliced back to 3 in wrapper

B_TILE_MAX = 128           # max batch rows per grid step
POOL_ROWS = 32             # batch-row strip in the pooling loop (24-vreg f32 carry)
WEIGHT_DTYPE = jnp.bfloat16  # MXU operands only; gate/elementwise math stays f32


def _round_up(x, m):
    return ((x + m - 1) // m) * m


def _choose_b_tile(batch):
    """Adaptive batch tile: round_up(B, 8) capped at 128; split in two when
    possible so the 'parallel' batch axis has >= 2 tiles (v7x has 2 TCs)."""
    b8 = _round_up(batch, 8)
    bt = min(B_TILE_MAX, b8)
    if b8 // bt < 2 and b8 >= 16:
        bt = _round_up(pl.cdiv(b8, 2), 8)
    return bt


def _pick_seq_tiling():
    """(s_tile_max, vmem_limit_bytes) per TPU generation."""
    try:
        vmem_cap = pltpu.get_tpu_info().vmem_capacity_bytes
    except Exception:
        vmem_cap = 64 * 1024 * 1024          # conservative (v7x-sized) fallback
    if vmem_cap >= 100 * 1024 * 1024:        # v5e / v6e: 128 MiB physical VMEM
        return 64, 96 * 1024 * 1024
    return 32, 48 * 1024 * 1024              # v7x: 64 MiB physical VMEM


# ----------------------------------------------------------------------------
# In-kernel LSTM cell math (gate pre-activations already computed on the MXU).
# Gate order along the padded 1024-wide axis: [i | f | g | o], each 256 wide.
# Padded gate lanes have zero weights/biases, so padded h/c lanes stay exactly 0.
# ----------------------------------------------------------------------------
def _lstm_gates_zero_state(gates):
    """Cell with h0 = c0 = 0: the f gate and the h@Whh matmul drop out exactly."""
    i = jax.nn.sigmoid(gates[:, 0 * HPAD:1 * HPAD])
    g = jnp.tanh(gates[:, 2 * HPAD:3 * HPAD])
    o = jax.nn.sigmoid(gates[:, 3 * HPAD:4 * HPAD])
    c = i * g
    h = o * jnp.tanh(c)
    return h, c


def _lstm_gates_step(gates, c_prev):
    i = jax.nn.sigmoid(gates[:, 0 * HPAD:1 * HPAD])
    f = jax.nn.sigmoid(gates[:, 1 * HPAD:2 * HPAD])
    g = jnp.tanh(gates[:, 2 * HPAD:3 * HPAD])
    o = jax.nn.sigmoid(gates[:, 3 * HPAD:4 * HPAD])
    c = f * c_prev + i * g
    h = o * jnp.tanh(c)
    return h, c


# ----------------------------------------------------------------------------
# Fused kernel: masked mean pool (S reduction) -> bi-LSTM x2 -> FC (finalize).
# ----------------------------------------------------------------------------
def _fused_kernel(mask_ref, hid_ref,
                  w1_ref, b1_ref,
                  w2f_ref, b2f_ref,
                  w2r_ref, b2r_ref,
                  wfc_ref, bfc_ref,
                  out_ref,
                  acc_ref):
    s_tile, b_tile, _ = hid_ref.shape
    j = pl.program_id(1)

    @pl.when(j == 0)
    def _():
        acc_ref[...] = jnp.zeros_like(acc_ref)

    # ---- pooling partial sum over this sequence tile (reduction axis) -------
    # hid is pre-masked (mask is 0/1, so the wrapper-side multiply is exact) and
    # laid out (s, b, 768): each seq position is a contiguous (b_tile, 768) slab.
    # Strip-mine over POOL_ROWS batch rows so the carried f32 sum stays <= 24
    # vregs; acc_ref is touched once per strip per grid step.
    for r0 in range(0, b_tile, POOL_ROWS):
        rs = min(POOL_ROWS, b_tile - r0)
        part = jnp.zeros((rs, BERT_DIM), jnp.float32)
        for s in range(s_tile):                               # static, unrolled
            part = part + hid_ref[s, pl.ds(r0, rs), :].astype(jnp.float32)
        acc_ref[pl.ds(r0, rs), :] += part

    # ---- finalize: mean -> rnn1 -> rnn2 -> fc, once per batch tile ----------
    @pl.when(j == pl.num_programs(1) - 1)
    def _():
        den = jnp.sum(mask_ref[...], axis=1, keepdims=True)    # (Bt, 1) mask length
        # NOTE: guard changes semantics only for all-zero-mask rows (torch: nan/inf).
        den = jnp.maximum(den, 1.0)
        pooled = acc_ref[...] / den    # exact divide, runs once per batch tile
        x = pooled.astype(WEIGHT_DTYPE)

        # rnn1: both directions fused into one (Bt,768)@(768,2048) MXU matmul.
        g1 = jnp.dot(x, w1_ref[...], preferred_element_type=jnp.float32) + b1_ref[...]
        h1_f, _ = _lstm_gates_zero_state(g1[:, :GP])
        h1_b, _ = _lstm_gates_zero_state(g1[:, GP:])
        h1_f_w = h1_f.astype(WEIGHT_DTYPE)
        h1_b_w = h1_b.astype(WEIGHT_DTYPE)

        # rnn2 forward direction over the length-2 sequence [h1_f, h1_b].
        gf0 = (jnp.dot(h1_f_w, w2f_ref[:HPAD, :], preferred_element_type=jnp.float32)
               + b2f_ref[...])
        hf0, cf0 = _lstm_gates_zero_state(gf0)
        xh_f = jnp.concatenate([h1_b_w, hf0.astype(WEIGHT_DTYPE)], axis=1)  # [x_t1 | h_t0]
        gf1 = jnp.dot(xh_f, w2f_ref[...], preferred_element_type=jnp.float32) + b2f_ref[...]
        h2_f, _ = _lstm_gates_step(gf1, cf0)

        # rnn2 backward direction: reversed sequence [h1_b, h1_f].
        gr0 = (jnp.dot(h1_b_w, w2r_ref[:HPAD, :], preferred_element_type=jnp.float32)
               + b2r_ref[...])
        hb0, cb0 = _lstm_gates_zero_state(gr0)
        xh_r = jnp.concatenate([h1_f_w, hb0.astype(WEIGHT_DTYPE)], axis=1)
        gr1 = jnp.dot(xh_r, w2r_ref[...], preferred_element_type=jnp.float32) + b2r_ref[...]
        h2_b, _ = _lstm_gates_step(gr1, cb0)

        # torch.cat((h1, h2), dim=2).permute(1, 0, 2).view(B, -1):
        #   row b = [h1_f[b] | h2_f[b] | h1_b[b] | h2_b[b]] (padded lanes stay 0).
        feat = jnp.concatenate([h1_f, h2_f, h1_b, h2_b], axis=1).astype(WEIGHT_DTYPE)
        out = jnp.dot(feat, wfc_ref[...], preferred_element_type=jnp.float32) + bfc_ref[...]
        out_ref[...] = out


# ----------------------------------------------------------------------------
# Wrapper: padding / layout, grid + BlockSpec setup, single pallas_call.
# ----------------------------------------------------------------------------
def lstm_xgboost_forward(bert_hidden, bert_sent_mask, packed):
    """bert_hidden: (B, S, 768) BERT last hidden state; bert_sent_mask: (B, S) 0/1."""
    B, S, D = bert_hidden.shape
    assert D == BERT_DIM

    b_tile = _choose_b_tile(B)
    b_pad = _round_up(B, b_tile)
    s_tile_max, vmem_limit = _pick_seq_tiling()
    s_tile = min(s_tile_max, _round_up(S, 8))
    s_pad = _round_up(S, s_tile)

    mask = bert_sent_mask.astype(jnp.float32)                     # (B, S)
    # Mask multiply (exact: mask in {0,1}), bf16 cast, (S, B, D) transpose and
    # pad all fuse into the one XLA copy pass the bf16 cast already required.
    hid = (bert_hidden.astype(jnp.float32) * mask[:, :, None]).astype(jnp.bfloat16)
    hid = jnp.pad(jnp.transpose(hid, (1, 0, 2)),
                  ((0, s_pad - S), (0, b_pad - B), (0, 0)))        # (Sp, Bp, 768) bf16
    mask_p = jnp.pad(mask, ((0, b_pad - B), (0, s_pad - S)))       # (Bp, Sp) f32

    grid = (b_pad // b_tile, s_pad // s_tile)
    const = lambda i, j: (0, 0)   # weights: constant block index -> VMEM-resident
    # NOTE: weight blocks fit double-buffered (~10.6 MiB); pl.Buffered(1)
    # single-buffering is the next VMEM lever if s_tile is ever pushed higher.

    grid_spec = pltpu.PrefetchScalarGridSpec(
        num_scalar_prefetch=0,
        grid=grid,
        in_specs=[
            pl.BlockSpec((b_tile, s_pad), lambda i, j: (i, 0)),                # mask rows
            pl.BlockSpec((s_tile, b_tile, BERT_DIM), lambda i, j: (j, i, 0)),  # hid (bf16)
            pl.BlockSpec((BERT_DIM, 2 * GP), const),   # rnn1 w_ih, both directions fused
            pl.BlockSpec((1, 2 * GP), const),          # rnn1 biases (b_ih + b_hh), both dirs
            pl.BlockSpec((2 * HPAD, GP), const),       # rnn2 fwd [Wih; Whh]
            pl.BlockSpec((1, GP), const),              # rnn2 fwd bias
            pl.BlockSpec((2 * HPAD, GP), const),       # rnn2 rev [Wih; Whh]
            pl.BlockSpec((1, GP), const),              # rnn2 rev bias
            pl.BlockSpec((4 * HPAD, OUT_PAD), const),  # fc weight (lane-padded)
            pl.BlockSpec((1, OUT_PAD), const),         # fc bias (lane-padded)
        ],
        out_specs=pl.BlockSpec((b_tile, OUT_PAD), lambda i, j: (i, 0)),
        scratch_shapes=[pltpu.VMEM((b_tile, BERT_DIM), jnp.float32)],   # pooled-sum acc
    )

    out = pl.pallas_call(
        _fused_kernel,
        out_shape=jax.ShapeDtypeStruct((b_pad, OUT_PAD), jnp.float32),
        grid_spec=grid_spec,
        compiler_params=pltpu.CompilerParams(
            dimension_semantics=("parallel", "arbitrary"),
            vmem_limit_bytes=vmem_limit),
    )(mask_p, hid,
      packed["w1_ih"], packed["b1"],
      packed["w2f"], packed["b2f"],
      packed["w2r"], packed["b2r"],
      packed["wfc"], packed["bfc"])

    return out[:B, :NUM_CLASSES]


# ----------------------------------------------------------------------------
# Deterministic PyTorch-layout parameter init + packing for the kernel.
# ----------------------------------------------------------------------------
def init_torch_params(key):
    """PyTorch layout: LSTM weight_ih (4H, in), weight_hh (4H, H), biases (4H,);
    fc weight (3, 800), bias (3,). Gate order [i, f, g, o]. uniform(-1/sqrt(H), .)."""
    keys = iter(jax.random.split(key, 24))

    def uni(shape, bound):
        return jax.random.uniform(next(keys), shape, jnp.float32, -bound, bound)

    k = 1.0 / float(HIDDEN) ** 0.5
    p = {}
    for rnn, in_dim in (("rnn1", BERT_DIM), ("rnn2", HIDDEN)):
        for d in ("f", "r"):
            p[f"{rnn}_{d}_w_ih"] = uni((4 * HIDDEN, in_dim), k)
            p[f"{rnn}_{d}_w_hh"] = uni((4 * HIDDEN, HIDDEN), k)
            p[f"{rnn}_{d}_b_ih"] = uni((4 * HIDDEN,), k)
            p[f"{rnn}_{d}_b_hh"] = uni((4 * HIDDEN,), k)
    kf = 1.0 / float(4 * HIDDEN) ** 0.5
    p["fc_w"] = uni((NUM_CLASSES, 4 * HIDDEN), kf)
    p["fc_b"] = uni((NUM_CLASSES,), kf)
    return p


def _pad_gates_t(w, in_pad):
    """(4H, in) torch gate weight -> (in_pad, 4*HPAD), transposed, zero-padded."""
    in_dim = w.shape[1]
    out = jnp.zeros((in_pad, 4 * HPAD), jnp.float32)
    for g in range(4):
        blk = w[g * HIDDEN:(g + 1) * HIDDEN, :].T              # (in, H)
        out = out.at[:in_dim, g * HPAD:g * HPAD + HIDDEN].set(blk)
    return out


def _pad_gate_bias(b_ih, b_hh):
    b = b_ih + b_hh
    out = jnp.zeros((1, 4 * HPAD), jnp.float32)
    for g in range(4):
        out = out.at[0, g * HPAD:g * HPAD + HIDDEN].set(b[g * HIDDEN:(g + 1) * HIDDEN])
    return out


def pack_params(p):
    """Pad gates 200->256 (128-lane-aligned slices; padded cols are zero so padded
    h/c lanes stay exactly 0), pre-transpose to (in, out), fuse rnn1 directions and
    rnn2 [Wih; Whh], and cast MXU operands to bf16 (biases stay f32)."""
    wd = WEIGHT_DTYPE
    packed = {
        # rnn1: both directions side by side; Whh dropped entirely (h0 = 0).
        "w1_ih": jnp.concatenate([_pad_gates_t(p["rnn1_f_w_ih"], BERT_DIM),
                                  _pad_gates_t(p["rnn1_r_w_ih"], BERT_DIM)],
                                 axis=1).astype(wd),
        "b1": jnp.concatenate([_pad_gate_bias(p["rnn1_f_b_ih"], p["rnn1_f_b_hh"]),
                               _pad_gate_bias(p["rnn1_r_b_ih"], p["rnn1_r_b_hh"])],
                              axis=1),
        # rnn2: [Wih; Whh] stacked so [x | h] @ W is a single matmul per t1 step.
        "w2f": jnp.concatenate([_pad_gates_t(p["rnn2_f_w_ih"], HPAD),
                                _pad_gates_t(p["rnn2_f_w_hh"], HPAD)],
                               axis=0).astype(wd),
        "b2f": _pad_gate_bias(p["rnn2_f_b_ih"], p["rnn2_f_b_hh"]),
        "w2r": jnp.concatenate([_pad_gates_t(p["rnn2_r_w_ih"], HPAD),
                                _pad_gates_t(p["rnn2_r_w_hh"], HPAD)],
                               axis=0).astype(wd),
        "b2r": _pad_gate_bias(p["rnn2_r_b_ih"], p["rnn2_r_b_hh"]),
    }
    # FC: rows of the padded 1024-wide feature [h1_f | h2_f | h1_b | h2_b].
    wfc = jnp.zeros((4 * HPAD, OUT_PAD), jnp.float32)
    for g in range(4):
        wfc = wfc.at[g * HPAD:g * HPAD + HIDDEN, :NUM_CLASSES].set(
            p["fc_w"][:, g * HIDDEN:(g + 1) * HIDDEN].T)
    packed["wfc"] = wfc.astype(wd)
    packed["bfc"] = jnp.zeros((1, OUT_PAD), jnp.float32).at[0, :NUM_CLASSES].set(p["fc_b"])
    return packed


if __name__ == "__main__":
    key = jax.random.PRNGKey(0)
    k_hid, k_param = jax.random.split(key, 2)

    B, S = 2, 8
    # Synthetic stand-in for BERT's last hidden state (B, S, 768).
    bert_hidden = jax.random.normal(k_hid, (B, S, BERT_DIM), jnp.float32)
    # Attention mask: second example has 3 padding positions.
    bert_sent_mask = jnp.array(
        [[1.0] * S,
         [1.0] * 5 + [0.0] * 3], dtype=jnp.float32)

    params = pack_params(init_torch_params(k_param))

    out = lstm_xgboost_forward(bert_hidden, bert_sent_mask, params)
    out = jax.block_until_ready(out)

    assert out.shape == (B, NUM_CLASSES)
    assert bool(jnp.all(jnp.isfinite(out)))
    print("KERNEL_OK")
</pallas_src>

<mosaic_0001>
module attributes {stable_mosaic.version = 11 : i64} {
  func.func @_fused_kernel(%arg0: i32, %arg1: i32, %arg2: memref<8x8xf32, #tpu.memory_space<vmem>>, %arg3: memref<8x8x768xbf16, #tpu.memory_space<vmem>>, %arg4: memref<768x2048xbf16, #tpu.memory_space<vmem>>, %arg5: memref<1x2048xf32, #tpu.memory_space<vmem>>, %arg6: memref<512x1024xbf16, #tpu.memory_space<vmem>>, %arg7: memref<1x1024xf32, #tpu.memory_space<vmem>>, %arg8: memref<512x1024xbf16, #tpu.memory_space<vmem>>, %arg9: memref<1x1024xf32, #tpu.memory_space<vmem>>, %arg10: memref<1024x128xbf16, #tpu.memory_space<vmem>>, %arg11: memref<1x128xf32, #tpu.memory_space<vmem>>, %arg12: memref<8x128xf32, #tpu.memory_space<vmem>>, %arg13: memref<8x768xf32, #tpu.memory_space<vmem>>) attributes {dimension_semantics = [#tpu.dimension_semantics<parallel>, #tpu.dimension_semantics<arbitrary>], iteration_bounds = array<i64: 1, 1>, scalar_prefetch = 0 : i64, scratch_operands = 1 : i64, tpu.core_type = #tpu.core_type<tc>, window_params = [{transform_indices = @transform_0, window_bounds = array<i64: 8, 8>}, {transform_indices = @transform_1, window_bounds = array<i64: 8, 8, 768>}, {pipeline_mode = #tpu.pipeline_mode<synchronous>, transform_indices = @transform_2, window_bounds = array<i64: 768, 2048>}, {pipeline_mode = #tpu.pipeline_mode<synchronous>, transform_indices = @transform_3, window_bounds = array<i64: 1, 2048>}, {pipeline_mode = #tpu.pipeline_mode<synchronous>, transform_indices = @transform_4, window_bounds = array<i64: 512, 1024>}, {pipeline_mode = #tpu.pipeline_mode<synchronous>, transform_indices = @transform_5, window_bounds = array<i64: 1, 1024>}, {pipeline_mode = #tpu.pipeline_mode<synchronous>, transform_indices = @transform_6, window_bounds = array<i64: 512, 1024>}, {pipeline_mode = #tpu.pipeline_mode<synchronous>, transform_indices = @transform_7, window_bounds = array<i64: 1, 1024>}, {pipeline_mode = #tpu.pipeline_mode<synchronous>, transform_indices = @transform_8, window_bounds = array<i64: 1024, 128>}, {pipeline_mode = #tpu.pipeline_mode<synchronous>, transform_indices = @transform_9, window_bounds = array<i64: 1, 128>}, {transform_indices = @transform_10, window_bounds = array<i64: 8, 128>}]} {
    %c0_i32 = arith.constant 0 : i32
    %0 = arith.cmpi eq, %arg1, %c0_i32 : i32
    %1 = arith.extui %0 : i1 to i32
    %c0_i32_0 = arith.constant 0 : i32
    %2 = arith.cmpi ne, %1, %c0_i32_0 : i32
    scf.if %2 {
      %cst_23 = arith.constant 0.000000e+00 : f32
      %42 = vector.broadcast %cst_23 : f32 to vector<8x768xf32>
      %c0_24 = arith.constant 0 : index
      %c0_25 = arith.constant 0 : index
      %43 = vector.load %arg13[%c0_24, %c0_25] : memref<8x768xf32, #tpu.memory_space<vmem>>, vector<8x768xf32>
      tpu.vector_store %arg13[%c0_24, %c0_25], %42 {strides = array<i32>} : memref<8x768xf32, #tpu.memory_space<vmem>>, vector<8x768xf32>,
    } else {
    }
    %cst = arith.constant 0.000000e+00 : f32
    %3 = vector.broadcast %cst : f32 to vector<8x768xf32>
    %c0 = arith.constant 0 : index
    %c0_1 = arith.constant 0 : index
    %c0_2 = arith.constant 0 : index
    %4 = vector.load %arg3[%c0, %c0_1, %c0_2] : memref<8x8x768xbf16, #tpu.memory_space<vmem>>, vector<1x8x768xbf16>
    %5 = vector.shape_cast %4 : vector<1x8x768xbf16> to vector<8x768xbf16>
    %6 = arith.extf %5 : vector<8x768xbf16> to vector<8x768xf32>
    %7 = arith.addf %3, %6 : vector<8x768xf32>
    %c1 = arith.constant 1 : index
    %c0_3 = arith.constant 0 : index
    %c0_4 = arith.constant 0 : index
    %8 = vector.load %arg3[%c1, %c0_3, %c0_4] : memref<8x8x768xbf16, #tpu.memory_space<vmem>>, vector<1x8x768xbf16>
    %9 = vector.shape_cast %8 : vector<1x8x768xbf16> to vector<8x768xbf16>
    %10 = arith.extf %9 : vector<8x768xbf16> to vector<8x768xf32>
    %11 = arith.addf %7, %10 : vector<8x768xf32>
    %c2 = arith.constant 2 : index
    %c0_5 = arith.constant 0 : index
    %c0_6 = arith.constant 0 : index
    %12 = vector.load %arg3[%c2, %c0_5, %c0_6] : memref<8x8x768xbf16, #tpu.memory_space<vmem>>, vector<1x8x768xbf16>
    %13 = vector.shape_cast %12 : vector<1x8x768xbf16> to vector<8x768xbf16>
    %14 = arith.extf %13 : vector<8x768xbf16> to vector<8x768xf32>
    %15 = arith.addf %11, %14 : vector<8x768xf32>
    %c3 = arith.constant 3 : index
    %c0_7 = arith.constant 0 : index
    %c0_8 = arith.constant 0 : index
    %16 = vector.load %arg3[%c3, %c0_7, %c0_8] : memref<8x8x768xbf16, #tpu.memory_space<vmem>>, vector<1x8x768xbf16>
    %17 = vector.shape_cast %16 : vector<1x8x768xbf16> to vector<8x768xbf16>
    %18 = arith.extf %17 : vector<8x768xbf16> to vector<8x768xf32>
    %19 = arith.addf %15, %18 : vector<8x768xf32>
    %c4 = arith.constant 4 : index
    %c0_9 = arith.constant 0 : index
    %c0_10 = arith.constant 0 : index
    %20 = vector.load %arg3[%c4, %c0_9, %c0_10] : memref<8x8x768xbf16, #tpu.memory_space<vmem>>, vector<1x8x768xbf16>
    %21 = vector.shape_cast %20 : vector<1x8x768xbf16> to vector<8x768xbf16>
    %22 = arith.extf %21 : vector<8x768xbf16> to vector<8x768xf32>
    %23 = arith.addf %19, %22 : vector<8x768xf32>
    %c5 = arith.constant 5 : index
    %c0_11 = arith.constant 0 : index
    %c0_12 = arith.constant 0 : index
    %24 = vector.load %arg3[%c5, %c0_11, %c0_12] : memref<8x8x768xbf16, #tpu.memory_space<vmem>>, vector<1x8x768xbf16>
    %25 = vector.shape_cast %24 : vector<1x8x768xbf16> to vector<8x768xbf16>
    %26 = arith.extf %25 : vector<8x768xbf16> to vector<8x768xf32>
    %27 = arith.addf %23, %26 : vector<8x768xf32>
    %c6 = arith.constant 6 : index
    %c0_13 = arith.constant 0 : index
    %c0_14 = arith.constant 0 : index
    %28 = vector.load %arg3[%c6, %c0_13, %c0_14] : memref<8x8x768xbf16, #tpu.memory_space<vmem>>, vector<1x8x768xbf16>
    %29 = vector.shape_cast %28 : vector<1x8x768xbf16> to vector<8x768xbf16>
    %30 = arith.extf %29 : vector<8x768xbf16> to vector<8x768xf32>
    %31 = arith.addf %27, %30 : vector<8x768xf32>
    %c7 = arith.constant 7 : index
    %c0_15 = arith.constant 0 : index
    %c0_16 = arith.constant 0 : index
    %32 = vector.load %arg3[%c7, %c0_15, %c0_16] : memref<8x8x768xbf16, #tpu.memory_space<vmem>>, vector<1x8x768xbf16>
    %33 = vector.shape_cast %32 : vector<1x8x768xbf16> to vector<8x768xbf16>
    %34 = arith.extf %33 : vector<8x768xbf16> to vector<8x768xf32>
    %35 = arith.addf %31, %34 : vector<8x768xf32>
    %c0_17 = arith.constant 0 : index
    %c0_18 = arith.constant 0 : index
    %36 = vector.load %arg13[%c0_17, %c0_18] : memref<8x768xf32, #tpu.memory_space<vmem>>, vector<8x768xf32>
    %37 = arith.addf %36, %35 : vector<8x768xf32>
    %c0_19 = arith.constant 0 : index
    %c0_20 = arith.constant 0 : index
    %38 = vector.load %arg13[%c0_19, %c0_20] : memref<8x768xf32, #tpu.memory_space<vmem>>, vector<8x768xf32>
    tpu.vector_store %arg13[%c0_19, %c0_20], %37 {strides = array<i32>} : memref<8x768xf32, #tpu.memory_space<vmem>>, vector<8x768xf32>,
    %c0_i32_21 = arith.constant 0 : i32
    %39 = arith.cmpi eq, %arg1, %c0_i32_21 : i32
    %40 = arith.extui %39 : i1 to i32
    %c0_i32_22 = arith.constant 0 : i32
    %41 = arith.cmpi ne, %40, %c0_i32_22 : i32
    scf.if %41 {
      %c0_23 = arith.constant 0 : index
      %c0_24 = arith.constant 0 : index
      %42 = vector.load %arg2[%c0_23, %c0_24] : memref<8x8xf32, #tpu.memory_space<vmem>>, vector<8x8xf32>
      %cst_25 = arith.constant dense<0.000000e+00> : vector<8xf32>
      %43 = vector.multi_reduction <add>, %42, %cst_25 [1] : vector<8x8xf32> to vector<8xf32>
      %44 = vector.shape_cast %43 : vector<8xf32> to vector<8x1xf32>
      %cst_26 = arith.constant 1.000000e+00 : f32
      %45 = vector.broadcast %cst_26 : f32 to vector<8x1xf32>
      %46 = arith.maximumf %44, %45 : vector<8x1xf32>
      %c0_27 = arith.constant 0 : index
      %c0_28 = arith.constant 0 : index
      %47 = vector.load %arg13[%c0_27, %c0_28] : memref<8x768xf32, #tpu.memory_space<vmem>>, vector<8x768xf32>
      %48 = vector.broadcast %46 : vector<8x1xf32> to vector<8x768xf32>
      %49 = arith.divf %47, %48 : vector<8x768xf32>
      %50 = arith.truncf %49 : vector<8x768xf32> to vector<8x768xbf16>
      %c0_29 = arith.constant 0 : index
      %c0_30 = arith.constant 0 : index
      %51 = vector.load %arg4[%c0_29, %c0_30] : memref<768x2048xbf16, #tpu.memory_space<vmem>>, vector<768x2048xbf16>
      %cst_31 = arith.constant dense<0.000000e+00> : vector<8x2048xf32>
      %52 = tpu.matmul %50, %51, %cst_31 {dimension_numbers = #tpu.dot_dimension_numbers<[1], [0], [0], [1], [0, 0, 1, 1], [], []>} : vector<8x768xbf16>, vector<768x2048xbf16>, vector<8x2048xf32> -> vector<8x2048xf32>
      %c0_32 = arith.constant 0 : index
      %c0_33 = arith.constant 0 : index
      %53 = vector.load %arg5[%c0_32, %c0_33] : memref<1x2048xf32, #tpu.memory_space<vmem>>, vector<1x2048xf32>
      %54 = vector.broadcast %53 : vector<1x2048xf32> to vector<8x2048xf32>
      %55 = arith.addf %52, %54 : vector<8x2048xf32>
      %56 = vector.extract_strided_slice %55 {offsets = [0, 0], sizes = [8, 1024], strides = [1, 1]} : vector<8x2048xf32> to vector<8x1024xf32>
      %57 = vector.extract_strided_slice %56 {offsets = [0, 0], sizes = [8, 256], strides = [1, 1]} : vector<8x1024xf32> to vector<8x256xf32>
      %58 = arith.negf %57 : vector<8x256xf32>
      %59 = math.exp %58 : vector<8x256xf32>
      %cst_34 = arith.constant 1.000000e+00 : f32
      %60 = vector.broadcast %cst_34 : f32 to vector<8x256xf32>
      %61 = arith.addf %60, %59 : vector<8x256xf32>
      %62 = arith.divf %60, %61 : vector<8x256xf32>
      %63 = vector.extract_strided_slice %56 {offsets = [0, 512], sizes = [8, 256], strides = [1, 1]} : vector<8x1024xf32> to vector<8x256xf32>
      %64 = math.tanh %63 : vector<8x256xf32>
      %65 = vector.extract_strided_slice %56 {offsets = [0, 768], sizes = [8, 256], strides = [1, 1]} : vector<8x1024xf32> to vector<8x256xf32>
      %66 = arith.negf %65 : vector<8x256xf32>
      %67 = math.exp %66 : vector<8x256xf32>
      %cst_35 = arith.constant 1.000000e+00 : f32
      %68 = vector.broadcast %cst_35 : f32 to vector<8x256xf32>
      %69 = arith.addf %68, %67 : vector<8x256xf32>
      %70 = arith.divf %68, %69 : vector<8x256xf32>
      %71 = arith.mulf %62, %64 : vector<8x256xf32>
      %72 = math.tanh %71 : vector<8x256xf32>
      %73 = arith.mulf %70, %72 : vector<8x256xf32>
      %74 = vector.extract_strided_slice %55 {offsets = [0, 1024], sizes = [8, 1024], strides = [1, 1]} : vector<8x2048xf32> to vector<8x1024xf32>
      %75 = vector.extract_strided_slice %74 {offsets = [0, 0], sizes = [8, 256], strides = [1, 1]} : vector<8x1024xf32> to vector<8x256xf32>
      %76 = arith.negf %75 : vector<8x256xf32>
      %77 = math.exp %76 : vector<8x256xf32>
      %cst_36 = arith.constant 1.000000e+00 : f32
      %78 = vector.broadcast %cst_36 : f32 to vector<8x256xf32>
      %79 = arith.addf %78, %77 : vector<8x256xf32>
      %80 = arith.divf %78, %79 : vector<8x256xf32>
      %81 = vector.extract_strided_slice %74 {offsets = [0, 512], sizes = [8, 256], strides = [1, 1]} : vector<8x1024xf32> to vector<8x256xf32>
      %82 = math.tanh %81 : vector<8x256xf32>
      %83 = vector.extract_strided_slice %74 {offsets = [0, 768], sizes = [8, 256], strides = [1, 1]} : vector<8x1024xf32> to vector<8x256xf32>
      %84 = arith.negf %83 : vector<8x256xf32>
      %85 = math.exp %84 : vector<8x256xf32>
      %cst_37 = arith.constant 1.000000e+00 : f32
      %86 = vector.broadcast %cst_37 : f32 to vector<8x256xf32>
      %87 = arith.addf %86, %85 : vector<8x256xf32>
      %88 = arith.divf %86, %87 : vector<8x256xf32>
      %89 = arith.mulf %80, %82 : vector<8x256xf32>
      %90 = math.tanh %89 : vector<8x256xf32>
      %91 = arith.mulf %88, %90 : vector<8x256xf32>
      %92 = arith.truncf %73 : vector<8x256xf32> to vector<8x256xbf16>
      %93 = arith.truncf %91 : vector<8x256xf32> to vector<8x256xbf16>
      %c0_38 = arith.constant 0 : index
      %c0_39 = arith.constant 0 : index
      %94 = vector.load %arg6[%c0_38, %c0_39] : memref<512x1024xbf16, #tpu.memory_space<vmem>>, vector<256x1024xbf16>
      %cst_40 = arith.constant dense<0.000000e+00> : vector<8x1024xf32>
      %95 = tpu.matmul %92, %94, %cst_40 {dimension_numbers = #tpu.dot_dimension_numbers<[1], [0], [0], [1], [0, 0, 1, 1], [], []>} : vector<8x256xbf16>, vector<256x1024xbf16>, vector<8x1024xf32> -> vector<8x1024xf32>
      %c0_41 = arith.constant 0 : index
      %c0_42 = arith.constant 0 : index
      %96 = vector.load %arg7[%c0_41, %c0_42] : memref<1x1024xf32, #tpu.memory_space<vmem>>, vector<1x1024xf32>
      %97 = vector.broadcast %96 : vector<1x1024xf32> to vector<8x1024xf32>
      %98 = arith.addf %95, %97 : vector<8x1024xf32>
      %99 = vector.extract_strided_slice %98 {offsets = [0, 0], sizes = [8, 256], strides = [1, 1]} : vector<8x1024xf32> to vector<8x256xf32>
      %100 = arith.negf %99 : vector<8x256xf32>
      %101 = math.exp %100 : vector<8x256xf32>
      %cst_43 = arith.constant 1.000000e+00 : f32
      %102 = vector.broadcast %cst_43 : f32 to vector<8x256xf32>
      %103 = arith.addf %102, %101 : vector<8x256xf32>
      %104 = arith.divf %102, %103 : vector<8x256xf32>
      %105 = vector.extract_strided_slice %98 {offsets = [0, 512], sizes = [8, 256], strides = [1, 1]} : vector<8x1024xf32> to vector<8x256xf32>
      %106 = math.tanh %105 : vector<8x256xf32>
      %107 = vector.extract_strided_slice %98 {offsets = [0, 768], sizes = [8, 256], strides = [1, 1]} : vector<8x1024xf32> to vector<8x256xf32>
      %108 = arith.negf %107 : vector<8x256xf32>
      %109 = math.exp %108 : vector<8x256xf32>
      %cst_44 = arith.constant 1.000000e+00 : f32
      %110 = vector.broadcast %cst_44 : f32 to vector<8x256xf32>
      %111 = arith.addf %110, %109 : vector<8x256xf32>
      %112 = arith.divf %110, %111 : vector<8x256xf32>
      %113 = arith.mulf %104, %106 : vector<8x256xf32>
      %114 = math.tanh %113 : vector<8x256xf32>
      %115 = arith.mulf %112, %114 : vector<8x256xf32>
      %116 = arith.truncf %115 : vector<8x256xf32> to vector<8x256xbf16>
      %117 = tpu.concatenate %93, %116 in 1 : vector<8x256xbf16>, vector<8x256xbf16> -> vector<8x512xbf16>
      %c0_45 = arith.constant 0 : index
      %c0_46 = arith.constant 0 : index
      %118 = vector.load %arg6[%c0_45, %c0_46] : memref<512x1024xbf16, #tpu.memory_space<vmem>>, vector<512x1024xbf16>
      %cst_47 = arith.constant dense<0.000000e+00> : vector<8x1024xf32>
      %119 = tpu.matmul %117, %118, %cst_47 {dimension_numbers = #tpu.dot_dimension_numbers<[1], [0], [0], [1], [0, 0, 1, 1], [], []>} : vector<8x512xbf16>, vector<512x1024xbf16>, vector<8x1024xf32> -> vector<8x1024xf32>
      %c0_48 = arith.constant 0 : index
      %c0_49 = arith.constant 0 : index
      %120 = vector.load %arg7[%c0_48, %c0_49] : memref<1x1024xf32, #tpu.memory_space<vmem>>, vector<1x1024xf32>
      %121 = vector.broadcast %120 : vector<1x1024xf32> to vector<8x1024xf32>
      %122 = arith.addf %119, %121 : vector<8x1024xf32>
      %123 = vector.extract_strided_slice %122 {offsets = [0, 0], sizes = [8, 256], strides = [1, 1]} : vector<8x1024xf32> to vector<8x256xf32>
      %124 = arith.negf %123 : vector<8x256xf32>
      %125 = math.exp %124 : vector<8x256xf32>
      %cst_50 = arith.constant 1.000000e+00 : f32
      %126 = vector.broadcast %cst_50 : f32 to vector<8x256xf32>
      %127 = arith.addf %126, %125 : vector<8x256xf32>
      %128 = arith.divf %126, %127 : vector<8x256xf32>
      %129 = vector.extract_strided_slice %122 {offsets = [0, 256], sizes = [8, 256], strides = [1, 1]} : vector<8x1024xf32> to vector<8x256xf32>
      %130 = arith.negf %129 : vector<8x256xf32>
      %131 = math.exp %130 : vector<8x256xf32>
      %cst_51 = arith.constant 1.000000e+00 : f32
      %132 = vector.broadcast %cst_51 : f32 to vector<8x256xf32>
      %133 = arith.addf %132, %131 : vector<8x256xf32>
      %134 = arith.divf %132, %133 : vector<8x256xf32>
      %135 = vector.extract_strided_slice %122 {offsets = [0, 512], sizes = [8, 256], strides = [1, 1]} : vector<8x1024xf32> to vector<8x256xf32>
      %136 = math.tanh %135 : vector<8x256xf32>
      %137 = vector.extract_strided_slice %122 {offsets = [0, 768], sizes = [8, 256], strides = [1, 1]} : vector<8x1024xf32> to vector<8x256xf32>
      %138 = arith.negf %137 : vector<8x256xf32>
      %139 = math.exp %138 : vector<8x256xf32>
      %cst_52 = arith.constant 1.000000e+00 : f32
      %140 = vector.broadcast %cst_52 : f32 to vector<8x256xf32>
      %141 = arith.addf %140, %139 : vector<8x256xf32>
      %142 = arith.divf %140, %141 : vector<8x256xf32>
      %143 = arith.mulf %134, %113 : vector<8x256xf32>
      %144 = arith.mulf %128, %136 : vector<8x256xf32>
      %145 = arith.addf %143, %144 : vector<8x256xf32>
      %146 = math.tanh %145 : vector<8x256xf32>
      %147 = arith.mulf %142, %146 : vector<8x256xf32>
      %c0_53 = arith.constant 0 : index
      %c0_54 = arith.constant 0 : index
      %148 = vector.load %arg8[%c0_53, %c0_54] : memref<512x1024xbf16, #tpu.memory_space<vmem>>, vector<256x1024xbf16>
      %cst_55 = arith.constant dense<0.000000e+00> : vector<8x1024xf32>
      %149 = tpu.matmul %93, %148, %cst_55 {dimension_numbers = #tpu.dot_dimension_numbers<[1], [0], [0], [1], [0, 0, 1, 1], [], []>} : vector<8x256xbf16>, vector<256x1024xbf16>, vector<8x1024xf32> -> vector<8x1024xf32>
      %c0_56 = arith.constant 0 : index
      %c0_57 = arith.constant 0 : index
      %150 = vector.load %arg9[%c0_56, %c0_57] : memref<1x1024xf32, #tpu.memory_space<vmem>>, vector<1x1024xf32>
      %151 = vector.broadcast %150 : vector<1x1024xf32> to vector<8x1024xf32>
      %152 = arith.addf %149, %151 : vector<8x1024xf32>
      %153 = vector.extract_strided_slice %152 {offsets = [0, 0], sizes = [8, 256], strides = [1, 1]} : vector<8x1024xf32> to vector<8x256xf32>
      %154 = arith.negf %153 : vector<8x256xf32>
      %155 = math.exp %154 : vector<8x256xf32>
      %cst_58 = arith.constant 1.000000e+00 : f32
      %156 = vector.broadcast %cst_58 : f32 to vector<8x256xf32>
      %157 = arith.addf %156, %155 : vector<8x256xf32>
      %158 = arith.divf %156, %157 : vector<8x256xf32>
      %159 = vector.extract_strided_slice %152 {offsets = [0, 512], sizes = [8, 256], strides = [1, 1]} : vector<8x1024xf32> to vector<8x256xf32>
      %160 = math.tanh %159 : vector<8x256xf32>
      %161 = vector.extract_strided_slice %152 {offsets = [0, 768], sizes = [8, 256], strides = [1, 1]} : vector<8x1024xf32> to vector<8x256xf32>
      %162 = arith.negf %161 : vector<8x256xf32>
      %163 = math.exp %162 : vector<8x256xf32>
      %cst_59 = arith.constant 1.000000e+00 : f32
      %164 = vector.broadcast %cst_59 : f32 to vector<8x256xf32>
      %165 = arith.addf %164, %163 : vector<8x256xf32>
      %166 = arith.divf %164, %165 : vector<8x256xf32>
      %167 = arith.mulf %158, %160 : vector<8x256xf32>
      %168 = math.tanh %167 : vector<8x256xf32>
      %169 = arith.mulf %166, %168 : vector<8x256xf32>
      %170 = arith.truncf %169 : vector<8x256xf32> to vector<8x256xbf16>
      %171 = tpu.concatenate %92, %170 in 1 : vector<8x256xbf16>, vector<8x256xbf16> -> vector<8x512xbf16>
      %c0_60 = arith.constant 0 : index
      %c0_61 = arith.constant 0 : index
      %172 = vector.load %arg8[%c0_60, %c0_61] : memref<512x1024xbf16, #tpu.memory_space<vmem>>, vector<512x1024xbf16>
      %cst_62 = arith.constant dense<0.000000e+00> : vector<8x1024xf32>
      %173 = tpu.matmul %171, %172, %cst_62 {dimension_numbers = #tpu.dot_dimension_numbers<[1], [0], [0], [1], [0, 0, 1, 1], [], []>} : vector<8x512xbf16>, vector<512x1024xbf16>, vector<8x1024xf32> -> vector<8x1024xf32>
      %c0_63 = arith.constant 0 : index
      %c0_64 = arith.constant 0 : index
      %174 = vector.load %arg9[%c0_63, %c0_64] : memref<1x1024xf32, #tpu.memory_space<vmem>>, vector<1x1024xf32>
      %175 = vector.broadcast %174 : vector<1x1024xf32> to vector<8x1024xf32>
      %176 = arith.addf %173, %175 : vector<8x1024xf32>
      %177 = vector.extract_strided_slice %176 {offsets = [0, 0], sizes = [8, 256], strides = [1, 1]} : vector<8x1024xf32> to vector<8x256xf32>
      %178 = arith.negf %177 : vector<8x256xf32>
      %179 = math.exp %178 : vector<8x256xf32>
      %cst_65 = arith.constant 1.000000e+00 : f32
      %180 = vector.broadcast %cst_65 : f32 to vector<8x256xf32>
      %181 = arith.addf %180, %179 : vector<8x256xf32>
      %182 = arith.divf %180, %181 : vector<8x256xf32>
      %183 = vector.extract_strided_slice %176 {offsets = [0, 256], sizes = [8, 256], strides = [1, 1]} : vector<8x1024xf32> to vector<8x256xf32>
      %184 = arith.negf %183 : vector<8x256xf32>
      %185 = math.exp %184 : vector<8x256xf32>
      %cst_66 = arith.constant 1.000000e+00 : f32
      %186 = vector.broadcast %cst_66 : f32 to vector<8x256xf32>
      %187 = arith.addf %186, %185 : vector<8x256xf32>
      %188 = arith.divf %186, %187 : vector<8x256xf32>
      %189 = vector.extract_strided_slice %176 {offsets = [0, 512], sizes = [8, 256], strides = [1, 1]} : vector<8x1024xf32> to vector<8x256xf32>
      %190 = math.tanh %189 : vector<8x256xf32>
      %191 = vector.extract_strided_slice %176 {offsets = [0, 768], sizes = [8, 256], strides = [1, 1]} : vector<8x1024xf32> to vector<8x256xf32>
      %192 = arith.negf %191 : vector<8x256xf32>
      %193 = math.exp %192 : vector<8x256xf32>
      %cst_67 = arith.constant 1.000000e+00 : f32
      %194 = vector.broadcast %cst_67 : f32 to vector<8x256xf32>
      %195 = arith.addf %194, %193 : vector<8x256xf32>
      %196 = arith.divf %194, %195 : vector<8x256xf32>
      %197 = arith.mulf %188, %167 : vector<8x256xf32>
      %198 = arith.mulf %182, %190 : vector<8x256xf32>
      %199 = arith.addf %197, %198 : vector<8x256xf32>
      %200 = math.tanh %199 : vector<8x256xf32>
      %201 = arith.mulf %196, %200 : vector<8x256xf32>
      %202 = tpu.concatenate %73, %147, %91, %201 in 1 : vector<8x256xf32>, vector<8x256xf32>, vector<8x256xf32>, vector<8x256xf32> -> vector<8x1024xf32>
      %203 = arith.truncf %202 : vector<8x1024xf32> to vector<8x1024xbf16>
      %c0_68 = arith.constant 0 : index
      %c0_69 = arith.constant 0 : index
      %204 = vector.load %arg10[%c0_68, %c0_69] : memref<1024x128xbf16, #tpu.memory_space<vmem>>, vector<1024x128xbf16>
      %cst_70 = arith.constant dense<0.000000e+00> : vector<8x128xf32>
      %205 = tpu.matmul %203, %204, %cst_70 {dimension_numbers = #tpu.dot_dimension_numbers<[1], [0], [0], [1], [0, 0, 1, 1], [], []>} : vector<8x1024xbf16>, vector<1024x128xbf16>, vector<8x128xf32> -> vector<8x128xf32>
      %c0_71 = arith.constant 0 : index
      %c0_72 = arith.constant 0 : index
      %206 = vector.load %arg11[%c0_71, %c0_72] : memref<1x128xf32, #tpu.memory_space<vmem>>, vector<1x128xf32>
      %207 = vector.broadcast %206 : vector<1x128xf32> to vector<8x128xf32>
      %208 = arith.addf %205, %207 : vector<8x128xf32>
      %c0_73 = arith.constant 0 : index
      %c0_74 = arith.constant 0 : index
      %209 = vector.load %arg12[%c0_73, %c0_74] : memref<8x128xf32, #tpu.memory_space<vmem>>, vector<8x128xf32>
      tpu.vector_store %arg12[%c0_73, %c0_74], %208 {strides = array<i32>} : memref<8x128xf32, #tpu.memory_space<vmem>>, vector<8x128xf32>,
    } else {
    }
    return
  }
  func.func @transform_0(%arg0: i32, %arg1: i32) -> (i32, i32) {
    %c0_i32 = arith.constant 0 : i32
    %c0_i32_0 = arith.constant 0 : i32
    return %arg0, %c0_i32 : i32, i32
  }
  func.func @transform_1(%arg0: i32, %arg1: i32) -> (i32, i32, i32) {
    %c0_i32 = arith.constant 0 : i32
    %c0_i32_0 = arith.constant 0 : i32
    return %arg1, %arg0, %c0_i32 : i32, i32, i32
  }
  func.func @transform_2(%arg0: i32, %arg1: i32) -> (i32, i32) {
    %c0_i32 = arith.constant 0 : i32
    %c0_i32_0 = arith.constant 0 : i32
    %c0_i32_1 = arith.constant 0 : i32
    return %c0_i32, %c0_i32_0 : i32, i32
  }
  func.func @transform_3(%arg0: i32, %arg1: i32) -> (i32, i32) {
    %c0_i32 = arith.constant 0 : i32
    %c0_i32_0 = arith.constant 0 : i32
    %c0_i32_1 = arith.constant 0 : i32
    return %c0_i32, %c0_i32_0 : i32, i32
  }
  func.func @transform_4(%arg0: i32, %arg1: i32) -> (i32, i32) {
    %c0_i32 = arith.constant 0 : i32
    %c0_i32_0 = arith.constant 0 : i32
    %c0_i32_1 = arith.constant 0 : i32
    return %c0_i32, %c0_i32_0 : i32, i32
  }
  func.func @transform_5(%arg0: i32, %arg1: i32) -> (i32, i32) {
    %c0_i32 = arith.constant 0 : i32
    %c0_i32_0 = arith.constant 0 : i32
    %c0_i32_1 = arith.constant 0 : i32
    return %c0_i32, %c0_i32_0 : i32, i32
  }
  func.func @transform_6(%arg0: i32, %arg1: i32) -> (i32, i32) {
    %c0_i32 = arith.constant 0 : i32
    %c0_i32_0 = arith.constant 0 : i32
    %c0_i32_1 = arith.constant 0 : i32
    return %c0_i32, %c0_i32_0 : i32, i32
  }
  func.func @transform_7(%arg0: i32, %arg1: i32) -> (i32, i32) {
    %c0_i32 = arith.constant 0 : i32
    %c0_i32_0 = arith.constant 0 : i32
    %c0_i32_1 = arith.constant 0 : i32
    return %c0_i32, %c0_i32_0 : i32, i32
  }
  func.func @transform_8(%arg0: i32, %arg1: i32) -> (i32, i32) {
    %c0_i32 = arith.constant 0 : i32
    %c0_i32_0 = arith.constant 0 : i32
    %c0_i32_1 = arith.constant 0 : i32
    return %c0_i32, %c0_i32_0 : i32, i32
  }
  func.func @transform_9(%arg0: i32, %arg1: i32) -> (i32, i32) {
    %c0_i32 = arith.constant 0 : i32
    %c0_i32_0 = arith.constant 0 : i32
    %c0_i32_1 = arith.constant 0 : i32
    return %c0_i32, %c0_i32_0 : i32, i32
  }
  func.func @transform_10(%arg0: i32, %arg1: i32) -> (i32, i32) {
    %c0_i32 = arith.constant 0 : i32
    %c0_i32_0 = arith.constant 0 : i32
    return %arg0, %c0_i32 : i32, i32
  }
}

</mosaic_0001>

<llo_original>
// kernel: tpu_custom_call.1
$region0: #{tpu_custom_call.1}
  #allocation0 [shape = 'u32[]', space=smem, size = 0x4, offset = 0x4, fixed_abs, tag = 'smem constant byte address 0x4 - core index']
  #allocation1 [shape = 'u32[144,128]{1,0:T(1,128)}', space=vmem, size = 0x12000, scoped, tag = 'internal scratch']
  #allocation2 [shape = 'f32[8,768]{1,0:T(8,128)}', space=vmem, size = 0x6000, scoped, tag = 'scratch operand']
  %s0 = inlined_call_operand.hbm [shape: f32[8,8], index: 0, kind: input, shape index: {}]
  %s1 = inlined_call_operand.hbm [shape: bf16[8,8,768], index: 1, kind: input, shape index: {}]
  %s2 = inlined_call_operand.hbm [shape: bf16[768,2048], index: 2, kind: input, shape index: {}]
  %s3 = inlined_call_operand.hbm [shape: f32[1,2048], index: 3, kind: input, shape index: {}]
  %s4 = inlined_call_operand.hbm [shape: bf16[512,1024], index: 4, kind: input, shape index: {}]
  %s5 = inlined_call_operand.hbm [shape: f32[1,1024], index: 5, kind: input, shape index: {}]
  %s6 = inlined_call_operand.hbm [shape: bf16[512,1024], index: 6, kind: input, shape index: {}]
  %s7 = inlined_call_operand.hbm [shape: f32[1,1024], index: 7, kind: input, shape index: {}]
  %s8 = inlined_call_operand.hbm [shape: bf16[1024,128], index: 8, kind: input, shape index: {}]
  %s9 = inlined_call_operand.hbm [shape: f32[1,128], index: 9, kind: input, shape index: {}]
  %s10 = inlined_call_operand.hbm [shape: f32[8,128], index: 10, kind: output, shape index: {}]
  %s11 = sld [smem:[#allocation0]]
  $region98: #{tpu_custom_call.1} parent=0
    _
  %s13 = ssub.s32 1, %s11
  %s14 = scalar_select 0, %s13, %s11
  $region1: #{tpu_custom_call.1} parent=0
    #allocation3 [shape = 'u8[4096]{0}', space=vmem, size = 0x1000, scoped, tag = 'input window, operand 0, single buffered']
    #allocation4 [shape = 's32[1]{0}', space=sflag, size = 0x4, scoped, tag = 'scoped memory for tpu_custom_call.1']
    #allocation5 [shape = 's32[1]{0}', space=sflag, size = 0x4, scoped, tag = 'scoped memory for tpu_custom_call.1']
    #allocation6 [shape = 'u8[98304]{0}', space=vmem, size = 0x18000, scoped, tag = 'input window, operand 1, single buffered']
    #allocation7 [shape = 's32[1]{0}', space=sflag, size = 0x4, scoped, tag = 'scoped memory for tpu_custom_call.1']
    #allocation8 [shape = 'u8[3145728]{0}', space=vmem, size = 0x300000, scoped, tag = 'input window, operand 2, single buffered']
    #allocation9 [shape = 'u8[8192]{0}', space=vmem, size = 0x2000, scoped, tag = 'input window, operand 3, single buffered']
    #allocation10 [shape = 's32[1]{0}', space=sflag, size = 0x4, scoped, tag = 'scoped memory for tpu_custom_call.1']
    #allocation11 [shape = 'u8[1048576]{0}', space=vmem, size = 0x100000, scoped, tag = 'input window, operand 4, single buffered']
    #allocation12 [shape = 'u8[4096]{0}', space=vmem, size = 0x1000, scoped, tag = 'input window, operand 5, single buffered']
    #allocation13 [shape = 's32[1]{0}', space=sflag, size = 0x4, scoped, tag = 'scoped memory for tpu_custom_call.1']
    #allocation14 [shape = 'u8[1048576]{0}', space=vmem, size = 0x100000, scoped, tag = 'input window, operand 6, single buffered']
    #allocation15 [shape = 'u8[4096]{0}', space=vmem, size = 0x1000, scoped, tag = 'input window, operand 7, single buffered']
    #allocation16 [shape = 's32[1]{0}', space=sflag, size = 0x4, scoped, tag = 'scoped memory for tpu_custom_call.1']
    #allocation17 [shape = 'u8[262144]{0}', space=vmem, size = 0x40000, scoped, tag = 'input window, operand 8, single buffered']
    #allocation18 [shape = 'u8[512]{0}', space=vmem, size = 0x400, scoped, tag = 'input window, operand 9, single buffered']
    #allocation19 [shape = 's32[1]{0}', space=sflag, size = 0x4, scoped, tag = 'scoped memory for tpu_custom_call.1']
    #allocation20 [shape = 'u8[4096]{0}', space=vmem, size = 0x1000, scoped, tag = 'output window, operand 0, single buffered']
    %15 = vsyncpa [#allocation4], 0
    %16 = vsyncpa [#allocation7], 0
    %17 = vsyncpa [#allocation10], 0
    %18 = vsyncpa [#allocation13], 0
    %19 = vsyncpa [#allocation16], 0
    %20 = vsyncpa [#allocation19], 0
    %21 = vsyncpa [#allocation5], 0
    // Predicated region
    $region2: #{tpu_custom_call.1} parent=1 // pred_check
      _
    $region3: #{tpu_custom_call.1} parent=1 // pred_check_branch
      %23 = sbr.rel (0) target = $region5
    $region4: #{tpu_custom_call.1} parent=1 // pred_region
      %s25 = ssub.s32 128, 128
      %26 = vsyncadd [#allocation4], %s25
      %s28 = sshll.u32 [#allocation3], 4
      %s29 = int_to_ptr.vmem [resolvable:$true] %s28
      %31 = dma.hbm_to_vmem [thread:$0]  %s0, 128, %s29, [#allocation4]
    $region5: #{tpu_custom_call.1} parent=1 // pred_fallthru
      _
    // Predicated region
    $region6: #{tpu_custom_call.1} parent=1 // pred_check
      _
    $region7: #{tpu_custom_call.1} parent=1 // pred_check_branch
      %33 = sbr.rel (0) target = $region9
    $region8: #{tpu_custom_call.1} parent=1 // pred_region
      %s35 = ssub.s32 3072, 3072
      %36 = vsyncadd [#allocation7], %s35
      %s37 = sshll.u32 [#allocation6], 4
      %s38 = int_to_ptr.vmem [resolvable:$true] %s37
      %43 = dma.hbm_to_vmem [thread:$0]  %s1, 3072, %s38, [#allocation7], 384, 384, 24
    $region9: #{tpu_custom_call.1} parent=1 // pred_fallthru
      _
    // Predicated region
    $region10: #{tpu_custom_call.1} parent=1 // pred_check
      _
    $region11: #{tpu_custom_call.1} parent=1 // pred_check_branch
      %45 = sbr.rel (0) target = $region13
    $region12: #{tpu_custom_call.1} parent=1 // pred_region
      %s47 = ssub.s32 98304, 98304
      %48 = vsyncadd [#allocation7], %s47
      %s49 = sshll.u32 [#allocation8], 4
      %s50 = int_to_ptr.vmem [resolvable:$true] %s49
      %55 = dma.hbm_to_vmem [thread:$0]  %s2, 98304, %s50, [#allocation7], 1024, 1024, 64
    $region13: #{tpu_custom_call.1} parent=1 // pred_fallthru
      _
    // Predicated region
    $region14: #{tpu_custom_call.1} parent=1 // pred_check
      _
    $region15: #{tpu_custom_call.1} parent=1 // pred_check_branch
      %57 = sbr.rel (0) target = $region17
    $region16: #{tpu_custom_call.1} parent=1 // pred_region
      %s59 = ssub.s32 256, 256
      %60 = vsyncadd [#allocation10], %s59
      %s62 = sshll.u32 [#allocation9], 4
      %s63 = int_to_ptr.vmem [resolvable:$true] %s62
      %65 = dma.hbm_to_vmem [thread:$0]  %s3, 256, %s63, [#allocation10]
    $region17: #{tpu_custom_call.1} parent=1 // pred_fallthru
      _
    // Predicated region
    $region18: #{tpu_custom_call.1} parent=1 // pred_check
      _
    $region19: #{tpu_custom_call.1} parent=1 // pred_check_branch
      %67 = sbr.rel (0) target = $region21
    $region20: #{tpu_custom_call.1} parent=1 // pred_region
      %s69 = ssub.s32 32768, 32768
      %70 = vsyncadd [#allocation10], %s69
      %s71 = sshll.u32 [#allocation11], 4
      %s72 = int_to_ptr.vmem [resolvable:$true] %s71
      %77 = dma.hbm_to_vmem [thread:$0]  %s4, 32768, %s72, [#allocation10], 512, 512, 32
    $region21: #{tpu_custom_call.1} parent=1 // pred_fallthru
      _
    // Predicated region
    $region22: #{tpu_custom_call.1} parent=1 // pred_check
      _
    $region23: #{tpu_custom_call.1} parent=1 // pred_check_branch
      %79 = sbr.rel (0) target = $region25
    $region24: #{tpu_custom_call.1} parent=1 // pred_region
      %s81 = ssub.s32 128, 128
      %82 = vsyncadd [#allocation13], %s81
      %s84 = sshll.u32 [#allocation12], 4
      %s85 = int_to_ptr.vmem [resolvable:$true] %s84
      %87 = dma.hbm_to_vmem [thread:$0]  %s5, 128, %s85, [#allocation13]
    $region25: #{tpu_custom_call.1} parent=1 // pred_fallthru
      _
    // Predicated region
    $region26: #{tpu_custom_call.1} parent=1 // pred_check
      _
    $region27: #{tpu_custom_call.1} parent=1 // pred_check_branch
      %89 = sbr.rel (0) target = $region29
    $region28: #{tpu_custom_call.1} parent=1 // pred_region
      %s91 = ssub.s32 32768, 32768
      %92 = vsyncadd [#allocation13], %s91
      %s93 = sshll.u32 [#allocation14], 4
      %s94 = int_to_ptr.vmem [resolvable:$true] %s93
      %99 = dma.hbm_to_vmem [thread:$0]  %s6, 32768, %s94, [#allocation13], 512, 512, 32
    $region29: #{tpu_custom_call.1} parent=1 // pred_fallthru
      _
    // Predicated region
    $region30: #{tpu_custom_call.1} parent=1 // pred_check
      _
    $region31: #{tpu_custom_call.1} parent=1 // pred_check_branch
      %101 = sbr.rel (0) target = $region33
    $region32: #{tpu_custom_call.1} parent=1 // pred_region
      %s103 = ssub.s32 128, 128
      %104 = vsyncadd [#allocation16], %s103
      %s106 = sshll.u32 [#allocation15], 4
      %s107 = int_to_ptr.vmem [resolvable:$true] %s106
      %109 = dma.hbm_to_vmem [thread:$0]  %s7, 128, %s107, [#allocation16]
    $region33: #{tpu_custom_call.1} parent=1 // pred_fallthru
      _
    // Predicated region
    $region34: #{tpu_custom_call.1} parent=1 // pred_check
      _
    $region35: #{tpu_custom_call.1} parent=1 // pred_check_branch
      %111 = sbr.rel (0) target = $region37
    $region36: #{tpu_custom_call.1} parent=1 // pred_region
      %s113 = ssub.s32 8192, 8192
      %114 = vsyncadd [#allocation16], %s113
      %s115 = sshll.u32 [#allocation17], 4
      %s116 = int_to_ptr.vmem [resolvable:$true] %s115
      %121 = dma.hbm_to_vmem [thread:$0]  %s8, 8192, %s116, [#allocation16], 64, 64, 4
    $region37: #{tpu_custom_call.1} parent=1 // pred_fallthru
      _
    // Predicated region
    $region38: #{tpu_custom_call.1} parent=1 // pred_check
      _
    $region39: #{tpu_custom_call.1} parent=1 // pred_check_branch
      %123 = sbr.rel (0) target = $region41
    $region40: #{tpu_custom_call.1} parent=1 // pred_region
      %s125 = ssub.s32 16, 16
      %126 = vsyncadd [#allocation19], %s125
      %s128 = sshll.u32 [#allocation18], 4
      %s129 = int_to_ptr.vmem [resolvable:$true] %s128
      %131 = dma.hbm_to_vmem [thread:$0]  %s9, 16, %s129, [#allocation19]
    $region41: #{tpu_custom_call.1} parent=1 // pred_fallthru
      _
    // Predicated region
    $region42: #{tpu_custom_call.1} parent=1 // pred_check
      _
    $region43: #{tpu_custom_call.1} parent=1 // pred_check_branch
      %133 = sbr.rel (0) target = $region45
    $region44: #{tpu_custom_call.1} parent=1 // pred_region
      %134 = dma.done [#allocation4], 128
    $region45: #{tpu_custom_call.1} parent=1 // pred_fallthru
      _
    // Predicated region
    $region46: #{tpu_custom_call.1} parent=1 // pred_check
      _
    $region47: #{tpu_custom_call.1} parent=1 // pred_check_branch
      %136 = sbr.rel (0) target = $region49
    $region48: #{tpu_custom_call.1} parent=1 // pred_region
      %137 = dma.done [#allocation7], 3072
    $region49: #{tpu_custom_call.1} parent=1 // pred_fallthru
      _
    // Predicated region
    $region50: #{tpu_custom_call.1} parent=1 // pred_check
      _
    $region51: #{tpu_custom_call.1} parent=1 // pred_check_branch
      %139 = sbr.rel (0) target = $region53
    $region52: #{tpu_custom_call.1} parent=1 // pred_region
      %140 = dma.done [#allocation7], 98304
    $region53: #{tpu_custom_call.1} parent=1 // pred_fallthru
      _
    // Predicated region
    $region54: #{tpu_custom_call.1} parent=1 // pred_check
      _
    $region55: #{tpu_custom_call.1} parent=1 // pred_check_branch
      %142 = sbr.rel (0) target = $region57
    $region56: #{tpu_custom_call.1} parent=1 // pred_region
      %143 = dma.done [#allocation10], 256
    $region57: #{tpu_custom_call.1} parent=1 // pred_fallthru
      _
    // Predicated region
    $region58: #{tpu_custom_call.1} parent=1 // pred_check
      _
    $region59: #{tpu_custom_call.1} parent=1 // pred_check_branch
      %145 = sbr.rel (0) target = $region61
    $region60: #{tpu_custom_call.1} parent=1 // pred_region
      %146 = dma.done [#allocation10], 32768
    $region61: #{tpu_custom_call.1} parent=1 // pred_fallthru
      _
    // Predicated region
    $region62: #{tpu_custom_call.1} parent=1 // pred_check
      _
    $region63: #{tpu_custom_call.1} parent=1 // pred_check_branch
      %148 = sbr.rel (0) target = $region65
    $region64: #{tpu_custom_call.1} parent=1 // pred_region
      %149 = dma.done [#allocation13], 128
    $region65: #{tpu_custom_call.1} parent=1 // pred_fallthru
      _
    // Predicated region
    $region66: #{tpu_custom_call.1} parent=1 // pred_check
      _
    $region67: #{tpu_custom_call.1} parent=1 // pred_check_branch
      %151 = sbr.rel (0) target = $region69
    $region68: #{tpu_custom_call.1} parent=1 // pred_region
      %152 = dma.done [#allocation13], 32768
    $region69: #{tpu_custom_call.1} parent=1 // pred_fallthru
      _
    // Predicated region
    $region70: #{tpu_custom_call.1} parent=1 // pred_check
      _
    $region71: #{tpu_custom_call.1} parent=1 // pred_check_branch
      %154 = sbr.rel (0) target = $region73
    $region72: #{tpu_custom_call.1} parent=1 // pred_region
      %155 = dma.done [#allocation16], 128
    $region73: #{tpu_custom_call.1} parent=1 // pred_fallthru
      _
    // Predicated region
    $region74: #{tpu_custom_call.1} parent=1 // pred_check
      _
    $region75: #{tpu_custom_call.1} parent=1 // pred_check_branch
      %157 = sbr.rel (0) target = $region77
    $region76: #{tpu_custom_call.1} parent=1 // pred_region
      %158 = dma.done [#allocation16], 8192
    $region77: #{tpu_custom_call.1} parent=1 // pred_fallthru
      _
    // Predicated region
    $region78: #{tpu_custom_call.1} parent=1 // pred_check
      _
    $region79: #{tpu_custom_call.1} parent=1 // pred_check_branch
      %160 = sbr.rel (0) target = $region81
    $region80: #{tpu_custom_call.1} parent=1 // pred_region
      %161 = dma.done [#allocation19], 16
    $region81: #{tpu_custom_call.1} parent=1 // pred_fallthru
      _
    %p163 = scmp.eq.s32.totalorder 0, 0
    // Predicated region
    $region82: #{tpu_custom_call.1} parent=1 // pred_check
      %p164 = pneg %p163
    $region83: #{tpu_custom_call.1} parent=1 // pred_check_branch
      %166 = sbr.rel (%p164) target = $region85
    $region84: #{tpu_custom_call.1} parent=1 // pred_region
      %167 = vst [vmem:[#allocation2] sm:$0xff] 0.0
      %168 = vst [vmem:[#allocation2 + $0x8] sm:$0xff] 0.0
      %169 = vst [vmem:[#allocation2 + $0x10] sm:$0xff] 0.0
      %170 = vst [vmem:[#allocation2 + $0x18] sm:$0xff] 0.0
      %171 = vst [vmem:[#allocation2 + $0x20] sm:$0xff] 0.0
      %172 = vst [vmem:[#allocation2 + $0x28] sm:$0xff] 0.0
    $region85: #{tpu_custom_call.1} parent=1 // pred_fallthru
      _
    %v173 = vld [vmem:[#allocation6] sm:$0xff]
    %v174 = vld [vmem:[#allocation6 + $0x8] sm:$0xff]
    %v175 = vld [vmem:[#allocation6 + $0x10] sm:$0xff]
    %v176 = vunpack.c.l.bf16 %v173
    %v177 = vunpack.c.h.bf16 %v173
    %v178 = vunpack.c.l.bf16 %v174
    %v179 = vunpack.c.h.bf16 %v174
    %v180 = vunpack.c.l.bf16 %v175
    %v181 = vunpack.c.h.bf16 %v175
    %v182 = vadd.f32 %v176, 0.0
    %v183 = vadd.f32 %v177, 0.0
    %v184 = vadd.f32 %v178, 0.0
    %v185 = vadd.f32 %v179, 0.0
    %v186 = vadd.f32 %v180, 0.0
    %v187 = vadd.f32 %v181, 0.0
    %s188 = scalar_lea.vmem [#allocation6], 24
    %v189 = vld [vmem:[%s188] sm:$0xff]
    %v190 = vld [vmem:[%s188 + $0x8] sm:$0xff]
    %v191 = vld [vmem:[%s188 + $0x10] sm:$0xff]
    %v192 = vunpack.c.l.bf16 %v189
    %v193 = vunpack.c.h.bf16 %v189
    %v194 = vunpack.c.l.bf16 %v190
    %v195 = vunpack.c.h.bf16 %v190
    %v196 = vunpack.c.l.bf16 %v191
    %v197 = vunpack.c.h.bf16 %v191
    %v198 = vadd.f32 %v182, %v192
    %v199 = vadd.f32 %v183, %v193
    %v200 = vadd.f32 %v184, %v194
    %v201 = vadd.f32 %v185, %v195
    %v202 = vadd.f32 %v186, %v196
    %v203 = vadd.f32 %v187, %v197
    %s204 = scalar_lea.vmem [#allocation6], 48
    %v205 = vld [vmem:[%s204] sm:$0xff]
    %v206 = vld [vmem:[%s204 + $0x8] sm:$0xff]
    %v207 = vld [vmem:[%s204 + $0x10] sm:$0xff]
    %v208 = vunpack.c.l.bf16 %v205
    %v209 = vunpack.c.h.bf16 %v205
    %v210 = vunpack.c.l.bf16 %v206
    %v211 = vunpack.c.h.bf16 %v206
    %v212 = vunpack.c.l.bf16 %v207
    %v213 = vunpack.c.h.bf16 %v207
    %v214 = vadd.f32 %v198, %v208
    %v215 = vadd.f32 %v199, %v209
    %v216 = vadd.f32 %v200, %v210
    %v217 = vadd.f32 %v201, %v211
    %v218 = vadd.f32 %v202, %v212
    %v219 = vadd.f32 %v203, %v213
    %s220 = scalar_lea.vmem [#allocation6], 72
    %v221 = vld [vmem:[%s220] sm:$0xff]
    %v222 = vld [vmem:[%s220 + $0x8] sm:$0xff]
    %v223 = vld [vmem:[%s220 + $0x10] sm:$0xff]
    %v224 = vunpack.c.l.bf16 %v221
    %v225 = vunpack.c.h.bf16 %v221
    %v226 = vunpack.c.l.bf16 %v222
    %v227 = vunpack.c.h.bf16 %v222
    %v228 = vunpack.c.l.bf16 %v223
    %v229 = vunpack.c.h.bf16 %v223
    %v230 = vadd.f32 %v214, %v224
    %v231 = vadd.f32 %v215, %v225
    %v232 = vadd.f32 %v216, %v226
    %v233 = vadd.f32 %v217, %v227
    %v234 = vadd.f32 %v218, %v228
    %v235 = vadd.f32 %v219, %v229
    %s236 = scalar_lea.vmem [#allocation6], 96
    %v237 = vld [vmem:[%s236] sm:$0xff]
    %v238 = vld [vmem:[%s236 + $0x8] sm:$0xff]
    %v239 = vld [vmem:[%s236 + $0x10] sm:$0xff]
    %v240 = vunpack.c.l.bf16 %v237
    %v241 = vunpack.c.h.bf16 %v237
    %v242 = vunpack.c.l.bf16 %v238
    %v243 = vunpack.c.h.bf16 %v238
    %v244 = vunpack.c.l.bf16 %v239
    %v245 = vunpack.c.h.bf16 %v239
    %v246 = vadd.f32 %v230, %v240
    %v247 = vadd.f32 %v231, %v241
    %v248 = vadd.f32 %v232, %v242
    %v249 = vadd.f32 %v233, %v243
    %v250 = vadd.f32 %v234, %v244
    %v251 = vadd.f32 %v235, %v245
    %s252 = scalar_lea.vmem [#allocation6], 120
    %v253 = vld [vmem:[%s252] sm:$0xff]
    %v254 = vld [vmem:[%s252 + $0x8] sm:$0xff]
    %v255 = vld [vmem:[%s252 + $0x10] sm:$0xff]
    %v256 = vunpack.c.l.bf16 %v253
    %v257 = vunpack.c.h.bf16 %v253
    %v258 = vunpack.c.l.bf16 %v254
    %v259 = vunpack.c.h.bf16 %v254
    %v260 = vunpack.c.l.bf16 %v255
    %v261 = vunpack.c.h.bf16 %v255
    %v262 = vadd.f32 %v246, %v256
    %v263 = vadd.f32 %v247, %v257
    %v264 = vadd.f32 %v248, %v258
    %v265 = vadd.f32 %v249, %v259
    %v266 = vadd.f32 %v250, %v260
    %v267 = vadd.f32 %v251, %v261
    %s268 = scalar_lea.vmem [#allocation6], 144
    %v269 = vld [vmem:[%s268] sm:$0xff]
    %v270 = vld [vmem:[%s268 + $0x8] sm:$0xff]
    %v271 = vld [vmem:[%s268 + $0x10] sm:$0xff]
    %v272 = vunpack.c.l.bf16 %v269
    %v273 = vunpack.c.h.bf16 %v269
    %v274 = vunpack.c.l.bf16 %v270
    %v275 = vunpack.c.h.bf16 %v270
    %v276 = vunpack.c.l.bf16 %v271
    %v277 = vunpack.c.h.bf16 %v271
    %v278 = vadd.f32 %v262, %v272
    %v279 = vadd.f32 %v263, %v273
    %v280 = vadd.f32 %v264, %v274
    %v281 = vadd.f32 %v265, %v275
    %v282 = vadd.f32 %v266, %v276
    %v283 = vadd.f32 %v267, %v277
    %s284 = scalar_lea.vmem [#allocation6], 168
    %v285 = vld [vmem:[%s284] sm:$0xff]
    %v286 = vld [vmem:[%s284 + $0x8] sm:$0xff]
    %v287 = vld [vmem:[%s284 + $0x10] sm:$0xff]
    %v288 = vunpack.c.l.bf16 %v285
    %v289 = vunpack.c.h.bf16 %v285
    %v290 = vunpack.c.l.bf16 %v286
    %v291 = vunpack.c.h.bf16 %v286
    %v292 = vunpack.c.l.bf16 %v287
    %v293 = vunpack.c.h.bf16 %v287
    %v294 = vadd.f32 %v278, %v288
    %v295 = vadd.f32 %v279, %v289
    %v296 = vadd.f32 %v280, %v290
    %v297 = vadd.f32 %v281, %v291
    %v298 = vadd.f32 %v282, %v292
    %v299 = vadd.f32 %v283, %v293
    %v300 = vld [vmem:[#allocation2] sm:$0xff]
    %v301 = vld [vmem:[#allocation2 + $0x8] sm:$0xff]
    %v302 = vld [vmem:[#allocation2 + $0x10] sm:$0xff]
    %v303 = vld [vmem:[#allocation2 + $0x18] sm:$0xff]
    %v304 = vld [vmem:[#allocation2 + $0x20] sm:$0xff]
    %v305 = vld [vmem:[#allocation2 + $0x28] sm:$0xff]
    %v306 = vadd.f32 %v300, %v294
    %v307 = vadd.f32 %v301, %v295
    %v308 = vadd.f32 %v302, %v296
    %v309 = vadd.f32 %v303, %v297
    %v310 = vadd.f32 %v304, %v298
    %v311 = vadd.f32 %v305, %v299
    %312 = vst [vmem:[#allocation2] sm:$0xff] %v306
    %313 = vst [vmem:[#allocation2 + $0x8] sm:$0xff] %v307
    %314 = vst [vmem:[#allocation2 + $0x10] sm:$0xff] %v308
    %315 = vst [vmem:[#allocation2 + $0x18] sm:$0xff] %v309
    %316 = vst [vmem:[#allocation2 + $0x20] sm:$0xff] %v310
    %317 = vst [vmem:[#allocation2 + $0x28] sm:$0xff] %v311
    // Predicated region
    $region86: #{tpu_custom_call.1} parent=1 // pred_check
      %p318 = pneg %p163
    $region87: #{tpu_custom_call.1} parent=1 // pred_check_branch
      %320 = sbr.rel (%p318) target = $region89
    $region88: #{tpu_custom_call.1} parent=1 // pred_region
      %v321 = vld [vmem:[#allocation3] sm:$0xff]
      %vm322 = vcmask 64512
      %v323 = vsel %vm322, %v321, 0.0
      %324 = vadd.xlane.f32.xlu0 %v323
      %v325 = vpop.xlane.xlu0 %324
      %v326 = vmax.f32 %v325, 1.0
      %v327 = vld [vmem:[#allocation2] sm:$0xff]
      %v328 = vld [vmem:[#allocation2 + $0x8] sm:$0xff]
      %v329 = vld [vmem:[#allocation2 + $0x10] sm:$0xff]
      %v330 = vld [vmem:[#allocation2 + $0x18] sm:$0xff]
      %v331 = vld [vmem:[#allocation2 + $0x20] sm:$0xff]
      %v332 = vld [vmem:[#allocation2 + $0x28] sm:$0xff]
      %v333 = vrcp.pop %v326
      %v334 = vmul.f32 %v327, %v333
      %v335 = vmul.f32 %v328, %v333
      %v336 = vmul.f32 %v329, %v333
      %v337 = vmul.f32 %v330, %v333
      %v338 = vmul.f32 %v331, %v333
      %v339 = vmul.f32 %v332, %v333
      %v340 = vpack.c.bf16 %v334, %v334
      %v341 = vpack.c.bf16 %v335, %v335
      %v342 = vpack.c.bf16 %v336, %v336
      %v343 = vpack.c.bf16 %v337, %v337
      %v344 = vpack.c.bf16 %v338, %v338
      %v345 = vpack.c.bf16 %v339, %v339
      %v346 = vld [vmem:[#allocation8] sm:$0xff]
      %v347 = vld [vmem:[#allocation8 + $0x10] sm:$0xff]
      %v348 = vld [vmem:[#allocation8 + $0x18] sm:$0xff]
      %v349 = vld [vmem:[#allocation8 + $0x20] sm:$0xff]
      %v350 = vld [vmem:[#allocation8 + $0x30] sm:$0xff]
      %v351 = vld [vmem:[#allocation8 + $0x38] sm:$0xff]
      %v352 = vld [vmem:[#allocation8 + $0x40] sm:$0xff]
      %v353 = vld [vmem:[#allocation8 + $0x50] sm:$0xff]
      %v354 = vld [vmem:[#allocation8 + $0x58] sm:$0xff]
      %v355 = vld [vmem:[#allocation8 + $0x60] sm:$0xff]
      %v356 = vld [vmem:[#allocation8 + $0x70] sm:$0xff]
      %v357 = vld [vmem:[#allocation8 + $0x78] sm:$0xff]
      %v358 = vld [vmem:[#allocation8 + $0x80] sm:$0xff]
      %v359 = vld [vmem:[#allocation8 + $0x90] sm:$0xff]
      %v360 = vld [vmem:[#allocation8 + $0x98] sm:$0xff]
      %v361 = vld [vmem:[#allocation8 + $0xa0] sm:$0xff]
      %v362 = vld [vmem:[#allocation8 + $0xb0] sm:$0xff]
      %v363 = vld [vmem:[#allocation8 + $0xb8] sm:$0xff]
      %v364 = vld [vmem:[#allocation8 + $0xc0] sm:$0xff]
      %v365 = vld [vmem:[#allocation8 + $0xd0] sm:$0xff]
      %v366 = vld [vmem:[#allocation8 + $0xd8] sm:$0xff]
      %v367 = vld [vmem:[#allocation8 + $0xe0] sm:$0xff]
      %v368 = vld [vmem:[#allocation8 + $0xf0] sm:$0xff]
      %v369 = vld [vmem:[#allocation8 + $0xf8] sm:$0xff]
      %v370 = vld [vmem:[#allocation8 + $0x100] sm:$0xff]
      %v371 = vld [vmem:[#allocation8 + $0x110] sm:$0xff]
      %v372 = vld [vmem:[#allocation8 + $0x118] sm:$0xff]
      %v373 = vld [vmem:[#allocation8 + $0x120] sm:$0xff]
      %v374 = vld [vmem:[#allocation8 + $0x130] sm:$0xff]
      %v375 = vld [vmem:[#allocation8 + $0x138] sm:$0xff]
      %v376 = vld [vmem:[#allocation8 + $0x140] sm:$0xff]
      %v377 = vld [vmem:[#allocation8 + $0x150] sm:$0xff]
      %v378 = vld [vmem:[#allocation8 + $0x158] sm:$0xff]
      %v379 = vld [vmem:[#allocation8 + $0x160] sm:$0xff]
      %v380 = vld [vmem:[#allocation8 + $0x170] sm:$0xff]
      %v381 = vld [vmem:[#allocation8 + $0x178] sm:$0xff]
      %v382 = vld [vmem:[#allocation8 + $0x180] sm:$0xff]
      %v383 = vld [vmem:[#allocation8 + $0x190] sm:$0xff]
      %v384 = vld [vmem:[#allocation8 + $0x198] sm:$0xff]
      %v385 = vld [vmem:[#allocation8 + $0x1a0] sm:$0xff]
      %v386 = vld [vmem:[#allocation8 + $0x1b0] sm:$0xff]
      %v387 = vld [vmem:[#allocation8 + $0x1b8] sm:$0xff]
      %v388 = vld [vmem:[#allocation8 + $0x1c0] sm:$0xff]
      %v389 = vld [vmem:[#allocation8 + $0x1d0] sm:$0xff]
      %v390 = vld [vmem:[#allocation8 + $0x1d8] sm:$0xff]
      %v391 = vld [vmem:[#allocation8 + $0x1e0] sm:$0xff]
      %v392 = vld [vmem:[#allocation8 + $0x1f0] sm:$0xff]
      %v393 = vld [vmem:[#allocation8 + $0x1f8] sm:$0xff]
      %v394 = vld [vmem:[#allocation8 + $0x200] sm:$0xff]
      %v395 = vld [vmem:[#allocation8 + $0x210] sm:$0xff]
      %v396 = vld [vmem:[#allocation8 + $0x218] sm:$0xff]
      %v397 = vld [vmem:[#allocation8 + $0x220] sm:$0xff]
      %v398 = vld [vmem:[#allocation8 + $0x230] sm:$0xff]
      %v399 = vld [vmem:[#allocation8 + $0x238] sm:$0xff]
      %v400 = vld [vmem:[#allocation8 + $0x240] sm:$0xff]
      %v401 = vld [vmem:[#allocation8 + $0x250] sm:$0xff]
      %v402 = vld [vmem:[#allocation8 + $0x258] sm:$0xff]
      %v403 = vld [vmem:[#allocation8 + $0x260] sm:$0xff]
      %v404 = vld [vmem:[#allocation8 + $0x270] sm:$0xff]
      %v405 = vld [vmem:[#allocation8 + $0x278] sm:$0xff]
      %v406 = vld [vmem:[#allocation8 + $0x280] sm:$0xff]
      %v407 = vld [vmem:[#allocation8 + $0x290] sm:$0xff]
      %v408 = vld [vmem:[#allocation8 + $0x298] sm:$0xff]
      %v409 = vld [vmem:[#allocation8 + $0x2a0] sm:$0xff]
      %v410 = vld [vmem:[#allocation8 + $0x2b0] sm:$0xff]
      %v411 = vld [vmem:[#allocation8 + $0x2b8] sm:$0xff]
      %v412 = vld [vmem:[#allocation8 + $0x2c0] sm:$0xff]
      %v413 = vld [vmem:[#allocation8 + $0x2d0] sm:$0xff]
      %v414 = vld [vmem:[#allocation8 + $0x2d8] sm:$0xff]
      %v415 = vld [vmem:[#allocation8 + $0x2e0] sm:$0xff]
      %v416 = vld [vmem:[#allocation8 + $0x2f0] sm:$0xff]
      %v417 = vld [vmem:[#allocation8 + $0x2f8] sm:$0xff]
      %v418 = vld [vmem:[#allocation8 + $0x300] sm:$0xff]
      %v419 = vld [vmem:[#allocation8 + $0x310] sm:$0xff]
      %v420 = vld [vmem:[#allocation8 + $0x318] sm:$0xff]
      %v421 = vld [vmem:[#allocation8 + $0x320] sm:$0xff]
      %v422 = vld [vmem:[#allocation8 + $0x330] sm:$0xff]
      %v423 = vld [vmem:[#allocation8 + $0x338] sm:$0xff]
      %v424 = vld [vmem:[#allocation8 + $0x340] sm:$0xff]
      %v425 = vld [vmem:[#allocation8 + $0x350] sm:$0xff]
      %v426 = vld [vmem:[#allocation8 + $0x358] sm:$0xff]
      %v427 = vld [vmem:[#allocation8 + $0x360] sm:$0xff]
      %v428 = vld [vmem:[#allocation8 + $0x370] sm:$0xff]
      %v429 = vld [vmem:[#allocation8 + $0x378] sm:$0xff]
      %v430 = vld [vmem:[#allocation8 + $0x380] sm:$0xff]
      %v431 = vld [vmem:[#allocation8 + $0x390] sm:$0xff]
      %v432 = vld [vmem:[#allocation8 + $0x398] sm:$0xff]
      %v433 = vld [vmem:[#allocation8 + $0x3a0] sm:$0xff]
      %v434 = vld [vmem:[#allocation8 + $0x3b0] sm:$0xff]
      %v435 = vld [vmem:[#allocation8 + $0x3b8] sm:$0xff]
      %v436 = vld [vmem:[#allocation8 + $0x3c0] sm:$0xff]
      %v437 = vld [vmem:[#allocation8 + $0x3d0] sm:$0xff]
      %v438 = vld [vmem:[#allocation8 + $0x3d8] sm:$0xff]
      %v439 = vld [vmem:[#allocation8 + $0x3e0] sm:$0xff]
      %v440 = vld [vmem:[#allocation8 + $0x3f0] sm:$0xff]
      %v441 = vld [vmem:[#allocation8 + $0x3f8] sm:$0xff]
      %v442 = vld [vmem:[#allocation8 + $0x400] sm:$0xff]
      %v443 = vld [vmem:[#allocation8 + $0x410] sm:$0xff]
      %v444 = vld [vmem:[#allocation8 + $0x418] sm:$0xff]
      %v445 = vld [vmem:[#allocation8 + $0x420] sm:$0xff]
      %v446 = vld [vmem:[#allocation8 + $0x430] sm:$0xff]
      %v447 = vld [vmem:[#allocation8 + $0x438] sm:$0xff]
      %v448 = vld [vmem:[#allocation8 + $0x440] sm:$0xff]
      %v449 = vld [vmem:[#allocation8 + $0x450] sm:$0xff]
      %v450 = vld [vmem:[#allocation8 + $0x458] sm:$0xff]
      %v451 = vld [vmem:[#allocation8 + $0x460] sm:$0xff]
      %v452 = vld [vmem:[#allocation8 + $0x470] sm:$0xff]
      %v453 = vld [vmem:[#allocation8 + $0x478] sm:$0xff]
      %v454 = vld [vmem:[#allocation8 + $0x480] sm:$0xff]
      %v455 = vld [vmem:[#allocation8 + $0x490] sm:$0xff]
      %v456 = vld [vmem:[#allocation8 + $0x498] sm:$0xff]
      %v457 = vld [vmem:[#allocation8 + $0x4a0] sm:$0xff]
      %v458 = vld [vmem:[#allocation8 + $0x4b0] sm:$0xff]
      %v459 = vld [vmem:[#allocation8 + $0x4b8] sm:$0xff]
      %v460 = vld [vmem:[#allocation8 + $0x4c0] sm:$0xff]
      %v461 = vld [vmem:[#allocation8 + $0x4d0] sm:$0xff]
      %v462 = vld [vmem:[#allocation8 + $0x4d8] sm:$0xff]
      %v463 = vld [vmem:[#allocation8 + $0x4e0] sm:$0xff]
      %v464 = vld [vmem:[#allocation8 + $0x4f0] sm:$0xff]
      %v465 = vld [vmem:[#allocation8 + $0x4f8] sm:$0xff]
      %v466 = vld [vmem:[#allocation8 + $0x500] sm:$0xff]
      %v467 = vld [vmem:[#allocation8 + $0x510] sm:$0xff]
      %v468 = vld [vmem:[#allocation8 + $0x518] sm:$0xff]
      %v469 = vld [vmem:[#allocation8 + $0x520] sm:$0xff]
      %v470 = vld [vmem:[#allocation8 + $0x530] sm:$0xff]
      %v471 = vld [vmem:[#allocation8 + $0x538] sm:$0xff]
      %v472 = vld [vmem:[#allocation8 + $0x540] sm:$0xff]
      %v473 = vld [vmem:[#allocation8 + $0x550] sm:$0xff]
      %v474 = vld [vmem:[#allocation8 + $0x558] sm:$0xff]
      %v475 = vld [vmem:[#allocation8 + $0x560] sm:$0xff]
      %v476 = vld [vmem:[#allocation8 + $0x570] sm:$0xff]
      %v477 = vld [vmem:[#allocation8 + $0x578] sm:$0xff]
      %v478 = vld [vmem:[#allocation8 + $0x580] sm:$0xff]
      %v479 = vld [vmem:[#allocation8 + $0x590] sm:$0xff]
      %v480 = vld [vmem:[#allocation8 + $0x598] sm:$0xff]
      %v481 = vld [vmem:[#allocation8 + $0x5a0] sm:$0xff]
      %v482 = vld [vmem:[#allocation8 + $0x5b0] sm:$0xff]
      %v483 = vld [vmem:[#allocation8 + $0x5b8] sm:$0xff]
      %v484 = vld [vmem:[#allocation8 + $0x5c0] sm:$0xff]
      %v485 = vld [vmem:[#allocation8 + $0x5d0] sm:$0xff]
      %v486 = vld [vmem:[#allocation8 + $0x5d8] sm:$0xff]
      %v487 = vld [vmem:[#allocation8 + $0x5e0] sm:$0xff]
      %v488 = vld [vmem:[#allocation8 + $0x5f0] sm:$0xff]
      %v489 = vld [vmem:[#allocation8 + $0x5f8] sm:$0xff]
      %v490 = vld [vmem:[#allocation8 + $0x600] sm:$0xff]
      %v491 = vld [vmem:[#allocation8 + $0x610] sm:$0xff]
      %v492 = vld [vmem:[#allocation8 + $0x618] sm:$0xff]
      %v493 = vld [vmem:[#allocation8 + $0x620] sm:$0xff]
      %v494 = vld [vmem:[#allocation8 + $0x630] sm:$0xff]
      %v495 = vld [vmem:[#allocation8 + $0x638] sm:$0xff]
      %v496 = vld [vmem:[#allocation8 + $0x640] sm:$0xff]
      %v497 = vld [vmem:[#allocation8 + $0x650] sm:$0xff]
      %v498 = vld [vmem:[#allocation8 + $0x658] sm:$0xff]
      %v499 = vld [vmem:[#allocation8 + $0x660] sm:$0xff]
      %v500 = vld [vmem:[#allocation8 + $0x670] sm:$0xff]
      %v501 = vld [vmem:[#allocation8 + $0x678] sm:$0xff]
      %v502 = vld [vmem:[#allocation8 + $0x680] sm:$0xff]
      %v503 = vld [vmem:[#allocation8 + $0x690] sm:$0xff]
      %v504 = vld [vmem:[#allocation8 + $0x698] sm:$0xff]
      %v505 = vld [vmem:[#allocation8 + $0x6a0] sm:$0xff]
      %v506 = vld [vmem:[#allocation8 + $0x6b0] sm:$0xff]
      %v507 = vld [vmem:[#allocation8 + $0x6b8] sm:$0xff]
      %v508 = vld [vmem:[#allocation8 + $0x6c0] sm:$0xff]
      %v509 = vld [vmem:[#allocation8 + $0x6d0] sm:$0xff]
      %v510 = vld [vmem:[#allocation8 + $0x6d8] sm:$0xff]
      %v511 = vld [vmem:[#allocation8 + $0x6e0] sm:$0xff]
      %v512 = vld [vmem:[#allocation8 + $0x6f0] sm:$0xff]
      %v513 = vld [vmem:[#allocation8 + $0x6f8] sm:$0xff]
      %v514 = vld [vmem:[#allocation8 + $0x700] sm:$0xff]
      %v515 = vld [vmem:[#allocation8 + $0x710] sm:$0xff]
      %v516 = vld [vmem:[#allocation8 + $0x718] sm:$0xff]
      %v517 = vld [vmem:[#allocation8 + $0x720] sm:$0xff]
      %v518 = vld [vmem:[#allocation8 + $0x730] sm:$0xff]
      %v519 = vld [vmem:[#allocation8 + $0x738] sm:$0xff]
      %v520 = vld [vmem:[#allocation8 + $0x740] sm:$0xff]
      %v521 = vld [vmem:[#allocation8 + $0x750] sm:$0xff]
      %v522 = vld [vmem:[#allocation8 + $0x758] sm:$0xff]
      %v523 = vld [vmem:[#allocation8 + $0x760] sm:$0xff]
      %v524 = vld [vmem:[#allocation8 + $0x770] sm:$0xff]
      %v525 = vld [vmem:[#allocation8 + $0x778] sm:$0xff]
      %v526 = vld [vmem:[#allocation8 + $0x780] sm:$0xff]
      %v527 = vld [vmem:[#allocation8 + $0x790] sm:$0xff]
      %v528 = vld [vmem:[#allocation8 + $0x798] sm:$0xff]
      %v529 = vld [vmem:[#allocation8 + $0x7a0] sm:$0xff]
      %v530 = vld [vmem:[#allocation8 + $0x7b0] sm:$0xff]
      %v531 = vld [vmem:[#allocation8 + $0x7b8] sm:$0xff]
      %v532 = vld [vmem:[#allocation8 + $0x7c0] sm:$0xff]
      %v533 = vld [vmem:[#allocation8 + $0x7d0] sm:$0xff]
      %v534 = vld [vmem:[#allocation8 + $0x7d8] sm:$0xff]
      %v535 = vld [vmem:[#allocation8 + $0x7e0] sm:$0xff]
      %v536 = vld [vmem:[#allocation8 + $0x7f0] sm:$0xff]
      %v537 = vld [vmem:[#allocation8 + $0x7f8] sm:$0xff]
      %v538 = vld [vmem:[#allocation8 + $0x800] sm:$0xff]
      %v539 = vld [vmem:[#allocation8 + $0x810] sm:$0xff]
      %v540 = vld [vmem:[#allocation8 + $0x818] sm:$0xff]
      %v541 = vld [vmem:[#allocation8 + $0x820] sm:$0xff]
      %v542 = vld [vmem:[#allocation8 + $0x830] sm:$0xff]
      %v543 = vld [vmem:[#allocation8 + $0x838] sm:$0xff]
      %v544 = vld [vmem:[#allocation8 + $0x840] sm:$0xff]
      %v545 = vld [vmem:[#allocation8 + $0x850] sm:$0xff]
      %v546 = vld [vmem:[#allocation8 + $0x858] sm:$0xff]
      %v547 = vld [vmem:[#allocation8 + $0x860] sm:$0xff]
      %v548 = vld [vmem:[#allocation8 + $0x870] sm:$0xff]
      %v549 = vld [vmem:[#allocation8 + $0x878] sm:$0xff]
      %v550 = vld [vmem:[#allocation8 + $0x880] sm:$0xff]
      %v551 = vld [vmem:[#allocation8 + $0x890] sm:$0xff]
      %v552 = vld [vmem:[#allocation8 + $0x898] sm:$0xff]
      %v553 = vld [vmem:[#allocation8 + $0x8a0] sm:$0xff]
      %v554 = vld [vmem:[#allocation8 + $0x8b0] sm:$0xff]
      %v555 = vld [vmem:[#allocation8 + $0x8b8] sm:$0xff]
      %v556 = vld [vmem:[#allocation8 + $0x8c0] sm:$0xff]
      %v557 = vld [vmem:[#allocation8 + $0x8d0] sm:$0xff]
      %v558 = vld [vmem:[#allocation8 + $0x8d8] sm:$0xff]
      %v559 = vld [vmem:[#allocation8 + $0x8e0] sm:$0xff]
      %v560 = vld [vmem:[#allocation8 + $0x8f0] sm:$0xff]
      %v561 = vld [vmem:[#allocation8 + $0x8f8] sm:$0xff]
      %v562 = vld [vmem:[#allocation8 + $0x900] sm:$0xff]
      %v563 = vld [vmem:[#allocation8 + $0x910] sm:$0xff]
      %v564 = vld [vmem:[#allocation8 + $0x918] sm:$0xff]
      %v565 = vld [vmem:[#allocation8 + $0x920] sm:$0xff]
      %v566 = vld [vmem:[#allocation8 + $0x930] sm:$0xff]
      %v567 = vld [vmem:[#allocation8 + $0x938] sm:$0xff]
      %v568 = vld [vmem:[#allocation8 + $0x940] sm:$0xff]
      %v569 = vld [vmem:[#allocation8 + $0x950] sm:$0xff]
      %v570 = vld [vmem:[#allocation8 + $0x958] sm:$0xff]
      %v571 = vld [vmem:[#allocation8 + $0x960] sm:$0xff]
      %v572 = vld [vmem:[#allocation8 + $0x970] sm:$0xff]
      %v573 = vld [vmem:[#allocation8 + $0x978] sm:$0xff]
      %v574 = vld [vmem:[#allocation8 + $0x980] sm:$0xff]
      %v575 = vld [vmem:[#allocation8 + $0x990] sm:$0xff]
      %v576 = vld [vmem:[#allocation8 + $0x998] sm:$0xff]
      %v577 = vld [vmem:[#allocation8 + $0x9a0] sm:$0xff]
      %v578 = vld [vmem:[#allocation8 + $0x9b0] sm:$0xff]
      %v579 = vld [vmem:[#allocation8 + $0x9b8] sm:$0xff]
      %v580 = vld [vmem:[#allocation8 + $0x9c0] sm:$0xff]
      %v581 = vld [vmem:[#allocation8 + $0x9d0] sm:$0xff]
      %v582 = vld [vmem:[#allocation8 + $0x9d8] sm:$0xff]
      %v583 = vld [vmem:[#allocation8 + $0x9e0] sm:$0xff]
      %v584 = vld [vmem:[#allocation8 + $0x9f0] sm:$0xff]
      %v585 = vld [vmem:[#allocation8 + $0x9f8] sm:$0xff]
      %v586 = vld [vmem:[#allocation8 + $0xa00] sm:$0xff]
      %v587 = vld [vmem:[#allocation8 + $0xa10] sm:$0xff]
      %v588 = vld [vmem:[#allocation8 + $0xa18] sm:$0xff]
      %v589 = vld [vmem:[#allocation8 + $0xa20] sm:$0xff]
      %v590 = vld [vmem:[#allocation8 + $0xa30] sm:$0xff]
      %v591 = vld [vmem:[#allocation8 + $0xa38] sm:$0xff]
      %v592 = vld [vmem:[#allocation8 + $0xa40] sm:$0xff]
      %v593 = vld [vmem:[#allocation8 + $0xa50] sm:$0xff]
      %v594 = vld [vmem:[#allocation8 + $0xa58] sm:$0xff]
      %v595 = vld [vmem:[#allocation8 + $0xa60] sm:$0xff]
      %v596 = vld [vmem:[#allocation8 + $0xa70] sm:$0xff]
      %v597 = vld [vmem:[#allocation8 + $0xa78] sm:$0xff]
      %v598 = vld [vmem:[#allocation8 + $0xa80] sm:$0xff]
      %v599 = vld [vmem:[#allocation8 + $0xa90] sm:$0xff]
      %v600 = vld [vmem:[#allocation8 + $0xa98] sm:$0xff]
      %v601 = vld [vmem:[#allocation8 + $0xaa0] sm:$0xff]
      %v602 = vld [vmem:[#allocation8 + $0xab0] sm:$0xff]
      %v603 = vld [vmem:[#allocation8 + $0xab8] sm:$0xff]
      %v604 = vld [vmem:[#allocation8 + $0xac0] sm:$0xff]
      %v605 = vld [vmem:[#allocation8 + $0xad0] sm:$0xff]
      %v606 = vld [vmem:[#allocation8 + $0xad8] sm:$0xff]
      %v607 = vld [vmem:[#allocation8 + $0xae0] sm:$0xff]
      %v608 = vld [vmem:[#allocation8 + $0xaf0] sm:$0xff]
      %v609 = vld [vmem:[#allocation8 + $0xaf8] sm:$0xff]
      %v610 = vld [vmem:[#allocation8 + $0xb00] sm:$0xff]
      %v611 = vld [vmem:[#allocation8 + $0xb10] sm:$0xff]
      %v612 = vld [vmem:[#allocation8 + $0xb18] sm:$0xff]
      %v613 = vld [vmem:[#allocation8 + $0xb20] sm:$0xff]
      %v614 = vld [vmem:[#allocation8 + $0xb30] sm:$0xff]
      %v615 = vld [vmem:[#allocation8 + $0xb38] sm:$0xff]
      %v616 = vld [vmem:[#allocation8 + $0xb40] sm:$0xff]
      %v617 = vld [vmem:[#allocation8 + $0xb50] sm:$0xff]
      %v618 = vld [vmem:[#allocation8 + $0xb58] sm:$0xff]
      %v619 = vld [vmem:[#allocation8 + $0xb60] sm:$0xff]
      %v620 = vld [vmem:[#allocation8 + $0xb70] sm:$0xff]
      %v621 = vld [vmem:[#allocation8 + $0xb78] sm:$0xff]
      %v622 = vld [vmem:[#allocation8 + $0xb80] sm:$0xff]
      %v623 = vld [vmem:[#allocation8 + $0xb90] sm:$0xff]
      %v624 = vld [vmem:[#allocation8 + $0xb98] sm:$0xff]
      %v625 = vld [vmem:[#allocation8 + $0xba0] sm:$0xff]
      %v626 = vld [vmem:[#allocation8 + $0xbb0] sm:$0xff]
      %v627 = vld [vmem:[#allocation8 + $0xbb8] sm:$0xff]
      %v628 = vld [vmem:[#allocation8 + $0xbc0] sm:$0xff]
      %v629 = vld [vmem:[#allocation8 + $0xbd0] sm:$0xff]
      %v630 = vld [vmem:[#allocation8 + $0xbd8] sm:$0xff]
      %v631 = vld [vmem:[#allocation8 + $0xbe0] sm:$0xff]
      %v632 = vld [vmem:[#allocation8 + $0xbf0] sm:$0xff]
      %v633 = vld [vmem:[#allocation8 + $0xbf8] sm:$0xff]
      %v634 = vld [vmem:[#allocation8 + $0xc00] sm:$0xff]
      %v635 = vld [vmem:[#allocation8 + $0xc10] sm:$0xff]
      %v636 = vld [vmem:[#allocation8 + $0xc18] sm:$0xff]
      %v637 = vld [vmem:[#allocation8 + $0xc20] sm:$0xff]
      %v638 = vld [vmem:[#allocation8 + $0xc30] sm:$0xff]
      %v639 = vld [vmem:[#allocation8 + $0xc38] sm:$0xff]
      %v640 = vld [vmem:[#allocation8 + $0xc40] sm:$0xff]
      %v641 = vld [vmem:[#allocation8 + $0xc50] sm:$0xff]
      %v642 = vld [vmem:[#allocation8 + $0xc58] sm:$0xff]
      %v643 = vld [vmem:[#allocation8 + $0xc60] sm:$0xff]
      %v644 = vld [vmem:[#allocation8 + $0xc70] sm:$0xff]
      %v645 = vld [vmem:[#allocation8 + $0xc78] sm:$0xff]
      %v646 = vld [vmem:[#allocation8 + $0xc80] sm:$0xff]
      %v647 = vld [vmem:[#allocation8 + $0xc90] sm:$0xff]
      %v648 = vld [vmem:[#allocation8 + $0xc98] sm:$0xff]
      %v649 = vld [vmem:[#allocation8 + $0xca0] sm:$0xff]
      %v650 = vld [vmem:[#allocation8 + $0xcb0] sm:$0xff]
      %v651 = vld [vmem:[#allocation8 + $0xcb8] sm:$0xff]
      %v652 = vld [vmem:[#allocation8 + $0xcc0] sm:$0xff]
      %v653 = vld [vmem:[#allocation8 + $0xcd0] sm:$0xff]
      %v654 = vld [vmem:[#allocation8 + $0xcd8] sm:$0xff]
      %v655 = vld [vmem:[#allocation8 + $0xce0] sm:$0xff]
      %v656 = vld [vmem:[#allocation8 + $0xcf0] sm:$0xff]
      %v657 = vld [vmem:[#allocation8 + $0xcf8] sm:$0xff]
      %v658 = vld [vmem:[#allocation8 + $0xd00] sm:$0xff]
      %v659 = vld [vmem:[#allocation8 + $0xd10] sm:$0xff]
      %v660 = vld [vmem:[#allocation8 + $0xd18] sm:$0xff]
      %v661 = vld [vmem:[#allocation8 + $0xd20] sm:$0xff]
      %v662 = vld [vmem:[#allocation8 + $0xd30] sm:$0xff]
      %v663 = vld [vmem:[#allocation8 + $0xd38] sm:$0xff]
      %v664 = vld [vmem:[#allocation8 + $0xd40] sm:$0xff]
      %v665 = vld [vmem:[#allocation8 + $0xd50] sm:$0xff]
      %v666 = vld [vmem:[#allocation8 + $0xd58] sm:$0xff]
      %v667 = vld [vmem:[#allocation8 + $0xd60] sm:$0xff]
      %v668 = vld [vmem:[#allocation8 + $0xd70] sm:$0xff]
      %v669 = vld [vmem:[#allocation8 + $0xd78] sm:$0xff]
      %v670 = vld [vmem:[#allocation8 + $0xd80] sm:$0xff]
      %v671 = vld [vmem:[#allocation8 + $0xd90] sm:$0xff]
      %v672 = vld [vmem:[#allocation8 + $0xd98] sm:$0xff]
      %v673 = vld [vmem:[#allocation8 + $0xda0] sm:$0xff]
      %v674 = vld [vmem:[#allocation8 + $0xdb0] sm:$0xff]
      %v675 = vld [vmem:[#allocation8 + $0xdb8] sm:$0xff]
      %v676 = vld [vmem:[#allocation8 + $0xdc0] sm:$0xff]
      %v677 = vld [vmem:[#allocation8 + $0xdd0] sm:$0xff]
      %v678 = vld [vmem:[#allocation8 + $0xdd8] sm:$0xff]
      %v679 = vld [vmem:[#allocation8 + $0xde0] sm:$0xff]
      %v680 = vld [vmem:[#allocation8 + $0xdf0] sm:$0xff]
      %v681 = vld [vmem:[#allocation8 + $0xdf8] sm:$0xff]
      %v682 = vld [vmem:[#allocation8 + $0xe00] sm:$0xff]
      %v683 = vld [vmem:[#allocation8 + $0xe10] sm:$0xff]
      %v684 = vld [vmem:[#allocation8 + $0xe18] sm:$0xff]
      %v685 = vld [vmem:[#allocation8 + $0xe20] sm:$0xff]
      %v686 = vld [vmem:[#allocation8 + $0xe30] sm:$0xff]
      %v687 = vld [vmem:[#allocation8 + $0xe38] sm:$0xff]
      %v688 = vld [vmem:[#allocation8 + $0xe40] sm:$0xff]
      %v689 = vld [vmem:[#allocation8 + $0xe50] sm:$0xff]
      %v690 = vld [vmem:[#allocation8 + $0xe58] sm:$0xff]
      %v691 = vld [vmem:[#allocation8 + $0xe60] sm:$0xff]
      %v692 = vld [vmem:[#allocation8 + $0xe70] sm:$0xff]
      %v693 = vld [vmem:[#allocation8 + $0xe78] sm:$0xff]
      %v694 = vld [vmem:[#allocation8 + $0xe80] sm:$0xff]
      %v695 = vld [vmem:[#allocation8 + $0xe90] sm:$0xff]
      %v696 = vld [vmem:[#allocation8 + $0xe98] sm:$0xff]
      %v697 = vld [vmem:[#allocation8 + $0xea0] sm:$0xff]
      %v698 = vld [vmem:[#allocation8 + $0xeb0] sm:$0xff]
      %v699 = vld [vmem:[#allocation8 + $0xeb8] sm:$0xff]
      %v700 = vld [vmem:[#allocation8 + $0xec0] sm:$0xff]
      %v701 = vld [vmem:[#allocation8 + $0xed0] sm:$0xff]
      %v702 = vld [vmem:[#allocation8 + $0xed8] sm:$0xff]
      %v703 = vld [vmem:[#allocation8 + $0xee0] sm:$0xff]
      %v704 = vld [vmem:[#allocation8 + $0xef0] sm:$0xff]
      %v705 = vld [vmem:[#allocation8 + $0xef8] sm:$0xff]
      %v706 = vld [vmem:[#allocation8 + $0xf00] sm:$0xff]
      %v707 = vld [vmem:[#allocation8 + $0xf10] sm:$0xff]
      %v708 = vld [vmem:[#allocation8 + $0xf18] sm:$0xff]
      %v709 = vld [vmem:[#allocation8 + $0xf20] sm:$0xff]
      %v710 = vld [vmem:[#allocation8 + $0xf30] sm:$0xff]
      %v711 = vld [vmem:[#allocation8 + $0xf38] sm:$0xff]
      %v712 = vld [vmem:[#allocation8 + $0xf40] sm:$0xff]
      %v713 = vld [vmem:[#allocation8 + $0xf50] sm:$0xff]
      %v714 = vld [vmem:[#allocation8 + $0xf58] sm:$0xff]
      %v715 = vld [vmem:[#allocation8 + $0xf60] sm:$0xff]
      %v716 = vld [vmem:[#allocation8 + $0xf70] sm:$0xff]
      %v717 = vld [vmem:[#allocation8 + $0xf78] sm:$0xff]
      %v718 = vld [vmem:[#allocation8 + $0xf80] sm:$0xff]
      %v719 = vld [vmem:[#allocation8 + $0xf90] sm:$0xff]
      %v720 = vld [vmem:[#allocation8 + $0xf98] sm:$0xff]
      %v721 = vld [vmem:[#allocation8 + $0xfa0] sm:$0xff]
      %v722 = vld [vmem:[#allocation8 + $0xfb0] sm:$0xff]
      %v723 = vld [vmem:[#allocation8 + $0xfb8] sm:$0xff]
      %v724 = vld [vmem:[#allocation8 + $0xfc0] sm:$0xff]
      %v725 = vld [vmem:[#allocation8 + $0xfd0] sm:$0xff]
      %v726 = vld [vmem:[#allocation8 + $0xfd8] sm:$0xff]
      %v727 = vld [vmem:[#allocation8 + $0xfe0] sm:$0xff]
      %v728 = vld [vmem:[#allocation8 + $0xff0] sm:$0xff]
      %v729 = vld [vmem:[#allocation8 + $0xff8] sm:$0xff]
      %v730 = vld [vmem:[#allocation8 + $0x1000] sm:$0xff]
      %v731 = vld [vmem:[#allocation8 + $0x1010] sm:$0xff]
      %v732 = vld [vmem:[#allocation8 + $0x1018] sm:$0xff]
      %v733 = vld [vmem:[#allocation8 + $0x1020] sm:$0xff]
      %v734 = vld [vmem:[#allocation8 + $0x1030] sm:$0xff]
      %v735 = vld [vmem:[#allocation8 + $0x1038] sm:$0xff]
      %v736 = vld [vmem:[#allocation8 + $0x1040] sm:$0xff]
      %v737 = vld [vmem:[#allocation8 + $0x1050] sm:$0xff]
      %v738 = vld [vmem:[#allocation8 + $0x1058] sm:$0xff]
      %v739 = vld [vmem:[#allocation8 + $0x1060] sm:$0xff]
      %v740 = vld [vmem:[#allocation8 + $0x1070] sm:$0xff]
      %v741 = vld [vmem:[#allocation8 + $0x1078] sm:$0xff]
      %v742 = vld [vmem:[#allocation8 + $0x1080] sm:$0xff]
      %v743 = vld [vmem:[#allocation8 + $0x1090] sm:$0xff]
      %v744 = vld [vmem:[#allocation8 + $0x1098] sm:$0xff]
      %v745 = vld [vmem:[#allocation8 + $0x10a0] sm:$0xff]
      %v746 = vld [vmem:[#allocation8 + $0x10b0] sm:$0xff]
      %v747 = vld [vmem:[#allocation8 + $0x10b8] sm:$0xff]
      %v748 = vld [vmem:[#allocation8 + $0x10c0] sm:$0xff]
      %v749 = vld [vmem:[#allocation8 + $0x10d0] sm:$0xff]
      %v750 = vld [vmem:[#allocation8 + $0x10d8] sm:$0xff]
      %v751 = vld [vmem:[#allocation8 + $0x10e0] sm:$0xff]
      %v752 = vld [vmem:[#allocation8 + $0x10f0] sm:$0xff]
      %v753 = vld [vmem:[#allocation8 + $0x10f8] sm:$0xff]
      %v754 = vld [vmem:[#allocation8 + $0x1100] sm:$0xff]
      %v755 = vld [vmem:[#allocation8 + $0x1110] sm:$0xff]
      %v756 = vld [vmem:[#allocation8 + $0x1118] sm:$0xff]
      %v757 = vld [vmem:[#allocation8 + $0x1120] sm:$0xff]
      %v758 = vld [vmem:[#allocation8 + $0x1130] sm:$0xff]
      %v759 = vld [vmem:[#allocation8 + $0x1138] sm:$0xff]
      %v760 = vld [vmem:[#allocation8 + $0x1140] sm:$0xff]
      %v761 = vld [vmem:[#allocation8 + $0x1150] sm:$0xff]
      %v762 = vld [vmem:[#allocation8 + $0x1158] sm:$0xff]
      %v763 = vld [vmem:[#allocation8 + $0x1160] sm:$0xff]
      %v764 = vld [vmem:[#allocation8 + $0x1170] sm:$0xff]
      %v765 = vld [vmem:[#allocation8 + $0x1178] sm:$0xff]
      %v766 = vld [vmem:[#allocation8 + $0x1180] sm:$0xff]
      %v767 = vld [vmem:[#allocation8 + $0x1190] sm:$0xff]
      %v768 = vld [vmem:[#allocation8 + $0x1198] sm:$0xff]
      %v769 = vld [vmem:[#allocation8 + $0x11a0] sm:$0xff]
      %v770 = vld [vmem:[#allocation8 + $0x11b0] sm:$0xff]
      %v771 = vld [vmem:[#allocation8 + $0x11b8] sm:$0xff]
      %v772 = vld [vmem:[#allocation8 + $0x11c0] sm:$0xff]
      %v773 = vld [vmem:[#allocation8 + $0x11d0] sm:$0xff]
      %v774 = vld [vmem:[#allocation8 + $0x11d8] sm:$0xff]
      %v775 = vld [vmem:[#allocation8 + $0x11e0] sm:$0xff]
      %v776 = vld [vmem:[#allocation8 + $0x11f0] sm:$0xff]
      %v777 = vld [vmem:[#allocation8 + $0x11f8] sm:$0xff]
      %v778 = vld [vmem:[#allocation8 + $0x1200] sm:$0xff]
      %v779 = vld [vmem:[#allocation8 + $0x1210] sm:$0xff]
      %v780 = vld [vmem:[#allocation8 + $0x1218] sm:$0xff]
      %v781 = vld [vmem:[#allocation8 + $0x1220] sm:$0xff]
      %v782 = vld [vmem:[#allocation8 + $0x1230] sm:$0xff]
      %v783 = vld [vmem:[#allocation8 + $0x1238] sm:$0xff]
      %v784 = vld [vmem:[#allocation8 + $0x1240] sm:$0xff]
      %v785 = vld [vmem:[#allocation8 + $0x1250] sm:$0xff]
      %v786 = vld [vmem:[#allocation8 + $0x1258] sm:$0xff]
      %v787 = vld [vmem:[#allocation8 + $0x1260] sm:$0xff]
      %v788 = vld [vmem:[#allocation8 + $0x1270] sm:$0xff]
      %v789 = vld [vmem:[#allocation8 + $0x1278] sm:$0xff]
      %v790 = vld [vmem:[#allocation8 + $0x1280] sm:$0xff]
      %v791 = vld [vmem:[#allocation8 + $0x1290] sm:$0xff]
      %v792 = vld [vmem:[#allocation8 + $0x1298] sm:$0xff]
      %v793 = vld [vmem:[#allocation8 + $0x12a0] sm:$0xff]
      %v794 = vld [vmem:[#allocation8 + $0x12b0] sm:$0xff]
      %v795 = vld [vmem:[#allocation8 + $0x12b8] sm:$0xff]
      %v796 = vld [vmem:[#allocation8 + $0x12c0] sm:$0xff]
      %v797 = vld [vmem:[#allocation8 + $0x12d0] sm:$0xff]
      %v798 = vld [vmem:[#allocation8 + $0x12d8] sm:$0xff]
      %v799 = vld [vmem:[#allocation8 + $0x12e0] sm:$0xff]
      %v800 = vld [vmem:[#allocation8 + $0x12f0] sm:$0xff]
      %v801 = vld [vmem:[#allocation8 + $0x12f8] sm:$0xff]
      %v802 = vld [vmem:[#allocation8 + $0x1300] sm:$0xff]
      %v803 = vld [vmem:[#allocation8 + $0x1310] sm:$0xff]
      %v804 = vld [vmem:[#allocation8 + $0x1318] sm:$0xff]
      %v805 = vld [vmem:[#allocation8 + $0x1320] sm:$0xff]
      %v806 = vld [vmem:[#allocation8 + $0x1330] sm:$0xff]
      %v807 = vld [vmem:[#allocation8 + $0x1338] sm:$0xff]
      %v808 = vld [vmem:[#allocation8 + $0x1340] sm:$0xff]
      %v809 = vld [vmem:[#allocation8 + $0x1350] sm:$0xff]
      %v810 = vld [vmem:[#allocation8 + $0x1358] sm:$0xff]
      %v811 = vld [vmem:[#allocation8 + $0x1360] sm:$0xff]
      %v812 = vld [vmem:[#allocation8 + $0x1370] sm:$0xff]
      %v813 = vld [vmem:[#allocation8 + $0x1378] sm:$0xff]
      %v814 = vld [vmem:[#allocation8 + $0x1380] sm:$0xff]
      %v815 = vld [vmem:[#allocation8 + $0x1390] sm:$0xff]
      %v816 = vld [vmem:[#allocation8 + $0x1398] sm:$0xff]
      %v817 = vld [vmem:[#allocation8 + $0x13a0] sm:$0xff]
      %v818 = vld [vmem:[#allocation8 + $0x13b0] sm:$0xff]
      %v819 = vld [vmem:[#allocation8 + $0x13b8] sm:$0xff]
      %v820 = vld [vmem:[#allocation8 + $0x13c0] sm:$0xff]
      %v821 = vld [vmem:[#allocation8 + $0x13d0] sm:$0xff]
      %v822 = vld [vmem:[#allocation8 + $0x13d8] sm:$0xff]
      %v823 = vld [vmem:[#allocation8 + $0x13e0] sm:$0xff]
      %v824 = vld [vmem:[#allocation8 + $0x13f0] sm:$0xff]
      %v825 = vld [vmem:[#allocation8 + $0x13f8] sm:$0xff]
      %v826 = vld [vmem:[#allocation8 + $0x1400] sm:$0xff]
      %v827 = vld [vmem:[#allocation8 + $0x1410] sm:$0xff]
      %v828 = vld [vmem:[#allocation8 + $0x1418] sm:$0xff]
      %v829 = vld [vmem:[#allocation8 + $0x1420] sm:$0xff]
      %v830 = vld [vmem:[#allocation8 + $0x1430] sm:$0xff]
      %v831 = vld [vmem:[#allocation8 + $0x1438] sm:$0xff]
      %v832 = vld [vmem:[#allocation8 + $0x1440] sm:$0xff]
      %v833 = vld [vmem:[#allocation8 + $0x1450] sm:$0xff]
      %v834 = vld [vmem:[#allocation8 + $0x1458] sm:$0xff]
      %v835 = vld [vmem:[#allocation8 + $0x1460] sm:$0xff]
      %v836 = vld [vmem:[#allocation8 + $0x1470] sm:$0xff]
      %v837 = vld [vmem:[#allocation8 + $0x1478] sm:$0xff]
      %v838 = vld [vmem:[#allocation8 + $0x1480] sm:$0xff]
      %v839 = vld [vmem:[#allocation8 + $0x1490] sm:$0xff]
      %v840 = vld [vmem:[#allocation8 + $0x1498] sm:$0xff]
      %v841 = vld [vmem:[#allocation8 + $0x14a0] sm:$0xff]
      %v842 = vld [vmem:[#allocation8 + $0x14b0] sm:$0xff]
      %v843 = vld [vmem:[#allocation8 + $0x14b8] sm:$0xff]
      %v844 = vld [vmem:[#allocation8 + $0x14c0] sm:$0xff]
      %v845 = vld [vmem:[#allocation8 + $0x14d0] sm:$0xff]
      %v846 = vld [vmem:[#allocation8 + $0x14d8] sm:$0xff]
      %v847 = vld [vmem:[#allocation8 + $0x14e0] sm:$0xff]
      %v848 = vld [vmem:[#allocation8 + $0x14f0] sm:$0xff]
      %v849 = vld [vmem:[#allocation8 + $0x14f8] sm:$0xff]
      %v850 = vld [vmem:[#allocation8 + $0x1500] sm:$0xff]
      %v851 = vld [vmem:[#allocation8 + $0x1510] sm:$0xff]
      %v852 = vld [vmem:[#allocation8 + $0x1518] sm:$0xff]
      %v853 = vld [vmem:[#allocation8 + $0x1520] sm:$0xff]
      %v854 = vld [vmem:[#allocation8 + $0x1530] sm:$0xff]
      %v855 = vld [vmem:[#allocation8 + $0x1538] sm:$0xff]
      %v856 = vld [vmem:[#allocation8 + $0x1540] sm:$0xff]
      %v857 = vld [vmem:[#allocation8 + $0x1550] sm:$0xff]
      %v858 = vld [vmem:[#allocation8 + $0x1558] sm:$0xff]
      %v859 = vld [vmem:[#allocation8 + $0x1560] sm:$0xff]
      %v860 = vld [vmem:[#allocation8 + $0x1570] sm:$0xff]
      %v861 = vld [vmem:[#allocation8 + $0x1578] sm:$0xff]
      %v862 = vld [vmem:[#allocation8 + $0x1580] sm:$0xff]
      %v863 = vld [vmem:[#allocation8 + $0x1590] sm:$0xff]
      %v864 = vld [vmem:[#allocation8 + $0x1598] sm:$0xff]
      %v865 = vld [vmem:[#allocation8 + $0x15a0] sm:$0xff]
      %v866 = vld [vmem:[#allocation8 + $0x15b0] sm:$0xff]
      %v867 = vld [vmem:[#allocation8 + $0x15b8] sm:$0xff]
      %v868 = vld [vmem:[#allocation8 + $0x15c0] sm:$0xff]
      %v869 = vld [vmem:[#allocation8 + $0x15d0] sm:$0xff]
      %v870 = vld [vmem:[#allocation8 + $0x15d8] sm:$0xff]
      %v871 = vld [vmem:[#allocation8 + $0x15e0] sm:$0xff]
      %v872 = vld [vmem:[#allocation8 + $0x15f0] sm:$0xff]
      %v873 = vld [vmem:[#allocation8 + $0x15f8] sm:$0xff]
      %v874 = vld [vmem:[#allocation8 + $0x1600] sm:$0xff]
      %v875 = vld [vmem:[#allocation8 + $0x1610] sm:$0xff]
      %v876 = vld [vmem:[#allocation8 + $0x1618] sm:$0xff]
      %v877 = vld [vmem:[#allocation8 + $0x1620] sm:$0xff]
      %v878 = vld [vmem:[#allocation8 + $0x1630] sm:$0xff]
      %v879 = vld [vmem:[#allocation8 + $0x1638] sm:$0xff]
      %v880 = vld [vmem:[#allocation8 + $0x1640] sm:$0xff]
      %v881 = vld [vmem:[#allocation8 + $0x1650] sm:$0xff]
      %v882 = vld [vmem:[#allocation8 + $0x1658] sm:$0xff]
      %v883 = vld [vmem:[#allocation8 + $0x1660] sm:$0xff]
      %v884 = vld [vmem:[#allocation8 + $0x1670] sm:$0xff]
      %v885 = vld [vmem:[#allocation8 + $0x1678] sm:$0xff]
      %v886 = vld [vmem:[#allocation8 + $0x1680] sm:$0xff]
      %v887 = vld [vmem:[#allocation8 + $0x1690] sm:$0xff]
      %v888 = vld [vmem:[#allocation8 + $0x1698] sm:$0xff]
      %v889 = vld [vmem:[#allocation8 + $0x16a0] sm:$0xff]
      %v890 = vld [vmem:[#allocation8 + $0x16b0] sm:$0xff]
      %v891 = vld [vmem:[#allocation8 + $0x16b8] sm:$0xff]
      %v892 = vld [vmem:[#allocation8 + $0x16c0] sm:$0xff]
      %v893 = vld [vmem:[#allocation8 + $0x16d0] sm:$0xff]
      %v894 = vld [vmem:[#allocation8 + $0x16d8] sm:$0xff]
      %v895 = vld [vmem:[#allocation8 + $0x16e0] sm:$0xff]
      %v896 = vld [vmem:[#allocation8 + $0x16f0] sm:$0xff]
      %v897 = vld [vmem:[#allocation8 + $0x16f8] sm:$0xff]
      %v898 = vld [vmem:[#allocation8 + $0x1700] sm:$0xff]
      %v899 = vld [vmem:[#allocation8 + $0x1710] sm:$0xff]
      %v900 = vld [vmem:[#allocation8 + $0x1718] sm:$0xff]
      %v901 = vld [vmem:[#allocation8 + $0x1720] sm:$0xff]
      %v902 = vld [vmem:[#allocation8 + $0x1730] sm:$0xff]
      %v903 = vld [vmem:[#allocation8 + $0x1738] sm:$0xff]
      %v904 = vld [vmem:[#allocation8 + $0x1740] sm:$0xff]
      %v905 = vld [vmem:[#allocation8 + $0x1750] sm:$0xff]
      %v906 = vld [vmem:[#allocation8 + $0x1758] sm:$0xff]
      %v907 = vld [vmem:[#allocation8 + $0x1760] sm:$0xff]
      %v908 = vld [vmem:[#allocation8 + $0x1770] sm:$0xff]
      %v909 = vld [vmem:[#allocation8 + $0x1778] sm:$0xff]
      %v910 = vld [vmem:[#allocation8 + $0x1780] sm:$0xff]
      %v911 = vld [vmem:[#allocation8 + $0x1790] sm:$0xff]
      %v912 = vld [vmem:[#allocation8 + $0x1798] sm:$0xff]
      %v913 = vld [vmem:[#allocation8 + $0x17a0] sm:$0xff]
      %v914 = vld [vmem:[#allocation8 + $0x17b0] sm:$0xff]
      %v915 = vld [vmem:[#allocation8 + $0x17b8] sm:$0xff]
      %v916 = vld [vmem:[#allocation8 + $0x17c0] sm:$0xff]
      %v917 = vld [vmem:[#allocation8 + $0x17d0] sm:$0xff]
      %v918 = vld [vmem:[#allocation8 + $0x17d8] sm:$0xff]
      %v919 = vld [vmem:[#allocation8 + $0x17e0] sm:$0xff]
      %v920 = vld [vmem:[#allocation8 + $0x17f0] sm:$0xff]
      %v921 = vld [vmem:[#allocation8 + $0x17f8] sm:$0xff]
      %v922 = vld [vmem:[#allocation9] sm:$0xff]
      %v923 = vld [vmem:[#allocation9 + $0x8] sm:$0xff]
      %v926 = vlaneseq
      %v927 = vshrl.u32 %v926, 7
      %v928 = vsub.s32 0, %v927
      %v929 = vrot.slane %v922, %v928
      %v930 = vlaneseq
      %v931 = vshrl.u32 %v930, 7
      %v932 = vsub.s32 1, %v931
      %v933 = vrot.slane %v922, %v932
      %v934 = vlaneseq
      %v935 = vshrl.u32 %v934, 7
      %v936 = vsub.s32 4, %v935
      %v937 = vrot.slane %v922, %v936
      %v938 = vlaneseq
      %v939 = vshrl.u32 %v938, 7
      %v940 = vsub.s32 5, %v939
      %v941 = vrot.slane %v922, %v940
      %v942 = vlaneseq
      %v943 = vshrl.u32 %v942, 7
      %v944 = vsub.s32 6, %v943
      %v945 = vrot.slane %v922, %v944
      %v946 = vlaneseq
      %v947 = vshrl.u32 %v946, 7
      %v948 = vsub.s32 7, %v947
      %v949 = vrot.slane %v922, %v948
      %v950 = vlaneseq
      %v951 = vshrl.u32 %v950, 7
      %v952 = vsub.s32 0, %v951
      %v953 = vrot.slane %v923, %v952
      %v954 = vlaneseq
      %v955 = vshrl.u32 %v954, 7
      %v956 = vsub.s32 1, %v955
      %v957 = vrot.slane %v923, %v956
      %v958 = vlaneseq
      %v959 = vshrl.u32 %v958, 7
      %v960 = vsub.s32 4, %v959
      %v961 = vrot.slane %v923, %v960
      %v962 = vlaneseq
      %v963 = vshrl.u32 %v962, 7
      %v964 = vsub.s32 5, %v963
      %v965 = vrot.slane %v923, %v964
      %v966 = vlaneseq
      %v967 = vshrl.u32 %v966, 7
      %v968 = vsub.s32 6, %v967
      %v969 = vrot.slane %v923, %v968
      %v970 = vlaneseq
      %v971 = vshrl.u32 %v970, 7
      %v972 = vsub.s32 7, %v971
      %v973 = vrot.slane %v923, %v972
      %v1562 = vunpack.c.l.b16 %v346
      %v1563 = vunpack.c.h.b16 %v346
      %v1564 = vunpack.c.l.b16 %v347
      %v1565 = vunpack.c.h.b16 %v347
      %v1566 = vunpack.c.l.b16 %v348
      %v1567 = vunpack.c.h.b16 %v348
      %v1568 = vunpack.c.l.b16 %v349
      %v1569 = vunpack.c.h.b16 %v349
      %v1570 = vunpack.c.l.b16 %v350
      %v1571 = vunpack.c.h.b16 %v350
      %v1572 = vunpack.c.l.b16 %v351
      %v1573 = vunpack.c.h.b16 %v351
      %v1574 = vunpack.c.l.b16 %v352
      %v1575 = vunpack.c.h.b16 %v352
      %v1576 = vunpack.c.l.b16 %v353
      %v1577 = vunpack.c.h.b16 %v353
      %v1578 = vunpack.c.l.b16 %v354
      %v1579 = vunpack.c.h.b16 %v354
      %v1580 = vunpack.c.l.b16 %v355
      %v1581 = vunpack.c.h.b16 %v355
      %v1582 = vunpack.c.l.b16 %v356
      %v1583 = vunpack.c.h.b16 %v356
      %v1584 = vunpack.c.l.b16 %v357
      %v1585 = vunpack.c.h.b16 %v357
      %v1586 = vunpack.c.l.b16 %v358
      %v1587 = vunpack.c.h.b16 %v358
      %v1588 = vunpack.c.l.b16 %v359
      %v1589 = vunpack.c.h.b16 %v359
      %v1590 = vunpack.c.l.b16 %v360
      %v1591 = vunpack.c.h.b16 %v360
      %v1592 = vunpack.c.l.b16 %v361
      %v1593 = vunpack.c.h.b16 %v361
      %v1594 = vunpack.c.l.b16 %v362
      %v1595 = vunpack.c.h.b16 %v362
      %v1596 = vunpack.c.l.b16 %v363
      %v1597 = vunpack.c.h.b16 %v363
      %v1598 = vunpack.c.l.b16 %v364
      %v1599 = vunpack.c.h.b16 %v364
      %v1600 = vunpack.c.l.b16 %v365
      %v1601 = vunpack.c.h.b16 %v365
      %v1602 = vunpack.c.l.b16 %v366
      %v1603 = vunpack.c.h.b16 %v366
      %v1604 = vunpack.c.l.b16 %v367
      %v1605 = vunpack.c.h.b16 %v367
      %v1606 = vunpack.c.l.b16 %v368
      %v1607 = vunpack.c.h.b16 %v368
      %v1608 = vunpack.c.l.b16 %v369
      %v1609 = vunpack.c.h.b16 %v369
      %v1610 = vunpack.c.l.b16 %v370
      %v1611 = vunpack.c.h.b16 %v370
      %v1612 = vunpack.c.l.b16 %v371
      %v1613 = vunpack.c.h.b16 %v371
      %v1614 = vunpack.c.l.b16 %v372
      %v1615 = vunpack.c.h.b16 %v372
      %v1616 = vunpack.c.l.b16 %v373
      %v1617 = vunpack.c.h.b16 %v373
      %v1618 = vunpack.c.l.b16 %v374
      %v1619 = vunpack.c.h.b16 %v374
      %v1620 = vunpack.c.l.b16 %v375
      %v1621 = vunpack.c.h.b16 %v375
      %v1622 = vunpack.c.l.b16 %v376
      %v1623 = vunpack.c.h.b16 %v376
      %v1624 = vunpack.c.l.b16 %v377
      %v1625 = vunpack.c.h.b16 %v377
      %v1626 = vunpack.c.l.b16 %v378
      %v1627 = vunpack.c.h.b16 %v378
      %v1628 = vunpack.c.l.b16 %v379
      %v1629 = vunpack.c.h.b16 %v379
      %v1630 = vunpack.c.l.b16 %v380
      %v1631 = vunpack.c.h.b16 %v380
      %v1632 = vunpack.c.l.b16 %v381
      %v1633 = vunpack.c.h.b16 %v381
      %v1634 = vunpack.c.l.b16 %v382
      %v1635 = vunpack.c.h.b16 %v382
      %v1636 = vunpack.c.l.b16 %v383
      %v1637 = vunpack.c.h.b16 %v383
      %v1638 = vunpack.c.l.b16 %v384
      %v1639 = vunpack.c.h.b16 %v384
      %v1640 = vunpack.c.l.b16 %v385
      %v1641 = vunpack.c.h.b16 %v385
      %v1642 = vunpack.c.l.b16 %v386
      %v1643 = vunpack.c.h.b16 %v386
      %v1644 = vunpack.c.l.b16 %v387
      %v1645 = vunpack.c.h.b16 %v387
      %v1646 = vunpack.c.l.b16 %v388
      %v1647 = vunpack.c.h.b16 %v388
      %v1648 = vunpack.c.l.b16 %v389
      %v1649 = vunpack.c.h.b16 %v389
      %v1650 = vunpack.c.l.b16 %v390
      %v1651 = vunpack.c.h.b16 %v390
      %v1652 = vunpack.c.l.b16 %v391
      %v1653 = vunpack.c.h.b16 %v391
      %v1654 = vunpack.c.l.b16 %v392
      %v1655 = vunpack.c.h.b16 %v392
      %v1656 = vunpack.c.l.b16 %v393
      %v1657 = vunpack.c.h.b16 %v393
      %v1658 = vunpack.c.l.b16 %v394
      %v1659 = vunpack.c.h.b16 %v394
      %v1660 = vunpack.c.l.b16 %v395
      %v1661 = vunpack.c.h.b16 %v395
      %v1662 = vunpack.c.l.b16 %v396
      %v1663 = vunpack.c.h.b16 %v396
      %v1664 = vunpack.c.l.b16 %v397
      %v1665 = vunpack.c.h.b16 %v397
      %v1666 = vunpack.c.l.b16 %v398
      %v1667 = vunpack.c.h.b16 %v398
      %v1668 = vunpack.c.l.b16 %v399
      %v1669 = vunpack.c.h.b16 %v399
      %v1670 = vunpack.c.l.b16 %v400
      %v1671 = vunpack.c.h.b16 %v400
      %v1672 = vunpack.c.l.b16 %v401
      %v1673 = vunpack.c.h.b16 %v401
      %v1674 = vunpack.c.l.b16 %v402
      %v1675 = vunpack.c.h.b16 %v402
      %v1676 = vunpack.c.l.b16 %v403
      %v1677 = vunpack.c.h.b16 %v403
      %v1678 = vunpack.c.l.b16 %v404
      %v1679 = vunpack.c.h.b16 %v404
      %v1680 = vunpack.c.l.b16 %v405
      %v1681 = vunpack.c.h.b16 %v405
      %v1682 = vunpack.c.l.b16 %v406
      %v1683 = vunpack.c.h.b16 %v406
      %v1684 = vunpack.c.l.b16 %v407
      %v1685 = vunpack.c.h.b16 %v407
      %v1686 = vunpack.c.l.b16 %v408
      %v1687 = vunpack.c.h.b16 %v408
      %v1688 = vunpack.c.l.b16 %v409
      %v1689 = vunpack.c.h.b16 %v409
      %v1690 = vunpack.c.l.b16 %v410
      %v1691 = vunpack.c.h.b16 %v410
      %v1692 = vunpack.c.l.b16 %v411
      %v1693 = vunpack.c.h.b16 %v411
      %v1694 = vunpack.c.l.b16 %v412
      %v1695 = vunpack.c.h.b16 %v412
      %v1696 = vunpack.c.l.b16 %v413
      %v1697 = vunpack.c.h.b16 %v413
      %v1698 = vunpack.c.l.b16 %v414
      %v1699 = vunpack.c.h.b16 %v414
      %v1700 = vunpack.c.l.b16 %v415
      %v1701 = vunpack.c.h.b16 %v415
      %v1702 = vunpack.c.l.b16 %v416
      %v1703 = vunpack.c.h.b16 %v416
      %v1704 = vunpack.c.l.b16 %v417
      %v1705 = vunpack.c.h.b16 %v417
      %v1706 = vunpack.c.l.b16 %v418
      %v1707 = vunpack.c.h.b16 %v418
      %v1708 = vunpack.c.l.b16 %v419
      %v1709 = vunpack.c.h.b16 %v419
      %v1710 = vunpack.c.l.b16 %v420
      %v1711 = vunpack.c.h.b16 %v420
      %v1712 = vunpack.c.l.b16 %v421
      %v1713 = vunpack.c.h.b16 %v421
      %v1714 = vunpack.c.l.b16 %v422
      %v1715 = vunpack.c.h.b16 %v422
      %v1716 = vunpack.c.l.b16 %v423
      %v1717 = vunpack.c.h.b16 %v423
      %v1718 = vunpack.c.l.b16 %v424
      %v1719 = vunpack.c.h.b16 %v424
      %v1720 = vunpack.c.l.b16 %v425
      %v1721 = vunpack.c.h.b16 %v425
      %v1722 = vunpack.c.l.b16 %v426
      %v1723 = vunpack.c.h.b16 %v426
      %v1724 = vunpack.c.l.b16 %v427
      %v1725 = vunpack.c.h.b16 %v427
      %v1726 = vunpack.c.l.b16 %v428
      %v1727 = vunpack.c.h.b16 %v428
      %v1728 = vunpack.c.l.b16 %v429
      %v1729 = vunpack.c.h.b16 %v429
      %v1730 = vunpack.c.l.b16 %v430
      %v1731 = vunpack.c.h.b16 %v430
      %v1732 = vunpack.c.l.b16 %v431
      %v1733 = vunpack.c.h.b16 %v431
      %v1734 = vunpack.c.l.b16 %v432
      %v1735 = vunpack.c.h.b16 %v432
      %v1736 = vunpack.c.l.b16 %v433
      %v1737 = vunpack.c.h.b16 %v433
      %v1738 = vunpack.c.l.b16 %v434
      %v1739 = vunpack.c.h.b16 %v434
      %v1740 = vunpack.c.l.b16 %v435
      %v1741 = vunpack.c.h.b16 %v435
      %v1742 = vunpack.c.l.b16 %v436
      %v1743 = vunpack.c.h.b16 %v436
      %v1744 = vunpack.c.l.b16 %v437
      %v1745 = vunpack.c.h.b16 %v437
      %v1746 = vunpack.c.l.b16 %v438
      %v1747 = vunpack.c.h.b16 %v438
      %v1748 = vunpack.c.l.b16 %v439
      %v1749 = vunpack.c.h.b16 %v439
      %v1750 = vunpack.c.l.b16 %v440
      %v1751 = vunpack.c.h.b16 %v440
      %v1752 = vunpack.c.l.b16 %v441
      %v1753 = vunpack.c.h.b16 %v441
      %v1754 = vunpack.c.l.b16 %v442
      %v1755 = vunpack.c.h.b16 %v442
      %v1756 = vunpack.c.l.b16 %v443
      %v1757 = vunpack.c.h.b16 %v443
      %v1758 = vunpack.c.l.b16 %v444
      %v1759 = vunpack.c.h.b16 %v444
      %v1760 = vunpack.c.l.b16 %v445
      %v1761 = vunpack.c.h.b16 %v445
      %v1762 = vunpack.c.l.b16 %v446
      %v1763 = vunpack.c.h.b16 %v446
      %v1764 = vunpack.c.l.b16 %v447
      %v1765 = vunpack.c.h.b16 %v447
      %v1766 = vunpack.c.l.b16 %v448
      %v1767 = vunpack.c.h.b16 %v448
      %v1768 = vunpack.c.l.b16 %v449
      %v1769 = vunpack.c.h.b16 %v449
      %v1770 = vunpack.c.l.b16 %v450
      %v1771 = vunpack.c.h.b16 %v450
      %v1772 = vunpack.c.l.b16 %v451
      %v1773 = vunpack.c.h.b16 %v451
      %v1774 = vunpack.c.l.b16 %v452
      %v1775 = vunpack.c.h.b16 %v452
      %v1776 = vunpack.c.l.b16 %v453
      %v1777 = vunpack.c.h.b16 %v453
      %v1778 = vunpack.c.l.b16 %v454
      %v1779 = vunpack.c.h.b16 %v454
      %v1780 = vunpack.c.l.b16 %v455
      %v1781 = vunpack.c.h.b16 %v455
      %v1782 = vunpack.c.l.b16 %v456
      %v1783 = vunpack.c.h.b16 %v456
      %v1784 = vunpack.c.l.b16 %v457
      %v1785 = vunpack.c.h.b16 %v457
      %v1786 = vunpack.c.l.b16 %v458
      %v1787 = vunpack.c.h.b16 %v458
      %v1788 = vunpack.c.l.b16 %v459
      %v1789 = vunpack.c.h.b16 %v459
      %v1790 = vunpack.c.l.b16 %v460
      %v1791 = vunpack.c.h.b16 %v460
      %v1792 = vunpack.c.l.b16 %v461
      %v1793 = vunpack.c.h.b16 %v461
      %v1794 = vunpack.c.l.b16 %v462
      %v1795 = vunpack.c.h.b16 %v462
      %v1796 = vunpack.c.l.b16 %v463
      %v1797 = vunpack.c.h.b16 %v463
      %v1798 = vunpack.c.l.b16 %v464
      %v1799 = vunpack.c.h.b16 %v464
      %v1800 = vunpack.c.l.b16 %v465
      %v1801 = vunpack.c.h.b16 %v465
      %v1802 = vunpack.c.l.b16 %v466
      %v1803 = vunpack.c.h.b16 %v466
      %v1804 = vunpack.c.l.b16 %v467
      %v1805 = vunpack.c.h.b16 %v467
      %v1806 = vunpack.c.l.b16 %v468
      %v1807 = vunpack.c.h.b16 %v468
      %v1808 = vunpack.c.l.b16 %v469
      %v1809 = vunpack.c.h.b16 %v469
      %v1810 = vunpack.c.l.b16 %v470
      %v1811 = vunpack.c.h.b16 %v470
      %v1812 = vunpack.c.l.b16 %v471
      %v1813 = vunpack.c.h.b16 %v471
      %v1814 = vunpack.c.l.b16 %v472
      %v1815 = vunpack.c.h.b16 %v472
      %v1816 = vunpack.c.l.b16 %v473
      %v1817 = vunpack.c.h.b16 %v473
      %v1818 = vunpack.c.l.b16 %v474
      %v1819 = vunpack.c.h.b16 %v474
      %v1820 = vunpack.c.l.b16 %v475
      %v1821 = vunpack.c.h.b16 %v475
      %v1822 = vunpack.c.l.b16 %v476
      %v1823 = vunpack.c.h.b16 %v476
      %v1824 = vunpack.c.l.b16 %v477
      %v1825 = vunpack.c.h.b16 %v477
      %v1826 = vunpack.c.l.b16 %v478
      %v1827 = vunpack.c.h.b16 %v478
      %v1828 = vunpack.c.l.b16 %v479
      %v1829 = vunpack.c.h.b16 %v479
      %v1830 = vunpack.c.l.b16 %v480
      %v1831 = vunpack.c.h.b16 %v480
      %v1832 = vunpack.c.l.b16 %v481
      %v1833 = vunpack.c.h.b16 %v481
      %v1834 = vunpack.c.l.b16 %v482
      %v1835 = vunpack.c.h.b16 %v482
      %v1836 = vunpack.c.l.b16 %v483
      %v1837 = vunpack.c.h.b16 %v483
      %v1838 = vunpack.c.l.b16 %v484
      %v1839 = vunpack.c.h.b16 %v484
      %v1840 = vunpack.c.l.b16 %v485
      %v1841 = vunpack.c.h.b16 %v485
      %v1842 = vunpack.c.l.b16 %v486
      %v1843 = vunpack.c.h.b16 %v486
      %v1844 = vunpack.c.l.b16 %v487
      %v1845 = vunpack.c.h.b16 %v487
      %v1846 = vunpack.c.l.b16 %v488
      %v1847 = vunpack.c.h.b16 %v488
      %v1848 = vunpack.c.l.b16 %v489
      %v1849 = vunpack.c.h.b16 %v489
      %v1850 = vunpack.c.l.b16 %v490
      %v1851 = vunpack.c.h.b16 %v490
      %v1852 = vunpack.c.l.b16 %v491
      %v1853 = vunpack.c.h.b16 %v491
      %v1854 = vunpack.c.l.b16 %v492
      %v1855 = vunpack.c.h.b16 %v492
      %v1856 = vunpack.c.l.b16 %v493
      %v1857 = vunpack.c.h.b16 %v493
      %v1858 = vunpack.c.l.b16 %v494
      %v1859 = vunpack.c.h.b16 %v494
      %v1860 = vunpack.c.l.b16 %v495
      %v1861 = vunpack.c.h.b16 %v495
      %v1862 = vunpack.c.l.b16 %v496
      %v1863 = vunpack.c.h.b16 %v496
      %v1864 = vunpack.c.l.b16 %v497
      %v1865 = vunpack.c.h.b16 %v497
      %v1866 = vunpack.c.l.b16 %v498
      %v1867 = vunpack.c.h.b16 %v498
      %v1868 = vunpack.c.l.b16 %v499
      %v1869 = vunpack.c.h.b16 %v499
      %v1870 = vunpack.c.l.b16 %v500
      %v1871 = vunpack.c.h.b16 %v500
      %v1872 = vunpack.c.l.b16 %v501
      %v1873 = vunpack.c.h.b16 %v501
      %v1874 = vunpack.c.l.b16 %v502
      %v1875 = vunpack.c.h.b16 %v502
      %v1876 = vunpack.c.l.b16 %v503
      %v1877 = vunpack.c.h.b16 %v503
      %v1878 = vunpack.c.l.b16 %v504
      %v1879 = vunpack.c.h.b16 %v504
      %v1880 = vunpack.c.l.b16 %v505
      %v1881 = vunpack.c.h.b16 %v505
      %v1882 = vunpack.c.l.b16 %v506
      %v1883 = vunpack.c.h.b16 %v506
      %v1884 = vunpack.c.l.b16 %v507
      %v1885 = vunpack.c.h.b16 %v507
      %v1886 = vunpack.c.l.b16 %v508
      %v1887 = vunpack.c.h.b16 %v508
      %v1888 = vunpack.c.l.b16 %v509
      %v1889 = vunpack.c.h.b16 %v509
      %v1890 = vunpack.c.l.b16 %v510
      %v1891 = vunpack.c.h.b16 %v510
      %v1892 = vunpack.c.l.b16 %v511
      %v1893 = vunpack.c.h.b16 %v511
      %v1894 = vunpack.c.l.b16 %v512
      %v1895 = vunpack.c.h.b16 %v512
      %v1896 = vunpack.c.l.b16 %v513
      %v1897 = vunpack.c.h.b16 %v513
      %v1898 = vunpack.c.l.b16 %v514
      %v1899 = vunpack.c.h.b16 %v514
      %v1900 = vunpack.c.l.b16 %v515
      %v1901 = vunpack.c.h.b16 %v515
      %v1902 = vunpack.c.l.b16 %v516
      %v1903 = vunpack.c.h.b16 %v516
      %v1904 = vunpack.c.l.b16 %v517
      %v1905 = vunpack.c.h.b16 %v517
      %v1906 = vunpack.c.l.b16 %v518
      %v1907 = vunpack.c.h.b16 %v518
      %v1908 = vunpack.c.l.b16 %v519
      %v1909 = vunpack.c.h.b16 %v519
      %v1910 = vunpack.c.l.b16 %v520
      %v1911 = vunpack.c.h.b16 %v520
      %v1912 = vunpack.c.l.b16 %v521
      %v1913 = vunpack.c.h.b16 %v521
      %v1914 = vunpack.c.l.b16 %v522
      %v1915 = vunpack.c.h.b16 %v522
      %v1916 = vunpack.c.l.b16 %v523
      %v1917 = vunpack.c.h.b16 %v523
      %v1918 = vunpack.c.l.b16 %v524
      %v1919 = vunpack.c.h.b16 %v524
      %v1920 = vunpack.c.l.b16 %v525
      %v1921 = vunpack.c.h.b16 %v525
      %v1922 = vunpack.c.l.b16 %v526
      %v1923 = vunpack.c.h.b16 %v526
      %v1924 = vunpack.c.l.b16 %v527
      %v1925 = vunpack.c.h.b16 %v527
      %v1926 = vunpack.c.l.b16 %v528
      %v1927 = vunpack.c.h.b16 %v528
      %v1928 = vunpack.c.l.b16 %v529
      %v1929 = vunpack.c.h.b16 %v529
      %v1930 = vunpack.c.l.b16 %v530
      %v1931 = vunpack.c.h.b16 %v530
      %v1932 = vunpack.c.l.b16 %v531
      %v1933 = vunpack.c.h.b16 %v531
      %v1934 = vunpack.c.l.b16 %v532
      %v1935 = vunpack.c.h.b16 %v532
      %v1936 = vunpack.c.l.b16 %v533
      %v1937 = vunpack.c.h.b16 %v533
      %v1938 = vunpack.c.l.b16 %v534
      %v1939 = vunpack.c.h.b16 %v534
      %v1940 = vunpack.c.l.b16 %v535
      %v1941 = vunpack.c.h.b16 %v535
      %v1942 = vunpack.c.l.b16 %v536
      %v1943 = vunpack.c.h.b16 %v536
      %v1944 = vunpack.c.l.b16 %v537
      %v1945 = vunpack.c.h.b16 %v537
      %v1946 = vunpack.c.l.b16 %v538
      %v1947 = vunpack.c.h.b16 %v538
      %v1948 = vunpack.c.l.b16 %v539
      %v1949 = vunpack.c.h.b16 %v539
      %v1950 = vunpack.c.l.b16 %v540
      %v1951 = vunpack.c.h.b16 %v540
      %v1952 = vunpack.c.l.b16 %v541
      %v1953 = vunpack.c.h.b16 %v541
      %v1954 = vunpack.c.l.b16 %v542
      %v1955 = vunpack.c.h.b16 %v542
      %v1956 = vunpack.c.l.b16 %v543
      %v1957 = vunpack.c.h.b16 %v543
      %v1958 = vunpack.c.l.b16 %v544
      %v1959 = vunpack.c.h.b16 %v544
      %v1960 = vunpack.c.l.b16 %v545
      %v1961 = vunpack.c.h.b16 %v545
      %v1962 = vunpack.c.l.b16 %v546
      %v1963 = vunpack.c.h.b16 %v546
      %v1964 = vunpack.c.l.b16 %v547
      %v1965 = vunpack.c.h.b16 %v547
      %v1966 = vunpack.c.l.b16 %v548
      %v1967 = vunpack.c.h.b16 %v548
      %v1968 = vunpack.c.l.b16 %v549
      %v1969 = vunpack.c.h.b16 %v549
      %v1970 = vunpack.c.l.b16 %v550
      %v1971 = vunpack.c.h.b16 %v550
      %v1972 = vunpack.c.l.b16 %v551
      %v1973 = vunpack.c.h.b16 %v551
      %v1974 = vunpack.c.l.b16 %v552
      %v1975 = vunpack.c.h.b16 %v552
      %v1976 = vunpack.c.l.b16 %v553
      %v1977 = vunpack.c.h.b16 %v553
      %v1978 = vunpack.c.l.b16 %v554
      %v1979 = vunpack.c.h.b16 %v554
      %v1980 = vunpack.c.l.b16 %v555
      %v1981 = vunpack.c.h.b16 %v555
      %v1982 = vunpack.c.l.b16 %v556
      %v1983 = vunpack.c.h.b16 %v556
      %v1984 = vunpack.c.l.b16 %v557
      %v1985 = vunpack.c.h.b16 %v557
      %v1986 = vunpack.c.l.b16 %v558
      %v1987 = vunpack.c.h.b16 %v558
      %v1988 = vunpack.c.l.b16 %v559
      %v1989 = vunpack.c.h.b16 %v559
      %v1990 = vunpack.c.l.b16 %v560
      %v1991 = vunpack.c.h.b16 %v560
      %v1992 = vunpack.c.l.b16 %v561
      %v1993 = vunpack.c.h.b16 %v561
      %v1994 = vunpack.c.l.b16 %v562
      %v1995 = vunpack.c.h.b16 %v562
      %v1996 = vunpack.c.l.b16 %v563
      %v1997 = vunpack.c.h.b16 %v563
      %v1998 = vunpack.c.l.b16 %v564
      %v1999 = vunpack.c.h.b16 %v564
      %v2000 = vunpack.c.l.b16 %v565
      %v2001 = vunpack.c.h.b16 %v565
      %v2002 = vunpack.c.l.b16 %v566
      %v2003 = vunpack.c.h.b16 %v566
      %v2004 = vunpack.c.l.b16 %v567
      %v2005 = vunpack.c.h.b16 %v567
      %v2006 = vunpack.c.l.b16 %v568
      %v2007 = vunpack.c.h.b16 %v568
      %v2008 = vunpack.c.l.b16 %v569
      %v2009 = vunpack.c.h.b16 %v569
      %v2010 = vunpack.c.l.b16 %v570
      %v2011 = vunpack.c.h.b16 %v570
      %v2012 = vunpack.c.l.b16 %v571
      %v2013 = vunpack.c.h.b16 %v571
      %v2014 = vunpack.c.l.b16 %v572
      %v2015 = vunpack.c.h.b16 %v572
      %v2016 = vunpack.c.l.b16 %v573
      %v2017 = vunpack.c.h.b16 %v573
      %v2018 = vunpack.c.l.b16 %v574
      %v2019 = vunpack.c.h.b16 %v574
      %v2020 = vunpack.c.l.b16 %v575
      %v2021 = vunpack.c.h.b16 %v575
      %v2022 = vunpack.c.l.b16 %v576
      %v2023 = vunpack.c.h.b16 %v576
      %v2024 = vunpack.c.l.b16 %v577
      %v2025 = vunpack.c.h.b16 %v577
      %v2026 = vunpack.c.l.b16 %v578
      %v2027 = vunpack.c.h.b16 %v578
      %v2028 = vunpack.c.l.b16 %v579
      %v2029 = vunpack.c.h.b16 %v579
      %v2030 = vunpack.c.l.b16 %v580
      %v2031 = vunpack.c.h.b16 %v580
      %v2032 = vunpack.c.l.b16 %v581
      %v2033 = vunpack.c.h.b16 %v581
      %v2034 = vunpack.c.l.b16 %v582
      %v2035 = vunpack.c.h.b16 %v582
      %v2036 = vunpack.c.l.b16 %v583
      %v2037 = vunpack.c.h.b16 %v583
      %v2038 = vunpack.c.l.b16 %v584
      %v2039 = vunpack.c.h.b16 %v584
      %v2040 = vunpack.c.l.b16 %v585
      %v2041 = vunpack.c.h.b16 %v585
      %v2042 = vunpack.c.l.b16 %v586
      %v2043 = vunpack.c.h.b16 %v586
      %v2044 = vunpack.c.l.b16 %v587
      %v2045 = vunpack.c.h.b16 %v587
      %v2046 = vunpack.c.l.b16 %v588
      %v2047 = vunpack.c.h.b16 %v588
      %v2048 = vunpack.c.l.b16 %v589
      %v2049 = vunpack.c.h.b16 %v589
      %v2050 = vunpack.c.l.b16 %v590
      %v2051 = vunpack.c.h.b16 %v590
      %v2052 = vunpack.c.l.b16 %v591
      %v2053 = vunpack.c.h.b16 %v591
      %v2054 = vunpack.c.l.b16 %v592
      %v2055 = vunpack.c.h.b16 %v592
      %v2056 = vunpack.c.l.b16 %v593
      %v2057 = vunpack.c.h.b16 %v593
      %v2058 = vunpack.c.l.b16 %v594
      %v2059 = vunpack.c.h.b16 %v594
      %v2060 = vunpack.c.l.b16 %v595
      %v2061 = vunpack.c.h.b16 %v595
      %v2062 = vunpack.c.l.b16 %v596
      %v2063 = vunpack.c.h.b16 %v596
      %v2064 = vunpack.c.l.b16 %v597
      %v2065 = vunpack.c.h.b16 %v597
      %v2066 = vunpack.c.l.b16 %v598
      %v2067 = vunpack.c.h.b16 %v598
      %v2068 = vunpack.c.l.b16 %v599
      %v2069 = vunpack.c.h.b16 %v599
      %v2070 = vunpack.c.l.b16 %v600
      %v2071 = vunpack.c.h.b16 %v600
      %v2072 = vunpack.c.l.b16 %v601
      %v2073 = vunpack.c.h.b16 %v601
      %v2074 = vunpack.c.l.b16 %v602
      %v2075 = vunpack.c.h.b16 %v602
      %v2076 = vunpack.c.l.b16 %v603
      %v2077 = vunpack.c.h.b16 %v603
      %v2078 = vunpack.c.l.b16 %v604
      %v2079 = vunpack.c.h.b16 %v604
      %v2080 = vunpack.c.l.b16 %v605
      %v2081 = vunpack.c.h.b16 %v605
      %v2082 = vunpack.c.l.b16 %v606
      %v2083 = vunpack.c.h.b16 %v606
      %v2084 = vunpack.c.l.b16 %v607
      %v2085 = vunpack.c.h.b16 %v607
      %v2086 = vunpack.c.l.b16 %v608
      %v2087 = vunpack.c.h.b16 %v608
      %v2088 = vunpack.c.l.b16 %v609
      %v2089 = vunpack.c.h.b16 %v609
      %v2090 = vunpack.c.l.b16 %v610
      %v2091 = vunpack.c.h.b16 %v610
      %v2092 = vunpack.c.l.b16 %v611
      %v2093 = vunpack.c.h.b16 %v611
      %v2094 = vunpack.c.l.b16 %v612
      %v2095 = vunpack.c.h.b16 %v612
      %v2096 = vunpack.c.l.b16 %v613
      %v2097 = vunpack.c.h.b16 %v613
      %v2098 = vunpack.c.l.b16 %v614
      %v2099 = vunpack.c.h.b16 %v614
      %v2100 = vunpack.c.l.b16 %v615
      %v2101 = vunpack.c.h.b16 %v615
      %v2102 = vunpack.c.l.b16 %v616
      %v2103 = vunpack.c.h.b16 %v616
      %v2104 = vunpack.c.l.b16 %v617
      %v2105 = vunpack.c.h.b16 %v617
      %v2106 = vunpack.c.l.b16 %v618
      %v2107 = vunpack.c.h.b16 %v618
      %v2108 = vunpack.c.l.b16 %v619
      %v2109 = vunpack.c.h.b16 %v619
      %v2110 = vunpack.c.l.b16 %v620
      %v2111 = vunpack.c.h.b16 %v620
      %v2112 = vunpack.c.l.b16 %v621
      %v2113 = vunpack.c.h.b16 %v621
      %v2114 = vunpack.c.l.b16 %v622
      %v2115 = vunpack.c.h.b16 %v622
      %v2116 = vunpack.c.l.b16 %v623
      %v2117 = vunpack.c.h.b16 %v623
      %v2118 = vunpack.c.l.b16 %v624
      %v2119 = vunpack.c.h.b16 %v624
      %v2120 = vunpack.c.l.b16 %v625
      %v2121 = vunpack.c.h.b16 %v625
      %v2122 = vunpack.c.l.b16 %v626
      %v2123 = vunpack.c.h.b16 %v626
      %v2124 = vunpack.c.l.b16 %v627
      %v2125 = vunpack.c.h.b16 %v627
      %v2126 = vunpack.c.l.b16 %v628
      %v2127 = vunpack.c.h.b16 %v628
      %v2128 = vunpack.c.l.b16 %v629
      %v2129 = vunpack.c.h.b16 %v629
      %v2130 = vunpack.c.l.b16 %v630
      %v2131 = vunpack.c.h.b16 %v630
      %v2132 = vunpack.c.l.b16 %v631
      %v2133 = vunpack.c.h.b16 %v631
      %v2134 = vunpack.c.l.b16 %v632
      %v2135 = vunpack.c.h.b16 %v632
      %v2136 = vunpack.c.l.b16 %v633
      %v2137 = vunpack.c.h.b16 %v633
      %v2138 = vunpack.c.l.b16 %v634
      %v2139 = vunpack.c.h.b16 %v634
      %v2140 = vunpack.c.l.b16 %v635
      %v2141 = vunpack.c.h.b16 %v635
      %v2142 = vunpack.c.l.b16 %v636
      %v2143 = vunpack.c.h.b16 %v636
      %v2144 = vunpack.c.l.b16 %v637
      %v2145 = vunpack.c.h.b16 %v637
      %v2146 = vunpack.c.l.b16 %v638
      %v2147 = vunpack.c.h.b16 %v638
      %v2148 = vunpack.c.l.b16 %v639
      %v2149 = vunpack.c.h.b16 %v639
      %v2150 = vunpack.c.l.b16 %v640
      %v2151 = vunpack.c.h.b16 %v640
      %v2152 = vunpack.c.l.b16 %v641
      %v2153 = vunpack.c.h.b16 %v641
      %v2154 = vunpack.c.l.b16 %v642
      %v2155 = vunpack.c.h.b16 %v642
      %v2156 = vunpack.c.l.b16 %v643
      %v2157 = vunpack.c.h.b16 %v643
      %v2158 = vunpack.c.l.b16 %v644
      %v2159 = vunpack.c.h.b16 %v644
      %v2160 = vunpack.c.l.b16 %v645
      %v2161 = vunpack.c.h.b16 %v645
      %v2162 = vunpack.c.l.b16 %v646
      %v2163 = vunpack.c.h.b16 %v646
      %v2164 = vunpack.c.l.b16 %v647
      %v2165 = vunpack.c.h.b16 %v647
      %v2166 = vunpack.c.l.b16 %v648
      %v2167 = vunpack.c.h.b16 %v648
      %v2168 = vunpack.c.l.b16 %v649
      %v2169 = vunpack.c.h.b16 %v649
      %v2170 = vunpack.c.l.b16 %v650
      %v2171 = vunpack.c.h.b16 %v650
      %v2172 = vunpack.c.l.b16 %v651
      %v2173 = vunpack.c.h.b16 %v651
      %v2174 = vunpack.c.l.b16 %v652
      %v2175 = vunpack.c.h.b16 %v652
      %v2176 = vunpack.c.l.b16 %v653
      %v2177 = vunpack.c.h.b16 %v653
      %v2178 = vunpack.c.l.b16 %v654
      %v2179 = vunpack.c.h.b16 %v654
      %v2180 = vunpack.c.l.b16 %v655
      %v2181 = vunpack.c.h.b16 %v655
      %v2182 = vunpack.c.l.b16 %v656
      %v2183 = vunpack.c.h.b16 %v656
      %v2184 = vunpack.c.l.b16 %v657
      %v2185 = vunpack.c.h.b16 %v657
      %v2186 = vunpack.c.l.b16 %v658
      %v2187 = vunpack.c.h.b16 %v658
      %v2188 = vunpack.c.l.b16 %v659
      %v2189 = vunpack.c.h.b16 %v659
      %v2190 = vunpack.c.l.b16 %v660
      %v2191 = vunpack.c.h.b16 %v660
      %v2192 = vunpack.c.l.b16 %v661
      %v2193 = vunpack.c.h.b16 %v661
      %v2194 = vunpack.c.l.b16 %v662
      %v2195 = vunpack.c.h.b16 %v662
      %v2196 = vunpack.c.l.b16 %v663
      %v2197 = vunpack.c.h.b16 %v663
      %v2198 = vunpack.c.l.b16 %v664
      %v2199 = vunpack.c.h.b16 %v664
      %v2200 = vunpack.c.l.b16 %v665
      %v2201 = vunpack.c.h.b16 %v665
      %v2202 = vunpack.c.l.b16 %v666
      %v2203 = vunpack.c.h.b16 %v666
      %v2204 = vunpack.c.l.b16 %v667
      %v2205 = vunpack.c.h.b16 %v667
      %v2206 = vunpack.c.l.b16 %v668
      %v2207 = vunpack.c.h.b16 %v668
      %v2208 = vunpack.c.l.b16 %v669
      %v2209 = vunpack.c.h.b16 %v669
      %v2210 = vunpack.c.l.b16 %v670
      %v2211 = vunpack.c.h.b16 %v670
      %v2212 = vunpack.c.l.b16 %v671
      %v2213 = vunpack.c.h.b16 %v671
      %v2214 = vunpack.c.l.b16 %v672
      %v2215 = vunpack.c.h.b16 %v672
      %v2216 = vunpack.c.l.b16 %v673
      %v2217 = vunpack.c.h.b16 %v673
      %v2218 = vunpack.c.l.b16 %v674
      %v2219 = vunpack.c.h.b16 %v674
      %v2220 = vunpack.c.l.b16 %v675
      %v2221 = vunpack.c.h.b16 %v675
      %v2222 = vunpack.c.l.b16 %v676
      %v2223 = vunpack.c.h.b16 %v676
      %v2224 = vunpack.c.l.b16 %v677
      %v2225 = vunpack.c.h.b16 %v677
      %v2226 = vunpack.c.l.b16 %v678
      %v2227 = vunpack.c.h.b16 %v678
      %v2228 = vunpack.c.l.b16 %v679
      %v2229 = vunpack.c.h.b16 %v679
      %v2230 = vunpack.c.l.b16 %v680
      %v2231 = vunpack.c.h.b16 %v680
      %v2232 = vunpack.c.l.b16 %v681
      %v2233 = vunpack.c.h.b16 %v681
      %v2234 = vunpack.c.l.b16 %v682
      %v2235 = vunpack.c.h.b16 %v682
      %v2236 = vunpack.c.l.b16 %v683
      %v2237 = vunpack.c.h.b16 %v683
      %v2238 = vunpack.c.l.b16 %v684
      %v2239 = vunpack.c.h.b16 %v684
      %v2240 = vunpack.c.l.b16 %v685
      %v2241 = vunpack.c.h.b16 %v685
      %v2242 = vunpack.c.l.b16 %v686
      %v2243 = vunpack.c.h.b16 %v686
      %v2244 = vunpack.c.l.b16 %v687
      %v2245 = vunpack.c.h.b16 %v687
      %v2246 = vunpack.c.l.b16 %v688
      %v2247 = vunpack.c.h.b16 %v688
      %v2248 = vunpack.c.l.b16 %v689
      %v2249 = vunpack.c.h.b16 %v689
      %v2250 = vunpack.c.l.b16 %v690
      %v2251 = vunpack.c.h.b16 %v690
      %v2252 = vunpack.c.l.b16 %v691
      %v2253 = vunpack.c.h.b16 %v691
      %v2254 = vunpack.c.l.b16 %v692
      %v2255 = vunpack.c.h.b16 %v692
      %v2256 = vunpack.c.l.b16 %v693
      %v2257 = vunpack.c.h.b16 %v693
      %v2258 = vunpack.c.l.b16 %v694
      %v2259 = vunpack.c.h.b16 %v694
      %v2260 = vunpack.c.l.b16 %v695
      %v2261 = vunpack.c.h.b16 %v695
      %v2262 = vunpack.c.l.b16 %v696
      %v2263 = vunpack.c.h.b16 %v696
      %v2264 = vunpack.c.l.b16 %v697
      %v2265 = vunpack.c.h.b16 %v697
      %v2266 = vunpack.c.l.b16 %v698
      %v2267 = vunpack.c.h.b16 %v698
      %v2268 = vunpack.c.l.b16 %v699
      %v2269 = vunpack.c.h.b16 %v699
      %v2270 = vunpack.c.l.b16 %v700
      %v2271 = vunpack.c.h.b16 %v700
      %v2272 = vunpack.c.l.b16 %v701
      %v2273 = vunpack.c.h.b16 %v701
      %v2274 = vunpack.c.l.b16 %v702
      %v2275 = vunpack.c.h.b16 %v702
      %v2276 = vunpack.c.l.b16 %v703
      %v2277 = vunpack.c.h.b16 %v703
      %v2278 = vunpack.c.l.b16 %v704
      %v2279 = vunpack.c.h.b16 %v704
      %v2280 = vunpack.c.l.b16 %v705
      %v2281 = vunpack.c.h.b16 %v705
      %v2282 = vunpack.c.l.b16 %v706
      %v2283 = vunpack.c.h.b16 %v706
      %v2284 = vunpack.c.l.b16 %v707
      %v2285 = vunpack.c.h.b16 %v707
      %v2286 = vunpack.c.l.b16 %v708
      %v2287 = vunpack.c.h.b16 %v708
      %v2288 = vunpack.c.l.b16 %v709
      %v2289 = vunpack.c.h.b16 %v709
      %v2290 = vunpack.c.l.b16 %v710
      %v2291 = vunpack.c.h.b16 %v710
      %v2292 = vunpack.c.l.b16 %v711
      %v2293 = vunpack.c.h.b16 %v711
      %v2294 = vunpack.c.l.b16 %v712
      %v2295 = vunpack.c.h.b16 %v712
      %v2296 = vunpack.c.l.b16 %v713
      %v2297 = vunpack.c.h.b16 %v713
      %v2298 = vunpack.c.l.b16 %v714
      %v2299 = vunpack.c.h.b16 %v714
      %v2300 = vunpack.c.l.b16 %v715
      %v2301 = vunpack.c.h.b16 %v715
      %v2302 = vunpack.c.l.b16 %v716
      %v2303 = vunpack.c.h.b16 %v716
      %v2304 = vunpack.c.l.b16 %v717
      %v2305 = vunpack.c.h.b16 %v717
      %v2306 = vunpack.c.l.b16 %v718
      %v2307 = vunpack.c.h.b16 %v718
      %v2308 = vunpack.c.l.b16 %v719
      %v2309 = vunpack.c.h.b16 %v719
      %v2310 = vunpack.c.l.b16 %v720
      %v2311 = vunpack.c.h.b16 %v720
      %v2312 = vunpack.c.l.b16 %v721
      %v2313 = vunpack.c.h.b16 %v721
      %v2314 = vunpack.c.l.b16 %v722
      %v2315 = vunpack.c.h.b16 %v722
      %v2316 = vunpack.c.l.b16 %v723
      %v2317 = vunpack.c.h.b16 %v723
      %v2318 = vunpack.c.l.b16 %v724
      %v2319 = vunpack.c.h.b16 %v724
      %v2320 = vunpack.c.l.b16 %v725
      %v2321 = vunpack.c.h.b16 %v725
      %v2322 = vunpack.c.l.b16 %v726
      %v2323 = vunpack.c.h.b16 %v726
      %v2324 = vunpack.c.l.b16 %v727
      %v2325 = vunpack.c.h.b16 %v727
      %v2326 = vunpack.c.l.b16 %v728
      %v2327 = vunpack.c.h.b16 %v728
      %v2328 = vunpack.c.l.b16 %v729
      %v2329 = vunpack.c.h.b16 %v729
      %v2330 = vunpack.c.l.b16 %v730
      %v2331 = vunpack.c.h.b16 %v730
      %v2332 = vunpack.c.l.b16 %v731
      %v2333 = vunpack.c.h.b16 %v731
      %v2334 = vunpack.c.l.b16 %v732
      %v2335 = vunpack.c.h.b16 %v732
      %v2336 = vunpack.c.l.b16 %v733
      %v2337 = vunpack.c.h.b16 %v733
      %v2338 = vunpack.c.l.b16 %v734
      %v2339 = vunpack.c.h.b16 %v734
      %v2340 = vunpack.c.l.b16 %v735
      %v2341 = vunpack.c.h.b16 %v735
      %v2342 = vunpack.c.l.b16 %v736
      %v2343 = vunpack.c.h.b16 %v736
      %v2344 = vunpack.c.l.b16 %v737
      %v2345 = vunpack.c.h.b16 %v737
      %v2346 = vunpack.c.l.b16 %v738
      %v2347 = vunpack.c.h.b16 %v738
      %v2348 = vunpack.c.l.b16 %v739
      %v2349 = vunpack.c.h.b16 %v739
      %v2350 = vunpack.c.l.b16 %v740
      %v2351 = vunpack.c.h.b16 %v740
      %v2352 = vunpack.c.l.b16 %v741
      %v2353 = vunpack.c.h.b16 %v741
      %v2354 = vunpack.c.l.b16 %v742
      %v2355 = vunpack.c.h.b16 %v742
      %v2356 = vunpack.c.l.b16 %v743
      %v2357 = vunpack.c.h.b16 %v743
      %v2358 = vunpack.c.l.b16 %v744
      %v2359 = vunpack.c.h.b16 %v744
      %v2360 = vunpack.c.l.b16 %v745
      %v2361 = vunpack.c.h.b16 %v745
      %v2362 = vunpack.c.l.b16 %v746
      %v2363 = vunpack.c.h.b16 %v746
      %v2364 = vunpack.c.l.b16 %v747
      %v2365 = vunpack.c.h.b16 %v747
      %v2366 = vunpack.c.l.b16 %v748
      %v2367 = vunpack.c.h.b16 %v748
      %v2368 = vunpack.c.l.b16 %v749
      %v2369 = vunpack.c.h.b16 %v749
      %v2370 = vunpack.c.l.b16 %v750
      %v2371 = vunpack.c.h.b16 %v750
      %v2372 = vunpack.c.l.b16 %v751
      %v2373 = vunpack.c.h.b16 %v751
      %v2374 = vunpack.c.l.b16 %v752
      %v2375 = vunpack.c.h.b16 %v752
      %v2376 = vunpack.c.l.b16 %v753
      %v2377 = vunpack.c.h.b16 %v753
      %v2378 = vunpack.c.l.b16 %v754
      %v2379 = vunpack.c.h.b16 %v754
      %v2380 = vunpack.c.l.b16 %v755
      %v2381 = vunpack.c.h.b16 %v755
      %v2382 = vunpack.c.l.b16 %v756
      %v2383 = vunpack.c.h.b16 %v756
      %v2384 = vunpack.c.l.b16 %v757
      %v2385 = vunpack.c.h.b16 %v757
      %v2386 = vunpack.c.l.b16 %v758
      %v2387 = vunpack.c.h.b16 %v758
      %v2388 = vunpack.c.l.b16 %v759
      %v2389 = vunpack.c.h.b16 %v759
      %v2390 = vunpack.c.l.b16 %v760
      %v2391 = vunpack.c.h.b16 %v760
      %v2392 = vunpack.c.l.b16 %v761
      %v2393 = vunpack.c.h.b16 %v761
      %v2394 = vunpack.c.l.b16 %v762
      %v2395 = vunpack.c.h.b16 %v762
      %v2396 = vunpack.c.l.b16 %v763
      %v2397 = vunpack.c.h.b16 %v763
      %v2398 = vunpack.c.l.b16 %v764
      %v2399 = vunpack.c.h.b16 %v764
      %v2400 = vunpack.c.l.b16 %v765
      %v2401 = vunpack.c.h.b16 %v765
      %v2402 = vunpack.c.l.b16 %v766
      %v2403 = vunpack.c.h.b16 %v766
      %v2404 = vunpack.c.l.b16 %v767
      %v2405 = vunpack.c.h.b16 %v767
      %v2406 = vunpack.c.l.b16 %v768
      %v2407 = vunpack.c.h.b16 %v768
      %v2408 = vunpack.c.l.b16 %v769
      %v2409 = vunpack.c.h.b16 %v769
      %v2410 = vunpack.c.l.b16 %v770
      %v2411 = vunpack.c.h.b16 %v770
      %v2412 = vunpack.c.l.b16 %v771
      %v2413 = vunpack.c.h.b16 %v771
      %v2414 = vunpack.c.l.b16 %v772
      %v2415 = vunpack.c.h.b16 %v772
      %v2416 = vunpack.c.l.b16 %v773
      %v2417 = vunpack.c.h.b16 %v773
      %v2418 = vunpack.c.l.b16 %v774
      %v2419 = vunpack.c.h.b16 %v774
      %v2420 = vunpack.c.l.b16 %v775
      %v2421 = vunpack.c.h.b16 %v775
      %v2422 = vunpack.c.l.b16 %v776
      %v2423 = vunpack.c.h.b16 %v776
      %v2424 = vunpack.c.l.b16 %v777
      %v2425 = vunpack.c.h.b16 %v777
      %v2426 = vunpack.c.l.b16 %v778
      %v2427 = vunpack.c.h.b16 %v778
      %v2428 = vunpack.c.l.b16 %v779
      %v2429 = vunpack.c.h.b16 %v779
      %v2430 = vunpack.c.l.b16 %v780
      %v2431 = vunpack.c.h.b16 %v780
      %v2432 = vunpack.c.l.b16 %v781
      %v2433 = vunpack.c.h.b16 %v781
      %v2434 = vunpack.c.l.b16 %v782
      %v2435 = vunpack.c.h.b16 %v782
      %v2436 = vunpack.c.l.b16 %v783
      %v2437 = vunpack.c.h.b16 %v783
      %v2438 = vunpack.c.l.b16 %v784
      %v2439 = vunpack.c.h.b16 %v784
      %v2440 = vunpack.c.l.b16 %v785
      %v2441 = vunpack.c.h.b16 %v785
      %v2442 = vunpack.c.l.b16 %v786
      %v2443 = vunpack.c.h.b16 %v786
      %v2444 = vunpack.c.l.b16 %v787
      %v2445 = vunpack.c.h.b16 %v787
      %v2446 = vunpack.c.l.b16 %v788
      %v2447 = vunpack.c.h.b16 %v788
      %v2448 = vunpack.c.l.b16 %v789
      %v2449 = vunpack.c.h.b16 %v789
      %v2450 = vunpack.c.l.b16 %v790
      %v2451 = vunpack.c.h.b16 %v790
      %v2452 = vunpack.c.l.b16 %v791
      %v2453 = vunpack.c.h.b16 %v791
      %v2454 = vunpack.c.l.b16 %v792
      %v2455 = vunpack.c.h.b16 %v792
      %v2456 = vunpack.c.l.b16 %v793
      %v2457 = vunpack.c.h.b16 %v793
      %v2458 = vunpack.c.l.b16 %v794
      %v2459 = vunpack.c.h.b16 %v794
      %v2460 = vunpack.c.l.b16 %v795
      %v2461 = vunpack.c.h.b16 %v795
      %v2462 = vunpack.c.l.b16 %v796
      %v2463 = vunpack.c.h.b16 %v796
      %v2464 = vunpack.c.l.b16 %v797
      %v2465 = vunpack.c.h.b16 %v797
      %v2466 = vunpack.c.l.b16 %v798
      %v2467 = vunpack.c.h.b16 %v798
      %v2468 = vunpack.c.l.b16 %v799
      %v2469 = vunpack.c.h.b16 %v799
      %v2470 = vunpack.c.l.b16 %v800
      %v2471 = vunpack.c.h.b16 %v800
      %v2472 = vunpack.c.l.b16 %v801
      %v2473 = vunpack.c.h.b16 %v801
      %v2474 = vunpack.c.l.b16 %v802
      %v2475 = vunpack.c.h.b16 %v802
      %v2476 = vunpack.c.l.b16 %v803
      %v2477 = vunpack.c.h.b16 %v803
      %v2478 = vunpack.c.l.b16 %v804
      %v2479 = vunpack.c.h.b16 %v804
      %v2480 = vunpack.c.l.b16 %v805
      %v2481 = vunpack.c.h.b16 %v805
      %v2482 = vunpack.c.l.b16 %v806
      %v2483 = vunpack.c.h.b16 %v806
      %v2484 = vunpack.c.l.b16 %v807
      %v2485 = vunpack.c.h.b16 %v807
      %v2486 = vunpack.c.l.b16 %v808
      %v2487 = vunpack.c.h.b16 %v808
      %v2488 = vunpack.c.l.b16 %v809
      %v2489 = vunpack.c.h.b16 %v809
      %v2490 = vunpack.c.l.b16 %v810
      %v2491 = vunpack.c.h.b16 %v810
      %v2492 = vunpack.c.l.b16 %v811
      %v2493 = vunpack.c.h.b16 %v811
      %v2494 = vunpack.c.l.b16 %v812
      %v2495 = vunpack.c.h.b16 %v812
      %v2496 = vunpack.c.l.b16 %v813
      %v2497 = vunpack.c.h.b16 %v813
      %v2498 = vunpack.c.l.b16 %v814
      %v2499 = vunpack.c.h.b16 %v814
      %v2500 = vunpack.c.l.b16 %v815
      %v2501 = vunpack.c.h.b16 %v815
      %v2502 = vunpack.c.l.b16 %v816
      %v2503 = vunpack.c.h.b16 %v816
      %v2504 = vunpack.c.l.b16 %v817
      %v2505 = vunpack.c.h.b16 %v817
      %v2506 = vunpack.c.l.b16 %v818
      %v2507 = vunpack.c.h.b16 %v818
      %v2508 = vunpack.c.l.b16 %v819
      %v2509 = vunpack.c.h.b16 %v819
      %v2510 = vunpack.c.l.b16 %v820
      %v2511 = vunpack.c.h.b16 %v820
      %v2512 = vunpack.c.l.b16 %v821
      %v2513 = vunpack.c.h.b16 %v821
      %v2514 = vunpack.c.l.b16 %v822
      %v2515 = vunpack.c.h.b16 %v822
      %v2516 = vunpack.c.l.b16 %v823
      %v2517 = vunpack.c.h.b16 %v823
      %v2518 = vunpack.c.l.b16 %v824
      %v2519 = vunpack.c.h.b16 %v824
      %v2520 = vunpack.c.l.b16 %v825
      %v2521 = vunpack.c.h.b16 %v825
      %v2522 = vunpack.c.l.b16 %v826
      %v2523 = vunpack.c.h.b16 %v826
      %v2524 = vunpack.c.l.b16 %v827
      %v2525 = vunpack.c.h.b16 %v827
      %v2526 = vunpack.c.l.b16 %v828
      %v2527 = vunpack.c.h.b16 %v828
      %v2528 = vunpack.c.l.b16 %v829
      %v2529 = vunpack.c.h.b16 %v829
      %v2530 = vunpack.c.l.b16 %v830
      %v2531 = vunpack.c.h.b16 %v830
      %v2532 = vunpack.c.l.b16 %v831
      %v2533 = vunpack.c.h.b16 %v831
      %v2534 = vunpack.c.l.b16 %v832
      %v2535 = vunpack.c.h.b16 %v832
      %v2536 = vunpack.c.l.b16 %v833
      %v2537 = vunpack.c.h.b16 %v833
      %v2538 = vunpack.c.l.b16 %v834
      %v2539 = vunpack.c.h.b16 %v834
      %v2540 = vunpack.c.l.b16 %v835
      %v2541 = vunpack.c.h.b16 %v835
      %v2542 = vunpack.c.l.b16 %v836
      %v2543 = vunpack.c.h.b16 %v836
      %v2544 = vunpack.c.l.b16 %v837
      %v2545 = vunpack.c.h.b16 %v837
      %v2546 = vunpack.c.l.b16 %v838
      %v2547 = vunpack.c.h.b16 %v838
      %v2548 = vunpack.c.l.b16 %v839
      %v2549 = vunpack.c.h.b16 %v839
      %v2550 = vunpack.c.l.b16 %v840
      %v2551 = vunpack.c.h.b16 %v840
      %v2552 = vunpack.c.l.b16 %v841
      %v2553 = vunpack.c.h.b16 %v841
      %v2554 = vunpack.c.l.b16 %v842
      %v2555 = vunpack.c.h.b16 %v842
      %v2556 = vunpack.c.l.b16 %v843
      %v2557 = vunpack.c.h.b16 %v843
      %v2558 = vunpack.c.l.b16 %v844
      %v2559 = vunpack.c.h.b16 %v844
      %v2560 = vunpack.c.l.b16 %v845
      %v2561 = vunpack.c.h.b16 %v845
      %v2562 = vunpack.c.l.b16 %v846
      %v2563 = vunpack.c.h.b16 %v846
      %v2564 = vunpack.c.l.b16 %v847
      %v2565 = vunpack.c.h.b16 %v847
      %v2566 = vunpack.c.l.b16 %v848
      %v2567 = vunpack.c.h.b16 %v848
      %v2568 = vunpack.c.l.b16 %v849
      %v2569 = vunpack.c.h.b16 %v849
      %v2570 = vunpack.c.l.b16 %v850
      %v2571 = vunpack.c.h.b16 %v850
      %v2572 = vunpack.c.l.b16 %v851
      %v2573 = vunpack.c.h.b16 %v851
      %v2574 = vunpack.c.l.b16 %v852
      %v2575 = vunpack.c.h.b16 %v852
      %v2576 = vunpack.c.l.b16 %v853
      %v2577 = vunpack.c.h.b16 %v853
      %v2578 = vunpack.c.l.b16 %v854
      %v2579 = vunpack.c.h.b16 %v854
      %v2580 = vunpack.c.l.b16 %v855
      %v2581 = vunpack.c.h.b16 %v855
      %v2582 = vunpack.c.l.b16 %v856
      %v2583 = vunpack.c.h.b16 %v856
      %v2584 = vunpack.c.l.b16 %v857
      %v2585 = vunpack.c.h.b16 %v857
      %v2586 = vunpack.c.l.b16 %v858
      %v2587 = vunpack.c.h.b16 %v858
      %v2588 = vunpack.c.l.b16 %v859
      %v2589 = vunpack.c.h.b16 %v859
      %v2590 = vunpack.c.l.b16 %v860
      %v2591 = vunpack.c.h.b16 %v860
      %v2592 = vunpack.c.l.b16 %v861
      %v2593 = vunpack.c.h.b16 %v861
      %v2594 = vunpack.c.l.b16 %v862
      %v2595 = vunpack.c.h.b16 %v862
      %v2596 = vunpack.c.l.b16 %v863
      %v2597 = vunpack.c.h.b16 %v863
      %v2598 = vunpack.c.l.b16 %v864
      %v2599 = vunpack.c.h.b16 %v864
      %v2600 = vunpack.c.l.b16 %v865
      %v2601 = vunpack.c.h.b16 %v865
      %v2602 = vunpack.c.l.b16 %v866
      %v2603 = vunpack.c.h.b16 %v866
      %v2604 = vunpack.c.l.b16 %v867
      %v2605 = vunpack.c.h.b16 %v867
      %v2606 = vunpack.c.l.b16 %v868
      %v2607 = vunpack.c.h.b16 %v868
      %v2608 = vunpack.c.l.b16 %v869
      %v2609 = vunpack.c.h.b16 %v869
      %v2610 = vunpack.c.l.b16 %v870
      %v2611 = vunpack.c.h.b16 %v870
      %v2612 = vunpack.c.l.b16 %v871
      %v2613 = vunpack.c.h.b16 %v871
      %v2614 = vunpack.c.l.b16 %v872
      %v2615 = vunpack.c.h.b16 %v872
      %v2616 = vunpack.c.l.b16 %v873
      %v2617 = vunpack.c.h.b16 %v873
      %v2618 = vunpack.c.l.b16 %v874
      %v2619 = vunpack.c.h.b16 %v874
      %v2620 = vunpack.c.l.b16 %v875
      %v2621 = vunpack.c.h.b16 %v875
      %v2622 = vunpack.c.l.b16 %v876
      %v2623 = vunpack.c.h.b16 %v876
      %v2624 = vunpack.c.l.b16 %v877
      %v2625 = vunpack.c.h.b16 %v877
      %v2626 = vunpack.c.l.b16 %v878
      %v2627 = vunpack.c.h.b16 %v878
      %v2628 = vunpack.c.l.b16 %v879
      %v2629 = vunpack.c.h.b16 %v879
      %v2630 = vunpack.c.l.b16 %v880
      %v2631 = vunpack.c.h.b16 %v880
      %v2632 = vunpack.c.l.b16 %v881
      %v2633 = vunpack.c.h.b16 %v881
      %v2634 = vunpack.c.l.b16 %v882
      %v2635 = vunpack.c.h.b16 %v882
      %v2636 = vunpack.c.l.b16 %v883
      %v2637 = vunpack.c.h.b16 %v883
      %v2638 = vunpack.c.l.b16 %v884
      %v2639 = vunpack.c.h.b16 %v884
      %v2640 = vunpack.c.l.b16 %v885
      %v2641 = vunpack.c.h.b16 %v885
      %v2642 = vunpack.c.l.b16 %v886
      %v2643 = vunpack.c.h.b16 %v886
      %v2644 = vunpack.c.l.b16 %v887
      %v2645 = vunpack.c.h.b16 %v887
      %v2646 = vunpack.c.l.b16 %v888
      %v2647 = vunpack.c.h.b16 %v888
      %v2648 = vunpack.c.l.b16 %v889
      %v2649 = vunpack.c.h.b16 %v889
      %v2650 = vunpack.c.l.b16 %v890
      %v2651 = vunpack.c.h.b16 %v890
      %v2652 = vunpack.c.l.b16 %v891
      %v2653 = vunpack.c.h.b16 %v891
      %v2654 = vunpack.c.l.b16 %v892
      %v2655 = vunpack.c.h.b16 %v892
      %v2656 = vunpack.c.l.b16 %v893
      %v2657 = vunpack.c.h.b16 %v893
      %v2658 = vunpack.c.l.b16 %v894
      %v2659 = vunpack.c.h.b16 %v894
      %v2660 = vunpack.c.l.b16 %v895
      %v2661 = vunpack.c.h.b16 %v895
      %v2662 = vunpack.c.l.b16 %v896
      %v2663 = vunpack.c.h.b16 %v896
      %v2664 = vunpack.c.l.b16 %v897
      %v2665 = vunpack.c.h.b16 %v897
      %v2666 = vunpack.c.l.b16 %v898
      %v2667 = vunpack.c.h.b16 %v898
      %v2668 = vunpack.c.l.b16 %v899
      %v2669 = vunpack.c.h.b16 %v899
      %v2670 = vunpack.c.l.b16 %v900
      %v2671 = vunpack.c.h.b16 %v900
      %v2672 = vunpack.c.l.b16 %v901
      %v2673 = vunpack.c.h.b16 %v901
      %v2674 = vunpack.c.l.b16 %v902
      %v2675 = vunpack.c.h.b16 %v902
      %v2676 = vunpack.c.l.b16 %v903
      %v2677 = vunpack.c.h.b16 %v903
      %v2678 = vunpack.c.l.b16 %v904
      %v2679 = vunpack.c.h.b16 %v904
      %v2680 = vunpack.c.l.b16 %v905
      %v2681 = vunpack.c.h.b16 %v905
      %v2682 = vunpack.c.l.b16 %v906
      %v2683 = vunpack.c.h.b16 %v906
      %v2684 = vunpack.c.l.b16 %v907
      %v2685 = vunpack.c.h.b16 %v907
      %v2686 = vunpack.c.l.b16 %v908
      %v2687 = vunpack.c.h.b16 %v908
      %v2688 = vunpack.c.l.b16 %v909
      %v2689 = vunpack.c.h.b16 %v909
      %v2690 = vunpack.c.l.b16 %v910
      %v2691 = vunpack.c.h.b16 %v910
      %v2692 = vunpack.c.l.b16 %v911
      %v2693 = vunpack.c.h.b16 %v911
      %v2694 = vunpack.c.l.b16 %v912
      %v2695 = vunpack.c.h.b16 %v912
      %v2696 = vunpack.c.l.b16 %v913
      %v2697 = vunpack.c.h.b16 %v913
      %v2698 = vunpack.c.l.b16 %v914
      %v2699 = vunpack.c.h.b16 %v914
      %v2700 = vunpack.c.l.b16 %v915
      %v2701 = vunpack.c.h.b16 %v915
      %v2702 = vunpack.c.l.b16 %v916
      %v2703 = vunpack.c.h.b16 %v916
      %v2704 = vunpack.c.l.b16 %v917
      %v2705 = vunpack.c.h.b16 %v917
      %v2706 = vunpack.c.l.b16 %v918
      %v2707 = vunpack.c.h.b16 %v918
      %v2708 = vunpack.c.l.b16 %v919
      %v2709 = vunpack.c.h.b16 %v919
      %v2710 = vunpack.c.l.b16 %v920
      %v2711 = vunpack.c.h.b16 %v920
      %v2712 = vunpack.c.l.b16 %v921
      %v2713 = vunpack.c.h.b16 %v921
      %v2714 = vpack.c.b16 %v1574, %v1562
      %v2715 = vpack.c.b16 %v1575, %v1563
      %v2716 = vpack.c.b16 %v1576, %v1564
      %v2717 = vpack.c.b16 %v1577, %v1565
      %v2718 = vpack.c.b16 %v1578, %v1566
      %v2719 = vpack.c.b16 %v1579, %v1567
      %v2720 = vpack.c.b16 %v1580, %v1568
      %v2721 = vpack.c.b16 %v1581, %v1569
      %v2722 = vpack.c.b16 %v1582, %v1570
      %v2723 = vpack.c.b16 %v1583, %v1571
      %v2724 = vpack.c.b16 %v1584, %v1572
      %v2725 = vpack.c.b16 %v1585, %v1573
      %v2726 = vpack.c.b16 %v1598, %v1586
      %v2727 = vpack.c.b16 %v1599, %v1587
      %v2728 = vpack.c.b16 %v1600, %v1588
      %v2729 = vpack.c.b16 %v1601, %v1589
      %v2730 = vpack.c.b16 %v1602, %v1590
      %v2731 = vpack.c.b16 %v1603, %v1591
      %v2732 = vpack.c.b16 %v1604, %v1592
      %v2733 = vpack.c.b16 %v1605, %v1593
      %v2734 = vpack.c.b16 %v1606, %v1594
      %v2735 = vpack.c.b16 %v1607, %v1595
      %v2736 = vpack.c.b16 %v1608, %v1596
      %v2737 = vpack.c.b16 %v1609, %v1597
      %v2738 = vpack.c.b16 %v1622, %v1610
      %v2739 = vpack.c.b16 %v1623, %v1611
      %v2740 = vpack.c.b16 %v1624, %v1612
      %v2741 = vpack.c.b16 %v1625, %v1613
      %v2742 = vpack.c.b16 %v1626, %v1614
      %v2743 = vpack.c.b16 %v1627, %v1615
      %v2744 = vpack.c.b16 %v1628, %v1616
      %v2745 = vpack.c.b16 %v1629, %v1617
      %v2746 = vpack.c.b16 %v1630, %v1618
      %v2747 = vpack.c.b16 %v1631, %v1619
      %v2748 = vpack.c.b16 %v1632, %v1620
      %v2749 = vpack.c.b16 %v1633, %v1621
      %v2750 = vpack.c.b16 %v1646, %v1634
      %v2751 = vpack.c.b16 %v1647, %v1635
      %v2752 = vpack.c.b16 %v1648, %v1636
      %v2753 = vpack.c.b16 %v1649, %v1637
      %v2754 = vpack.c.b16 %v1650, %v1638
      %v2755 = vpack.c.b16 %v1651, %v1639
      %v2756 = vpack.c.b16 %v1652, %v1640
      %v2757 = vpack.c.b16 %v1653, %v1641
      %v2758 = vpack.c.b16 %v1654, %v1642
      %v2759 = vpack.c.b16 %v1655, %v1643
      %v2760 = vpack.c.b16 %v1656, %v1644
      %v2761 = vpack.c.b16 %v1657, %v1645
      %v2762 = vpack.c.b16 %v1670, %v1658
      %v2763 = vpack.c.b16 %v1671, %v1659
      %v2764 = vpack.c.b16 %v1672, %v1660
      %v2765 = vpack.c.b16 %v1673, %v1661
      %v2766 = vpack.c.b16 %v1674, %v1662
      %v2767 = vpack.c.b16 %v1675, %v1663
      %v2768 = vpack.c.b16 %v1676, %v1664
      %v2769 = vpack.c.b16 %v1677, %v1665
      %v2770 = vpack.c.b16 %v1678, %v1666
      %v2771 = vpack.c.b16 %v1679, %v1667
      %v2772 = vpack.c.b16 %v1680, %v1668
      %v2773 = vpack.c.b16 %v1681, %v1669
      %v2774 = vpack.c.b16 %v1694, %v1682
      %v2775 = vpack.c.b16 %v1695, %v1683
      %v2776 = vpack.c.b16 %v1696, %v1684
      %v2777 = vpack.c.b16 %v1697, %v1685
      %v2778 = vpack.c.b16 %v1698, %v1686
      %v2779 = vpack.c.b16 %v1699, %v1687
      %v2780 = vpack.c.b16 %v1700, %v1688
      %v2781 = vpack.c.b16 %v1701, %v1689
      %v2782 = vpack.c.b16 %v1702, %v1690
      %v2783 = vpack.c.b16 %v1703, %v1691
      %v2784 = vpack.c.b16 %v1704, %v1692
      %v2785 = vpack.c.b16 %v1705, %v1693
      %v2786 = vpack.c.b16 %v1718, %v1706
      %v2787 = vpack.c.b16 %v1719, %v1707
      %v2788 = vpack.c.b16 %v1720, %v1708
      %v2789 = vpack.c.b16 %v1721, %v1709
      %v2790 = vpack.c.b16 %v1722, %v1710
      %v2791 = vpack.c.b16 %v1723, %v1711
      %v2792 = vpack.c.b16 %v1724, %v1712
      %v2793 = vpack.c.b16 %v1725, %v1713
      %v2794 = vpack.c.b16 %v1726, %v1714
      %v2795 = vpack.c.b16 %v1727, %v1715
      %v2796 = vpack.c.b16 %v1728, %v1716
      %v2797 = vpack.c.b16 %v1729, %v1717
      %v2798 = vpack.c.b16 %v1742, %v1730
      %v2799 = vpack.c.b16 %v1743, %v1731
      %v2800 = vpack.c.b16 %v1744, %v1732
      %v2801 = vpack.c.b16 %v1745, %v1733
      %v2802 = vpack.c.b16 %v1746, %v1734
      %v2803 = vpack.c.b16 %v1747, %v1735
      %v2804 = vpack.c.b16 %v1748, %v1736
      %v2805 = vpack.c.b16 %v1749, %v1737
      %v2806 = vpack.c.b16 %v1750, %v1738
      %v2807 = vpack.c.b16 %v1751, %v1739
      %v2808 = vpack.c.b16 %v1752, %v1740
      %v2809 = vpack.c.b16 %v1753, %v1741
      %v2810 = vpack.c.b16 %v1766, %v1754
      %v2811 = vpack.c.b16 %v1767, %v1755
      %v2812 = vpack.c.b16 %v1768, %v1756
      %v2813 = vpack.c.b16 %v1769, %v1757
      %v2814 = vpack.c.b16 %v1770, %v1758
      %v2815 = vpack.c.b16 %v1771, %v1759
      %v2816 = vpack.c.b16 %v1772, %v1760
      %v2817 = vpack.c.b16 %v1773, %v1761
      %v2818 = vpack.c.b16 %v1774, %v1762
      %v2819 = vpack.c.b16 %v1775, %v1763
      %v2820 = vpack.c.b16 %v1776, %v1764
      %v2821 = vpack.c.b16 %v1777, %v1765
      %v2822 = vpack.c.b16 %v1790, %v1778
      %v2823 = vpack.c.b16 %v1791, %v1779
      %v2824 = vpack.c.b16 %v1792, %v1780
      %v2825 = vpack.c.b16 %v1793, %v1781
      %v2826 = vpack.c.b16 %v1794, %v1782
      %v2827 = vpack.c.b16 %v1795, %v1783
      %v2828 = vpack.c.b16 %v1796, %v1784
      %v2829 = vpack.c.b16 %v1797, %v1785
      %v2830 = vpack.c.b16 %v1798, %v1786
      %v2831 = vpack.c.b16 %v1799, %v1787
      %v2832 = vpack.c.b16 %v1800, %v1788
      %v2833 = vpack.c.b16 %v1801, %v1789
      %v2834 = vpack.c.b16 %v1814, %v1802
      %v2835 = vpack.c.b16 %v1815, %v1803
      %v2836 = vpack.c.b16 %v1816, %v1804
      %v2837 = vpack.c.b16 %v1817, %v1805
      %v2838 = vpack.c.b16 %v1818, %v1806
      %v2839 = vpack.c.b16 %v1819, %v1807
      %v2840 = vpack.c.b16 %v1820, %v1808
      %v2841 = vpack.c.b16 %v1821, %v1809
      %v2842 = vpack.c.b16 %v1822, %v1810
      %v2843 = vpack.c.b16 %v1823, %v1811
      %v2844 = vpack.c.b16 %v1824, %v1812
      %v2845 = vpack.c.b16 %v1825, %v1813
      %v2846 = vpack.c.b16 %v1838, %v1826
      %v2847 = vpack.c.b16 %v1839, %v1827
      %v2848 = vpack.c.b16 %v1840, %v1828
      %v2849 = vpack.c.b16 %v1841, %v1829
      %v2850 = vpack.c.b16 %v1842, %v1830
      %v2851 = vpack.c.b16 %v1843, %v1831
      %v2852 = vpack.c.b16 %v1844, %v1832
      %v2853 = vpack.c.b16 %v1845, %v1833
      %v2854 = vpack.c.b16 %v1846, %v1834
      %v2855 = vpack.c.b16 %v1847, %v1835
      %v2856 = vpack.c.b16 %v1848, %v1836
      %v2857 = vpack.c.b16 %v1849, %v1837
      %v2858 = vpack.c.b16 %v1862, %v1850
      %v2859 = vpack.c.b16 %v1863, %v1851
      %v2860 = vpack.c.b16 %v1864, %v1852
      %v2861 = vpack.c.b16 %v1865, %v1853
      %v2862 = vpack.c.b16 %v1866, %v1854
      %v2863 = vpack.c.b16 %v1867, %v1855
      %v2864 = vpack.c.b16 %v1868, %v1856
      %v2865 = vpack.c.b16 %v1869, %v1857
      %v2866 = vpack.c.b16 %v1870, %v1858
      %v2867 = vpack.c.b16 %v1871, %v1859
      %v2868 = vpack.c.b16 %v1872, %v1860
      %v2869 = vpack.c.b16 %v1873, %v1861
      %v2870 = vpack.c.b16 %v1886, %v1874
      %v2871 = vpack.c.b16 %v1887, %v1875
      %v2872 = vpack.c.b16 %v1888, %v1876
      %v2873 = vpack.c.b16 %v1889, %v1877
      %v2874 = vpack.c.b16 %v1890, %v1878
      %v2875 = vpack.c.b16 %v1891, %v1879
      %v2876 = vpack.c.b16 %v1892, %v1880
      %v2877 = vpack.c.b16 %v1893, %v1881
      %v2878 = vpack.c.b16 %v1894, %v1882
      %v2879 = vpack.c.b16 %v1895, %v1883
      %v2880 = vpack.c.b16 %v1896, %v1884
      %v2881 = vpack.c.b16 %v1897, %v1885
      %v2882 = vpack.c.b16 %v1910, %v1898
      %v2883 = vpack.c.b16 %v1911, %v1899
      %v2884 = vpack.c.b16 %v1912, %v1900
      %v2885 = vpack.c.b16 %v1913, %v1901
      %v2886 = vpack.c.b16 %v1914, %v1902
      %v2887 = vpack.c.b16 %v1915, %v1903
      %v2888 = vpack.c.b16 %v1916, %v1904
      %v2889 = vpack.c.b16 %v1917, %v1905
      %v2890 = vpack.c.b16 %v1918, %v1906
      %v2891 = vpack.c.b16 %v1919, %v1907
      %v2892 = vpack.c.b16 %v1920, %v1908
      %v2893 = vpack.c.b16 %v1921, %v1909
      %v2894 = vpack.c.b16 %v1934, %v1922
      %v2895 = vpack.c.b16 %v1935, %v1923
      %v2896 = vpack.c.b16 %v1936, %v1924
      %v2897 = vpack.c.b16 %v1937, %v1925
      %v2898 = vpack.c.b16 %v1938, %v1926
      %v2899 = vpack.c.b16 %v1939, %v1927
      %v2900 = vpack.c.b16 %v1940, %v1928
      %v2901 = vpack.c.b16 %v1941, %v1929
      %v2902 = vpack.c.b16 %v1942, %v1930
      %v2903 = vpack.c.b16 %v1943, %v1931
      %v2904 = vpack.c.b16 %v1944, %v1932
      %v2905 = vpack.c.b16 %v1945, %v1933
      %v2906 = vpack.c.b16 %v1958, %v1946
      %v2907 = vpack.c.b16 %v1959, %v1947
      %v2908 = vpack.c.b16 %v1960, %v1948
      %v2909 = vpack.c.b16 %v1961, %v1949
      %v2910 = vpack.c.b16 %v1962, %v1950
      %v2911 = vpack.c.b16 %v1963, %v1951
      %v2912 = vpack.c.b16 %v1964, %v1952
      %v2913 = vpack.c.b16 %v1965, %v1953
      %v2914 = vpack.c.b16 %v1966, %v1954
      %v2915 = vpack.c.b16 %v1967, %v1955
      %v2916 = vpack.c.b16 %v1968, %v1956
      %v2917 = vpack.c.b16 %v1969, %v1957
      %v2918 = vpack.c.b16 %v1982, %v1970
      %v2919 = vpack.c.b16 %v1983, %v1971
      %v2920 = vpack.c.b16 %v1984, %v1972
      %v2921 = vpack.c.b16 %v1985, %v1973
      %v2922 = vpack.c.b16 %v1986, %v1974
      %v2923 = vpack.c.b16 %v1987, %v1975
      %v2924 = vpack.c.b16 %v1988, %v1976
      %v2925 = vpack.c.b16 %v1989, %v1977
      %v2926 = vpack.c.b16 %v1990, %v1978
      %v2927 = vpack.c.b16 %v1991, %v1979
      %v2928 = vpack.c.b16 %v1992, %v1980
      %v2929 = vpack.c.b16 %v1993, %v1981
      %v2930 = vpack.c.b16 %v2006, %v1994
      %v2931 = vpack.c.b16 %v2007, %v1995
      %v2932 = vpack.c.b16 %v2008, %v1996
      %v2933 = vpack.c.b16 %v2009, %v1997
      %v2934 = vpack.c.b16 %v2010, %v1998
      %v2935 = vpack.c.b16 %v2011, %v1999
      %v2936 = vpack.c.b16 %v2012, %v2000
      %v2937 = vpack.c.b16 %v2013, %v2001
      %v2938 = vpack.c.b16 %v2014, %v2002
      %v2939 = vpack.c.b16 %v2015, %v2003
      %v2940 = vpack.c.b16 %v2016, %v2004
      %v2941 = vpack.c.b16 %v2017, %v2005
      %v2942 = vpack.c.b16 %v2030, %v2018
      %v2943 = vpack.c.b16 %v2031, %v2019
      %v2944 = vpack.c.b16 %v2032, %v2020
      %v2945 = vpack.c.b16 %v2033, %v2021
      %v2946 = vpack.c.b16 %v2034, %v2022
      %v2947 = vpack.c.b16 %v2035, %v2023
      %v2948 = vpack.c.b16 %v2036, %v2024
      %v2949 = vpack.c.b16 %v2037, %v2025
      %v2950 = vpack.c.b16 %v2038, %v2026
      %v2951 = vpack.c.b16 %v2039, %v2027
      %v2952 = vpack.c.b16 %v2040, %v2028
      %v2953 = vpack.c.b16 %v2041, %v2029
      %v2954 = vpack.c.b16 %v2054, %v2042
      %v2955 = vpack.c.b16 %v2055, %v2043
      %v2956 = vpack.c.b16 %v2056, %v2044
      %v2957 = vpack.c.b16 %v2057, %v2045
      %v2958 = vpack.c.b16 %v2058, %v2046
      %v2959 = vpack.c.b16 %v2059, %v2047
      %v2960 = vpack.c.b16 %v2060, %v2048
      %v2961 = vpack.c.b16 %v2061, %v2049
      %v2962 = vpack.c.b16 %v2062, %v2050
      %v2963 = vpack.c.b16 %v2063, %v2051
      %v2964 = vpack.c.b16 %v2064, %v2052
      %v2965 = vpack.c.b16 %v2065, %v2053
      %v2966 = vpack.c.b16 %v2078, %v2066
      %v2967 = vpack.c.b16 %v2079, %v2067
      %v2968 = vpack.c.b16 %v2080, %v2068
      %v2969 = vpack.c.b16 %v2081, %v2069
      %v2970 = vpack.c.b16 %v2082, %v2070
      %v2971 = vpack.c.b16 %v2083, %v2071
      %v2972 = vpack.c.b16 %v2084, %v2072
      %v2973 = vpack.c.b16 %v2085, %v2073
      %v2974 = vpack.c.b16 %v2086, %v2074
      %v2975 = vpack.c.b16 %v2087, %v2075
      %v2976 = vpack.c.b16 %v2088, %v2076
      %v2977 = vpack.c.b16 %v2089, %v2077
      %v2978 = vpack.c.b16 %v2102, %v2090
      %v2979 = vpack.c.b16 %v2103, %v2091
      %v2980 = vpack.c.b16 %v2104, %v2092
      %v2981 = vpack.c.b16 %v2105, %v2093
      %v2982 = vpack.c.b16 %v2106, %v2094
      %v2983 = vpack.c.b16 %v2107, %v2095
      %v2984 = vpack.c.b16 %v2108, %v2096
      %v2985 = vpack.c.b16 %v2109, %v2097
      %v2986 = vpack.c.b16 %v2110, %v2098
      %v2987 = vpack.c.b16 %v2111, %v2099
      %v2988 = vpack.c.b16 %v2112, %v2100
      %v2989 = vpack.c.b16 %v2113, %v2101
      %v2990 = vpack.c.b16 %v2126, %v2114
      %v2991 = vpack.c.b16 %v2127, %v2115
      %v2992 = vpack.c.b16 %v2128, %v2116
      %v2993 = vpack.c.b16 %v2129, %v2117
      %v2994 = vpack.c.b16 %v2130, %v2118
      %v2995 = vpack.c.b16 %v2131, %v2119
      %v2996 = vpack.c.b16 %v2132, %v2120
      %v2997 = vpack.c.b16 %v2133, %v2121
      %v2998 = vpack.c.b16 %v2134, %v2122
      %v2999 = vpack.c.b16 %v2135, %v2123
      %v3000 = vpack.c.b16 %v2136, %v2124
      %v3001 = vpack.c.b16 %v2137, %v2125
      %v3002 = vpack.c.b16 %v2150, %v2138
      %v3003 = vpack.c.b16 %v2151, %v2139
      %v3004 = vpack.c.b16 %v2152, %v2140
      %v3005 = vpack.c.b16 %v2153, %v2141
      %v3006 = vpack.c.b16 %v2154, %v2142
      %v3007 = vpack.c.b16 %v2155, %v2143
      %v3008 = vpack.c.b16 %v2156, %v2144
      %v3009 = vpack.c.b16 %v2157, %v2145
      %v3010 = vpack.c.b16 %v2158, %v2146
      %v3011 = vpack.c.b16 %v2159, %v2147
      %v3012 = vpack.c.b16 %v2160, %v2148
      %v3013 = vpack.c.b16 %v2161, %v2149
      %v3014 = vpack.c.b16 %v2174, %v2162
      %v3015 = vpack.c.b16 %v2175, %v2163
      %v3016 = vpack.c.b16 %v2176, %v2164
      %v3017 = vpack.c.b16 %v2177, %v2165
      %v3018 = vpack.c.b16 %v2178, %v2166
      %v3019 = vpack.c.b16 %v2179, %v2167
      %v3020 = vpack.c.b16 %v2180, %v2168
      %v3021 = vpack.c.b16 %v2181, %v2169
      %v3022 = vpack.c.b16 %v2182, %v2170
      %v3023 = vpack.c.b16 %v2183, %v2171
      %v3024 = vpack.c.b16 %v2184, %v2172
      %v3025 = vpack.c.b16 %v2185, %v2173
      %v3026 = vpack.c.b16 %v2198, %v2186
      %v3027 = vpack.c.b16 %v2199, %v2187
      %v3028 = vpack.c.b16 %v2200, %v2188
      %v3029 = vpack.c.b16 %v2201, %v2189
      %v3030 = vpack.c.b16 %v2202, %v2190
      %v3031 = vpack.c.b16 %v2203, %v2191
      %v3032 = vpack.c.b16 %v2204, %v2192
      %v3033 = vpack.c.b16 %v2205, %v2193
      %v3034 = vpack.c.b16 %v2206, %v2194
      %v3035 = vpack.c.b16 %v2207, %v2195
      %v3036 = vpack.c.b16 %v2208, %v2196
      %v3037 = vpack.c.b16 %v2209, %v2197
      %v3038 = vpack.c.b16 %v2222, %v2210
      %v3039 = vpack.c.b16 %v2223, %v2211
      %v3040 = vpack.c.b16 %v2224, %v2212
      %v3041 = vpack.c.b16 %v2225, %v2213
      %v3042 = vpack.c.b16 %v2226, %v2214
      %v3043 = vpack.c.b16 %v2227, %v2215
      %v3044 = vpack.c.b16 %v2228, %v2216
      %v3045 = vpack.c.b16 %v2229, %v2217
      %v3046 = vpack.c.b16 %v2230, %v2218
      %v3047 = vpack.c.b16 %v2231, %v2219
      %v3048 = vpack.c.b16 %v2232, %v2220
      %v3049 = vpack.c.b16 %v2233, %v2221
      %v3050 = vpack.c.b16 %v2246, %v2234
      %v3051 = vpack.c.b16 %v2247, %v2235
      %v3052 = vpack.c.b16 %v2248, %v2236
      %v3053 = vpack.c.b16 %v2249, %v2237
      %v3054 = vpack.c.b16 %v2250, %v2238
      %v3055 = vpack.c.b16 %v2251, %v2239
      %v3056 = vpack.c.b16 %v2252, %v2240
      %v3057 = vpack.c.b16 %v2253, %v2241
      %v3058 = vpack.c.b16 %v2254, %v2242
      %v3059 = vpack.c.b16 %v2255, %v2243
      %v3060 = vpack.c.b16 %v2256, %v2244
      %v3061 = vpack.c.b16 %v2257, %v2245
      %v3062 = vpack.c.b16 %v2270, %v2258
      %v3063 = vpack.c.b16 %v2271, %v2259
      %v3064 = vpack.c.b16 %v2272, %v2260
      %v3065 = vpack.c.b16 %v2273, %v2261
      %v3066 = vpack.c.b16 %v2274, %v2262
      %v3067 = vpack.c.b16 %v2275, %v2263
      %v3068 = vpack.c.b16 %v2276, %v2264
      %v3069 = vpack.c.b16 %v2277, %v2265
      %v3070 = vpack.c.b16 %v2278, %v2266
      %v3071 = vpack.c.b16 %v2279, %v2267
      %v3072 = vpack.c.b16 %v2280, %v2268
      %v3073 = vpack.c.b16 %v2281, %v2269
      %v3074 = vpack.c.b16 %v2294, %v2282
      %v3075 = vpack.c.b16 %v2295, %v2283
      %v3076 = vpack.c.b16 %v2296, %v2284
      %v3077 = vpack.c.b16 %v2297, %v2285
      %v3078 = vpack.c.b16 %v2298, %v2286
      %v3079 = vpack.c.b16 %v2299, %v2287
      %v3080 = vpack.c.b16 %v2300, %v2288
      %v3081 = vpack.c.b16 %v2301, %v2289
      %v3082 = vpack.c.b16 %v2302, %v2290
      %v3083 = vpack.c.b16 %v2303, %v2291
      %v3084 = vpack.c.b16 %v2304, %v2292
      %v3085 = vpack.c.b16 %v2305, %v2293
      %v3086 = vpack.c.b16 %v2318, %v2306
      %v3087 = vpack.c.b16 %v2319, %v2307
      %v3088 = vpack.c.b16 %v2320, %v2308
      %v3089 = vpack.c.b16 %v2321, %v2309
      %v3090 = vpack.c.b16 %v2322, %v2310
      %v3091 = vpack.c.b16 %v2323, %v2311
      %v3092 = vpack.c.b16 %v2324, %v2312
      %v3093 = vpack.c.b16 %v2325, %v2313
      %v3094 = vpack.c.b16 %v2326, %v2314
      %v3095 = vpack.c.b16 %v2327, %v2315
      %v3096 = vpack.c.b16 %v2328, %v2316
      %v3097 = vpack.c.b16 %v2329, %v2317
      %v3098 = vpack.c.b16 %v2342, %v2330
      %v3099 = vpack.c.b16 %v2343, %v2331
      %v3100 = vpack.c.b16 %v2344, %v2332
      %v3101 = vpack.c.b16 %v2345, %v2333
      %v3102 = vpack.c.b16 %v2346, %v2334
      %v3103 = vpack.c.b16 %v2347, %v2335
      %v3104 = vpack.c.b16 %v2348, %v2336
      %v3105 = vpack.c.b16 %v2349, %v2337
      %v3106 = vpack.c.b16 %v2350, %v2338
      %v3107 = vpack.c.b16 %v2351, %v2339
      %v3108 = vpack.c.b16 %v2352, %v2340
      %v3109 = vpack.c.b16 %v2353, %v2341
      %v3110 = vpack.c.b16 %v2366, %v2354
      %v3111 = vpack.c.b16 %v2367, %v2355
      %v3112 = vpack.c.b16 %v2368, %v2356
      %v3113 = vpack.c.b16 %v2369, %v2357
      %v3114 = vpack.c.b16 %v2370, %v2358
      %v3115 = vpack.c.b16 %v2371, %v2359
      %v3116 = vpack.c.b16 %v2372, %v2360
      %v3117 = vpack.c.b16 %v2373, %v2361
      %v3118 = vpack.c.b16 %v2374, %v2362
      %v3119 = vpack.c.b16 %v2375, %v2363
      %v3120 = vpack.c.b16 %v2376, %v2364
      %v3121 = vpack.c.b16 %v2377, %v2365
      %v3122 = vpack.c.b16 %v2390, %v2378
      %v3123 = vpack.c.b16 %v2391, %v2379
      %v3124 = vpack.c.b16 %v2392, %v2380
      %v3125 = vpack.c.b16 %v2393, %v2381
      %v3126 = vpack.c.b16 %v2394, %v2382
      %v3127 = vpack.c.b16 %v2395, %v2383
      %v3128 = vpack.c.b16 %v2396, %v2384
      %v3129 = vpack.c.b16 %v2397, %v2385
      %v3130 = vpack.c.b16 %v2398, %v2386
      %v3131 = vpack.c.b16 %v2399, %v2387
      %v3132 = vpack.c.b16 %v2400, %v2388
      %v3133 = vpack.c.b16 %v2401, %v2389
      %v3134 = vpack.c.b16 %v2414, %v2402
      %v3135 = vpack.c.b16 %v2415, %v2403
      %v3136 = vpack.c.b16 %v2416, %v2404
      %v3137 = vpack.c.b16 %v2417, %v2405
      %v3138 = vpack.c.b16 %v2418, %v2406
      %v3139 = vpack.c.b16 %v2419, %v2407
      %v3140 = vpack.c.b16 %v2420, %v2408
      %v3141 = vpack.c.b16 %v2421, %v2409
      %v3142 = vpack.c.b16 %v2422, %v2410
      %v3143 = vpack.c.b16 %v2423, %v2411
      %v3144 = vpack.c.b16 %v2424, %v2412
      %v3145 = vpack.c.b16 %v2425, %v2413
      %v3146 = vpack.c.b16 %v2438, %v2426
      %v3147 = vpack.c.b16 %v2439, %v2427
      %v3148 = vpack.c.b16 %v2440, %v2428
      %v3149 = vpack.c.b16 %v2441, %v2429
      %v3150 = vpack.c.b16 %v2442, %v2430
      %v3151 = vpack.c.b16 %v2443, %v2431
      %v3152 = vpack.c.b16 %v2444, %v2432
      %v3153 = vpack.c.b16 %v2445, %v2433
      %v3154 = vpack.c.b16 %v2446, %v2434
      %v3155 = vpack.c.b16 %v2447, %v2435
      %v3156 = vpack.c.b16 %v2448, %v2436
      %v3157 = vpack.c.b16 %v2449, %v2437
      %v3158 = vpack.c.b16 %v2462, %v2450
      %v3159 = vpack.c.b16 %v2463, %v2451
      %v3160 = vpack.c.b16 %v2464, %v2452
      %v3161 = vpack.c.b16 %v2465, %v2453
      %v3162 = vpack.c.b16 %v2466, %v2454
      %v3163 = vpack.c.b16 %v2467, %v2455
      %v3164 = vpack.c.b16 %v2468, %v2456
      %v3165 = vpack.c.b16 %v2469, %v2457
      %v3166 = vpack.c.b16 %v2470, %v2458
      %v3167 = vpack.c.b16 %v2471, %v2459
      %v3168 = vpack.c.b16 %v2472, %v2460
      %v3169 = vpack.c.b16 %v2473, %v2461
      %v3170 = vpack.c.b16 %v2486, %v2474
      %v3171 = vpack.c.b16 %v2487, %v2475
      %v3172 = vpack.c.b16 %v2488, %v2476
      %v3173 = vpack.c.b16 %v2489, %v2477
      %v3174 = vpack.c.b16 %v2490, %v2478
      %v3175 = vpack.c.b16 %v2491, %v2479
      %v3176 = vpack.c.b16 %v2492, %v2480
      %v3177 = vpack.c.b16 %v2493, %v2481
      %v3178 = vpack.c.b16 %v2494, %v2482
      %v3179 = vpack.c.b16 %v2495, %v2483
      %v3180 = vpack.c.b16 %v2496, %v2484
      %v3181 = vpack.c.b16 %v2497, %v2485
      %v3182 = vpack.c.b16 %v2510, %v2498
      %v3183 = vpack.c.b16 %v2511, %v2499
      %v3184 = vpack.c.b16 %v2512, %v2500
      %v3185 = vpack.c.b16 %v2513, %v2501
      %v3186 = vpack.c.b16 %v2514, %v2502
      %v3187 = vpack.c.b16 %v2515, %v2503
      %v3188 = vpack.c.b16 %v2516, %v2504
      %v3189 = vpack.c.b16 %v2517, %v2505
      %v3190 = vpack.c.b16 %v2518, %v2506
      %v3191 = vpack.c.b16 %v2519, %v2507
      %v3192 = vpack.c.b16 %v2520, %v2508
      %v3193 = vpack.c.b16 %v2521, %v2509
      %v3194 = vpack.c.b16 %v2534, %v2522
      %v3195 = vpack.c.b16 %v2535, %v2523
      %v3196 = vpack.c.b16 %v2536, %v2524
      %v3197 = vpack.c.b16 %v2537, %v2525
      %v3198 = vpack.c.b16 %v2538, %v2526
      %v3199 = vpack.c.b16 %v2539, %v2527
      %v3200 = vpack.c.b16 %v2540, %v2528
      %v3201 = vpack.c.b16 %v2541, %v2529
      %v3202 = vpack.c.b16 %v2542, %v2530
      %v3203 = vpack.c.b16 %v2543, %v2531
      %v3204 = vpack.c.b16 %v2544, %v2532
      %v3205 = vpack.c.b16 %v2545, %v2533
      %v3206 = vpack.c.b16 %v2558, %v2546
      %v3207 = vpack.c.b16 %v2559, %v2547
      %v3208 = vpack.c.b16 %v2560, %v2548
      %v3209 = vpack.c.b16 %v2561, %v2549
      %v3210 = vpack.c.b16 %v2562, %v2550
      %v3211 = vpack.c.b16 %v2563, %v2551
      %v3212 = vpack.c.b16 %v2564, %v2552
      %v3213 = vpack.c.b16 %v2565, %v2553
      %v3214 = vpack.c.b16 %v2566, %v2554
      %v3215 = vpack.c.b16 %v2567, %v2555
      %v3216 = vpack.c.b16 %v2568, %v2556
      %v3217 = vpack.c.b16 %v2569, %v2557
      %v3218 = vpack.c.b16 %v2582, %v2570
      %v3219 = vpack.c.b16 %v2583, %v2571
      %v3220 = vpack.c.b16 %v2584, %v2572
      %v3221 = vpack.c.b16 %v2585, %v2573
      %v3222 = vpack.c.b16 %v2586, %v2574
      %v3223 = vpack.c.b16 %v2587, %v2575
      %v3224 = vpack.c.b16 %v2588, %v2576
      %v3225 = vpack.c.b16 %v2589, %v2577
      %v3226 = vpack.c.b16 %v2590, %v2578
      %v3227 = vpack.c.b16 %v2591, %v2579
      %v3228 = vpack.c.b16 %v2592, %v2580
      %v3229 = vpack.c.b16 %v2593, %v2581
      %v3230 = vpack.c.b16 %v2606, %v2594
      %v3231 = vpack.c.b16 %v2607, %v2595
      %v3232 = vpack.c.b16 %v2608, %v2596
      %v3233 = vpack.c.b16 %v2609, %v2597
      %v3234 = vpack.c.b16 %v2610, %v2598
      %v3235 = vpack.c.b16 %v2611, %v2599
      %v3236 = vpack.c.b16 %v2612, %v2600
      %v3237 = vpack.c.b16 %v2613, %v2601
      %v3238 = vpack.c.b16 %v2614, %v2602
      %v3239 = vpack.c.b16 %v2615, %v2603
      %v3240 = vpack.c.b16 %v2616, %v2604
      %v3241 = vpack.c.b16 %v2617, %v2605
      %v3242 = vpack.c.b16 %v2630, %v2618
      %v3243 = vpack.c.b16 %v2631, %v2619
      %v3244 = vpack.c.b16 %v2632, %v2620
      %v3245 = vpack.c.b16 %v2633, %v2621
      %v3246 = vpack.c.b16 %v2634, %v2622
      %v3247 = vpack.c.b16 %v2635, %v2623
      %v3248 = vpack.c.b16 %v2636, %v2624
      %v3249 = vpack.c.b16 %v2637, %v2625
      %v3250 = vpack.c.b16 %v2638, %v2626
      %v3251 = vpack.c.b16 %v2639, %v2627
      %v3252 = vpack.c.b16 %v2640, %v2628
      %v3253 = vpack.c.b16 %v2641, %v2629
      %v3254 = vpack.c.b16 %v2654, %v2642
      %v3255 = vpack.c.b16 %v2655, %v2643
      %v3256 = vpack.c.b16 %v2656, %v2644
      %v3257 = vpack.c.b16 %v2657, %v2645
      %v3258 = vpack.c.b16 %v2658, %v2646
      %v3259 = vpack.c.b16 %v2659, %v2647
      %v3260 = vpack.c.b16 %v2660, %v2648
      %v3261 = vpack.c.b16 %v2661, %v2649
      %v3262 = vpack.c.b16 %v2662, %v2650
      %v3263 = vpack.c.b16 %v2663, %v2651
      %v3264 = vpack.c.b16 %v2664, %v2652
      %v3265 = vpack.c.b16 %v2665, %v2653
      %v3266 = vpack.c.b16 %v2678, %v2666
      %v3267 = vpack.c.b16 %v2679, %v2667
      %v3268 = vpack.c.b16 %v2680, %v2668
      %v3269 = vpack.c.b16 %v2681, %v2669
      %v3270 = vpack.c.b16 %v2682, %v2670
      %v3271 = vpack.c.b16 %v2683, %v2671
      %v3272 = vpack.c.b16 %v2684, %v2672
      %v3273 = vpack.c.b16 %v2685, %v2673
      %v3274 = vpack.c.b16 %v2686, %v2674
      %v3275 = vpack.c.b16 %v2687, %v2675
      %v3276 = vpack.c.b16 %v2688, %v2676
      %v3277 = vpack.c.b16 %v2689, %v2677
      %v3278 = vpack.c.b16 %v2702, %v2690
      %v3279 = vpack.c.b16 %v2703, %v2691
      %v3280 = vpack.c.b16 %v2704, %v2692
      %v3281 = vpack.c.b16 %v2705, %v2693
      %v3282 = vpack.c.b16 %v2706, %v2694
      %v3283 = vpack.c.b16 %v2707, %v2695
      %v3284 = vpack.c.b16 %v2708, %v2696
      %v3285 = vpack.c.b16 %v2709, %v2697
      %v3286 = vpack.c.b16 %v2710, %v2698
      %v3287 = vpack.c.b16 %v2711, %v2699
      %v3288 = vpack.c.b16 %v2712, %v2700
      %v3289 = vpack.c.b16 %v2713, %v2701
      %3866 = vmatprep.subr.bf16.mxu0 %v2715
      %3867 = vmatpush1.bf16.msra.mxu0 %v2714
      %3868 = vmatprep.subr.bf16.mxu0 %v2727
      %3869 = vmatpush1.bf16.msra.mxu0 %v2726
      %3870 = vmatprep.subr.bf16.mxu0 %v2739
      %3871 = vmatpush1.bf16.msra.mxu0 %v2738
      %3872 = vmatprep.subr.bf16.mxu0 %v2751
      %3873 = vmatpush1.bf16.msra.mxu0 %v2750
      %3874 = vmatprep.subr.bf16.mxu0 %v2763
      %3875 = vmatpush1.bf16.msra.mxu0 %v2762
      %3876 = vmatprep.subr.bf16.mxu0 %v2775
      %3877 = vmatpush1.bf16.msra.mxu0 %v2774
      %3878 = vmatprep.subr.bf16.mxu0 %v2787
      %3879 = vmatpush1.bf16.msra.mxu0 %v2786
      %3880 = vmatprep.subr.bf16.mxu0 %v2799
      %3881 = vmatpush1.bf16.msra.mxu0 %v2798
      %3882 = vmatprep.subr.bf16.mxu0 %v2811
      %3883 = vmatpush1.bf16.msra.mxu0 %v2810
      %3884 = vmatprep.subr.bf16.mxu0 %v2823
      %3885 = vmatpush1.bf16.msra.mxu0 %v2822
      %3886 = vmatprep.subr.bf16.mxu0 %v2835
      %3887 = vmatpush1.bf16.msra.mxu0 %v2834
      %3888 = vmatprep.subr.bf16.mxu0 %v2847
      %3889 = vmatpush1.bf16.msra.mxu0 %v2846
      %3890 = vmatprep.subr.bf16.mxu0 %v2859
      %3891 = vmatpush1.bf16.msra.mxu0 %v2858
      %3892 = vmatprep.subr.bf16.mxu0 %v2871
      %3893 = vmatpush1.bf16.msra.mxu0 %v2870
      %3894 = vmatprep.subr.bf16.mxu0 %v2883
      %3895 = vmatpush1.bf16.msra.mxu0 %v2882
      %3896 = vmatprep.subr.bf16.mxu0 %v2895
      %3897 = vmatpush1.bf16.msra.mxu0 %v2894
      %3898 = vmatprep.mubr.bf16.mxu0 %v341
      %3899 = vmatmul.mubr.bf16.gmra.mrb[0].mxu0 %v340
      %v3900 = vpop.f32.mrb[0].mxu0
      %v3901 = vadd.f32 %v929, %v3900
      %v3902 = vpop.f32.mrb[0].mxu0
      %v3903 = vadd.f32 %v933, %v3902
      %v3904 = vpop.f32.mrb[0].mxu0
      %v3905 = vpop.f32.mrb[0].mxu0
      %3906 = vdwg.mxu0
      %3907 = vmatprep.subr.bf16.mxu0 %v2907
      %3908 = vmatpush1.bf16.msra.mxu0 %v2906
      %3909 = vmatprep.subr.bf16.mxu0 %v2919
      %3910 = vmatpush1.bf16.msra.mxu0 %v2918
      %3911 = vmatprep.subr.bf16.mxu0 %v2931
      %3912 = vmatpush1.bf16.msra.mxu0 %v2930
      %3913 = vmatprep.subr.bf16.mxu0 %v2943
      %3914 = vmatpush1.bf16.msra.mxu0 %v2942
      %3915 = vmatprep.subr.bf16.mxu0 %v2955
      %3916 = vmatpush1.bf16.msra.mxu0 %v2954
      %3917 = vmatprep.subr.bf16.mxu0 %v2967
      %3918 = vmatpush1.bf16.msra.mxu0 %v2966
      %3919 = vmatprep.subr.bf16.mxu0 %v2979
      %3920 = vmatpush1.bf16.msra.mxu0 %v2978
      %3921 = vmatprep.subr.bf16.mxu0 %v2991
      %3922 = vmatpush1.bf16.msra.mxu0 %v2990
      %3923 = vmatprep.subr.bf16.mxu0 %v3003
      %3924 = vmatpush1.bf16.msra.mxu0 %v3002
      %3925 = vmatprep.subr.bf16.mxu0 %v3015
      %3926 = vmatpush1.bf16.msra.mxu0 %v3014
      %3927 = vmatprep.subr.bf16.mxu0 %v3027
      %3928 = vmatpush1.bf16.msra.mxu0 %v3026
      %3929 = vmatprep.subr.bf16.mxu0 %v3039
      %3930 = vmatpush1.bf16.msra.mxu0 %v3038
      %3931 = vmatprep.subr.bf16.mxu0 %v3051
      %3932 = vmatpush1.bf16.msra.mxu0 %v3050
      %3933 = vmatprep.subr.bf16.mxu0 %v3063
      %3934 = vmatpush1.bf16.msra.mxu0 %v3062
      %3935 = vmatprep.subr.bf16.mxu0 %v3075
      %3936 = vmatpush1.bf16.msra.mxu0 %v3074
      %3937 = vmatprep.subr.bf16.mxu0 %v3087
      %3938 = vmatpush1.bf16.msra.mxu0 %v3086
      %3939 = vmatprep.mubr.bf16.mxu0 %v343
      %3940 = vmatmul.mubr.bf16.gmra.mrb[0].mxu0 %v342
      %v3941 = vpop.f32.mrb[0].mxu0
      %v3942 = vadd.f32 %v3901, %v3941
      %v3943 = vpop.f32.mrb[0].mxu0
      %v3944 = vadd.f32 %v3903, %v3943
      %v3945 = vpop.f32.mrb[0].mxu0
      %v3946 = vpop.f32.mrb[0].mxu0
      %3947 = vdwg.mxu0
      %3948 = vmatprep.subr.bf16.mxu0 %v3099
      %3949 = vmatpush1.bf16.msra.mxu0 %v3098
      %3950 = vmatprep.subr.bf16.mxu0 %v3111
      %3951 = vmatpush1.bf16.msra.mxu0 %v3110
      %3952 = vmatprep.subr.bf16.mxu0 %v3123
      %3953 = vmatpush1.bf16.msra.mxu0 %v3122
      %3954 = vmatprep.subr.bf16.mxu0 %v3135
      %3955 = vmatpush1.bf16.msra.mxu0 %v3134
      %3956 = vmatprep.subr.bf16.mxu0 %v3147
      %3957 = vmatpush1.bf16.msra.mxu0 %v3146
      %3958 = vmatprep.subr.bf16.mxu0 %v3159
      %3959 = vmatpush1.bf16.msra.mxu0 %v3158
      %3960 = vmatprep.subr.bf16.mxu0 %v3171
      %3961 = vmatpush1.bf16.msra.mxu0 %v3170
      %3962 = vmatprep.subr.bf16.mxu0 %v3183
      %3963 = vmatpush1.bf16.msra.mxu0 %v3182
      %3964 = vmatprep.subr.bf16.mxu0 %v3195
      %3965 = vmatpush1.bf16.msra.mxu0 %v3194
      %3966 = vmatprep.subr.bf16.mxu0 %v3207
      %3967 = vmatpush1.bf16.msra.mxu0 %v3206
      %3968 = vmatprep.subr.bf16.mxu0 %v3219
      %3969 = vmatpush1.bf16.msra.mxu0 %v3218
      %3970 = vmatprep.subr.bf16.mxu0 %v3231
      %3971 = vmatpush1.bf16.msra.mxu0 %v3230
      %3972 = vmatprep.subr.bf16.mxu0 %v3243
      %3973 = vmatpush1.bf16.msra.mxu0 %v3242
      %3974 = vmatprep.subr.bf16.mxu0 %v3255
      %3975 = vmatpush1.bf16.msra.mxu0 %v3254
      %3976 = vmatprep.subr.bf16.mxu0 %v3267
      %3977 = vmatpush1.bf16.msra.mxu0 %v3266
      %3978 = vmatprep.subr.bf16.mxu0 %v3279
      %3979 = vmatpush1.bf16.msra.mxu0 %v3278
      %3980 = vmatprep.mubr.bf16.mxu0 %v345
      %3981 = vmatmul.mubr.bf16.gmra.mrb[0].mxu0 %v344
      %v3982 = vpop.f32.mrb[0].mxu0
      %v3983 = vadd.f32 %v3942, %v3982
      %v3984 = vpop.f32.mrb[0].mxu0
      %v3985 = vadd.f32 %v3944, %v3984
      %v3986 = vpop.f32.mrb[0].mxu0
      %v3987 = vpop.f32.mrb[0].mxu0
      %3988 = vdwg.mxu0
      %3989 = vmatprep.subr.bf16.mxu0 %v2717
      %3990 = vmatpush1.bf16.msra.mxu0 %v2716
      %3991 = vmatprep.subr.bf16.mxu0 %v2729
      %3992 = vmatpush1.bf16.msra.mxu0 %v2728
      %3993 = vmatprep.subr.bf16.mxu0 %v2741
      %3994 = vmatpush1.bf16.msra.mxu0 %v2740
      %3995 = vmatprep.subr.bf16.mxu0 %v2753
      %3996 = vmatpush1.bf16.msra.mxu0 %v2752
      %3997 = vmatprep.subr.bf16.mxu0 %v2765
      %3998 = vmatpush1.bf16.msra.mxu0 %v2764
      %3999 = vmatprep.subr.bf16.mxu0 %v2777
      %4000 = vmatpush1.bf16.msra.mxu0 %v2776
      %4001 = vmatprep.subr.bf16.mxu0 %v2789
      %4002 = vmatpush1.bf16.msra.mxu0 %v2788
      %4003 = vmatprep.subr.bf16.mxu0 %v2801
      %4004 = vmatpush1.bf16.msra.mxu0 %v2800
      %4005 = vmatprep.subr.bf16.mxu0 %v2813
      %4006 = vmatpush1.bf16.msra.mxu0 %v2812
      %4007 = vmatprep.subr.bf16.mxu0 %v2825
      %4008 = vmatpush1.bf16.msra.mxu0 %v2824
      %4009 = vmatprep.subr.bf16.mxu0 %v2837
      %4010 = vmatpush1.bf16.msra.mxu0 %v2836
      %4011 = vmatprep.subr.bf16.mxu0 %v2849
      %4012 = vmatpush1.bf16.msra.mxu0 %v2848
      %4013 = vmatprep.subr.bf16.mxu0 %v2861
      %4014 = vmatpush1.bf16.msra.mxu0 %v2860
      %4015 = vmatprep.subr.bf16.mxu0 %v2873
      %4016 = vmatpush1.bf16.msra.mxu0 %v2872
      %4017 = vmatprep.subr.bf16.mxu0 %v2885
      %4018 = vmatpush1.bf16.msra.mxu0 %v2884
      %4019 = vmatprep.subr.bf16.mxu0 %v2897
      %4020 = vmatpush1.bf16.msra.mxu0 %v2896
      %4021 = vmatprep.mubr.bf16.mxu0 %v341
      %4022 = vmatmul.mubr.bf16.gmra.mrb[0].mxu0 %v340
      %v4023 = vpop.f32.mrb[0].mxu0
      %v4024 = vadd.f32 %v937, %v4023
      %v4025 = vpop.f32.mrb[0].mxu0
      %v4026 = vadd.f32 %v941, %v4025
      %v4027 = vpop.f32.mrb[0].mxu0
      %v4028 = vpop.f32.mrb[0].mxu0
      %4029 = vdwg.mxu0
      %4030 = vmatprep.subr.bf16.mxu0 %v2909
      %4031 = vmatpush1.bf16.msra.mxu0 %v2908
      %4032 = vmatprep.subr.bf16.mxu0 %v2921
      %4033 = vmatpush1.bf16.msra.mxu0 %v2920
      %4034 = vmatprep.subr.bf16.mxu0 %v2933
      %4035 = vmatpush1.bf16.msra.mxu0 %v2932
      %4036 = vmatprep.subr.bf16.mxu0 %v2945
      %4037 = vmatpush1.bf16.msra.mxu0 %v2944
      %4038 = vmatprep.subr.bf16.mxu0 %v2957
      %4039 = vmatpush1.bf16.msra.mxu0 %v2956
      %4040 = vmatprep.subr.bf16.mxu0 %v2969
      %4041 = vmatpush1.bf16.msra.mxu0 %v2968
      %4042 = vmatprep.subr.bf16.mxu0 %v2981
      %4043 = vmatpush1.bf16.msra.mxu0 %v2980
      %4044 = vmatprep.subr.bf16.mxu0 %v2993
      %4045 = vmatpush1.bf16.msra.mxu0 %v2992
      %4046 = vmatprep.subr.bf16.mxu0 %v3005
      %4047 = vmatpush1.bf16.msra.mxu0 %v3004
      %4048 = vmatprep.subr.bf16.mxu0 %v3017
      %4049 = vmatpush1.bf16.msra.mxu0 %v3016
      %4050 = vmatprep.subr.bf16.mxu0 %v3029
      %4051 = vmatpush1.bf16.msra.mxu0 %v3028
      %4052 = vmatprep.subr.bf16.mxu0 %v3041
      %4053 = vmatpush1.bf16.msra.mxu0 %v3040
      %4054 = vmatprep.subr.bf16.mxu0 %v3053
      %4055 = vmatpush1.bf16.msra.mxu0 %v3052
      %4056 = vmatprep.subr.bf16.mxu0 %v3065
      %4057 = vmatpush1.bf16.msra.mxu0 %v3064
      %4058 = vmatprep.subr.bf16.mxu0 %v3077
      %4059 = vmatpush1.bf16.msra.mxu0 %v3076
      %4060 = vmatprep.subr.bf16.mxu0 %v3089
      %4061 = vmatpush1.bf16.msra.mxu0 %v3088
      %4062 = vmatprep.mubr.bf16.mxu0 %v343
      %4063 = vmatmul.mubr.bf16.gmra.mrb[0].mxu0 %v342
      %v4064 = vpop.f32.mrb[0].mxu0
      %v4065 = vadd.f32 %v4024, %v4064
      %v4066 = vpop.f32.mrb[0].mxu0
      %v4067 = vadd.f32 %v4026, %v4066
      %v4068 = vpop.f32.mrb[0].mxu0
      %v4069 = vpop.f32.mrb[0].mxu0
      %4070 = vdwg.mxu0
      %4071 = vmatprep.subr.bf16.mxu0 %v3101
      %4072 = vmatpush1.bf16.msra.mxu0 %v3100
      %4073 = vmatprep.subr.bf16.mxu0 %v3113
      %4074 = vmatpush1.bf16.msra.mxu0 %v3112
      %4075 = vmatprep.subr.bf16.mxu0 %v3125
      %4076 = vmatpush1.bf16.msra.mxu0 %v3124
      %4077 = vmatprep.subr.bf16.mxu0 %v3137
      %4078 = vmatpush1.bf16.msra.mxu0 %v3136
      %4079 = vmatprep.subr.bf16.mxu0 %v3149
      %4080 = vmatpush1.bf16.msra.mxu0 %v3148
      %4081 = vmatprep.subr.bf16.mxu0 %v3161
      %4082 = vmatpush1.bf16.msra.mxu0 %v3160
      %4083 = vmatprep.subr.bf16.mxu0 %v3173
      %4084 = vmatpush1.bf16.msra.mxu0 %v3172
      %4085 = vmatprep.subr.bf16.mxu0 %v3185
      %4086 = vmatpush1.bf16.msra.mxu0 %v3184
      %4087 = vmatprep.subr.bf16.mxu0 %v3197
      %4088 = vmatpush1.bf16.msra.mxu0 %v3196
      %4089 = vmatprep.subr.bf16.mxu0 %v3209
      %4090 = vmatpush1.bf16.msra.mxu0 %v3208
      %4091 = vmatprep.subr.bf16.mxu0 %v3221
      %4092 = vmatpush1.bf16.msra.mxu0 %v3220
      %4093 = vmatprep.subr.bf16.mxu0 %v3233
      %4094 = vmatpush1.bf16.msra.mxu0 %v3232
      %4095 = vmatprep.subr.bf16.mxu0 %v3245
      %4096 = vmatpush1.bf16.msra.mxu0 %v3244
      %4097 = vmatprep.subr.bf16.mxu0 %v3257
      %4098 = vmatpush1.bf16.msra.mxu0 %v3256
      %4099 = vmatprep.subr.bf16.mxu0 %v3269
      %4100 = vmatpush1.bf16.msra.mxu0 %v3268
      %4101 = vmatprep.subr.bf16.mxu0 %v3281
      %4102 = vmatpush1.bf16.msra.mxu0 %v3280
      %4103 = vmatprep.mubr.bf16.mxu0 %v345
      %4104 = vmatmul.mubr.bf16.gmra.mrb[0].mxu0 %v344
      %v4105 = vpop.f32.mrb[0].mxu0
      %v4106 = vadd.f32 %v4065, %v4105
      %v4107 = vpop.f32.mrb[0].mxu0
      %v4108 = vadd.f32 %v4067, %v4107
      %v4109 = vpop.f32.mrb[0].mxu0
      %v4110 = vpop.f32.mrb[0].mxu0
      %4111 = vdwg.mxu0
      %4112 = vmatprep.subr.bf16.mxu0 %v2719
      %4113 = vmatpush1.bf16.msra.mxu0 %v2718
      %4114 = vmatprep.subr.bf16.mxu0 %v2731
      %4115 = vmatpush1.bf16.msra.mxu0 %v2730
      %4116 = vmatprep.subr.bf16.mxu0 %v2743
      %4117 = vmatpush1.bf16.msra.mxu0 %v2742
      %4118 = vmatprep.subr.bf16.mxu0 %v2755
      %4119 = vmatpush1.bf16.msra.mxu0 %v2754
      %4120 = vmatprep.subr.bf16.mxu0 %v2767
      %4121 = vmatpush1.bf16.msra.mxu0 %v2766
      %4122 = vmatprep.subr.bf16.mxu0 %v2779
      %4123 = vmatpush1.bf16.msra.mxu0 %v2778
      %4124 = vmatprep.subr.bf16.mxu0 %v2791
      %4125 = vmatpush1.bf16.msra.mxu0 %v2790
      %4126 = vmatprep.subr.bf16.mxu0 %v2803
      %4127 = vmatpush1.bf16.msra.mxu0 %v2802
      %4128 = vmatprep.subr.bf16.mxu0 %v2815
      %4129 = vmatpush1.bf16.msra.mxu0 %v2814
      %4130 = vmatprep.subr.bf16.mxu0 %v2827
      %4131 = vmatpush1.bf16.msra.mxu0 %v2826
      %4132 = vmatprep.subr.bf16.mxu0 %v2839
      %4133 = vmatpush1.bf16.msra.mxu0 %v2838
      %4134 = vmatprep.subr.bf16.mxu0 %v2851
      %4135 = vmatpush1.bf16.msra.mxu0 %v2850
      %4136 = vmatprep.subr.bf16.mxu0 %v2863
      %4137 = vmatpush1.bf16.msra.mxu0 %v2862
      %4138 = vmatprep.subr.bf16.mxu0 %v2875
      %4139 = vmatpush1.bf16.msra.mxu0 %v2874
      %4140 = vmatprep.subr.bf16.mxu0 %v2887
      %4141 = vmatpush1.bf16.msra.mxu0 %v2886
      %4142 = vmatprep.subr.bf16.mxu0 %v2899
      %4143 = vmatpush1.bf16.msra.mxu0 %v2898
      %4144 = vmatprep.mubr.bf16.mxu0 %v341
      %4145 = vmatmul.mubr.bf16.gmra.mrb[0].mxu0 %v340
      %v4146 = vpop.f32.mrb[0].mxu0
      %v4147 = vadd.f32 %v945, %v4146
      %v4148 = vpop.f32.mrb[0].mxu0
      %v4149 = vadd.f32 %v949, %v4148
      %v4150 = vpop.f32.mrb[0].mxu0
      %v4151 = vpop.f32.mrb[0].mxu0
      %4152 = vdwg.mxu0
      %4153 = vmatprep.subr.bf16.mxu0 %v2911
      %4154 = vmatpush1.bf16.msra.mxu0 %v2910
      %4155 = vmatprep.subr.bf16.mxu0 %v2923
      %4156 = vmatpush1.bf16.msra.mxu0 %v2922
      %4157 = vmatprep.subr.bf16.mxu0 %v2935
      %4158 = vmatpush1.bf16.msra.mxu0 %v2934
      %4159 = vmatprep.subr.bf16.mxu0 %v2947
      %4160 = vmatpush1.bf16.msra.mxu0 %v2946
      %4161 = vmatprep.subr.bf16.mxu0 %v2959
      %4162 = vmatpush1.bf16.msra.mxu0 %v2958
      %4163 = vmatprep.subr.bf16.mxu0 %v2971
      %4164 = vmatpush1.bf16.msra.mxu0 %v2970
      %4165 = vmatprep.subr.bf16.mxu0 %v2983
      %4166 = vmatpush1.bf16.msra.mxu0 %v2982
      %4167 = vmatprep.subr.bf16.mxu0 %v2995
      %4168 = vmatpush1.bf16.msra.mxu0 %v2994
      %4169 = vmatprep.subr.bf16.mxu0 %v3007
      %4170 = vmatpush1.bf16.msra.mxu0 %v3006
      %4171 = vmatprep.subr.bf16.mxu0 %v3019
      %4172 = vmatpush1.bf16.msra.mxu0 %v3018
      %4173 = vmatprep.subr.bf16.mxu0 %v3031
      %4174 = vmatpush1.bf16.msra.mxu0 %v3030
      %4175 = vmatprep.subr.bf16.mxu0 %v3043
      %4176 = vmatpush1.bf16.msra.mxu0 %v3042
      %4177 = vmatprep.subr.bf16.mxu0 %v3055
      %4178 = vmatpush1.bf16.msra.mxu0 %v3054
      %4179 = vmatprep.subr.bf16.mxu0 %v3067
      %4180 = vmatpush1.bf16.msra.mxu0 %v3066
      %4181 = vmatprep.subr.bf16.mxu0 %v3079
      %4182 = vmatpush1.bf16.msra.mxu0 %v3078
      %4183 = vmatprep.subr.bf16.mxu0 %v3091
      %4184 = vmatpush1.bf16.msra.mxu0 %v3090
      %4185 = vmatprep.mubr.bf16.mxu0 %v343
      %4186 = vmatmul.mubr.bf16.gmra.mrb[0].mxu0 %v342
      %v4187 = vpop.f32.mrb[0].mxu0
      %v4188 = vadd.f32 %v4147, %v4187
      %v4189 = vpop.f32.mrb[0].mxu0
      %v4190 = vadd.f32 %v4149, %v4189
      %v4191 = vpop.f32.mrb[0].mxu0
      %v4192 = vpop.f32.mrb[0].mxu0
      %4193 = vdwg.mxu0
      %4194 = vmatprep.subr.bf16.mxu0 %v3103
      %4195 = vmatpush1.bf16.msra.mxu0 %v3102
      %4196 = vmatprep.subr.bf16.mxu0 %v3115
      %4197 = vmatpush1.bf16.msra.mxu0 %v3114
      %4198 = vmatprep.subr.bf16.mxu0 %v3127
      %4199 = vmatpush1.bf16.msra.mxu0 %v3126
      %4200 = vmatprep.subr.bf16.mxu0 %v3139
      %4201 = vmatpush1.bf16.msra.mxu0 %v3138
      %4202 = vmatprep.subr.bf16.mxu0 %v3151
      %4203 = vmatpush1.bf16.msra.mxu0 %v3150
      %4204 = vmatprep.subr.bf16.mxu0 %v3163
      %4205 = vmatpush1.bf16.msra.mxu0 %v3162
      %4206 = vmatprep.subr.bf16.mxu0 %v3175
      %4207 = vmatpush1.bf16.msra.mxu0 %v3174
      %4208 = vmatprep.subr.bf16.mxu0 %v3187
      %4209 = vmatpush1.bf16.msra.mxu0 %v3186
      %4210 = vmatprep.subr.bf16.mxu0 %v3199
      %4211 = vmatpush1.bf16.msra.mxu0 %v3198
      %4212 = vmatprep.subr.bf16.mxu0 %v3211
      %4213 = vmatpush1.bf16.msra.mxu0 %v3210
      %4214 = vmatprep.subr.bf16.mxu0 %v3223
      %4215 = vmatpush1.bf16.msra.mxu0 %v3222
      %4216 = vmatprep.subr.bf16.mxu0 %v3235
      %4217 = vmatpush1.bf16.msra.mxu0 %v3234
      %4218 = vmatprep.subr.bf16.mxu0 %v3247
      %4219 = vmatpush1.bf16.msra.mxu0 %v3246
      %4220 = vmatprep.subr.bf16.mxu0 %v3259
      %4221 = vmatpush1.bf16.msra.mxu0 %v3258
      %4222 = vmatprep.subr.bf16.mxu0 %v3271
      %4223 = vmatpush1.bf16.msra.mxu0 %v3270
      %4224 = vmatprep.subr.bf16.mxu0 %v3283
      %4225 = vmatpush1.bf16.msra.mxu0 %v3282
      %4226 = vmatprep.mubr.bf16.mxu0 %v345
      %4227 = vmatmul.mubr.bf16.gmra.mrb[0].mxu0 %v344
      %v4228 = vpop.f32.mrb[0].mxu0
      %v4229 = vadd.f32 %v4188, %v4228
      %v4230 = vpop.f32.mrb[0].mxu0
      %v4231 = vadd.f32 %v4190, %v4230
      %v4232 = vpop.f32.mrb[0].mxu0
      %v4233 = vpop.f32.mrb[0].mxu0
      %4234 = vdwg.mxu0
      %4235 = vmatprep.subr.bf16.mxu0 %v2721
      %4236 = vmatpush1.bf16.msra.mxu0 %v2720
      %4237 = vmatprep.subr.bf16.mxu0 %v2733
      %4238 = vmatpush1.bf16.msra.mxu0 %v2732
      %4239 = vmatprep.subr.bf16.mxu0 %v2745
      %4240 = vmatpush1.bf16.msra.mxu0 %v2744
      %4241 = vmatprep.subr.bf16.mxu0 %v2757
      %4242 = vmatpush1.bf16.msra.mxu0 %v2756
      %4243 = vmatprep.subr.bf16.mxu0 %v2769
      %4244 = vmatpush1.bf16.msra.mxu0 %v2768
      %4245 = vmatprep.subr.bf16.mxu0 %v2781
      %4246 = vmatpush1.bf16.msra.mxu0 %v2780
      %4247 = vmatprep.subr.bf16.mxu0 %v2793
      %4248 = vmatpush1.bf16.msra.mxu0 %v2792
      %4249 = vmatprep.subr.bf16.mxu0 %v2805
      %4250 = vmatpush1.bf16.msra.mxu0 %v2804
      %4251 = vmatprep.subr.bf16.mxu0 %v2817
      %4252 = vmatpush1.bf16.msra.mxu0 %v2816
      %4253 = vmatprep.subr.bf16.mxu0 %v2829
      %4254 = vmatpush1.bf16.msra.mxu0 %v2828
      %4255 = vmatprep.subr.bf16.mxu0 %v2841
      %4256 = vmatpush1.bf16.msra.mxu0 %v2840
      %4257 = vmatprep.subr.bf16.mxu0 %v2853
      %4258 = vmatpush1.bf16.msra.mxu0 %v2852
      %4259 = vmatprep.subr.bf16.mxu0 %v2865
      %4260 = vmatpush1.bf16.msra.mxu0 %v2864
      %4261 = vmatprep.subr.bf16.mxu0 %v2877
      %4262 = vmatpush1.bf16.msra.mxu0 %v2876
      %4263 = vmatprep.subr.bf16.mxu0 %v2889
      %4264 = vmatpush1.bf16.msra.mxu0 %v2888
      %4265 = vmatprep.subr.bf16.mxu0 %v2901
      %4266 = vmatpush1.bf16.msra.mxu0 %v2900
      %4267 = vmatprep.mubr.bf16.mxu0 %v341
      %4268 = vmatmul.mubr.bf16.gmra.mrb[0].mxu0 %v340
      %v4269 = vpop.f32.mrb[0].mxu0
      %v4270 = vadd.f32 %v953, %v4269
      %v4271 = vpop.f32.mrb[0].mxu0
      %v4272 = vadd.f32 %v957, %v4271
      %v4273 = vpop.f32.mrb[0].mxu0
      %v4274 = vpop.f32.mrb[0].mxu0
      %4275 = vdwg.mxu0
      %4276 = vmatprep.subr.bf16.mxu0 %v2913
      %4277 = vmatpush1.bf16.msra.mxu0 %v2912
      %4278 = vmatprep.subr.bf16.mxu0 %v2925
      %4279 = vmatpush1.bf16.msra.mxu0 %v2924
      %4280 = vmatprep.subr.bf16.mxu0 %v2937
      %4281 = vmatpush1.bf16.msra.mxu0 %v2936
      %4282 = vmatprep.subr.bf16.mxu0 %v2949
      %4283 = vmatpush1.bf16.msra.mxu0 %v2948
      %4284 = vmatprep.subr.bf16.mxu0 %v2961
      %4285 = vmatpush1.bf16.msra.mxu0 %v2960
      %4286 = vmatprep.subr.bf16.mxu0 %v2973
      %4287 = vmatpush1.bf16.msra.mxu0 %v2972
      %4288 = vmatprep.subr.bf16.mxu0 %v2985
      %4289 = vmatpush1.bf16.msra.mxu0 %v2984
      %4290 = vmatprep.subr.bf16.mxu0 %v2997
      %4291 = vmatpush1.bf16.msra.mxu0 %v2996
      %4292 = vmatprep.subr.bf16.mxu0 %v3009
      %4293 = vmatpush1.bf16.msra.mxu0 %v3008
      %4294 = vmatprep.subr.bf16.mxu0 %v3021
      %4295 = vmatpush1.bf16.msra.mxu0 %v3020
      %4296 = vmatprep.subr.bf16.mxu0 %v3033
      %4297 = vmatpush1.bf16.msra.mxu0 %v3032
      %4298 = vmatprep.subr.bf16.mxu0 %v3045
      %4299 = vmatpush1.bf16.msra.mxu0 %v3044
      %4300 = vmatprep.subr.bf16.mxu0 %v3057
      %4301 = vmatpush1.bf16.msra.mxu0 %v3056
      %4302 = vmatprep.subr.bf16.mxu0 %v3069
      %4303 = vmatpush1.bf16.msra.mxu0 %v3068
      %4304 = vmatprep.subr.bf16.mxu0 %v3081
      %4305 = vmatpush1.bf16.msra.mxu0 %v3080
      %4306 = vmatprep.subr.bf16.mxu0 %v3093
      %4307 = vmatpush1.bf16.msra.mxu0 %v3092
      %4308 = vmatprep.mubr.bf16.mxu0 %v343
      %4309 = vmatmul.mubr.bf16.gmra.mrb[0].mxu0 %v342
      %v4310 = vpop.f32.mrb[0].mxu0
      %v4311 = vadd.f32 %v4270, %v4310
      %v4312 = vpop.f32.mrb[0].mxu0
      %v4313 = vadd.f32 %v4272, %v4312
      %v4314 = vpop.f32.mrb[0].mxu0
      %v4315 = vpop.f32.mrb[0].mxu0
      %4316 = vdwg.mxu0
      %4317 = vmatprep.subr.bf16.mxu0 %v3105
      %4318 = vmatpush1.bf16.msra.mxu0 %v3104
      %4319 = vmatprep.subr.bf16.mxu0 %v3117
      %4320 = vmatpush1.bf16.msra.mxu0 %v3116
      %4321 = vmatprep.subr.bf16.mxu0 %v3129
      %4322 = vmatpush1.bf16.msra.mxu0 %v3128
      %4323 = vmatprep.subr.bf16.mxu0 %v3141
      %4324 = vmatpush1.bf16.msra.mxu0 %v3140
      %4325 = vmatprep.subr.bf16.mxu0 %v3153
      %4326 = vmatpush1.bf16.msra.mxu0 %v3152
      %4327 = vmatprep.subr.bf16.mxu0 %v3165
      %4328 = vmatpush1.bf16.msra.mxu0 %v3164
      %4329 = vmatprep.subr.bf16.mxu0 %v3177
      %4330 = vmatpush1.bf16.msra.mxu0 %v3176
      %4331 = vmatprep.subr.bf16.mxu0 %v3189
      %4332 = vmatpush1.bf16.msra.mxu0 %v3188
      %4333 = vmatprep.subr.bf16.mxu0 %v3201
      %4334 = vmatpush1.bf16.msra.mxu0 %v3200
      %4335 = vmatprep.subr.bf16.mxu0 %v3213
      %4336 = vmatpush1.bf16.msra.mxu0 %v3212
      %4337 = vmatprep.subr.bf16.mxu0 %v3225
      %4338 = vmatpush1.bf16.msra.mxu0 %v3224
      %4339 = vmatprep.subr.bf16.mxu0 %v3237
      %4340 = vmatpush1.bf16.msra.mxu0 %v3236
      %4341 = vmatprep.subr.bf16.mxu0 %v3249
      %4342 = vmatpush1.bf16.msra.mxu0 %v3248
      %4343 = vmatprep.subr.bf16.mxu0 %v3261
      %4344 = vmatpush1.bf16.msra.mxu0 %v3260
      %4345 = vmatprep.subr.bf16.mxu0 %v3273
      %4346 = vmatpush1.bf16.msra.mxu0 %v3272
      %4347 = vmatprep.subr.bf16.mxu0 %v3285
      %4348 = vmatpush1.bf16.msra.mxu0 %v3284
      %4349 = vmatprep.mubr.bf16.mxu0 %v345
      %4350 = vmatmul.mubr.bf16.gmra.mrb[0].mxu0 %v344
      %v4351 = vpop.f32.mrb[0].mxu0
      %v4352 = vadd.f32 %v4311, %v4351
      %v4353 = vpop.f32.mrb[0].mxu0
      %v4354 = vadd.f32 %v4313, %v4353
      %v4355 = vpop.f32.mrb[0].mxu0
      %v4356 = vpop.f32.mrb[0].mxu0
      %4357 = vdwg.mxu0
      %4358 = vmatprep.subr.bf16.mxu0 %v2723
      %4359 = vmatpush1.bf16.msra.mxu0 %v2722
      %4360 = vmatprep.subr.bf16.mxu0 %v2735
      %4361 = vmatpush1.bf16.msra.mxu0 %v2734
      %4362 = vmatprep.subr.bf16.mxu0 %v2747
      %4363 = vmatpush1.bf16.msra.mxu0 %v2746
      %4364 = vmatprep.subr.bf16.mxu0 %v2759
      %4365 = vmatpush1.bf16.msra.mxu0 %v2758
      %4366 = vmatprep.subr.bf16.mxu0 %v2771
      %4367 = vmatpush1.bf16.msra.mxu0 %v2770
      %4368 = vmatprep.subr.bf16.mxu0 %v2783
      %4369 = vmatpush1.bf16.msra.mxu0 %v2782
      %4370 = vmatprep.subr.bf16.mxu0 %v2795
      %4371 = vmatpush1.bf16.msra.mxu0 %v2794
      %4372 = vmatprep.subr.bf16.mxu0 %v2807
      %4373 = vmatpush1.bf16.msra.mxu0 %v2806
      %4374 = vmatprep.subr.bf16.mxu0 %v2819
      %4375 = vmatpush1.bf16.msra.mxu0 %v2818
      %4376 = vmatprep.subr.bf16.mxu0 %v2831
      %4377 = vmatpush1.bf16.msra.mxu0 %v2830
      %4378 = vmatprep.subr.bf16.mxu0 %v2843
      %4379 = vmatpush1.bf16.msra.mxu0 %v2842
      %4380 = vmatprep.subr.bf16.mxu0 %v2855
      %4381 = vmatpush1.bf16.msra.mxu0 %v2854
      %4382 = vmatprep.subr.bf16.mxu0 %v2867
      %4383 = vmatpush1.bf16.msra.mxu0 %v2866
      %4384 = vmatprep.subr.bf16.mxu0 %v2879
      %4385 = vmatpush1.bf16.msra.mxu0 %v2878
      %4386 = vmatprep.subr.bf16.mxu0 %v2891
      %4387 = vmatpush1.bf16.msra.mxu0 %v2890
      %4388 = vmatprep.subr.bf16.mxu0 %v2903
      %4389 = vmatpush1.bf16.msra.mxu0 %v2902
      %4390 = vmatprep.mubr.bf16.mxu0 %v341
      %4391 = vmatmul.mubr.bf16.gmra.mrb[0].mxu0 %v340
      %v4392 = vpop.f32.mrb[0].mxu0
      %v4393 = vadd.f32 %v961, %v4392
      %v4394 = vpop.f32.mrb[0].mxu0
      %v4395 = vadd.f32 %v965, %v4394
      %v4396 = vpop.f32.mrb[0].mxu0
      %v4397 = vpop.f32.mrb[0].mxu0
      %4398 = vdwg.mxu0
      %4399 = vmatprep.subr.bf16.mxu0 %v2915
      %4400 = vmatpush1.bf16.msra.mxu0 %v2914
      %4401 = vmatprep.subr.bf16.mxu0 %v2927
      %4402 = vmatpush1.bf16.msra.mxu0 %v2926
      %4403 = vmatprep.subr.bf16.mxu0 %v2939
      %4404 = vmatpush1.bf16.msra.mxu0 %v2938
      %4405 = vmatprep.subr.bf16.mxu0 %v2951
      %4406 = vmatpush1.bf16.msra.mxu0 %v2950
      %4407 = vmatprep.subr.bf16.mxu0 %v2963
      %4408 = vmatpush1.bf16.msra.mxu0 %v2962
      %4409 = vmatprep.subr.bf16.mxu0 %v2975
      %4410 = vmatpush1.bf16.msra.mxu0 %v2974
      %4411 = vmatprep.subr.bf16.mxu0 %v2987
      %4412 = vmatpush1.bf16.msra.mxu0 %v2986
      %4413 = vmatprep.subr.bf16.mxu0 %v2999
      %4414 = vmatpush1.bf16.msra.mxu0 %v2998
      %4415 = vmatprep.subr.bf16.mxu0 %v3011
      %4416 = vmatpush1.bf16.msra.mxu0 %v3010
      %4417 = vmatprep.subr.bf16.mxu0 %v3023
      %4418 = vmatpush1.bf16.msra.mxu0 %v3022
      %4419 = vmatprep.subr.bf16.mxu0 %v3035
      %4420 = vmatpush1.bf16.msra.mxu0 %v3034
      %4421 = vmatprep.subr.bf16.mxu0 %v3047
      %4422 = vmatpush1.bf16.msra.mxu0 %v3046
      %4423 = vmatprep.subr.bf16.mxu0 %v3059
      %4424 = vmatpush1.bf16.msra.mxu0 %v3058
      %4425 = vmatprep.subr.bf16.mxu0 %v3071
      %4426 = vmatpush1.bf16.msra.mxu0 %v3070
      %4427 = vmatprep.subr.bf16.mxu0 %v3083
      %4428 = vmatpush1.bf16.msra.mxu0 %v3082
      %4429 = vmatprep.subr.bf16.mxu0 %v3095
      %4430 = vmatpush1.bf16.msra.mxu0 %v3094
      %4431 = vmatprep.mubr.bf16.mxu0 %v343
      %4432 = vmatmul.mubr.bf16.gmra.mrb[0].mxu0 %v342
      %v4433 = vpop.f32.mrb[0].mxu0
      %v4434 = vadd.f32 %v4393, %v4433
      %v4435 = vpop.f32.mrb[0].mxu0
      %v4436 = vadd.f32 %v4395, %v4435
      %v4437 = vpop.f32.mrb[0].mxu0
      %v4438 = vpop.f32.mrb[0].mxu0
      %4439 = vdwg.mxu0
      %4440 = vmatprep.subr.bf16.mxu0 %v3107
      %4441 = vmatpush1.bf16.msra.mxu0 %v3106
      %4442 = vmatprep.subr.bf16.mxu0 %v3119
      %4443 = vmatpush1.bf16.msra.mxu0 %v3118
      %4444 = vmatprep.subr.bf16.mxu0 %v3131
      %4445 = vmatpush1.bf16.msra.mxu0 %v3130
      %4446 = vmatprep.subr.bf16.mxu0 %v3143
      %4447 = vmatpush1.bf16.msra.mxu0 %v3142
      %4448 = vmatprep.subr.bf16.mxu0 %v3155
      %4449 = vmatpush1.bf16.msra.mxu0 %v3154
      %4450 = vmatprep.subr.bf16.mxu0 %v3167
      %4451 = vmatpush1.bf16.msra.mxu0 %v3166
      %4452 = vmatprep.subr.bf16.mxu0 %v3179
      %4453 = vmatpush1.bf16.msra.mxu0 %v3178
      %4454 = vmatprep.subr.bf16.mxu0 %v3191
      %4455 = vmatpush1.bf16.msra.mxu0 %v3190
      %4456 = vmatprep.subr.bf16.mxu0 %v3203
      %4457 = vmatpush1.bf16.msra.mxu0 %v3202
      %4458 = vmatprep.subr.bf16.mxu0 %v3215
      %4459 = vmatpush1.bf16.msra.mxu0 %v3214
      %4460 = vmatprep.subr.bf16.mxu0 %v3227
      %4461 = vmatpush1.bf16.msra.mxu0 %v3226
      %4462 = vmatprep.subr.bf16.mxu0 %v3239
      %4463 = vmatpush1.bf16.msra.mxu0 %v3238
      %4464 = vmatprep.subr.bf16.mxu0 %v3251
      %4465 = vmatpush1.bf16.msra.mxu0 %v3250
      %4466 = vmatprep.subr.bf16.mxu0 %v3263
      %4467 = vmatpush1.bf16.msra.mxu0 %v3262
      %4468 = vmatprep.subr.bf16.mxu0 %v3275
      %4469 = vmatpush1.bf16.msra.mxu0 %v3274
      %4470 = vmatprep.subr.bf16.mxu0 %v3287
      %4471 = vmatpush1.bf16.msra.mxu0 %v3286
      %4472 = vmatprep.mubr.bf16.mxu0 %v345
      %4473 = vmatmul.mubr.bf16.gmra.mrb[0].mxu0 %v344
      %v4474 = vpop.f32.mrb[0].mxu0
      %v4475 = vadd.f32 %v4434, %v4474
      %v4476 = vpop.f32.mrb[0].mxu0
      %v4477 = vadd.f32 %v4436, %v4476
      %v4478 = vpop.f32.mrb[0].mxu0
      %v4479 = vpop.f32.mrb[0].mxu0
      %4480 = vdwg.mxu0
      %4481 = vmatprep.subr.bf16.mxu0 %v2725
      %4482 = vmatpush1.bf16.msra.mxu0 %v2724
      %4483 = vmatprep.subr.bf16.mxu0 %v2737
      %4484 = vmatpush1.bf16.msra.mxu0 %v2736
      %4485 = vmatprep.subr.bf16.mxu0 %v2749
      %4486 = vmatpush1.bf16.msra.mxu0 %v2748
      %4487 = vmatprep.subr.bf16.mxu0 %v2761
      %4488 = vmatpush1.bf16.msra.mxu0 %v2760
      %4489 = vmatprep.subr.bf16.mxu0 %v2773
      %4490 = vmatpush1.bf16.msra.mxu0 %v2772
      %4491 = vmatprep.subr.bf16.mxu0 %v2785
      %4492 = vmatpush1.bf16.msra.mxu0 %v2784
      %4493 = vmatprep.subr.bf16.mxu0 %v2797
      %4494 = vmatpush1.bf16.msra.mxu0 %v2796
      %4495 = vmatprep.subr.bf16.mxu0 %v2809
      %4496 = vmatpush1.bf16.msra.mxu0 %v2808
      %4497 = vmatprep.subr.bf16.mxu0 %v2821
      %4498 = vmatpush1.bf16.msra.mxu0 %v2820
      %4499 = vmatprep.subr.bf16.mxu0 %v2833
      %4500 = vmatpush1.bf16.msra.mxu0 %v2832
      %4501 = vmatprep.subr.bf16.mxu0 %v2845
      %4502 = vmatpush1.bf16.msra.mxu0 %v2844
      %4503 = vmatprep.subr.bf16.mxu0 %v2857
      %4504 = vmatpush1.bf16.msra.mxu0 %v2856
      %4505 = vmatprep.subr.bf16.mxu0 %v2869
      %4506 = vmatpush1.bf16.msra.mxu0 %v2868
      %4507 = vmatprep.subr.bf16.mxu0 %v2881
      %4508 = vmatpush1.bf16.msra.mxu0 %v2880
      %4509 = vmatprep.subr.bf16.mxu0 %v2893
      %4510 = vmatpush1.bf16.msra.mxu0 %v2892
      %4511 = vmatprep.subr.bf16.mxu0 %v2905
      %4512 = vmatpush1.bf16.msra.mxu0 %v2904
      %4513 = vmatprep.mubr.bf16.mxu0 %v341
      %4514 = vmatmul.mubr.bf16.gmra.mrb[0].mxu0 %v340
      %v4515 = vpop.f32.mrb[0].mxu0
      %v4516 = vadd.f32 %v969, %v4515
      %v4517 = vpop.f32.mrb[0].mxu0
      %v4518 = vadd.f32 %v973, %v4517
      %v4519 = vpop.f32.mrb[0].mxu0
      %v4520 = vpop.f32.mrb[0].mxu0
      %4521 = vdwg.mxu0
      %4522 = vmatprep.subr.bf16.mxu0 %v2917
      %4523 = vmatpush1.bf16.msra.mxu0 %v2916
      %4524 = vmatprep.subr.bf16.mxu0 %v2929
      %4525 = vmatpush1.bf16.msra.mxu0 %v2928
      %4526 = vmatprep.subr.bf16.mxu0 %v2941
      %4527 = vmatpush1.bf16.msra.mxu0 %v2940
      %4528 = vmatprep.subr.bf16.mxu0 %v2953
      %4529 = vmatpush1.bf16.msra.mxu0 %v2952
      %4530 = vmatprep.subr.bf16.mxu0 %v2965
      %4531 = vmatpush1.bf16.msra.mxu0 %v2964
      %4532 = vmatprep.subr.bf16.mxu0 %v2977
      %4533 = vmatpush1.bf16.msra.mxu0 %v2976
      %4534 = vmatprep.subr.bf16.mxu0 %v2989
      %4535 = vmatpush1.bf16.msra.mxu0 %v2988
      %4536 = vmatprep.subr.bf16.mxu0 %v3001
      %4537 = vmatpush1.bf16.msra.mxu0 %v3000
      %4538 = vmatprep.subr.bf16.mxu0 %v3013
      %4539 = vmatpush1.bf16.msra.mxu0 %v3012
      %4540 = vmatprep.subr.bf16.mxu0 %v3025
      %4541 = vmatpush1.bf16.msra.mxu0 %v3024
      %4542 = vmatprep.subr.bf16.mxu0 %v3037
      %4543 = vmatpush1.bf16.msra.mxu0 %v3036
      %4544 = vmatprep.subr.bf16.mxu0 %v3049
      %4545 = vmatpush1.bf16.msra.mxu0 %v3048
      %4546 = vmatprep.subr.bf16.mxu0 %v3061
      %4547 = vmatpush1.bf16.msra.mxu0 %v3060
      %4548 = vmatprep.subr.bf16.mxu0 %v3073
      %4549 = vmatpush1.bf16.msra.mxu0 %v3072
      %4550 = vmatprep.subr.bf16.mxu0 %v3085
      %4551 = vmatpush1.bf16.msra.mxu0 %v3084
      %4552 = vmatprep.subr.bf16.mxu0 %v3097
      %4553 = vmatpush1.bf16.msra.mxu0 %v3096
      %4554 = vmatprep.mubr.bf16.mxu0 %v343
      %4555 = vmatmul.mubr.bf16.gmra.mrb[0].mxu0 %v342
      %v4556 = vpop.f32.mrb[0].mxu0
      %v4557 = vadd.f32 %v4516, %v4556
      %v4558 = vpop.f32.mrb[0].mxu0
      %v4559 = vadd.f32 %v4518, %v4558
      %v4560 = vpop.f32.mrb[0].mxu0
      %v4561 = vpop.f32.mrb[0].mxu0
      %4562 = vdwg.mxu0
      %4563 = vmatprep.subr.bf16.mxu0 %v3109
      %4564 = vmatpush1.bf16.msra.mxu0 %v3108
      %4565 = vmatprep.subr.bf16.mxu0 %v3121
      %4566 = vmatpush1.bf16.msra.mxu0 %v3120
      %4567 = vmatprep.subr.bf16.mxu0 %v3133
      %4568 = vmatpush1.bf16.msra.mxu0 %v3132
      %4569 = vmatprep.subr.bf16.mxu0 %v3145
      %4570 = vmatpush1.bf16.msra.mxu0 %v3144
      %4571 = vmatprep.subr.bf16.mxu0 %v3157
      %4572 = vmatpush1.bf16.msra.mxu0 %v3156
      %4573 = vmatprep.subr.bf16.mxu0 %v3169
      %4574 = vmatpush1.bf16.msra.mxu0 %v3168
      %4575 = vmatprep.subr.bf16.mxu0 %v3181
      %4576 = vmatpush1.bf16.msra.mxu0 %v3180
      %4577 = vmatprep.subr.bf16.mxu0 %v3193
      %4578 = vmatpush1.bf16.msra.mxu0 %v3192
      %4579 = vmatprep.subr.bf16.mxu0 %v3205
      %4580 = vmatpush1.bf16.msra.mxu0 %v3204
      %4581 = vmatprep.subr.bf16.mxu0 %v3217
      %4582 = vmatpush1.bf16.msra.mxu0 %v3216
      %4583 = vmatprep.subr.bf16.mxu0 %v3229
      %4584 = vmatpush1.bf16.msra.mxu0 %v3228
      %4585 = vmatprep.subr.bf16.mxu0 %v3241
      %4586 = vmatpush1.bf16.msra.mxu0 %v3240
      %4587 = vmatprep.subr.bf16.mxu0 %v3253
      %4588 = vmatpush1.bf16.msra.mxu0 %v3252
      %4589 = vmatprep.subr.bf16.mxu0 %v3265
      %4590 = vmatpush1.bf16.msra.mxu0 %v3264
      %4591 = vmatprep.subr.bf16.mxu0 %v3277
      %4592 = vmatpush1.bf16.msra.mxu0 %v3276
      %4593 = vmatprep.subr.bf16.mxu0 %v3289
      %4594 = vmatpush1.bf16.msra.mxu0 %v3288
      %4595 = vmatprep.mubr.bf16.mxu0 %v345
      %4596 = vmatmul.mubr.bf16.gmra.mrb[0].mxu0 %v344
      %v4597 = vpop.f32.mrb[0].mxu0
      %v4598 = vadd.f32 %v4557, %v4597
      %v4599 = vpop.f32.mrb[0].mxu0
      %v4600 = vadd.f32 %v4559, %v4599
      %v4601 = vpop.f32.mrb[0].mxu0
      %v4602 = vpop.f32.mrb[0].mxu0
      %4603 = vdwg.mxu0
      %v4604 = vxor.u32 %v3983, 2147483648
      %v4605 = vxor.u32 %v3985, 2147483648
      %v4606 = vmul.f32 %v4604, 1.442695
      %v4607 = vpow.pop %v4606
      %v4608 = vmul.f32 %v4605, 1.442695
      %v4609 = vpow.pop %v4608
      %v4610 = vadd.f32 %v4607, 1.0
      %v4611 = vadd.f32 %v4609, 1.0
      %v4612 = vrcp.pop %v4610
      %v4613 = vmul.f32 1.0, %v4612
      %v4614 = vrcp.pop %v4611
      %v4615 = vmul.f32 1.0, %v4614
      %v4616 = vtanh.pop %v4106
      %v4617 = vtanh.pop %v4108
      %v4618 = vxor.u32 %v4229, 2147483648
      %v4619 = vxor.u32 %v4231, 2147483648
      %v4620 = vmul.f32 %v4618, 1.442695
      %v4621 = vpow.pop %v4620
      %v4622 = vmul.f32 %v4619, 1.442695
      %v4623 = vpow.pop %v4622
      %v4624 = vadd.f32 %v4621, 1.0
      %v4625 = vadd.f32 %v4623, 1.0
      %v4626 = vrcp.pop %v4624
      %v4627 = vmul.f32 1.0, %v4626
      %v4628 = vrcp.pop %v4625
      %v4629 = vmul.f32 1.0, %v4628
      %v4630 = vmul.f32 %v4613, %v4616
      %v4631 = vmul.f32 %v4615, %v4617
      %v4632 = vtanh.pop %v4630
      %v4633 = vtanh.pop %v4631
      %v4634 = vmul.f32 %v4627, %v4632
      %v4635 = vmul.f32 %v4629, %v4633
      %v4636 = vxor.u32 %v4352, 2147483648
      %v4637 = vxor.u32 %v4354, 2147483648
      %v4638 = vmul.f32 %v4636, 1.442695
      %v4639 = vpow.pop %v4638
      %v4640 = vmul.f32 %v4637, 1.442695
      %v4641 = vpow.pop %v4640
      %v4642 = vadd.f32 %v4639, 1.0
      %v4643 = vadd.f32 %v4641, 1.0
      %v4644 = vrcp.pop %v4642
      %v4645 = vmul.f32 1.0, %v4644
      %v4646 = vrcp.pop %v4643
      %v4647 = vmul.f32 1.0, %v4646
      %v4648 = vtanh.pop %v4475
      %v4649 = vtanh.pop %v4477
      %v4650 = vxor.u32 %v4598, 2147483648
      %v4651 = vxor.u32 %v4600, 2147483648
      %v4652 = vmul.f32 %v4650, 1.442695
      %v4653 = vpow.pop %v4652
      %v4654 = vmul.f32 %v4651, 1.442695
      %v4655 = vpow.pop %v4654
      %v4656 = vadd.f32 %v4653, 1.0
      %v4657 = vadd.f32 %v4655, 1.0
      %v4658 = vrcp.pop %v4656
      %v4659 = vmul.f32 1.0, %v4658
      %v4660 = vrcp.pop %v4657
      %v4661 = vmul.f32 1.0, %v4660
      %v4662 = vmul.f32 %v4645, %v4648
      %v4663 = vmul.f32 %v4647, %v4649
      %v4664 = vtanh.pop %v4662
      %v4665 = vtanh.pop %v4663
      %v4666 = vmul.f32 %v4659, %v4664
      %v4667 = vmul.f32 %v4661, %v4665
      %v4668 = vpack.c.bf16 %v4634, %v4634
      %v4669 = vpack.c.bf16 %v4635, %v4635
      %v4670 = vpack.c.bf16 %v4666, %v4666
      %v4671 = vpack.c.bf16 %v4667, %v4667
      %v4672 = vld [vmem:[#allocation11] sm:$0xff]
      %v4673 = vld [vmem:[#allocation11 + $0x10] sm:$0xff]
      %v4674 = vld [vmem:[#allocation11 + $0x18] sm:$0xff]
      %v4675 = vld [vmem:[#allocation11 + $0x20] sm:$0xff]
      %v4676 = vld [vmem:[#allocation11 + $0x30] sm:$0xff]
      %v4677 = vld [vmem:[#allocation11 + $0x38] sm:$0xff]
      %v4678 = vld [vmem:[#allocation11 + $0x40] sm:$0xff]
      %v4679 = vld [vmem:[#allocation11 + $0x50] sm:$0xff]
      %v4680 = vld [vmem:[#allocation11 + $0x58] sm:$0xff]
      %v4681 = vld [vmem:[#allocation11 + $0x60] sm:$0xff]
      %v4682 = vld [vmem:[#allocation11 + $0x70] sm:$0xff]
      %v4683 = vld [vmem:[#allocation11 + $0x78] sm:$0xff]
      %v4684 = vld [vmem:[#allocation11 + $0x80] sm:$0xff]
      %v4685 = vld [vmem:[#allocation11 + $0x90] sm:$0xff]
      %v4686 = vld [vmem:[#allocation11 + $0x98] sm:$0xff]
      %v4687 = vld [vmem:[#allocation11 + $0xa0] sm:$0xff]
      %v4688 = vld [vmem:[#allocation11 + $0xb0] sm:$0xff]
      %v4689 = vld [vmem:[#allocation11 + $0xb8] sm:$0xff]
      %v4690 = vld [vmem:[#allocation11 + $0xc0] sm:$0xff]
      %v4691 = vld [vmem:[#allocation11 + $0xd0] sm:$0xff]
      %v4692 = vld [vmem:[#allocation11 + $0xd8] sm:$0xff]
      %v4693 = vld [vmem:[#allocation11 + $0xe0] sm:$0xff]
      %v4694 = vld [vmem:[#allocation11 + $0xf0] sm:$0xff]
      %v4695 = vld [vmem:[#allocation11 + $0xf8] sm:$0xff]
      %v4696 = vld [vmem:[#allocation11 + $0x100] sm:$0xff]
      %v4697 = vld [vmem:[#allocation11 + $0x110] sm:$0xff]
      %v4698 = vld [vmem:[#allocation11 + $0x118] sm:$0xff]
      %v4699 = vld [vmem:[#allocation11 + $0x120] sm:$0xff]
      %v4700 = vld [vmem:[#allocation11 + $0x130] sm:$0xff]
      %v4701 = vld [vmem:[#allocation11 + $0x138] sm:$0xff]
      %v4702 = vld [vmem:[#allocation11 + $0x140] sm:$0xff]
      %v4703 = vld [vmem:[#allocation11 + $0x150] sm:$0xff]
      %v4704 = vld [vmem:[#allocation11 + $0x158] sm:$0xff]
      %v4705 = vld [vmem:[#allocation11 + $0x160] sm:$0xff]
      %v4706 = vld [vmem:[#allocation11 + $0x170] sm:$0xff]
      %v4707 = vld [vmem:[#allocation11 + $0x178] sm:$0xff]
      %v4708 = vld [vmem:[#allocation11 + $0x180] sm:$0xff]
      %v4709 = vld [vmem:[#allocation11 + $0x190] sm:$0xff]
      %v4710 = vld [vmem:[#allocation11 + $0x198] sm:$0xff]
      %v4711 = vld [vmem:[#allocation11 + $0x1a0] sm:$0xff]
      %v4712 = vld [vmem:[#allocation11 + $0x1b0] sm:$0xff]
      %v4713 = vld [vmem:[#allocation11 + $0x1b8] sm:$0xff]
      %v4714 = vld [vmem:[#allocation11 + $0x1c0] sm:$0xff]
      %v4715 = vld [vmem:[#allocation11 + $0x1d0] sm:$0xff]
      %v4716 = vld [vmem:[#allocation11 + $0x1d8] sm:$0xff]
      %v4717 = vld [vmem:[#allocation11 + $0x1e0] sm:$0xff]
      %v4718 = vld [vmem:[#allocation11 + $0x1f0] sm:$0xff]
      %v4719 = vld [vmem:[#allocation11 + $0x1f8] sm:$0xff]
      %v4720 = vld [vmem:[#allocation11 + $0x200] sm:$0xff]
      %v4721 = vld [vmem:[#allocation11 + $0x210] sm:$0xff]
      %v4722 = vld [vmem:[#allocation11 + $0x218] sm:$0xff]
      %v4723 = vld [vmem:[#allocation11 + $0x220] sm:$0xff]
      %v4724 = vld [vmem:[#allocation11 + $0x230] sm:$0xff]
      %v4725 = vld [vmem:[#allocation11 + $0x238] sm:$0xff]
      %v4726 = vld [vmem:[#allocation11 + $0x240] sm:$0xff]
      %v4727 = vld [vmem:[#allocation11 + $0x250] sm:$0xff]
      %v4728 = vld [vmem:[#allocation11 + $0x258] sm:$0xff]
      %v4729 = vld [vmem:[#allocation11 + $0x260] sm:$0xff]
      %v4730 = vld [vmem:[#allocation11 + $0x270] sm:$0xff]
      %v4731 = vld [vmem:[#allocation11 + $0x278] sm:$0xff]
      %v4732 = vld [vmem:[#allocation11 + $0x280] sm:$0xff]
      %v4733 = vld [vmem:[#allocation11 + $0x290] sm:$0xff]
      %v4734 = vld [vmem:[#allocation11 + $0x298] sm:$0xff]
      %v4735 = vld [vmem:[#allocation11 + $0x2a0] sm:$0xff]
      %v4736 = vld [vmem:[#allocation11 + $0x2b0] sm:$0xff]
      %v4737 = vld [vmem:[#allocation11 + $0x2b8] sm:$0xff]
      %v4738 = vld [vmem:[#allocation11 + $0x2c0] sm:$0xff]
      %v4739 = vld [vmem:[#allocation11 + $0x2d0] sm:$0xff]
      %v4740 = vld [vmem:[#allocation11 + $0x2d8] sm:$0xff]
      %v4741 = vld [vmem:[#allocation11 + $0x2e0] sm:$0xff]
      %v4742 = vld [vmem:[#allocation11 + $0x2f0] sm:$0xff]
      %v4743 = vld [vmem:[#allocation11 + $0x2f8] sm:$0xff]
      %v4744 = vld [vmem:[#allocation11 + $0x300] sm:$0xff]
      %v4745 = vld [vmem:[#allocation11 + $0x310] sm:$0xff]
      %v4746 = vld [vmem:[#allocation11 + $0x318] sm:$0xff]
      %v4747 = vld [vmem:[#allocation11 + $0x320] sm:$0xff]
      %v4748 = vld [vmem:[#allocation11 + $0x330] sm:$0xff]
      %v4749 = vld [vmem:[#allocation11 + $0x338] sm:$0xff]
      %v4750 = vld [vmem:[#allocation11 + $0x340] sm:$0xff]
      %v4751 = vld [vmem:[#allocation11 + $0x350] sm:$0xff]
      %v4752 = vld [vmem:[#allocation11 + $0x358] sm:$0xff]
      %v4753 = vld [vmem:[#allocation11 + $0x360] sm:$0xff]
      %v4754 = vld [vmem:[#allocation11 + $0x370] sm:$0xff]
      %v4755 = vld [vmem:[#allocation11 + $0x378] sm:$0xff]
      %v4756 = vld [vmem:[#allocation11 + $0x380] sm:$0xff]
      %v4757 = vld [vmem:[#allocation11 + $0x390] sm:$0xff]
      %v4758 = vld [vmem:[#allocation11 + $0x398] sm:$0xff]
      %v4759 = vld [vmem:[#allocation11 + $0x3a0] sm:$0xff]
      %v4760 = vld [vmem:[#allocation11 + $0x3b0] sm:$0xff]
      %v4761 = vld [vmem:[#allocation11 + $0x3b8] sm:$0xff]
      %v4762 = vld [vmem:[#allocation11 + $0x3c0] sm:$0xff]
      %v4763 = vld [vmem:[#allocation11 + $0x3d0] sm:$0xff]
      %v4764 = vld [vmem:[#allocation11 + $0x3d8] sm:$0xff]
      %v4765 = vld [vmem:[#allocation11 + $0x3e0] sm:$0xff]
      %v4766 = vld [vmem:[#allocation11 + $0x3f0] sm:$0xff]
      %v4767 = vld [vmem:[#allocation11 + $0x3f8] sm:$0xff]
      %v4768 = vld [vmem:[#allocation12] sm:$0xff]
      %v4770 = vlaneseq
      %v4771 = vshrl.u32 %v4770, 7
      %v4772 = vsub.s32 0, %v4771
      %v4773 = vrot.slane %v4768, %v4772
      %v4774 = vlaneseq
      %v4775 = vshrl.u32 %v4774, 7
      %v4776 = vsub.s32 1, %v4775
      %v4777 = vrot.slane %v4768, %v4776
      %v4778 = vlaneseq
      %v4779 = vshrl.u32 %v4778, 7
      %v4780 = vsub.s32 2, %v4779
      %v4781 = vrot.slane %v4768, %v4780
      %v4782 = vlaneseq
      %v4783 = vshrl.u32 %v4782, 7
      %v4784 = vsub.s32 3, %v4783
      %v4785 = vrot.slane %v4768, %v4784
      %v4786 = vlaneseq
      %v4787 = vshrl.u32 %v4786, 7
      %v4788 = vsub.s32 4, %v4787
      %v4789 = vrot.slane %v4768, %v4788
      %v4790 = vlaneseq
      %v4791 = vshrl.u32 %v4790, 7
      %v4792 = vsub.s32 5, %v4791
      %v4793 = vrot.slane %v4768, %v4792
      %v4794 = vlaneseq
      %v4795 = vshrl.u32 %v4794, 7
      %v4796 = vsub.s32 6, %v4795
      %v4797 = vrot.slane %v4768, %v4796
      %v4798 = vlaneseq
      %v4799 = vshrl.u32 %v4798, 7
      %v4800 = vsub.s32 7, %v4799
      %v4801 = vrot.slane %v4768, %v4800
      %v4906 = vunpack.c.l.b16 %v4672
      %v4907 = vunpack.c.h.b16 %v4672
      %v4908 = vunpack.c.l.b16 %v4673
      %v4909 = vunpack.c.h.b16 %v4673
      %v4910 = vunpack.c.l.b16 %v4674
      %v4911 = vunpack.c.h.b16 %v4674
      %v4912 = vunpack.c.l.b16 %v4675
      %v4913 = vunpack.c.h.b16 %v4675
      %v4914 = vunpack.c.l.b16 %v4676
      %v4915 = vunpack.c.h.b16 %v4676
      %v4916 = vunpack.c.l.b16 %v4677
      %v4917 = vunpack.c.h.b16 %v4677
      %v4918 = vunpack.c.l.b16 %v4678
      %v4919 = vunpack.c.h.b16 %v4678
      %v4920 = vunpack.c.l.b16 %v4679
      %v4921 = vunpack.c.h.b16 %v4679
      %v4922 = vunpack.c.l.b16 %v4680
      %v4923 = vunpack.c.h.b16 %v4680
      %v4924 = vunpack.c.l.b16 %v4681
      %v4925 = vunpack.c.h.b16 %v4681
      %v4926 = vunpack.c.l.b16 %v4682
      %v4927 = vunpack.c.h.b16 %v4682
      %v4928 = vunpack.c.l.b16 %v4683
      %v4929 = vunpack.c.h.b16 %v4683
      %v4930 = vunpack.c.l.b16 %v4684
      %v4931 = vunpack.c.h.b16 %v4684
      %v4932 = vunpack.c.l.b16 %v4685
      %v4933 = vunpack.c.h.b16 %v4685
      %v4934 = vunpack.c.l.b16 %v4686
      %v4935 = vunpack.c.h.b16 %v4686
      %v4936 = vunpack.c.l.b16 %v4687
      %v4937 = vunpack.c.h.b16 %v4687
      %v4938 = vunpack.c.l.b16 %v4688
      %v4939 = vunpack.c.h.b16 %v4688
      %v4940 = vunpack.c.l.b16 %v4689
      %v4941 = vunpack.c.h.b16 %v4689
      %v4942 = vunpack.c.l.b16 %v4690
      %v4943 = vunpack.c.h.b16 %v4690
      %v4944 = vunpack.c.l.b16 %v4691
      %v4945 = vunpack.c.h.b16 %v4691
      %v4946 = vunpack.c.l.b16 %v4692
      %v4947 = vunpack.c.h.b16 %v4692
      %v4948 = vunpack.c.l.b16 %v4693
      %v4949 = vunpack.c.h.b16 %v4693
      %v4950 = vunpack.c.l.b16 %v4694
      %v4951 = vunpack.c.h.b16 %v4694
      %v4952 = vunpack.c.l.b16 %v4695
      %v4953 = vunpack.c.h.b16 %v4695
      %v4954 = vunpack.c.l.b16 %v4696
      %v4955 = vunpack.c.h.b16 %v4696
      %v4956 = vunpack.c.l.b16 %v4697
      %v4957 = vunpack.c.h.b16 %v4697
      %v4958 = vunpack.c.l.b16 %v4698
      %v4959 = vunpack.c.h.b16 %v4698
      %v4960 = vunpack.c.l.b16 %v4699
      %v4961 = vunpack.c.h.b16 %v4699
      %v4962 = vunpack.c.l.b16 %v4700
      %v4963 = vunpack.c.h.b16 %v4700
      %v4964 = vunpack.c.l.b16 %v4701
      %v4965 = vunpack.c.h.b16 %v4701
      %v4966 = vunpack.c.l.b16 %v4702
      %v4967 = vunpack.c.h.b16 %v4702
      %v4968 = vunpack.c.l.b16 %v4703
      %v4969 = vunpack.c.h.b16 %v4703
      %v4970 = vunpack.c.l.b16 %v4704
      %v4971 = vunpack.c.h.b16 %v4704
      %v4972 = vunpack.c.l.b16 %v4705
      %v4973 = vunpack.c.h.b16 %v4705
      %v4974 = vunpack.c.l.b16 %v4706
      %v4975 = vunpack.c.h.b16 %v4706
      %v4976 = vunpack.c.l.b16 %v4707
      %v4977 = vunpack.c.h.b16 %v4707
      %v4978 = vunpack.c.l.b16 %v4708
      %v4979 = vunpack.c.h.b16 %v4708
      %v4980 = vunpack.c.l.b16 %v4709
      %v4981 = vunpack.c.h.b16 %v4709
      %v4982 = vunpack.c.l.b16 %v4710
      %v4983 = vunpack.c.h.b16 %v4710
      %v4984 = vunpack.c.l.b16 %v4711
      %v4985 = vunpack.c.h.b16 %v4711
      %v4986 = vunpack.c.l.b16 %v4712
      %v4987 = vunpack.c.h.b16 %v4712
      %v4988 = vunpack.c.l.b16 %v4713
      %v4989 = vunpack.c.h.b16 %v4713
      %v4990 = vunpack.c.l.b16 %v4714
      %v4991 = vunpack.c.h.b16 %v4714
      %v4992 = vunpack.c.l.b16 %v4715
      %v4993 = vunpack.c.h.b16 %v4715
      %v4994 = vunpack.c.l.b16 %v4716
      %v4995 = vunpack.c.h.b16 %v4716
      %v4996 = vunpack.c.l.b16 %v4717
      %v4997 = vunpack.c.h.b16 %v4717
      %v4998 = vunpack.c.l.b16 %v4718
      %v4999 = vunpack.c.h.b16 %v4718
      %v5000 = vunpack.c.l.b16 %v4719
      %v5001 = vunpack.c.h.b16 %v4719
      %v5002 = vunpack.c.l.b16 %v4720
      %v5003 = vunpack.c.h.b16 %v4720
      %v5004 = vunpack.c.l.b16 %v4721
      %v5005 = vunpack.c.h.b16 %v4721
      %v5006 = vunpack.c.l.b16 %v4722
      %v5007 = vunpack.c.h.b16 %v4722
      %v5008 = vunpack.c.l.b16 %v4723
      %v5009 = vunpack.c.h.b16 %v4723
      %v5010 = vunpack.c.l.b16 %v4724
      %v5011 = vunpack.c.h.b16 %v4724
      %v5012 = vunpack.c.l.b16 %v4725
      %v5013 = vunpack.c.h.b16 %v4725
      %v5014 = vunpack.c.l.b16 %v4726
      %v5015 = vunpack.c.h.b16 %v4726
      %v5016 = vunpack.c.l.b16 %v4727
      %v5017 = vunpack.c.h.b16 %v4727
      %v5018 = vunpack.c.l.b16 %v4728
      %v5019 = vunpack.c.h.b16 %v4728
      %v5020 = vunpack.c.l.b16 %v4729
      %v5021 = vunpack.c.h.b16 %v4729
      %v5022 = vunpack.c.l.b16 %v4730
      %v5023 = vunpack.c.h.b16 %v4730
      %v5024 = vunpack.c.l.b16 %v4731
      %v5025 = vunpack.c.h.b16 %v4731
      %v5026 = vunpack.c.l.b16 %v4732
      %v5027 = vunpack.c.h.b16 %v4732
      %v5028 = vunpack.c.l.b16 %v4733
      %v5029 = vunpack.c.h.b16 %v4733
      %v5030 = vunpack.c.l.b16 %v4734
      %v5031 = vunpack.c.h.b16 %v4734
      %v5032 = vunpack.c.l.b16 %v4735
      %v5033 = vunpack.c.h.b16 %v4735
      %v5034 = vunpack.c.l.b16 %v4736
      %v5035 = vunpack.c.h.b16 %v4736
      %v5036 = vunpack.c.l.b16 %v4737
      %v5037 = vunpack.c.h.b16 %v4737
      %v5038 = vunpack.c.l.b16 %v4738
      %v5039 = vunpack.c.h.b16 %v4738
      %v5040 = vunpack.c.l.b16 %v4739
      %v5041 = vunpack.c.h.b16 %v4739
      %v5042 = vunpack.c.l.b16 %v4740
      %v5043 = vunpack.c.h.b16 %v4740
      %v5044 = vunpack.c.l.b16 %v4741
      %v5045 = vunpack.c.h.b16 %v4741
      %v5046 = vunpack.c.l.b16 %v4742
      %v5047 = vunpack.c.h.b16 %v4742
      %v5048 = vunpack.c.l.b16 %v4743
      %v5049 = vunpack.c.h.b16 %v4743
      %v5050 = vunpack.c.l.b16 %v4744
      %v5051 = vunpack.c.h.b16 %v4744
      %v5052 = vunpack.c.l.b16 %v4745
      %v5053 = vunpack.c.h.b16 %v4745
      %v5054 = vunpack.c.l.b16 %v4746
      %v5055 = vunpack.c.h.b16 %v4746
      %v5056 = vunpack.c.l.b16 %v4747
      %v5057 = vunpack.c.h.b16 %v4747
      %v5058 = vunpack.c.l.b16 %v4748
      %v5059 = vunpack.c.h.b16 %v4748
      %v5060 = vunpack.c.l.b16 %v4749
      %v5061 = vunpack.c.h.b16 %v4749
      %v5062 = vunpack.c.l.b16 %v4750
      %v5063 = vunpack.c.h.b16 %v4750
      %v5064 = vunpack.c.l.b16 %v4751
      %v5065 = vunpack.c.h.b16 %v4751
      %v5066 = vunpack.c.l.b16 %v4752
      %v5067 = vunpack.c.h.b16 %v4752
      %v5068 = vunpack.c.l.b16 %v4753
      %v5069 = vunpack.c.h.b16 %v4753
      %v5070 = vunpack.c.l.b16 %v4754
      %v5071 = vunpack.c.h.b16 %v4754
      %v5072 = vunpack.c.l.b16 %v4755
      %v5073 = vunpack.c.h.b16 %v4755
      %v5074 = vunpack.c.l.b16 %v4756
      %v5075 = vunpack.c.h.b16 %v4756
      %v5076 = vunpack.c.l.b16 %v4757
      %v5077 = vunpack.c.h.b16 %v4757
      %v5078 = vunpack.c.l.b16 %v4758
      %v5079 = vunpack.c.h.b16 %v4758
      %v5080 = vunpack.c.l.b16 %v4759
      %v5081 = vunpack.c.h.b16 %v4759
      %v5082 = vunpack.c.l.b16 %v4760
      %v5083 = vunpack.c.h.b16 %v4760
      %v5084 = vunpack.c.l.b16 %v4761
      %v5085 = vunpack.c.h.b16 %v4761
      %v5086 = vunpack.c.l.b16 %v4762
      %v5087 = vunpack.c.h.b16 %v4762
      %v5088 = vunpack.c.l.b16 %v4763
      %v5089 = vunpack.c.h.b16 %v4763
      %v5090 = vunpack.c.l.b16 %v4764
      %v5091 = vunpack.c.h.b16 %v4764
      %v5092 = vunpack.c.l.b16 %v4765
      %v5093 = vunpack.c.h.b16 %v4765
      %v5094 = vunpack.c.l.b16 %v4766
      %v5095 = vunpack.c.h.b16 %v4766
      %v5096 = vunpack.c.l.b16 %v4767
      %v5097 = vunpack.c.h.b16 %v4767
      %v5098 = vpack.c.b16 %v4912, %v4906
      %v5099 = vpack.c.b16 %v4913, %v4907
      %v5100 = vpack.c.b16 %v4914, %v4908
      %v5101 = vpack.c.b16 %v4915, %v4909
      %v5102 = vpack.c.b16 %v4916, %v4910
      %v5103 = vpack.c.b16 %v4917, %v4911
      %v5104 = vpack.c.b16 %v4924, %v4918
      %v5105 = vpack.c.b16 %v4925, %v4919
      %v5106 = vpack.c.b16 %v4926, %v4920
      %v5107 = vpack.c.b16 %v4927, %v4921
      %v5108 = vpack.c.b16 %v4928, %v4922
      %v5109 = vpack.c.b16 %v4929, %v4923
      %v5110 = vpack.c.b16 %v4936, %v4930
      %v5111 = vpack.c.b16 %v4937, %v4931
      %v5112 = vpack.c.b16 %v4938, %v4932
      %v5113 = vpack.c.b16 %v4939, %v4933
      %v5114 = vpack.c.b16 %v4940, %v4934
      %v5115 = vpack.c.b16 %v4941, %v4935
      %v5116 = vpack.c.b16 %v4948, %v4942
      %v5117 = vpack.c.b16 %v4949, %v4943
      %v5118 = vpack.c.b16 %v4950, %v4944
      %v5119 = vpack.c.b16 %v4951, %v4945
      %v5120 = vpack.c.b16 %v4952, %v4946
      %v5121 = vpack.c.b16 %v4953, %v4947
      %v5122 = vpack.c.b16 %v4960, %v4954
      %v5123 = vpack.c.b16 %v4961, %v4955
      %v5124 = vpack.c.b16 %v4962, %v4956
      %v5125 = vpack.c.b16 %v4963, %v4957
      %v5126 = vpack.c.b16 %v4964, %v4958
      %v5127 = vpack.c.b16 %v4965, %v4959
      %v5128 = vpack.c.b16 %v4972, %v4966
      %v5129 = vpack.c.b16 %v4973, %v4967
      %v5130 = vpack.c.b16 %v4974, %v4968
      %v5131 = vpack.c.b16 %v4975, %v4969
      %v5132 = vpack.c.b16 %v4976, %v4970
      %v5133 = vpack.c.b16 %v4977, %v4971
      %v5134 = vpack.c.b16 %v4984, %v4978
      %v5135 = vpack.c.b16 %v4985, %v4979
      %v5136 = vpack.c.b16 %v4986, %v4980
      %v5137 = vpack.c.b16 %v4987, %v4981
      %v5138 = vpack.c.b16 %v4988, %v4982
      %v5139 = vpack.c.b16 %v4989, %v4983
      %v5140 = vpack.c.b16 %v4996, %v4990
      %v5141 = vpack.c.b16 %v4997, %v4991
      %v5142 = vpack.c.b16 %v4998, %v4992
      %v5143 = vpack.c.b16 %v4999, %v4993
      %v5144 = vpack.c.b16 %v5000, %v4994
      %v5145 = vpack.c.b16 %v5001, %v4995
      %v5146 = vpack.c.b16 %v5008, %v5002
      %v5147 = vpack.c.b16 %v5009, %v5003
      %v5148 = vpack.c.b16 %v5010, %v5004
      %v5149 = vpack.c.b16 %v5011, %v5005
      %v5150 = vpack.c.b16 %v5012, %v5006
      %v5151 = vpack.c.b16 %v5013, %v5007
      %v5152 = vpack.c.b16 %v5020, %v5014
      %v5153 = vpack.c.b16 %v5021, %v5015
      %v5154 = vpack.c.b16 %v5022, %v5016
      %v5155 = vpack.c.b16 %v5023, %v5017
      %v5156 = vpack.c.b16 %v5024, %v5018
      %v5157 = vpack.c.b16 %v5025, %v5019
      %v5158 = vpack.c.b16 %v5032, %v5026
      %v5159 = vpack.c.b16 %v5033, %v5027
      %v5160 = vpack.c.b16 %v5034, %v5028
      %v5161 = vpack.c.b16 %v5035, %v5029
      %v5162 = vpack.c.b16 %v5036, %v5030
      %v5163 = vpack.c.b16 %v5037, %v5031
      %v5164 = vpack.c.b16 %v5044, %v5038
      %v5165 = vpack.c.b16 %v5045, %v5039
      %v5166 = vpack.c.b16 %v5046, %v5040
      %v5167 = vpack.c.b16 %v5047, %v5041
      %v5168 = vpack.c.b16 %v5048, %v5042
      %v5169 = vpack.c.b16 %v5049, %v5043
      %v5170 = vpack.c.b16 %v5056, %v5050
      %v5171 = vpack.c.b16 %v5057, %v5051
      %v5172 = vpack.c.b16 %v5058, %v5052
      %v5173 = vpack.c.b16 %v5059, %v5053
      %v5174 = vpack.c.b16 %v5060, %v5054
      %v5175 = vpack.c.b16 %v5061, %v5055
      %v5176 = vpack.c.b16 %v5068, %v5062
      %v5177 = vpack.c.b16 %v5069, %v5063
      %v5178 = vpack.c.b16 %v5070, %v5064
      %v5179 = vpack.c.b16 %v5071, %v5065
      %v5180 = vpack.c.b16 %v5072, %v5066
      %v5181 = vpack.c.b16 %v5073, %v5067
      %v5182 = vpack.c.b16 %v5080, %v5074
      %v5183 = vpack.c.b16 %v5081, %v5075
      %v5184 = vpack.c.b16 %v5082, %v5076
      %v5185 = vpack.c.b16 %v5083, %v5077
      %v5186 = vpack.c.b16 %v5084, %v5078
      %v5187 = vpack.c.b16 %v5085, %v5079
      %v5188 = vpack.c.b16 %v5092, %v5086
      %v5189 = vpack.c.b16 %v5093, %v5087
      %v5190 = vpack.c.b16 %v5094, %v5088
      %v5191 = vpack.c.b16 %v5095, %v5089
      %v5192 = vpack.c.b16 %v5096, %v5090
      %v5193 = vpack.c.b16 %v5097, %v5091
      %5290 = vmatprep.subr.bf16.mxu0 %v5099
      %5291 = vmatpush1.bf16.msra.mxu0 %v5098
      %5292 = vmatprep.subr.bf16.mxu0 %v5105
      %5293 = vmatpush1.bf16.msra.mxu0 %v5104
      %5294 = vmatprep.subr.bf16.mxu0 %v5111
      %5295 = vmatpush1.bf16.msra.mxu0 %v5110
      %5296 = vmatprep.subr.bf16.mxu0 %v5117
      %5297 = vmatpush1.bf16.msra.mxu0 %v5116
      %5298 = vmatprep.subr.bf16.mxu0 %v5123
      %5299 = vmatpush1.bf16.msra.mxu0 %v5122
      %5300 = vmatprep.subr.bf16.mxu0 %v5129
      %5301 = vmatpush1.bf16.msra.mxu0 %v5128
      %5302 = vmatprep.subr.bf16.mxu0 %v5135
      %5303 = vmatpush1.bf16.msra.mxu0 %v5134
      %5304 = vmatprep.subr.bf16.mxu0 %v5141
      %5305 = vmatpush1.bf16.msra.mxu0 %v5140
      %5306 = vmatprep.subr.bf16.mxu0 %v5147
      %5307 = vmatpush1.bf16.msra.mxu0 %v5146
      %5308 = vmatprep.subr.bf16.mxu0 %v5153
      %5309 = vmatpush1.bf16.msra.mxu0 %v5152
      %5310 = vmatprep.subr.bf16.mxu0 %v5159
      %5311 = vmatpush1.bf16.msra.mxu0 %v5158
      %5312 = vmatprep.subr.bf16.mxu0 %v5165
      %5313 = vmatpush1.bf16.msra.mxu0 %v5164
      %5314 = vmatprep.subr.bf16.mxu0 %v5171
      %5315 = vmatpush1.bf16.msra.mxu0 %v5170
      %5316 = vmatprep.subr.bf16.mxu0 %v5177
      %5317 = vmatpush1.bf16.msra.mxu0 %v5176
      %5318 = vmatprep.subr.bf16.mxu0 %v5183
      %5319 = vmatpush1.bf16.msra.mxu0 %v5182
      %5320 = vmatprep.subr.bf16.mxu0 %v5189
      %5321 = vmatpush1.bf16.msra.mxu0 %v5188
      %5322 = vmatprep.mubr.bf16.mxu0 %v4669
      %5323 = vmatmul.mubr.bf16.gmra.mrb[0].mxu0 %v4668
      %v5324 = vpop.f32.mrb[0].mxu0
      %v5325 = vadd.f32 %v4773, %v5324
      %v5326 = vpop.f32.mrb[0].mxu0
      %v5327 = vadd.f32 %v4777, %v5326
      %v5328 = vpop.f32.mrb[0].mxu0
      %v5329 = vpop.f32.mrb[0].mxu0
      %5330 = vdwg.mxu0
      %5331 = vmatprep.subr.bf16.mxu0 %v5101
      %5332 = vmatpush1.bf16.msra.mxu0 %v5100
      %5333 = vmatprep.subr.bf16.mxu0 %v5107
      %5334 = vmatpush1.bf16.msra.mxu0 %v5106
      %5335 = vmatprep.subr.bf16.mxu0 %v5113
      %5336 = vmatpush1.bf16.msra.mxu0 %v5112
      %5337 = vmatprep.subr.bf16.mxu0 %v5119
      %5338 = vmatpush1.bf16.msra.mxu0 %v5118
      %5339 = vmatprep.subr.bf16.mxu0 %v5125
      %5340 = vmatpush1.bf16.msra.mxu0 %v5124
      %5341 = vmatprep.subr.bf16.mxu0 %v5131
      %5342 = vmatpush1.bf16.msra.mxu0 %v5130
      %5343 = vmatprep.subr.bf16.mxu0 %v5137
      %5344 = vmatpush1.bf16.msra.mxu0 %v5136
      %5345 = vmatprep.subr.bf16.mxu0 %v5143
      %5346 = vmatpush1.bf16.msra.mxu0 %v5142
      %5347 = vmatprep.subr.bf16.mxu0 %v5149
      %5348 = vmatpush1.bf16.msra.mxu0 %v5148
      %5349 = vmatprep.subr.bf16.mxu0 %v5155
      %5350 = vmatpush1.bf16.msra.mxu0 %v5154
      %5351 = vmatprep.subr.bf16.mxu0 %v5161
      %5352 = vmatpush1.bf16.msra.mxu0 %v5160
      %5353 = vmatprep.subr.bf16.mxu0 %v5167
      %5354 = vmatpush1.bf16.msra.mxu0 %v5166
      %5355 = vmatprep.subr.bf16.mxu0 %v5173
      %5356 = vmatpush1.bf16.msra.mxu0 %v5172
      %5357 = vmatprep.subr.bf16.mxu0 %v5179
      %5358 = vmatpush1.bf16.msra.mxu0 %v5178
      %5359 = vmatprep.subr.bf16.mxu0 %v5185
      %5360 = vmatpush1.bf16.msra.mxu0 %v5184
      %5361 = vmatprep.subr.bf16.mxu0 %v5191
      %5362 = vmatpush1.bf16.msra.mxu0 %v5190
      %5363 = vmatprep.mubr.bf16.mxu0 %v4669
      %5364 = vmatmul.mubr.bf16.gmra.mrb[0].mxu0 %v4668
      %v5365 = vpop.f32.mrb[0].mxu0
      %v5366 = vadd.f32 %v4789, %v5365
      %v5367 = vpop.f32.mrb[0].mxu0
      %v5368 = vadd.f32 %v4793, %v5367
      %v5369 = vpop.f32.mrb[0].mxu0
      %v5370 = vpop.f32.mrb[0].mxu0
      %5371 = vdwg.mxu0
      %5372 = vmatprep.subr.bf16.mxu0 %v5103
      %5373 = vmatpush1.bf16.msra.mxu0 %v5102
      %5374 = vmatprep.subr.bf16.mxu0 %v5109
      %5375 = vmatpush1.bf16.msra.mxu0 %v5108
      %5376 = vmatprep.subr.bf16.mxu0 %v5115
      %5377 = vmatpush1.bf16.msra.mxu0 %v5114
      %5378 = vmatprep.subr.bf16.mxu0 %v5121
      %5379 = vmatpush1.bf16.msra.mxu0 %v5120
      %5380 = vmatprep.subr.bf16.mxu0 %v5127
      %5381 = vmatpush1.bf16.msra.mxu0 %v5126
      %5382 = vmatprep.subr.bf16.mxu0 %v5133
      %5383 = vmatpush1.bf16.msra.mxu0 %v5132
      %5384 = vmatprep.subr.bf16.mxu0 %v5139
      %5385 = vmatpush1.bf16.msra.mxu0 %v5138
      %5386 = vmatprep.subr.bf16.mxu0 %v5145
      %5387 = vmatpush1.bf16.msra.mxu0 %v5144
      %5388 = vmatprep.subr.bf16.mxu0 %v5151
      %5389 = vmatpush1.bf16.msra.mxu0 %v5150
      %5390 = vmatprep.subr.bf16.mxu0 %v5157
      %5391 = vmatpush1.bf16.msra.mxu0 %v5156
      %5392 = vmatprep.subr.bf16.mxu0 %v5163
      %5393 = vmatpush1.bf16.msra.mxu0 %v5162
      %5394 = vmatprep.subr.bf16.mxu0 %v5169
      %5395 = vmatpush1.bf16.msra.mxu0 %v5168
      %5396 = vmatprep.subr.bf16.mxu0 %v5175
      %5397 = vmatpush1.bf16.msra.mxu0 %v5174
      %5398 = vmatprep.subr.bf16.mxu0 %v5181
      %5399 = vmatpush1.bf16.msra.mxu0 %v5180
      %5400 = vmatprep.subr.bf16.mxu0 %v5187
      %5401 = vmatpush1.bf16.msra.mxu0 %v5186
      %5402 = vmatprep.subr.bf16.mxu0 %v5193
      %5403 = vmatpush1.bf16.msra.mxu0 %v5192
      %5404 = vmatprep.mubr.bf16.mxu0 %v4669
      %5405 = vmatmul.mubr.bf16.gmra.mrb[0].mxu0 %v4668
      %v5406 = vpop.f32.mrb[0].mxu0
      %v5407 = vadd.f32 %v4797, %v5406
      %v5408 = vpop.f32.mrb[0].mxu0
      %v5409 = vadd.f32 %v4801, %v5408
      %v5410 = vpop.f32.mrb[0].mxu0
      %v5411 = vpop.f32.mrb[0].mxu0
      %5412 = vdwg.mxu0
      %v5413 = vxor.u32 %v5325, 2147483648
      %v5414 = vxor.u32 %v5327, 2147483648
      %v5415 = vmul.f32 %v5413, 1.442695
      %v5416 = vpow.pop %v5415
      %v5417 = vmul.f32 %v5414, 1.442695
      %v5418 = vpow.pop %v5417
      %v5419 = vadd.f32 %v5416, 1.0
      %v5420 = vadd.f32 %v5418, 1.0
      %v5421 = vrcp.pop %v5419
      %v5422 = vmul.f32 1.0, %v5421
      %v5423 = vrcp.pop %v5420
      %v5424 = vmul.f32 1.0, %v5423
      %v5425 = vtanh.pop %v5366
      %v5426 = vtanh.pop %v5368
      %v5427 = vxor.u32 %v5407, 2147483648
      %v5428 = vxor.u32 %v5409, 2147483648
      %v5429 = vmul.f32 %v5427, 1.442695
      %v5430 = vpow.pop %v5429
      %v5431 = vmul.f32 %v5428, 1.442695
      %v5432 = vpow.pop %v5431
      %v5433 = vadd.f32 %v5430, 1.0
      %v5434 = vadd.f32 %v5432, 1.0
      %v5435 = vrcp.pop %v5433
      %v5436 = vmul.f32 1.0, %v5435
      %v5437 = vrcp.pop %v5434
      %v5438 = vmul.f32 1.0, %v5437
      %v5439 = vmul.f32 %v5422, %v5425
      %v5440 = vmul.f32 %v5424, %v5426
      %v5441 = vtanh.pop %v5439
      %v5442 = vtanh.pop %v5440
      %v5443 = vmul.f32 %v5436, %v5441
      %v5444 = vmul.f32 %v5438, %v5442
      %v5445 = vpack.c.bf16 %v5443, %v5443
      %v5446 = vpack.c.bf16 %v5444, %v5444
      %v5447 = vld [vmem:[#allocation11] sm:$0xff]
      %v5448 = vld [vmem:[#allocation11 + $0x8] sm:$0xff]
      %v5449 = vld [vmem:[#allocation11 + $0x10] sm:$0xff]
      %v5450 = vld [vmem:[#allocation11 + $0x18] sm:$0xff]
      %v5451 = vld [vmem:[#allocation11 + $0x20] sm:$0xff]
      %v5452 = vld [vmem:[#allocation11 + $0x28] sm:$0xff]
      %v5453 = vld [vmem:[#allocation11 + $0x30] sm:$0xff]
      %v5454 = vld [vmem:[#allocation11 + $0x38] sm:$0xff]
      %v5455 = vld [vmem:[#allocation11 + $0x40] sm:$0xff]
      %v5456 = vld [vmem:[#allocation11 + $0x48] sm:$0xff]
      %v5457 = vld [vmem:[#allocation11 + $0x50] sm:$0xff]
      %v5458 = vld [vmem:[#allocation11 + $0x58] sm:$0xff]
      %v5459 = vld [vmem:[#allocation11 + $0x60] sm:$0xff]
      %v5460 = vld [vmem:[#allocation11 + $0x68] sm:$0xff]
      %v5461 = vld [vmem:[#allocation11 + $0x70] sm:$0xff]
      %v5462 = vld [vmem:[#allocation11 + $0x78] sm:$0xff]
      %v5463 = vld [vmem:[#allocation11 + $0x80] sm:$0xff]
      %v5464 = vld [vmem:[#allocation11 + $0x88] sm:$0xff]
      %v5465 = vld [vmem:[#allocation11 + $0x90] sm:$0xff]
      %v5466 = vld [vmem:[#allocation11 + $0x98] sm:$0xff]
      %v5467 = vld [vmem:[#allocation11 + $0xa0] sm:$0xff]
      %v5468 = vld [vmem:[#allocation11 + $0xa8] sm:$0xff]
      %v5469 = vld [vmem:[#allocation11 + $0xb0] sm:$0xff]
      %v5470 = vld [vmem:[#allocation11 + $0xb8] sm:$0xff]
      %v5471 = vld [vmem:[#allocation11 + $0xc0] sm:$0xff]
      %v5472 = vld [vmem:[#allocation11 + $0xc8] sm:$0xff]
      %v5473 = vld [vmem:[#allocation11 + $0xd0] sm:$0xff]
      %v5474 = vld [vmem:[#allocation11 + $0xd8] sm:$0xff]
      %v5475 = vld [vmem:[#allocation11 + $0xe0] sm:$0xff]
      %v5476 = vld [vmem:[#allocation11 + $0xe8] sm:$0xff]
      %v5477 = vld [vmem:[#allocation11 + $0xf0] sm:$0xff]
      %v5478 = vld [vmem:[#allocation11 + $0xf8] sm:$0xff]
      %v5479 = vld [vmem:[#allocation11 + $0x100] sm:$0xff]
      %v5480 = vld [vmem:[#allocation11 + $0x108] sm:$0xff]
      %v5481 = vld [vmem:[#allocation11 + $0x110] sm:$0xff]
      %v5482 = vld [vmem:[#allocation11 + $0x118] sm:$0xff]
      %v5483 = vld [vmem:[#allocation11 + $0x120] sm:$0xff]
      %v5484 = vld [vmem:[#allocation11 + $0x128] sm:$0xff]
      %v5485 = vld [vmem:[#allocation11 + $0x130] sm:$0xff]
      %v5486 = vld [vmem:[#allocation11 + $0x138] sm:$0xff]
      %v5487 = vld [vmem:[#allocation11 + $0x140] sm:$0xff]
      %v5488 = vld [vmem:[#allocation11 + $0x148] sm:$0xff]
      %v5489 = vld [vmem:[#allocation11 + $0x150] sm:$0xff]
      %v5490 = vld [vmem:[#allocation11 + $0x158] sm:$0xff]
      %v5491 = vld [vmem:[#allocation11 + $0x160] sm:$0xff]
      %v5492 = vld [vmem:[#allocation11 + $0x168] sm:$0xff]
      %v5493 = vld [vmem:[#allocation11 + $0x170] sm:$0xff]
      %v5494 = vld [vmem:[#allocation11 + $0x178] sm:$0xff]
      %v5495 = vld [vmem:[#allocation11 + $0x180] sm:$0xff]
      %v5496 = vld [vmem:[#allocation11 + $0x188] sm:$0xff]
      %v5497 = vld [vmem:[#allocation11 + $0x190] sm:$0xff]
      %v5498 = vld [vmem:[#allocation11 + $0x198] sm:$0xff]
      %v5499 = vld [vmem:[#allocation11 + $0x1a0] sm:$0xff]
      %v5500 = vld [vmem:[#allocation11 + $0x1a8] sm:$0xff]
      %v5501 = vld [vmem:[#allocation11 + $0x1b0] sm:$0xff]
      %v5502 = vld [vmem:[#allocation11 + $0x1b8] sm:$0xff]
      %v5503 = vld [vmem:[#allocation11 + $0x1c0] sm:$0xff]
      %v5504 = vld [vmem:[#allocation11 + $0x1c8] sm:$0xff]
      %v5505 = vld [vmem:[#allocation11 + $0x1d0] sm:$0xff]
      %v5506 = vld [vmem:[#allocation11 + $0x1d8] sm:$0xff]
      %v5507 = vld [vmem:[#allocation11 + $0x1e0] sm:$0xff]
      %v5508 = vld [vmem:[#allocation11 + $0x1e8] sm:$0xff]
      %v5509 = vld [vmem:[#allocation11 + $0x1f0] sm:$0xff]
      %v5510 = vld [vmem:[#allocation11 + $0x1f8] sm:$0xff]
      %v5511 = vld [vmem:[#allocation11 + $0x200] sm:$0xff]
      %v5512 = vld [vmem:[#allocation11 + $0x208] sm:$0xff]
      %v5513 = vld [vmem:[#allocation11 + $0x210] sm:$0xff]
      %v5514 = vld [vmem:[#allocation11 + $0x218] sm:$0xff]
      %v5515 = vld [vmem:[#allocation11 + $0x220] sm:$0xff]
      %v5516 = vld [vmem:[#allocation11 + $0x228] sm:$0xff]
      %v5517 = vld [vmem:[#allocation11 + $0x230] sm:$0xff]
      %v5518 = vld [vmem:[#allocation11 + $0x238] sm:$0xff]
      %v5519 = vld [vmem:[#allocation11 + $0x240] sm:$0xff]
      %v5520 = vld [vmem:[#allocation11 + $0x248] sm:$0xff]
      %v5521 = vld [vmem:[#allocation11 + $0x250] sm:$0xff]
      %v5522 = vld [vmem:[#allocation11 + $0x258] sm:$0xff]
      %v5523 = vld [vmem:[#allocation11 + $0x260] sm:$0xff]
      %v5524 = vld [vmem:[#allocation11 + $0x268] sm:$0xff]
      %v5525 = vld [vmem:[#allocation11 + $0x270] sm:$0xff]
      %v5526 = vld [vmem:[#allocation11 + $0x278] sm:$0xff]
      %v5527 = vld [vmem:[#allocation11 + $0x280] sm:$0xff]
      %v5528 = vld [vmem:[#allocation11 + $0x288] sm:$0xff]
      %v5529 = vld [vmem:[#allocation11 + $0x290] sm:$0xff]
      %v5530 = vld [vmem:[#allocation11 + $0x298] sm:$0xff]
      %v5531 = vld [vmem:[#allocation11 + $0x2a0] sm:$0xff]
      %v5532 = vld [vmem:[#allocation11 + $0x2a8] sm:$0xff]
      %v5533 = vld [vmem:[#allocation11 + $0x2b0] sm:$0xff]
      %v5534 = vld [vmem:[#allocation11 + $0x2b8] sm:$0xff]
      %v5535 = vld [vmem:[#allocation11 + $0x2c0] sm:$0xff]
      %v5536 = vld [vmem:[#allocation11 + $0x2c8] sm:$0xff]
      %v5537 = vld [vmem:[#allocation11 + $0x2d0] sm:$0xff]
      %v5538 = vld [vmem:[#allocation11 + $0x2d8] sm:$0xff]
      %v5539 = vld [vmem:[#allocation11 + $0x2e0] sm:$0xff]
      %v5540 = vld [vmem:[#allocation11 + $0x2e8] sm:$0xff]
      %v5541 = vld [vmem:[#allocation11 + $0x2f0] sm:$0xff]
      %v5542 = vld [vmem:[#allocation11 + $0x2f8] sm:$0xff]
      %v5543 = vld [vmem:[#allocation11 + $0x300] sm:$0xff]
      %v5544 = vld [vmem:[#allocation11 + $0x308] sm:$0xff]
      %v5545 = vld [vmem:[#allocation11 + $0x310] sm:$0xff]
      %v5546 = vld [vmem:[#allocation11 + $0x318] sm:$0xff]
      %v5547 = vld [vmem:[#allocation11 + $0x320] sm:$0xff]
      %v5548 = vld [vmem:[#allocation11 + $0x328] sm:$0xff]
      %v5549 = vld [vmem:[#allocation11 + $0x330] sm:$0xff]
      %v5550 = vld [vmem:[#allocation11 + $0x338] sm:$0xff]
      %v5551 = vld [vmem:[#allocation11 + $0x340] sm:$0xff]
      %v5552 = vld [vmem:[#allocation11 + $0x348] sm:$0xff]
      %v5553 = vld [vmem:[#allocation11 + $0x350] sm:$0xff]
      %v5554 = vld [vmem:[#allocation11 + $0x358] sm:$0xff]
      %v5555 = vld [vmem:[#allocation11 + $0x360] sm:$0xff]
      %v5556 = vld [vmem:[#allocation11 + $0x368] sm:$0xff]
      %v5557 = vld [vmem:[#allocation11 + $0x370] sm:$0xff]
      %v5558 = vld [vmem:[#allocation11 + $0x378] sm:$0xff]
      %v5559 = vld [vmem:[#allocation11 + $0x380] sm:$0xff]
      %v5560 = vld [vmem:[#allocation11 + $0x388] sm:$0xff]
      %v5561 = vld [vmem:[#allocation11 + $0x390] sm:$0xff]
      %v5562 = vld [vmem:[#allocation11 + $0x398] sm:$0xff]
      %v5563 = vld [vmem:[#allocation11 + $0x3a0] sm:$0xff]
      %v5564 = vld [vmem:[#allocation11 + $0x3a8] sm:$0xff]
      %v5565 = vld [vmem:[#allocation11 + $0x3b0] sm:$0xff]
      %v5566 = vld [vmem:[#allocation11 + $0x3b8] sm:$0xff]
      %v5567 = vld [vmem:[#allocation11 + $0x3c0] sm:$0xff]
      %v5568 = vld [vmem:[#allocation11 + $0x3c8] sm:$0xff]
      %v5569 = vld [vmem:[#allocation11 + $0x3d0] sm:$0xff]
      %v5570 = vld [vmem:[#allocation11 + $0x3d8] sm:$0xff]
      %v5571 = vld [vmem:[#allocation11 + $0x3e0] sm:$0xff]
      %v5572 = vld [vmem:[#allocation11 + $0x3e8] sm:$0xff]
      %v5573 = vld [vmem:[#allocation11 + $0x3f0] sm:$0xff]
      %v5574 = vld [vmem:[#allocation11 + $0x3f8] sm:$0xff]
      %v5575 = vld [vmem:[#allocation11 + $0x400] sm:$0xff]
      %v5576 = vld [vmem:[#allocation11 + $0x408] sm:$0xff]
      %v5577 = vld [vmem:[#allocation11 + $0x410] sm:$0xff]
      %v5578 = vld [vmem:[#allocation11 + $0x418] sm:$0xff]
      %v5579 = vld [vmem:[#allocation11 + $0x420] sm:$0xff]
      %v5580 = vld [vmem:[#allocation11 + $0x428] sm:$0xff]
      %v5581 = vld [vmem:[#allocation11 + $0x430] sm:$0xff]
      %v5582 = vld [vmem:[#allocation11 + $0x438] sm:$0xff]
      %v5583 = vld [vmem:[#allocation11 + $0x440] sm:$0xff]
      %v5584 = vld [vmem:[#allocation11 + $0x448] sm:$0xff]
      %v5585 = vld [vmem:[#allocation11 + $0x450] sm:$0xff]
      %v5586 = vld [vmem:[#allocation11 + $0x458] sm:$0xff]
      %v5587 = vld [vmem:[#allocation11 + $0x460] sm:$0xff]
      %v5588 = vld [vmem:[#allocation11 + $0x468] sm:$0xff]
      %v5589 = vld [vmem:[#allocation11 + $0x470] sm:$0xff]
      %v5590 = vld [vmem:[#allocation11 + $0x478] sm:$0xff]
      %v5591 = vld [vmem:[#allocation11 + $0x480] sm:$0xff]
      %v5592 = vld [vmem:[#allocation11 + $0x488] sm:$0xff]
      %v5593 = vld [vmem:[#allocation11 + $0x490] sm:$0xff]
      %v5594 = vld [vmem:[#allocation11 + $0x498] sm:$0xff]
      %v5595 = vld [vmem:[#allocation11 + $0x4a0] sm:$0xff]
      %v5596 = vld [vmem:[#allocation11 + $0x4a8] sm:$0xff]
      %v5597 = vld [vmem:[#allocation11 + $0x4b0] sm:$0xff]
      %v5598 = vld [vmem:[#allocation11 + $0x4b8] sm:$0xff]
      %v5599 = vld [vmem:[#allocation11 + $0x4c0] sm:$0xff]
      %v5600 = vld [vmem:[#allocation11 + $0x4c8] sm:$0xff]
      %v5601 = vld [vmem:[#allocation11 + $0x4d0] sm:$0xff]
      %v5602 = vld [vmem:[#allocation11 + $0x4d8] sm:$0xff]
      %v5603 = vld [vmem:[#allocation11 + $0x4e0] sm:$0xff]
      %v5604 = vld [vmem:[#allocation11 + $0x4e8] sm:$0xff]
      %v5605 = vld [vmem:[#allocation11 + $0x4f0] sm:$0xff]
      %v5606 = vld [vmem:[#allocation11 + $0x4f8] sm:$0xff]
      %v5607 = vld [vmem:[#allocation11 + $0x500] sm:$0xff]
      %v5608 = vld [vmem:[#allocation11 + $0x508] sm:$0xff]
      %v5609 = vld [vmem:[#allocation11 + $0x510] sm:$0xff]
      %v5610 = vld [vmem:[#allocation11 + $0x518] sm:$0xff]
      %v5611 = vld [vmem:[#allocation11 + $0x520] sm:$0xff]
      %v5612 = vld [vmem:[#allocation11 + $0x528] sm:$0xff]
      %v5613 = vld [vmem:[#allocation11 + $0x530] sm:$0xff]
      %v5614 = vld [vmem:[#allocation11 + $0x538] sm:$0xff]
      %v5615 = vld [vmem:[#allocation11 + $0x540] sm:$0xff]
      %v5616 = vld [vmem:[#allocation11 + $0x548] sm:$0xff]
      %v5617 = vld [vmem:[#allocation11 + $0x550] sm:$0xff]
      %v5618 = vld [vmem:[#allocation11 + $0x558] sm:$0xff]
      %v5619 = vld [vmem:[#allocation11 + $0x560] sm:$0xff]
      %v5620 = vld [vmem:[#allocation11 + $0x568] sm:$0xff]
      %v5621 = vld [vmem:[#allocation11 + $0x570] sm:$0xff]
      %v5622 = vld [vmem:[#allocation11 + $0x578] sm:$0xff]
      %v5623 = vld [vmem:[#allocation11 + $0x580] sm:$0xff]
      %v5624 = vld [vmem:[#allocation11 + $0x588] sm:$0xff]
      %v5625 = vld [vmem:[#allocation11 + $0x590] sm:$0xff]
      %v5626 = vld [vmem:[#allocation11 + $0x598] sm:$0xff]
      %v5627 = vld [vmem:[#allocation11 + $0x5a0] sm:$0xff]
      %v5628 = vld [vmem:[#allocation11 + $0x5a8] sm:$0xff]
      %v5629 = vld [vmem:[#allocation11 + $0x5b0] sm:$0xff]
      %v5630 = vld [vmem:[#allocation11 + $0x5b8] sm:$0xff]
      %v5631 = vld [vmem:[#allocation11 + $0x5c0] sm:$0xff]
      %v5632 = vld [vmem:[#allocation11 + $0x5c8] sm:$0xff]
      %v5633 = vld [vmem:[#allocation11 + $0x5d0] sm:$0xff]
      %v5634 = vld [vmem:[#allocation11 + $0x5d8] sm:$0xff]
      %v5635 = vld [vmem:[#allocation11 + $0x5e0] sm:$0xff]
      %v5636 = vld [vmem:[#allocation11 + $0x5e8] sm:$0xff]
      %v5637 = vld [vmem:[#allocation11 + $0x5f0] sm:$0xff]
      %v5638 = vld [vmem:[#allocation11 + $0x5f8] sm:$0xff]
      %v5639 = vld [vmem:[#allocation11 + $0x600] sm:$0xff]
      %v5640 = vld [vmem:[#allocation11 + $0x608] sm:$0xff]
      %v5641 = vld [vmem:[#allocation11 + $0x610] sm:$0xff]
      %v5642 = vld [vmem:[#allocation11 + $0x618] sm:$0xff]
      %v5643 = vld [vmem:[#allocation11 + $0x620] sm:$0xff]
      %v5644 = vld [vmem:[#allocation11 + $0x628] sm:$0xff]
      %v5645 = vld [vmem:[#allocation11 + $0x630] sm:$0xff]
      %v5646 = vld [vmem:[#allocation11 + $0x638] sm:$0xff]
      %v5647 = vld [vmem:[#allocation11 + $0x640] sm:$0xff]
      %v5648 = vld [vmem:[#allocation11 + $0x648] sm:$0xff]
      %v5649 = vld [vmem:[#allocation11 + $0x650] sm:$0xff]
      %v5650 = vld [vmem:[#allocation11 + $0x658] sm:$0xff]
      %v5651 = vld [vmem:[#allocation11 + $0x660] sm:$0xff]
      %v5652 = vld [vmem:[#allocation11 + $0x668] sm:$0xff]
      %v5653 = vld [vmem:[#allocation11 + $0x670] sm:$0xff]
      %v5654 = vld [vmem:[#allocation11 + $0x678] sm:$0xff]
      %v5655 = vld [vmem:[#allocation11 + $0x680] sm:$0xff]
      %v5656 = vld [vmem:[#allocation11 + $0x688] sm:$0xff]
      %v5657 = vld [vmem:[#allocation11 + $0x690] sm:$0xff]
      %v5658 = vld [vmem:[#allocation11 + $0x698] sm:$0xff]
      %v5659 = vld [vmem:[#allocation11 + $0x6a0] sm:$0xff]
      %v5660 = vld [vmem:[#allocation11 + $0x6a8] sm:$0xff]
      %v5661 = vld [vmem:[#allocation11 + $0x6b0] sm:$0xff]
      %v5662 = vld [vmem:[#allocation11 + $0x6b8] sm:$0xff]
      %v5663 = vld [vmem:[#allocation11 + $0x6c0] sm:$0xff]
      %v5664 = vld [vmem:[#allocation11 + $0x6c8] sm:$0xff]
      %v5665 = vld [vmem:[#allocation11 + $0x6d0] sm:$0xff]
      %v5666 = vld [vmem:[#allocation11 + $0x6d8] sm:$0xff]
      %v5667 = vld [vmem:[#allocation11 + $0x6e0] sm:$0xff]
      %v5668 = vld [vmem:[#allocation11 + $0x6e8] sm:$0xff]
      %v5669 = vld [vmem:[#allocation11 + $0x6f0] sm:$0xff]
      %v5670 = vld [vmem:[#allocation11 + $0x6f8] sm:$0xff]
      %v5671 = vld [vmem:[#allocation11 + $0x700] sm:$0xff]
      %v5672 = vld [vmem:[#allocation11 + $0x708] sm:$0xff]
      %v5673 = vld [vmem:[#allocation11 + $0x710] sm:$0xff]
      %v5674 = vld [vmem:[#allocation11 + $0x718] sm:$0xff]
      %v5675 = vld [vmem:[#allocation11 + $0x720] sm:$0xff]
      %v5676 = vld [vmem:[#allocation11 + $0x728] sm:$0xff]
      %v5677 = vld [vmem:[#allocation11 + $0x730] sm:$0xff]
      %v5678 = vld [vmem:[#allocation11 + $0x738] sm:$0xff]
      %v5679 = vld [vmem:[#allocation11 + $0x740] sm:$0xff]
      %v5680 = vld [vmem:[#allocation11 + $0x748] sm:$0xff]
      %v5681 = vld [vmem:[#allocation11 + $0x750] sm:$0xff]
      %v5682 = vld [vmem:[#allocation11 + $0x758] sm:$0xff]
      %v5683 = vld [vmem:[#allocation11 + $0x760] sm:$0xff]
      %v5684 = vld [vmem:[#allocation11 + $0x768] sm:$0xff]
      %v5685 = vld [vmem:[#allocation11 + $0x770] sm:$0xff]
      %v5686 = vld [vmem:[#allocation11 + $0x778] sm:$0xff]
      %v5687 = vld [vmem:[#allocation11 + $0x780] sm:$0xff]
      %v5688 = vld [vmem:[#allocation11 + $0x788] sm:$0xff]
      %v5689 = vld [vmem:[#allocation11 + $0x790] sm:$0xff]
      %v5690 = vld [vmem:[#allocation11 + $0x798] sm:$0xff]
      %v5691 = vld [vmem:[#allocation11 + $0x7a0] sm:$0xff]
      %v5692 = vld [vmem:[#allocation11 + $0x7a8] sm:$0xff]
      %v5693 = vld [vmem:[#allocation11 + $0x7b0] sm:$0xff]
      %v5694 = vld [vmem:[#allocation11 + $0x7b8] sm:$0xff]
      %v5695 = vld [vmem:[#allocation11 + $0x7c0] sm:$0xff]
      %v5696 = vld [vmem:[#allocation11 + $0x7c8] sm:$0xff]
      %v5697 = vld [vmem:[#allocation11 + $0x7d0] sm:$0xff]
      %v5698 = vld [vmem:[#allocation11 + $0x7d8] sm:$0xff]
      %v5699 = vld [vmem:[#allocation11 + $0x7e0] sm:$0xff]
      %v5700 = vld [vmem:[#allocation11 + $0x7e8] sm:$0xff]
      %v5701 = vld [vmem:[#allocation11 + $0x7f0] sm:$0xff]
      %v5702 = vld [vmem:[#allocation11 + $0x7f8] sm:$0xff]
      %v5959 = vunpack.c.l.b16 %v5447
      %v5960 = vunpack.c.h.b16 %v5447
      %v5961 = vunpack.c.l.b16 %v5448
      %v5962 = vunpack.c.h.b16 %v5448
      %v5963 = vunpack.c.l.b16 %v5449
      %v5964 = vunpack.c.h.b16 %v5449
      %v5965 = vunpack.c.l.b16 %v5450
      %v5966 = vunpack.c.h.b16 %v5450
      %v5967 = vunpack.c.l.b16 %v5451
      %v5968 = vunpack.c.h.b16 %v5451
      %v5969 = vunpack.c.l.b16 %v5452
      %v5970 = vunpack.c.h.b16 %v5452
      %v5971 = vunpack.c.l.b16 %v5453
      %v5972 = vunpack.c.h.b16 %v5453
      %v5973 = vunpack.c.l.b16 %v5454
      %v5974 = vunpack.c.h.b16 %v5454
      %v5975 = vunpack.c.l.b16 %v5455
      %v5976 = vunpack.c.h.b16 %v5455
      %v5977 = vunpack.c.l.b16 %v5456
      %v5978 = vunpack.c.h.b16 %v5456
      %v5979 = vunpack.c.l.b16 %v5457
      %v5980 = vunpack.c.h.b16 %v5457
      %v5981 = vunpack.c.l.b16 %v5458
      %v5982 = vunpack.c.h.b16 %v5458
      %v5983 = vunpack.c.l.b16 %v5459
      %v5984 = vunpack.c.h.b16 %v5459
      %v5985 = vunpack.c.l.b16 %v5460
      %v5986 = vunpack.c.h.b16 %v5460
      %v5987 = vunpack.c.l.b16 %v5461
      %v5988 = vunpack.c.h.b16 %v5461
      %v5989 = vunpack.c.l.b16 %v5462
      %v5990 = vunpack.c.h.b16 %v5462
      %v5991 = vunpack.c.l.b16 %v5463
      %v5992 = vunpack.c.h.b16 %v5463
      %v5993 = vunpack.c.l.b16 %v5464
      %v5994 = vunpack.c.h.b16 %v5464
      %v5995 = vunpack.c.l.b16 %v5465
      %v5996 = vunpack.c.h.b16 %v5465
      %v5997 = vunpack.c.l.b16 %v5466
      %v5998 = vunpack.c.h.b16 %v5466
      %v5999 = vunpack.c.l.b16 %v5467
      %v6000 = vunpack.c.h.b16 %v5467
      %v6001 = vunpack.c.l.b16 %v5468
      %v6002 = vunpack.c.h.b16 %v5468
      %v6003 = vunpack.c.l.b16 %v5469
      %v6004 = vunpack.c.h.b16 %v5469
      %v6005 = vunpack.c.l.b16 %v5470
      %v6006 = vunpack.c.h.b16 %v5470
      %v6007 = vunpack.c.l.b16 %v5471
      %v6008 = vunpack.c.h.b16 %v5471
      %v6009 = vunpack.c.l.b16 %v5472
      %v6010 = vunpack.c.h.b16 %v5472
      %v6011 = vunpack.c.l.b16 %v5473
      %v6012 = vunpack.c.h.b16 %v5473
      %v6013 = vunpack.c.l.b16 %v5474
      %v6014 = vunpack.c.h.b16 %v5474
      %v6015 = vunpack.c.l.b16 %v5475
      %v6016 = vunpack.c.h.b16 %v5475
      %v6017 = vunpack.c.l.b16 %v5476
      %v6018 = vunpack.c.h.b16 %v5476
      %v6019 = vunpack.c.l.b16 %v5477
      %v6020 = vunpack.c.h.b16 %v5477
      %v6021 = vunpack.c.l.b16 %v5478
      %v6022 = vunpack.c.h.b16 %v5478
      %v6023 = vunpack.c.l.b16 %v5479
      %v6024 = vunpack.c.h.b16 %v5479
      %v6025 = vunpack.c.l.b16 %v5480
      %v6026 = vunpack.c.h.b16 %v5480
      %v6027 = vunpack.c.l.b16 %v5481
      %v6028 = vunpack.c.h.b16 %v5481
      %v6029 = vunpack.c.l.b16 %v5482
      %v6030 = vunpack.c.h.b16 %v5482
      %v6031 = vunpack.c.l.b16 %v5483
      %v6032 = vunpack.c.h.b16 %v5483
      %v6033 = vunpack.c.l.b16 %v5484
      %v6034 = vunpack.c.h.b16 %v5484
      %v6035 = vunpack.c.l.b16 %v5485
      %v6036 = vunpack.c.h.b16 %v5485
      %v6037 = vunpack.c.l.b16 %v5486
      %v6038 = vunpack.c.h.b16 %v5486
      %v6039 = vunpack.c.l.b16 %v5487
      %v6040 = vunpack.c.h.b16 %v5487
      %v6041 = vunpack.c.l.b16 %v5488
      %v6042 = vunpack.c.h.b16 %v5488
      %v6043 = vunpack.c.l.b16 %v5489
      %v6044 = vunpack.c.h.b16 %v5489
      %v6045 = vunpack.c.l.b16 %v5490
      %v6046 = vunpack.c.h.b16 %v5490
      %v6047 = vunpack.c.l.b16 %v5491
      %v6048 = vunpack.c.h.b16 %v5491
      %v6049 = vunpack.c.l.b16 %v5492
      %v6050 = vunpack.c.h.b16 %v5492
      %v6051 = vunpack.c.l.b16 %v5493
      %v6052 = vunpack.c.h.b16 %v5493
      %v6053 = vunpack.c.l.b16 %v5494
      %v6054 = vunpack.c.h.b16 %v5494
      %v6055 = vunpack.c.l.b16 %v5495
      %v6056 = vunpack.c.h.b16 %v5495
      %v6057 = vunpack.c.l.b16 %v5496
      %v6058 = vunpack.c.h.b16 %v5496
      %v6059 = vunpack.c.l.b16 %v5497
      %v6060 = vunpack.c.h.b16 %v5497
      %v6061 = vunpack.c.l.b16 %v5498
      %v6062 = vunpack.c.h.b16 %v5498
      %v6063 = vunpack.c.l.b16 %v5499
      %v6064 = vunpack.c.h.b16 %v5499
      %v6065 = vunpack.c.l.b16 %v5500
      %v6066 = vunpack.c.h.b16 %v5500
      %v6067 = vunpack.c.l.b16 %v5501
      %v6068 = vunpack.c.h.b16 %v5501
      %v6069 = vunpack.c.l.b16 %v5502
      %v6070 = vunpack.c.h.b16 %v5502
      %v6071 = vunpack.c.l.b16 %v5503
      %v6072 = vunpack.c.h.b16 %v5503
      %v6073 = vunpack.c.l.b16 %v5504
      %v6074 = vunpack.c.h.b16 %v5504
      %v6075 = vunpack.c.l.b16 %v5505
      %v6076 = vunpack.c.h.b16 %v5505
      %v6077 = vunpack.c.l.b16 %v5506
      %v6078 = vunpack.c.h.b16 %v5506
      %v6079 = vunpack.c.l.b16 %v5507
      %v6080 = vunpack.c.h.b16 %v5507
      %v6081 = vunpack.c.l.b16 %v5508
      %v6082 = vunpack.c.h.b16 %v5508
      %v6083 = vunpack.c.l.b16 %v5509
      %v6084 = vunpack.c.h.b16 %v5509
      %v6085 = vunpack.c.l.b16 %v5510
      %v6086 = vunpack.c.h.b16 %v5510
      %v6087 = vunpack.c.l.b16 %v5511
      %v6088 = vunpack.c.h.b16 %v5511
      %v6089 = vunpack.c.l.b16 %v5512
      %v6090 = vunpack.c.h.b16 %v5512
      %v6091 = vunpack.c.l.b16 %v5513
      %v6092 = vunpack.c.h.b16 %v5513
      %v6093 = vunpack.c.l.b16 %v5514
      %v6094 = vunpack.c.h.b16 %v5514
      %v6095 = vunpack.c.l.b16 %v5515
      %v6096 = vunpack.c.h.b16 %v5515
      %v6097 = vunpack.c.l.b16 %v5516
      %v6098 = vunpack.c.h.b16 %v5516
      %v6099 = vunpack.c.l.b16 %v5517
      %v6100 = vunpack.c.h.b16 %v5517
      %v6101 = vunpack.c.l.b16 %v5518
      %v6102 = vunpack.c.h.b16 %v5518
      %v6103 = vunpack.c.l.b16 %v5519
      %v6104 = vunpack.c.h.b16 %v5519
      %v6105 = vunpack.c.l.b16 %v5520
      %v6106 = vunpack.c.h.b16 %v5520
      %v6107 = vunpack.c.l.b16 %v5521
      %v6108 = vunpack.c.h.b16 %v5521
      %v6109 = vunpack.c.l.b16 %v5522
      %v6110 = vunpack.c.h.b16 %v5522
      %v6111 = vunpack.c.l.b16 %v5523
      %v6112 = vunpack.c.h.b16 %v5523
      %v6113 = vunpack.c.l.b16 %v5524
      %v6114 = vunpack.c.h.b16 %v5524
      %v6115 = vunpack.c.l.b16 %v5525
      %v6116 = vunpack.c.h.b16 %v5525
      %v6117 = vunpack.c.l.b16 %v5526
      %v6118 = vunpack.c.h.b16 %v5526
      %v6119 = vunpack.c.l.b16 %v5527
      %v6120 = vunpack.c.h.b16 %v5527
      %v6121 = vunpack.c.l.b16 %v5528
      %v6122 = vunpack.c.h.b16 %v5528
      %v6123 = vunpack.c.l.b16 %v5529
      %v6124 = vunpack.c.h.b16 %v5529
      %v6125 = vunpack.c.l.b16 %v5530
      %v6126 = vunpack.c.h.b16 %v5530
      %v6127 = vunpack.c.l.b16 %v5531
      %v6128 = vunpack.c.h.b16 %v5531
      %v6129 = vunpack.c.l.b16 %v5532
      %v6130 = vunpack.c.h.b16 %v5532
      %v6131 = vunpack.c.l.b16 %v5533
      %v6132 = vunpack.c.h.b16 %v5533
      %v6133 = vunpack.c.l.b16 %v5534
      %v6134 = vunpack.c.h.b16 %v5534
      %v6135 = vunpack.c.l.b16 %v5535
      %v6136 = vunpack.c.h.b16 %v5535
      %v6137 = vunpack.c.l.b16 %v5536
      %v6138 = vunpack.c.h.b16 %v5536
      %v6139 = vunpack.c.l.b16 %v5537
      %v6140 = vunpack.c.h.b16 %v5537
      %v6141 = vunpack.c.l.b16 %v5538
      %v6142 = vunpack.c.h.b16 %v5538
      %v6143 = vunpack.c.l.b16 %v5539
      %v6144 = vunpack.c.h.b16 %v5539
      %v6145 = vunpack.c.l.b16 %v5540
      %v6146 = vunpack.c.h.b16 %v5540
      %v6147 = vunpack.c.l.b16 %v5541
      %v6148 = vunpack.c.h.b16 %v5541
      %v6149 = vunpack.c.l.b16 %v5542
      %v6150 = vunpack.c.h.b16 %v5542
      %v6151 = vunpack.c.l.b16 %v5543
      %v6152 = vunpack.c.h.b16 %v5543
      %v6153 = vunpack.c.l.b16 %v5544
      %v6154 = vunpack.c.h.b16 %v5544
      %v6155 = vunpack.c.l.b16 %v5545
      %v6156 = vunpack.c.h.b16 %v5545
      %v6157 = vunpack.c.l.b16 %v5546
      %v6158 = vunpack.c.h.b16 %v5546
      %v6159 = vunpack.c.l.b16 %v5547
      %v6160 = vunpack.c.h.b16 %v5547
      %v6161 = vunpack.c.l.b16 %v5548
      %v6162 = vunpack.c.h.b16 %v5548
      %v6163 = vunpack.c.l.b16 %v5549
      %v6164 = vunpack.c.h.b16 %v5549
      %v6165 = vunpack.c.l.b16 %v5550
      %v6166 = vunpack.c.h.b16 %v5550
      %v6167 = vunpack.c.l.b16 %v5551
      %v6168 = vunpack.c.h.b16 %v5551
      %v6169 = vunpack.c.l.b16 %v5552
      %v6170 = vunpack.c.h.b16 %v5552
      %v6171 = vunpack.c.l.b16 %v5553
      %v6172 = vunpack.c.h.b16 %v5553
      %v6173 = vunpack.c.l.b16 %v5554
      %v6174 = vunpack.c.h.b16 %v5554
      %v6175 = vunpack.c.l.b16 %v5555
      %v6176 = vunpack.c.h.b16 %v5555
      %v6177 = vunpack.c.l.b16 %v5556
      %v6178 = vunpack.c.h.b16 %v5556
      %v6179 = vunpack.c.l.b16 %v5557
      %v6180 = vunpack.c.h.b16 %v5557
      %v6181 = vunpack.c.l.b16 %v5558
      %v6182 = vunpack.c.h.b16 %v5558
      %v6183 = vunpack.c.l.b16 %v5559
      %v6184 = vunpack.c.h.b16 %v5559
      %v6185 = vunpack.c.l.b16 %v5560
      %v6186 = vunpack.c.h.b16 %v5560
      %v6187 = vunpack.c.l.b16 %v5561
      %v6188 = vunpack.c.h.b16 %v5561
      %v6189 = vunpack.c.l.b16 %v5562
      %v6190 = vunpack.c.h.b16 %v5562
      %v6191 = vunpack.c.l.b16 %v5563
      %v6192 = vunpack.c.h.b16 %v5563
      %v6193 = vunpack.c.l.b16 %v5564
      %v6194 = vunpack.c.h.b16 %v5564
      %v6195 = vunpack.c.l.b16 %v5565
      %v6196 = vunpack.c.h.b16 %v5565
      %v6197 = vunpack.c.l.b16 %v5566
      %v6198 = vunpack.c.h.b16 %v5566
      %v6199 = vunpack.c.l.b16 %v5567
      %v6200 = vunpack.c.h.b16 %v5567
      %v6201 = vunpack.c.l.b16 %v5568
      %v6202 = vunpack.c.h.b16 %v5568
      %v6203 = vunpack.c.l.b16 %v5569
      %v6204 = vunpack.c.h.b16 %v5569
      %v6205 = vunpack.c.l.b16 %v5570
      %v6206 = vunpack.c.h.b16 %v5570
      %v6207 = vunpack.c.l.b16 %v5571
      %v6208 = vunpack.c.h.b16 %v5571
      %v6209 = vunpack.c.l.b16 %v5572
      %v6210 = vunpack.c.h.b16 %v5572
      %v6211 = vunpack.c.l.b16 %v5573
      %v6212 = vunpack.c.h.b16 %v5573
      %v6213 = vunpack.c.l.b16 %v5574
      %v6214 = vunpack.c.h.b16 %v5574
      %v6215 = vunpack.c.l.b16 %v5575
      %v6216 = vunpack.c.h.b16 %v5575
      %v6217 = vunpack.c.l.b16 %v5576
      %v6218 = vunpack.c.h.b16 %v5576
      %v6219 = vunpack.c.l.b16 %v5577
      %v6220 = vunpack.c.h.b16 %v5577
      %v6221 = vunpack.c.l.b16 %v5578
      %v6222 = vunpack.c.h.b16 %v5578
      %v6223 = vunpack.c.l.b16 %v5579
      %v6224 = vunpack.c.h.b16 %v5579
      %v6225 = vunpack.c.l.b16 %v5580
      %v6226 = vunpack.c.h.b16 %v5580
      %v6227 = vunpack.c.l.b16 %v5581
      %v6228 = vunpack.c.h.b16 %v5581
      %v6229 = vunpack.c.l.b16 %v5582
      %v6230 = vunpack.c.h.b16 %v5582
      %v6231 = vunpack.c.l.b16 %v5583
      %v6232 = vunpack.c.h.b16 %v5583
      %v6233 = vunpack.c.l.b16 %v5584
      %v6234 = vunpack.c.h.b16 %v5584
      %v6235 = vunpack.c.l.b16 %v5585
      %v6236 = vunpack.c.h.b16 %v5585
      %v6237 = vunpack.c.l.b16 %v5586
      %v6238 = vunpack.c.h.b16 %v5586
      %v6239 = vunpack.c.l.b16 %v5587
      %v6240 = vunpack.c.h.b16 %v5587
      %v6241 = vunpack.c.l.b16 %v5588
      %v6242 = vunpack.c.h.b16 %v5588
      %v6243 = vunpack.c.l.b16 %v5589
      %v6244 = vunpack.c.h.b16 %v5589
      %v6245 = vunpack.c.l.b16 %v5590
      %v6246 = vunpack.c.h.b16 %v5590
      %v6247 = vunpack.c.l.b16 %v5591
      %v6248 = vunpack.c.h.b16 %v5591
      %v6249 = vunpack.c.l.b16 %v5592
      %v6250 = vunpack.c.h.b16 %v5592
      %v6251 = vunpack.c.l.b16 %v5593
      %v6252 = vunpack.c.h.b16 %v5593
      %v6253 = vunpack.c.l.b16 %v5594
      %v6254 = vunpack.c.h.b16 %v5594
      %v6255 = vunpack.c.l.b16 %v5595
      %v6256 = vunpack.c.h.b16 %v5595
      %v6257 = vunpack.c.l.b16 %v5596
      %v6258 = vunpack.c.h.b16 %v5596
      %v6259 = vunpack.c.l.b16 %v5597
      %v6260 = vunpack.c.h.b16 %v5597
      %v6261 = vunpack.c.l.b16 %v5598
      %v6262 = vunpack.c.h.b16 %v5598
      %v6263 = vunpack.c.l.b16 %v5599
      %v6264 = vunpack.c.h.b16 %v5599
      %v6265 = vunpack.c.l.b16 %v5600
      %v6266 = vunpack.c.h.b16 %v5600
      %v6267 = vunpack.c.l.b16 %v5601
      %v6268 = vunpack.c.h.b16 %v5601
      %v6269 = vunpack.c.l.b16 %v5602
      %v6270 = vunpack.c.h.b16 %v5602
      %v6271 = vunpack.c.l.b16 %v5603
      %v6272 = vunpack.c.h.b16 %v5603
      %v6273 = vunpack.c.l.b16 %v5604
      %v6274 = vunpack.c.h.b16 %v5604
      %v6275 = vunpack.c.l.b16 %v5605
      %v6276 = vunpack.c.h.b16 %v5605
      %v6277 = vunpack.c.l.b16 %v5606
      %v6278 = vunpack.c.h.b16 %v5606
      %v6279 = vunpack.c.l.b16 %v5607
      %v6280 = vunpack.c.h.b16 %v5607
      %v6281 = vunpack.c.l.b16 %v5608
      %v6282 = vunpack.c.h.b16 %v5608
      %v6283 = vunpack.c.l.b16 %v5609
      %v6284 = vunpack.c.h.b16 %v5609
      %v6285 = vunpack.c.l.b16 %v5610
      %v6286 = vunpack.c.h.b16 %v5610
      %v6287 = vunpack.c.l.b16 %v5611
      %v6288 = vunpack.c.h.b16 %v5611
      %v6289 = vunpack.c.l.b16 %v5612
      %v6290 = vunpack.c.h.b16 %v5612
      %v6291 = vunpack.c.l.b16 %v5613
      %v6292 = vunpack.c.h.b16 %v5613
      %v6293 = vunpack.c.l.b16 %v5614
      %v6294 = vunpack.c.h.b16 %v5614
      %v6295 = vunpack.c.l.b16 %v5615
      %v6296 = vunpack.c.h.b16 %v5615
      %v6297 = vunpack.c.l.b16 %v5616
      %v6298 = vunpack.c.h.b16 %v5616
      %v6299 = vunpack.c.l.b16 %v5617
      %v6300 = vunpack.c.h.b16 %v5617
      %v6301 = vunpack.c.l.b16 %v5618
      %v6302 = vunpack.c.h.b16 %v5618
      %v6303 = vunpack.c.l.b16 %v5619
      %v6304 = vunpack.c.h.b16 %v5619
      %v6305 = vunpack.c.l.b16 %v5620
      %v6306 = vunpack.c.h.b16 %v5620
      %v6307 = vunpack.c.l.b16 %v5621
      %v6308 = vunpack.c.h.b16 %v5621
      %v6309 = vunpack.c.l.b16 %v5622
      %v6310 = vunpack.c.h.b16 %v5622
      %v6311 = vunpack.c.l.b16 %v5623
      %v6312 = vunpack.c.h.b16 %v5623
      %v6313 = vunpack.c.l.b16 %v5624
      %v6314 = vunpack.c.h.b16 %v5624
      %v6315 = vunpack.c.l.b16 %v5625
      %v6316 = vunpack.c.h.b16 %v5625
      %v6317 = vunpack.c.l.b16 %v5626
      %v6318 = vunpack.c.h.b16 %v5626
      %v6319 = vunpack.c.l.b16 %v5627
      %v6320 = vunpack.c.h.b16 %v5627
      %v6321 = vunpack.c.l.b16 %v5628
      %v6322 = vunpack.c.h.b16 %v5628
      %v6323 = vunpack.c.l.b16 %v5629
      %v6324 = vunpack.c.h.b16 %v5629
      %v6325 = vunpack.c.l.b16 %v5630
      %v6326 = vunpack.c.h.b16 %v5630
      %v6327 = vunpack.c.l.b16 %v5631
      %v6328 = vunpack.c.h.b16 %v5631
      %v6329 = vunpack.c.l.b16 %v5632
      %v6330 = vunpack.c.h.b16 %v5632
      %v6331 = vunpack.c.l.b16 %v5633
      %v6332 = vunpack.c.h.b16 %v5633
      %v6333 = vunpack.c.l.b16 %v5634
      %v6334 = vunpack.c.h.b16 %v5634
      %v6335 = vunpack.c.l.b16 %v5635
      %v6336 = vunpack.c.h.b16 %v5635
      %v6337 = vunpack.c.l.b16 %v5636
      %v6338 = vunpack.c.h.b16 %v5636
      %v6339 = vunpack.c.l.b16 %v5637
      %v6340 = vunpack.c.h.b16 %v5637
      %v6341 = vunpack.c.l.b16 %v5638
      %v6342 = vunpack.c.h.b16 %v5638
      %v6343 = vunpack.c.l.b16 %v5639
      %v6344 = vunpack.c.h.b16 %v5639
      %v6345 = vunpack.c.l.b16 %v5640
      %v6346 = vunpack.c.h.b16 %v5640
      %v6347 = vunpack.c.l.b16 %v5641
      %v6348 = vunpack.c.h.b16 %v5641
      %v6349 = vunpack.c.l.b16 %v5642
      %v6350 = vunpack.c.h.b16 %v5642
      %v6351 = vunpack.c.l.b16 %v5643
      %v6352 = vunpack.c.h.b16 %v5643
      %v6353 = vunpack.c.l.b16 %v5644
      %v6354 = vunpack.c.h.b16 %v5644
      %v6355 = vunpack.c.l.b16 %v5645
      %v6356 = vunpack.c.h.b16 %v5645
      %v6357 = vunpack.c.l.b16 %v5646
      %v6358 = vunpack.c.h.b16 %v5646
      %v6359 = vunpack.c.l.b16 %v5647
      %v6360 = vunpack.c.h.b16 %v5647
      %v6361 = vunpack.c.l.b16 %v5648
      %v6362 = vunpack.c.h.b16 %v5648
      %v6363 = vunpack.c.l.b16 %v5649
      %v6364 = vunpack.c.h.b16 %v5649
      %v6365 = vunpack.c.l.b16 %v5650
      %v6366 = vunpack.c.h.b16 %v5650
      %v6367 = vunpack.c.l.b16 %v5651
      %v6368 = vunpack.c.h.b16 %v5651
      %v6369 = vunpack.c.l.b16 %v5652
      %v6370 = vunpack.c.h.b16 %v5652
      %v6371 = vunpack.c.l.b16 %v5653
      %v6372 = vunpack.c.h.b16 %v5653
      %v6373 = vunpack.c.l.b16 %v5654
      %v6374 = vunpack.c.h.b16 %v5654
      %v6375 = vunpack.c.l.b16 %v5655
      %v6376 = vunpack.c.h.b16 %v5655
      %v6377 = vunpack.c.l.b16 %v5656
      %v6378 = vunpack.c.h.b16 %v5656
      %v6379 = vunpack.c.l.b16 %v5657
      %v6380 = vunpack.c.h.b16 %v5657
      %v6381 = vunpack.c.l.b16 %v5658
      %v6382 = vunpack.c.h.b16 %v5658
      %v6383 = vunpack.c.l.b16 %v5659
      %v6384 = vunpack.c.h.b16 %v5659
      %v6385 = vunpack.c.l.b16 %v5660
      %v6386 = vunpack.c.h.b16 %v5660
      %v6387 = vunpack.c.l.b16 %v5661
      %v6388 = vunpack.c.h.b16 %v5661
      %v6389 = vunpack.c.l.b16 %v5662
      %v6390 = vunpack.c.h.b16 %v5662
      %v6391 = vunpack.c.l.b16 %v5663
      %v6392 = vunpack.c.h.b16 %v5663
      %v6393 = vunpack.c.l.b16 %v5664
      %v6394 = vunpack.c.h.b16 %v5664
      %v6395 = vunpack.c.l.b16 %v5665
      %v6396 = vunpack.c.h.b16 %v5665
      %v6397 = vunpack.c.l.b16 %v5666
      %v6398 = vunpack.c.h.b16 %v5666
      %v6399 = vunpack.c.l.b16 %v5667
      %v6400 = vunpack.c.h.b16 %v5667
      %v6401 = vunpack.c.l.b16 %v5668
      %v6402 = vunpack.c.h.b16 %v5668
      %v6403 = vunpack.c.l.b16 %v5669
      %v6404 = vunpack.c.h.b16 %v5669
      %v6405 = vunpack.c.l.b16 %v5670
      %v6406 = vunpack.c.h.b16 %v5670
      %v6407 = vunpack.c.l.b16 %v5671
      %v6408 = vunpack.c.h.b16 %v5671
      %v6409 = vunpack.c.l.b16 %v5672
      %v6410 = vunpack.c.h.b16 %v5672
      %v6411 = vunpack.c.l.b16 %v5673
      %v6412 = vunpack.c.h.b16 %v5673
      %v6413 = vunpack.c.l.b16 %v5674
      %v6414 = vunpack.c.h.b16 %v5674
      %v6415 = vunpack.c.l.b16 %v5675
      %v6416 = vunpack.c.h.b16 %v5675
      %v6417 = vunpack.c.l.b16 %v5676
      %v6418 = vunpack.c.h.b16 %v5676
      %v6419 = vunpack.c.l.b16 %v5677
      %v6420 = vunpack.c.h.b16 %v5677
      %v6421 = vunpack.c.l.b16 %v5678
      %v6422 = vunpack.c.h.b16 %v5678
      %v6423 = vunpack.c.l.b16 %v5679
      %v6424 = vunpack.c.h.b16 %v5679
      %v6425 = vunpack.c.l.b16 %v5680
      %v6426 = vunpack.c.h.b16 %v5680
      %v6427 = vunpack.c.l.b16 %v5681
      %v6428 = vunpack.c.h.b16 %v5681
      %v6429 = vunpack.c.l.b16 %v5682
      %v6430 = vunpack.c.h.b16 %v5682
      %v6431 = vunpack.c.l.b16 %v5683
      %v6432 = vunpack.c.h.b16 %v5683
      %v6433 = vunpack.c.l.b16 %v5684
      %v6434 = vunpack.c.h.b16 %v5684
      %v6435 = vunpack.c.l.b16 %v5685
      %v6436 = vunpack.c.h.b16 %v5685
      %v6437 = vunpack.c.l.b16 %v5686
      %v6438 = vunpack.c.h.b16 %v5686
      %v6439 = vunpack.c.l.b16 %v5687
      %v6440 = vunpack.c.h.b16 %v5687
      %v6441 = vunpack.c.l.b16 %v5688
      %v6442 = vunpack.c.h.b16 %v5688
      %v6443 = vunpack.c.l.b16 %v5689
      %v6444 = vunpack.c.h.b16 %v5689
      %v6445 = vunpack.c.l.b16 %v5690
      %v6446 = vunpack.c.h.b16 %v5690
      %v6447 = vunpack.c.l.b16 %v5691
      %v6448 = vunpack.c.h.b16 %v5691
      %v6449 = vunpack.c.l.b16 %v5692
      %v6450 = vunpack.c.h.b16 %v5692
      %v6451 = vunpack.c.l.b16 %v5693
      %v6452 = vunpack.c.h.b16 %v5693
      %v6453 = vunpack.c.l.b16 %v5694
      %v6454 = vunpack.c.h.b16 %v5694
      %v6455 = vunpack.c.l.b16 %v5695
      %v6456 = vunpack.c.h.b16 %v5695
      %v6457 = vunpack.c.l.b16 %v5696
      %v6458 = vunpack.c.h.b16 %v5696
      %v6459 = vunpack.c.l.b16 %v5697
      %v6460 = vunpack.c.h.b16 %v5697
      %v6461 = vunpack.c.l.b16 %v5698
      %v6462 = vunpack.c.h.b16 %v5698
      %v6463 = vunpack.c.l.b16 %v5699
      %v6464 = vunpack.c.h.b16 %v5699
      %v6465 = vunpack.c.l.b16 %v5700
      %v6466 = vunpack.c.h.b16 %v5700
      %v6467 = vunpack.c.l.b16 %v5701
      %v6468 = vunpack.c.h.b16 %v5701
      %v6469 = vunpack.c.l.b16 %v5702
      %v6470 = vunpack.c.h.b16 %v5702
      %v6471 = vpack.c.b16 %v5967, %v5959
      %v6472 = vpack.c.b16 %v5968, %v5960
      %v6473 = vpack.c.b16 %v5969, %v5961
      %v6474 = vpack.c.b16 %v5970, %v5962
      %v6475 = vpack.c.b16 %v5971, %v5963
      %v6476 = vpack.c.b16 %v5972, %v5964
      %v6477 = vpack.c.b16 %v5973, %v5965
      %v6478 = vpack.c.b16 %v5974, %v5966
      %v6479 = vpack.c.b16 %v5983, %v5975
      %v6480 = vpack.c.b16 %v5984, %v5976
      %v6481 = vpack.c.b16 %v5985, %v5977
      %v6482 = vpack.c.b16 %v5986, %v5978
      %v6483 = vpack.c.b16 %v5987, %v5979
      %v6484 = vpack.c.b16 %v5988, %v5980
      %v6485 = vpack.c.b16 %v5989, %v5981
      %v6486 = vpack.c.b16 %v5990, %v5982
      %v6487 = vpack.c.b16 %v5999, %v5991
      %v6488 = vpack.c.b16 %v6000, %v5992
      %v6489 = vpack.c.b16 %v6001, %v5993
      %v6490 = vpack.c.b16 %v6002, %v5994
      %v6491 = vpack.c.b16 %v6003, %v5995
      %v6492 = vpack.c.b16 %v6004, %v5996
      %v6493 = vpack.c.b16 %v6005, %v5997
      %v6494 = vpack.c.b16 %v6006, %v5998
      %v6495 = vpack.c.b16 %v6015, %v6007
      %v6496 = vpack.c.b16 %v6016, %v6008
      %v6497 = vpack.c.b16 %v6017, %v6009
      %v6498 = vpack.c.b16 %v6018, %v6010
      %v6499 = vpack.c.b16 %v6019, %v6011
      %v6500 = vpack.c.b16 %v6020, %v6012
      %v6501 = vpack.c.b16 %v6021, %v6013
      %v6502 = vpack.c.b16 %v6022, %v6014
      %v6503 = vpack.c.b16 %v6031, %v6023
      %v6504 = vpack.c.b16 %v6032, %v6024
      %v6505 = vpack.c.b16 %v6033, %v6025
      %v6506 = vpack.c.b16 %v6034, %v6026
      %v6507 = vpack.c.b16 %v6035, %v6027
      %v6508 = vpack.c.b16 %v6036, %v6028
      %v6509 = vpack.c.b16 %v6037, %v6029
      %v6510 = vpack.c.b16 %v6038, %v6030
      %v6511 = vpack.c.b16 %v6047, %v6039
      %v6512 = vpack.c.b16 %v6048, %v6040
      %v6513 = vpack.c.b16 %v6049, %v6041
      %v6514 = vpack.c.b16 %v6050, %v6042
      %v6515 = vpack.c.b16 %v6051, %v6043
      %v6516 = vpack.c.b16 %v6052, %v6044
      %v6517 = vpack.c.b16 %v6053, %v6045
      %v6518 = vpack.c.b16 %v6054, %v6046
      %v6519 = vpack.c.b16 %v6063, %v6055
      %v6520 = vpack.c.b16 %v6064, %v6056
      %v6521 = vpack.c.b16 %v6065, %v6057
      %v6522 = vpack.c.b16 %v6066, %v6058
      %v6523 = vpack.c.b16 %v6067, %v6059
      %v6524 = vpack.c.b16 %v6068, %v6060
      %v6525 = vpack.c.b16 %v6069, %v6061
      %v6526 = vpack.c.b16 %v6070, %v6062
      %v6527 = vpack.c.b16 %v6079, %v6071
      %v6528 = vpack.c.b16 %v6080, %v6072
      %v6529 = vpack.c.b16 %v6081, %v6073
      %v6530 = vpack.c.b16 %v6082, %v6074
      %v6531 = vpack.c.b16 %v6083, %v6075
      %v6532 = vpack.c.b16 %v6084, %v6076
      %v6533 = vpack.c.b16 %v6085, %v6077
      %v6534 = vpack.c.b16 %v6086, %v6078
      %v6535 = vpack.c.b16 %v6095, %v6087
      %v6536 = vpack.c.b16 %v6096, %v6088
      %v6537 = vpack.c.b16 %v6097, %v6089
      %v6538 = vpack.c.b16 %v6098, %v6090
      %v6539 = vpack.c.b16 %v6099, %v6091
      %v6540 = vpack.c.b16 %v6100, %v6092
      %v6541 = vpack.c.b16 %v6101, %v6093
      %v6542 = vpack.c.b16 %v6102, %v6094
      %v6543 = vpack.c.b16 %v6111, %v6103
      %v6544 = vpack.c.b16 %v6112, %v6104
      %v6545 = vpack.c.b16 %v6113, %v6105
      %v6546 = vpack.c.b16 %v6114, %v6106
      %v6547 = vpack.c.b16 %v6115, %v6107
      %v6548 = vpack.c.b16 %v6116, %v6108
      %v6549 = vpack.c.b16 %v6117, %v6109
      %v6550 = vpack.c.b16 %v6118, %v6110
      %v6551 = vpack.c.b16 %v6127, %v6119
      %v6552 = vpack.c.b16 %v6128, %v6120
      %v6553 = vpack.c.b16 %v6129, %v6121
      %v6554 = vpack.c.b16 %v6130, %v6122
      %v6555 = vpack.c.b16 %v6131, %v6123
      %v6556 = vpack.c.b16 %v6132, %v6124
      %v6557 = vpack.c.b16 %v6133, %v6125
      %v6558 = vpack.c.b16 %v6134, %v6126
      %v6559 = vpack.c.b16 %v6143, %v6135
      %v6560 = vpack.c.b16 %v6144, %v6136
      %v6561 = vpack.c.b16 %v6145, %v6137
      %v6562 = vpack.c.b16 %v6146, %v6138
      %v6563 = vpack.c.b16 %v6147, %v6139
      %v6564 = vpack.c.b16 %v6148, %v6140
      %v6565 = vpack.c.b16 %v6149, %v6141
      %v6566 = vpack.c.b16 %v6150, %v6142
      %v6567 = vpack.c.b16 %v6159, %v6151
      %v6568 = vpack.c.b16 %v6160, %v6152
      %v6569 = vpack.c.b16 %v6161, %v6153
      %v6570 = vpack.c.b16 %v6162, %v6154
      %v6571 = vpack.c.b16 %v6163, %v6155
      %v6572 = vpack.c.b16 %v6164, %v6156
      %v6573 = vpack.c.b16 %v6165, %v6157
      %v6574 = vpack.c.b16 %v6166, %v6158
      %v6575 = vpack.c.b16 %v6175, %v6167
      %v6576 = vpack.c.b16 %v6176, %v6168
      %v6577 = vpack.c.b16 %v6177, %v6169
      %v6578 = vpack.c.b16 %v6178, %v6170
      %v6579 = vpack.c.b16 %v6179, %v6171
      %v6580 = vpack.c.b16 %v6180, %v6172
      %v6581 = vpack.c.b16 %v6181, %v6173
      %v6582 = vpack.c.b16 %v6182, %v6174
      %v6583 = vpack.c.b16 %v6191, %v6183
      %v6584 = vpack.c.b16 %v6192, %v6184
      %v6585 = vpack.c.b16 %v6193, %v6185
      %v6586 = vpack.c.b16 %v6194, %v6186
      %v6587 = vpack.c.b16 %v6195, %v6187
      %v6588 = vpack.c.b16 %v6196, %v6188
      %v6589 = vpack.c.b16 %v6197, %v6189
      %v6590 = vpack.c.b16 %v6198, %v6190
      %v6591 = vpack.c.b16 %v6207, %v6199
      %v6592 = vpack.c.b16 %v6208, %v6200
      %v6593 = vpack.c.b16 %v6209, %v6201
      %v6594 = vpack.c.b16 %v6210, %v6202
      %v6595 = vpack.c.b16 %v6211, %v6203
      %v6596 = vpack.c.b16 %v6212, %v6204
      %v6597 = vpack.c.b16 %v6213, %v6205
      %v6598 = vpack.c.b16 %v6214, %v6206
      %v6599 = vpack.c.b16 %v6223, %v6215
      %v6600 = vpack.c.b16 %v6224, %v6216
      %v6601 = vpack.c.b16 %v6225, %v6217
      %v6602 = vpack.c.b16 %v6226, %v6218
      %v6603 = vpack.c.b16 %v6227, %v6219
      %v6604 = vpack.c.b16 %v6228, %v6220
      %v6605 = vpack.c.b16 %v6229, %v6221
      %v6606 = vpack.c.b16 %v6230, %v6222
      %v6607 = vpack.c.b16 %v6239, %v6231
      %v6608 = vpack.c.b16 %v6240, %v6232
      %v6609 = vpack.c.b16 %v6241, %v6233
      %v6610 = vpack.c.b16 %v6242, %v6234
      %v6611 = vpack.c.b16 %v6243, %v6235
      %v6612 = vpack.c.b16 %v6244, %v6236
      %v6613 = vpack.c.b16 %v6245, %v6237
      %v6614 = vpack.c.b16 %v6246, %v6238
      %v6615 = vpack.c.b16 %v6255, %v6247
      %v6616 = vpack.c.b16 %v6256, %v6248
      %v6617 = vpack.c.b16 %v6257, %v6249
      %v6618 = vpack.c.b16 %v6258, %v6250
      %v6619 = vpack.c.b16 %v6259, %v6251
      %v6620 = vpack.c.b16 %v6260, %v6252
      %v6621 = vpack.c.b16 %v6261, %v6253
      %v6622 = vpack.c.b16 %v6262, %v6254
      %v6623 = vpack.c.b16 %v6271, %v6263
      %v6624 = vpack.c.b16 %v6272, %v6264
      %v6625 = vpack.c.b16 %v6273, %v6265
      %v6626 = vpack.c.b16 %v6274, %v6266
      %v6627 = vpack.c.b16 %v6275, %v6267
      %v6628 = vpack.c.b16 %v6276, %v6268
      %v6629 = vpack.c.b16 %v6277, %v6269
      %v6630 = vpack.c.b16 %v6278, %v6270
      %v6631 = vpack.c.b16 %v6287, %v6279
      %v6632 = vpack.c.b16 %v6288, %v6280
      %v6633 = vpack.c.b16 %v6289, %v6281
      %v6634 = vpack.c.b16 %v6290, %v6282
      %v6635 = vpack.c.b16 %v6291, %v6283
      %v6636 = vpack.c.b16 %v6292, %v6284
      %v6637 = vpack.c.b16 %v6293, %v6285
      %v6638 = vpack.c.b16 %v6294, %v6286
      %v6639 = vpack.c.b16 %v6303, %v6295
      %v6640 = vpack.c.b16 %v6304, %v6296
      %v6641 = vpack.c.b16 %v6305, %v6297
      %v6642 = vpack.c.b16 %v6306, %v6298
      %v6643 = vpack.c.b16 %v6307, %v6299
      %v6644 = vpack.c.b16 %v6308, %v6300
      %v6645 = vpack.c.b16 %v6309, %v6301
      %v6646 = vpack.c.b16 %v6310, %v6302
      %v6647 = vpack.c.b16 %v6319, %v6311
      %v6648 = vpack.c.b16 %v6320, %v6312
      %v6649 = vpack.c.b16 %v6321, %v6313
      %v6650 = vpack.c.b16 %v6322, %v6314
      %v6651 = vpack.c.b16 %v6323, %v6315
      %v6652 = vpack.c.b16 %v6324, %v6316
      %v6653 = vpack.c.b16 %v6325, %v6317
      %v6654 = vpack.c.b16 %v6326, %v6318
      %v6655 = vpack.c.b16 %v6335, %v6327
      %v6656 = vpack.c.b16 %v6336, %v6328
      %v6657 = vpack.c.b16 %v6337, %v6329
      %v6658 = vpack.c.b16 %v6338, %v6330
      %v6659 = vpack.c.b16 %v6339, %v6331
      %v6660 = vpack.c.b16 %v6340, %v6332
      %v6661 = vpack.c.b16 %v6341, %v6333
      %v6662 = vpack.c.b16 %v6342, %v6334
      %v6663 = vpack.c.b16 %v6351, %v6343
      %v6664 = vpack.c.b16 %v6352, %v6344
      %v6665 = vpack.c.b16 %v6353, %v6345
      %v6666 = vpack.c.b16 %v6354, %v6346
      %v6667 = vpack.c.b16 %v6355, %v6347
      %v6668 = vpack.c.b16 %v6356, %v6348
      %v6669 = vpack.c.b16 %v6357, %v6349
      %v6670 = vpack.c.b16 %v6358, %v6350
      %v6671 = vpack.c.b16 %v6367, %v6359
      %v6672 = vpack.c.b16 %v6368, %v6360
      %v6673 = vpack.c.b16 %v6369, %v6361
      %v6674 = vpack.c.b16 %v6370, %v6362
      %v6675 = vpack.c.b16 %v6371, %v6363
      %v6676 = vpack.c.b16 %v6372, %v6364
      %v6677 = vpack.c.b16 %v6373, %v6365
      %v6678 = vpack.c.b16 %v6374, %v6366
      %v6679 = vpack.c.b16 %v6383, %v6375
      %v6680 = vpack.c.b16 %v6384, %v6376
      %v6681 = vpack.c.b16 %v6385, %v6377
      %v6682 = vpack.c.b16 %v6386, %v6378
      %v6683 = vpack.c.b16 %v6387, %v6379
      %v6684 = vpack.c.b16 %v6388, %v6380
      %v6685 = vpack.c.b16 %v6389, %v6381
      %v6686 = vpack.c.b16 %v6390, %v6382
      %v6687 = vpack.c.b16 %v6399, %v6391
      %v6688 = vpack.c.b16 %v6400, %v6392
      %v6689 = vpack.c.b16 %v6401, %v6393
      %v6690 = vpack.c.b16 %v6402, %v6394
      %v6691 = vpack.c.b16 %v6403, %v6395
      %v6692 = vpack.c.b16 %v6404, %v6396
      %v6693 = vpack.c.b16 %v6405, %v6397
      %v6694 = vpack.c.b16 %v6406, %v6398
      %v6695 = vpack.c.b16 %v6415, %v6407
      %v6696 = vpack.c.b16 %v6416, %v6408
      %v6697 = vpack.c.b16 %v6417, %v6409
      %v6698 = vpack.c.b16 %v6418, %v6410
      %v6699 = vpack.c.b16 %v6419, %v6411
      %v6700 = vpack.c.b16 %v6420, %v6412
      %v6701 = vpack.c.b16 %v6421, %v6413
      %v6702 = vpack.c.b16 %v6422, %v6414
      %v6703 = vpack.c.b16 %v6431, %v6423
      %v6704 = vpack.c.b16 %v6432, %v6424
      %v6705 = vpack.c.b16 %v6433, %v6425
      %v6706 = vpack.c.b16 %v6434, %v6426
      %v6707 = vpack.c.b16 %v6435, %v6427
      %v6708 = vpack.c.b16 %v6436, %v6428
      %v6709 = vpack.c.b16 %v6437, %v6429
      %v6710 = vpack.c.b16 %v6438, %v6430
      %v6711 = vpack.c.b16 %v6447, %v6439
      %v6712 = vpack.c.b16 %v6448, %v6440
      %v6713 = vpack.c.b16 %v6449, %v6441
      %v6714 = vpack.c.b16 %v6450, %v6442
      %v6715 = vpack.c.b16 %v6451, %v6443
      %v6716 = vpack.c.b16 %v6452, %v6444
      %v6717 = vpack.c.b16 %v6453, %v6445
      %v6718 = vpack.c.b16 %v6454, %v6446
      %v6719 = vpack.c.b16 %v6463, %v6455
      %v6720 = vpack.c.b16 %v6464, %v6456
      %v6721 = vpack.c.b16 %v6465, %v6457
      %v6722 = vpack.c.b16 %v6466, %v6458
      %v6723 = vpack.c.b16 %v6467, %v6459
      %v6724 = vpack.c.b16 %v6468, %v6460
      %v6725 = vpack.c.b16 %v6469, %v6461
      %v6726 = vpack.c.b16 %v6470, %v6462
      %6983 = vmatprep.subr.bf16.mxu0 %v6472
      %6984 = vmatpush1.bf16.msra.mxu0 %v6471
      %6985 = vmatprep.subr.bf16.mxu0 %v6480
      %6986 = vmatpush1.bf16.msra.mxu0 %v6479
      %6987 = vmatprep.subr.bf16.mxu0 %v6488
      %6988 = vmatpush1.bf16.msra.mxu0 %v6487
      %6989 = vmatprep.subr.bf16.mxu0 %v6496
      %6990 = vmatpush1.bf16.msra.mxu0 %v6495
      %6991 = vmatprep.subr.bf16.mxu0 %v6504
      %6992 = vmatpush1.bf16.msra.mxu0 %v6503
      %6993 = vmatprep.subr.bf16.mxu0 %v6512
      %6994 = vmatpush1.bf16.msra.mxu0 %v6511
      %6995 = vmatprep.subr.bf16.mxu0 %v6520
      %6996 = vmatpush1.bf16.msra.mxu0 %v6519
      %6997 = vmatprep.subr.bf16.mxu0 %v6528
      %6998 = vmatpush1.bf16.msra.mxu0 %v6527
      %6999 = vmatprep.subr.bf16.mxu0 %v6536
      %7000 = vmatpush1.bf16.msra.mxu0 %v6535
      %7001 = vmatprep.subr.bf16.mxu0 %v6544
      %7002 = vmatpush1.bf16.msra.mxu0 %v6543
      %7003 = vmatprep.subr.bf16.mxu0 %v6552
      %7004 = vmatpush1.bf16.msra.mxu0 %v6551
      %7005 = vmatprep.subr.bf16.mxu0 %v6560
      %7006 = vmatpush1.bf16.msra.mxu0 %v6559
      %7007 = vmatprep.subr.bf16.mxu0 %v6568
      %7008 = vmatpush1.bf16.msra.mxu0 %v6567
      %7009 = vmatprep.subr.bf16.mxu0 %v6576
      %7010 = vmatpush1.bf16.msra.mxu0 %v6575
      %7011 = vmatprep.subr.bf16.mxu0 %v6584
      %7012 = vmatpush1.bf16.msra.mxu0 %v6583
      %7013 = vmatprep.subr.bf16.mxu0 %v6592
      %7014 = vmatpush1.bf16.msra.mxu0 %v6591
      %7015 = vmatprep.mubr.bf16.mxu0 %v4671
      %7016 = vmatmul.mubr.bf16.gmra.mrb[0].mxu0 %v4670
      %v7017 = vpop.f32.mrb[0].mxu0
      %v7018 = vadd.f32 %v4773, %v7017
      %v7019 = vpop.f32.mrb[0].mxu0
      %v7020 = vadd.f32 %v4777, %v7019
      %v7021 = vpop.f32.mrb[0].mxu0
      %v7022 = vpop.f32.mrb[0].mxu0
      %7023 = vdwg.mxu0
      %7024 = vmatprep.subr.bf16.mxu0 %v6600
      %7025 = vmatpush1.bf16.msra.mxu0 %v6599
      %7026 = vmatprep.subr.bf16.mxu0 %v6608
      %7027 = vmatpush1.bf16.msra.mxu0 %v6607
      %7028 = vmatprep.subr.bf16.mxu0 %v6616
      %7029 = vmatpush1.bf16.msra.mxu0 %v6615
      %7030 = vmatprep.subr.bf16.mxu0 %v6624
      %7031 = vmatpush1.bf16.msra.mxu0 %v6623
      %7032 = vmatprep.subr.bf16.mxu0 %v6632
      %7033 = vmatpush1.bf16.msra.mxu0 %v6631
      %7034 = vmatprep.subr.bf16.mxu0 %v6640
      %7035 = vmatpush1.bf16.msra.mxu0 %v6639
      %7036 = vmatprep.subr.bf16.mxu0 %v6648
      %7037 = vmatpush1.bf16.msra.mxu0 %v6647
      %7038 = vmatprep.subr.bf16.mxu0 %v6656
      %7039 = vmatpush1.bf16.msra.mxu0 %v6655
      %7040 = vmatprep.subr.bf16.mxu0 %v6664
      %7041 = vmatpush1.bf16.msra.mxu0 %v6663
      %7042 = vmatprep.subr.bf16.mxu0 %v6672
      %7043 = vmatpush1.bf16.msra.mxu0 %v6671
      %7044 = vmatprep.subr.bf16.mxu0 %v6680
      %7045 = vmatpush1.bf16.msra.mxu0 %v6679
      %7046 = vmatprep.subr.bf16.mxu0 %v6688
      %7047 = vmatpush1.bf16.msra.mxu0 %v6687
      %7048 = vmatprep.subr.bf16.mxu0 %v6696
      %7049 = vmatpush1.bf16.msra.mxu0 %v6695
      %7050 = vmatprep.subr.bf16.mxu0 %v6704
      %7051 = vmatpush1.bf16.msra.mxu0 %v6703
      %7052 = vmatprep.subr.bf16.mxu0 %v6712
      %7053 = vmatpush1.bf16.msra.mxu0 %v6711
      %7054 = vmatprep.subr.bf16.mxu0 %v6720
      %7055 = vmatpush1.bf16.msra.mxu0 %v6719
      %7056 = vmatprep.mubr.bf16.mxu0 %v5446
      %7057 = vmatmul.mubr.bf16.gmra.mrb[0].mxu0 %v5445
      %v7058 = vpop.f32.mrb[0].mxu0
      %v7059 = vadd.f32 %v7018, %v7058
      %v7060 = vpop.f32.mrb[0].mxu0
      %v7061 = vadd.f32 %v7020, %v7060
      %v7062 = vpop.f32.mrb[0].mxu0
      %v7063 = vpop.f32.mrb[0].mxu0
      %7064 = vdwg.mxu0
      %7065 = vmatprep.subr.bf16.mxu0 %v6474
      %7066 = vmatpush1.bf16.msra.mxu0 %v6473
      %7067 = vmatprep.subr.bf16.mxu0 %v6482
      %7068 = vmatpush1.bf16.msra.mxu0 %v6481
      %7069 = vmatprep.subr.bf16.mxu0 %v6490
      %7070 = vmatpush1.bf16.msra.mxu0 %v6489
      %7071 = vmatprep.subr.bf16.mxu0 %v6498
      %7072 = vmatpush1.bf16.msra.mxu0 %v6497
      %7073 = vmatprep.subr.bf16.mxu0 %v6506
      %7074 = vmatpush1.bf16.msra.mxu0 %v6505
      %7075 = vmatprep.subr.bf16.mxu0 %v6514
      %7076 = vmatpush1.bf16.msra.mxu0 %v6513
      %7077 = vmatprep.subr.bf16.mxu0 %v6522
      %7078 = vmatpush1.bf16.msra.mxu0 %v6521
      %7079 = vmatprep.subr.bf16.mxu0 %v6530
      %7080 = vmatpush1.bf16.msra.mxu0 %v6529
      %7081 = vmatprep.subr.bf16.mxu0 %v6538
      %7082 = vmatpush1.bf16.msra.mxu0 %v6537
      %7083 = vmatprep.subr.bf16.mxu0 %v6546
      %7084 = vmatpush1.bf16.msra.mxu0 %v6545
      %7085 = vmatprep.subr.bf16.mxu0 %v6554
      %7086 = vmatpush1.bf16.msra.mxu0 %v6553
      %7087 = vmatprep.subr.bf16.mxu0 %v6562
      %7088 = vmatpush1.bf16.msra.mxu0 %v6561
      %7089 = vmatprep.subr.bf16.mxu0 %v6570
      %7090 = vmatpush1.bf16.msra.mxu0 %v6569
      %7091 = vmatprep.subr.bf16.mxu0 %v6578
      %7092 = vmatpush1.bf16.msra.mxu0 %v6577
      %7093 = vmatprep.subr.bf16.mxu0 %v6586
      %7094 = vmatpush1.bf16.msra.mxu0 %v6585
      %7095 = vmatprep.subr.bf16.mxu0 %v6594
      %7096 = vmatpush1.bf16.msra.mxu0 %v6593
      %7097 = vmatprep.mubr.bf16.mxu0 %v4671
      %7098 = vmatmul.mubr.bf16.gmra.mrb[0].mxu0 %v4670
      %v7099 = vpop.f32.mrb[0].mxu0
      %v7100 = vadd.f32 %v4781, %v7099
      %v7101 = vpop.f32.mrb[0].mxu0
      %v7102 = vadd.f32 %v4785, %v7101
      %v7103 = vpop.f32.mrb[0].mxu0
      %v7104 = vpop.f32.mrb[0].mxu0
      %7105 = vdwg.mxu0
      %7106 = vmatprep.subr.bf16.mxu0 %v6602
      %7107 = vmatpush1.bf16.msra.mxu0 %v6601
      %7108 = vmatprep.subr.bf16.mxu0 %v6610
      %7109 = vmatpush1.bf16.msra.mxu0 %v6609
      %7110 = vmatprep.subr.bf16.mxu0 %v6618
      %7111 = vmatpush1.bf16.msra.mxu0 %v6617
      %7112 = vmatprep.subr.bf16.mxu0 %v6626
      %7113 = vmatpush1.bf16.msra.mxu0 %v6625
      %7114 = vmatprep.subr.bf16.mxu0 %v6634
      %7115 = vmatpush1.bf16.msra.mxu0 %v6633
      %7116 = vmatprep.subr.bf16.mxu0 %v6642
      %7117 = vmatpush1.bf16.msra.mxu0 %v6641
      %7118 = vmatprep.subr.bf16.mxu0 %v6650
      %7119 = vmatpush1.bf16.msra.mxu0 %v6649
      %7120 = vmatprep.subr.bf16.mxu0 %v6658
      %7121 = vmatpush1.bf16.msra.mxu0 %v6657
      %7122 = vmatprep.subr.bf16.mxu0 %v6666
      %7123 = vmatpush1.bf16.msra.mxu0 %v6665
      %7124 = vmatprep.subr.bf16.mxu0 %v6674
      %7125 = vmatpush1.bf16.msra.mxu0 %v6673
      %7126 = vmatprep.subr.bf16.mxu0 %v6682
      %7127 = vmatpush1.bf16.msra.mxu0 %v6681
      %7128 = vmatprep.subr.bf16.mxu0 %v6690
      %7129 = vmatpush1.bf16.msra.mxu0 %v6689
      %7130 = vmatprep.subr.bf16.mxu0 %v6698
      %7131 = vmatpush1.bf16.msra.mxu0 %v6697
      %7132 = vmatprep.subr.bf16.mxu0 %v6706
      %7133 = vmatpush1.bf16.msra.mxu0 %v6705
      %7134 = vmatprep.subr.bf16.mxu0 %v6714
      %7135 = vmatpush1.bf16.msra.mxu0 %v6713
      %7136 = vmatprep.subr.bf16.mxu0 %v6722
      %7137 = vmatpush1.bf16.msra.mxu0 %v6721
      %7138 = vmatprep.mubr.bf16.mxu0 %v5446
      %7139 = vmatmul.mubr.bf16.gmra.mrb[0].mxu0 %v5445
      %v7140 = vpop.f32.mrb[0].mxu0
      %v7141 = vadd.f32 %v7100, %v7140
      %v7142 = vpop.f32.mrb[0].mxu0
      %v7143 = vadd.f32 %v7102, %v7142
      %v7144 = vpop.f32.mrb[0].mxu0
      %v7145 = vpop.f32.mrb[0].mxu0
      %7146 = vdwg.mxu0
      %7147 = vmatprep.subr.bf16.mxu0 %v6476
      %7148 = vmatpush1.bf16.msra.mxu0 %v6475
      %7149 = vmatprep.subr.bf16.mxu0 %v6484
      %7150 = vmatpush1.bf16.msra.mxu0 %v6483
      %7151 = vmatprep.subr.bf16.mxu0 %v6492
      %7152 = vmatpush1.bf16.msra.mxu0 %v6491
      %7153 = vmatprep.subr.bf16.mxu0 %v6500
      %7154 = vmatpush1.bf16.msra.mxu0 %v6499
      %7155 = vmatprep.subr.bf16.mxu0 %v6508
      %7156 = vmatpush1.bf16.msra.mxu0 %v6507
      %7157 = vmatprep.subr.bf16.mxu0 %v6516
      %7158 = vmatpush1.bf16.msra.mxu0 %v6515
      %7159 = vmatprep.subr.bf16.mxu0 %v6524
      %7160 = vmatpush1.bf16.msra.mxu0 %v6523
      %7161 = vmatprep.subr.bf16.mxu0 %v6532
      %7162 = vmatpush1.bf16.msra.mxu0 %v6531
      %7163 = vmatprep.subr.bf16.mxu0 %v6540
      %7164 = vmatpush1.bf16.msra.mxu0 %v6539
      %7165 = vmatprep.subr.bf16.mxu0 %v6548
      %7166 = vmatpush1.bf16.msra.mxu0 %v6547
      %7167 = vmatprep.subr.bf16.mxu0 %v6556
      %7168 = vmatpush1.bf16.msra.mxu0 %v6555
      %7169 = vmatprep.subr.bf16.mxu0 %v6564
      %7170 = vmatpush1.bf16.msra.mxu0 %v6563
      %7171 = vmatprep.subr.bf16.mxu0 %v6572
      %7172 = vmatpush1.bf16.msra.mxu0 %v6571
      %7173 = vmatprep.subr.bf16.mxu0 %v6580
      %7174 = vmatpush1.bf16.msra.mxu0 %v6579
      %7175 = vmatprep.subr.bf16.mxu0 %v6588
      %7176 = vmatpush1.bf16.msra.mxu0 %v6587
      %7177 = vmatprep.subr.bf16.mxu0 %v6596
      %7178 = vmatpush1.bf16.msra.mxu0 %v6595
      %7179 = vmatprep.mubr.bf16.mxu0 %v4671
      %7180 = vmatmul.mubr.bf16.gmra.mrb[0].mxu0 %v4670
      %v7181 = vpop.f32.mrb[0].mxu0
      %v7182 = vadd.f32 %v4789, %v7181
      %v7183 = vpop.f32.mrb[0].mxu0
      %v7184 = vadd.f32 %v4793, %v7183
      %v7185 = vpop.f32.mrb[0].mxu0
      %v7186 = vpop.f32.mrb[0].mxu0
      %7187 = vdwg.mxu0
      %7188 = vmatprep.subr.bf16.mxu0 %v6604
      %7189 = vmatpush1.bf16.msra.mxu0 %v6603
      %7190 = vmatprep.subr.bf16.mxu0 %v6612
      %7191 = vmatpush1.bf16.msra.mxu0 %v6611
      %7192 = vmatprep.subr.bf16.mxu0 %v6620
      %7193 = vmatpush1.bf16.msra.mxu0 %v6619
      %7194 = vmatprep.subr.bf16.mxu0 %v6628
      %7195 = vmatpush1.bf16.msra.mxu0 %v6627
      %7196 = vmatprep.subr.bf16.mxu0 %v6636
      %7197 = vmatpush1.bf16.msra.mxu0 %v6635
      %7198 = vmatprep.subr.bf16.mxu0 %v6644
      %7199 = vmatpush1.bf16.msra.mxu0 %v6643
      %7200 = vmatprep.subr.bf16.mxu0 %v6652
      %7201 = vmatpush1.bf16.msra.mxu0 %v6651
      %7202 = vmatprep.subr.bf16.mxu0 %v6660
      %7203 = vmatpush1.bf16.msra.mxu0 %v6659
      %7204 = vmatprep.subr.bf16.mxu0 %v6668
      %7205 = vmatpush1.bf16.msra.mxu0 %v6667
      %7206 = vmatprep.subr.bf16.mxu0 %v6676
      %7207 = vmatpush1.bf16.msra.mxu0 %v6675
      %7208 = vmatprep.subr.bf16.mxu0 %v6684
      %7209 = vmatpush1.bf16.msra.mxu0 %v6683
      %7210 = vmatprep.subr.bf16.mxu0 %v6692
      %7211 = vmatpush1.bf16.msra.mxu0 %v6691
      %7212 = vmatprep.subr.bf16.mxu0 %v6700
      %7213 = vmatpush1.bf16.msra.mxu0 %v6699
      %7214 = vmatprep.subr.bf16.mxu0 %v6708
      %7215 = vmatpush1.bf16.msra.mxu0 %v6707
      %7216 = vmatprep.subr.bf16.mxu0 %v6716
      %7217 = vmatpush1.bf16.msra.mxu0 %v6715
      %7218 = vmatprep.subr.bf16.mxu0 %v6724
      %7219 = vmatpush1.bf16.msra.mxu0 %v6723
      %7220 = vmatprep.mubr.bf16.mxu0 %v5446
      %7221 = vmatmul.mubr.bf16.gmra.mrb[0].mxu0 %v5445
      %v7222 = vpop.f32.mrb[0].mxu0
      %v7223 = vadd.f32 %v7182, %v7222
      %v7224 = vpop.f32.mrb[0].mxu0
      %v7225 = vadd.f32 %v7184, %v7224
      %v7226 = vpop.f32.mrb[0].mxu0
      %v7227 = vpop.f32.mrb[0].mxu0
      %7228 = vdwg.mxu0
      %7229 = vmatprep.subr.bf16.mxu0 %v6478
      %7230 = vmatpush1.bf16.msra.mxu0 %v6477
      %7231 = vmatprep.subr.bf16.mxu0 %v6486
      %7232 = vmatpush1.bf16.msra.mxu0 %v6485
      %7233 = vmatprep.subr.bf16.mxu0 %v6494
      %7234 = vmatpush1.bf16.msra.mxu0 %v6493
      %7235 = vmatprep.subr.bf16.mxu0 %v6502
      %7236 = vmatpush1.bf16.msra.mxu0 %v6501
      %7237 = vmatprep.subr.bf16.mxu0 %v6510
      %7238 = vmatpush1.bf16.msra.mxu0 %v6509
      %7239 = vmatprep.subr.bf16.mxu0 %v6518
      %7240 = vmatpush1.bf16.msra.mxu0 %v6517
      %7241 = vmatprep.subr.bf16.mxu0 %v6526
      %7242 = vmatpush1.bf16.msra.mxu0 %v6525
      %7243 = vmatprep.subr.bf16.mxu0 %v6534
      %7244 = vmatpush1.bf16.msra.mxu0 %v6533
      %7245 = vmatprep.subr.bf16.mxu0 %v6542
      %7246 = vmatpush1.bf16.msra.mxu0 %v6541
      %7247 = vmatprep.subr.bf16.mxu0 %v6550
      %7248 = vmatpush1.bf16.msra.mxu0 %v6549
      %7249 = vmatprep.subr.bf16.mxu0 %v6558
      %7250 = vmatpush1.bf16.msra.mxu0 %v6557
      %7251 = vmatprep.subr.bf16.mxu0 %v6566
      %7252 = vmatpush1.bf16.msra.mxu0 %v6565
      %7253 = vmatprep.subr.bf16.mxu0 %v6574
      %7254 = vmatpush1.bf16.msra.mxu0 %v6573
      %7255 = vmatprep.subr.bf16.mxu0 %v6582
      %7256 = vmatpush1.bf16.msra.mxu0 %v6581
      %7257 = vmatprep.subr.bf16.mxu0 %v6590
      %7258 = vmatpush1.bf16.msra.mxu0 %v6589
      %7259 = vmatprep.subr.bf16.mxu0 %v6598
      %7260 = vmatpush1.bf16.msra.mxu0 %v6597
      %7261 = vmatprep.mubr.bf16.mxu0 %v4671
      %7262 = vmatmul.mubr.bf16.gmra.mrb[0].mxu0 %v4670
      %v7263 = vpop.f32.mrb[0].mxu0
      %v7264 = vadd.f32 %v4797, %v7263
      %v7265 = vpop.f32.mrb[0].mxu0
      %v7266 = vadd.f32 %v4801, %v7265
      %v7267 = vpop.f32.mrb[0].mxu0
      %v7268 = vpop.f32.mrb[0].mxu0
      %7269 = vdwg.mxu0
      %7270 = vmatprep.subr.bf16.mxu0 %v6606
      %7271 = vmatpush1.bf16.msra.mxu0 %v6605
      %7272 = vmatprep.subr.bf16.mxu0 %v6614
      %7273 = vmatpush1.bf16.msra.mxu0 %v6613
      %7274 = vmatprep.subr.bf16.mxu0 %v6622
      %7275 = vmatpush1.bf16.msra.mxu0 %v6621
      %7276 = vmatprep.subr.bf16.mxu0 %v6630
      %7277 = vmatpush1.bf16.msra.mxu0 %v6629
      %7278 = vmatprep.subr.bf16.mxu0 %v6638
      %7279 = vmatpush1.bf16.msra.mxu0 %v6637
      %7280 = vmatprep.subr.bf16.mxu0 %v6646
      %7281 = vmatpush1.bf16.msra.mxu0 %v6645
      %7282 = vmatprep.subr.bf16.mxu0 %v6654
      %7283 = vmatpush1.bf16.msra.mxu0 %v6653
      %7284 = vmatprep.subr.bf16.mxu0 %v6662
      %7285 = vmatpush1.bf16.msra.mxu0 %v6661
      %7286 = vmatprep.subr.bf16.mxu0 %v6670
      %7287 = vmatpush1.bf16.msra.mxu0 %v6669
      %7288 = vmatprep.subr.bf16.mxu0 %v6678
      %7289 = vmatpush1.bf16.msra.mxu0 %v6677
      %7290 = vmatprep.subr.bf16.mxu0 %v6686
      %7291 = vmatpush1.bf16.msra.mxu0 %v6685
      %7292 = vmatprep.subr.bf16.mxu0 %v6694
      %7293 = vmatpush1.bf16.msra.mxu0 %v6693
      %7294 = vmatprep.subr.bf16.mxu0 %v6702
      %7295 = vmatpush1.bf16.msra.mxu0 %v6701
      %7296 = vmatprep.subr.bf16.mxu0 %v6710
      %7297 = vmatpush1.bf16.msra.mxu0 %v6709
      %7298 = vmatprep.subr.bf16.mxu0 %v6718
      %7299 = vmatpush1.bf16.msra.mxu0 %v6717
      %7300 = vmatprep.subr.bf16.mxu0 %v6726
      %7301 = vmatpush1.bf16.msra.mxu0 %v6725
      %7302 = vmatprep.mubr.bf16.mxu0 %v5446
      %7303 = vmatmul.mubr.bf16.gmra.mrb[0].mxu0 %v5445
      %v7304 = vpop.f32.mrb[0].mxu0
      %v7305 = vadd.f32 %v7264, %v7304
      %v7306 = vpop.f32.mrb[0].mxu0
      %v7307 = vadd.f32 %v7266, %v7306
      %v7308 = vpop.f32.mrb[0].mxu0
      %v7309 = vpop.f32.mrb[0].mxu0
      %7310 = vdwg.mxu0
      %v7311 = vxor.u32 %v7059, 2147483648
      %v7312 = vxor.u32 %v7061, 2147483648
      %v7313 = vmul.f32 %v7311, 1.442695
      %v7314 = vpow.pop %v7313
      %v7315 = vmul.f32 %v7312, 1.442695
      %v7316 = vpow.pop %v7315
      %v7317 = vadd.f32 %v7314, 1.0
      %v7318 = vadd.f32 %v7316, 1.0
      %v7319 = vrcp.pop %v7317
      %v7320 = vmul.f32 1.0, %v7319
      %v7321 = vrcp.pop %v7318
      %v7322 = vmul.f32 1.0, %v7321
      %v7323 = vxor.u32 %v7141, 2147483648
      %v7324 = vxor.u32 %v7143, 2147483648
      %v7325 = vmul.f32 %v7323, 1.442695
      %v7326 = vpow.pop %v7325
      %v7327 = vmul.f32 %v7324, 1.442695
      %v7328 = vpow.pop %v7327
      %v7329 = vadd.f32 %v7326, 1.0
      %v7330 = vadd.f32 %v7328, 1.0
      %v7331 = vrcp.pop %v7329
      %v7332 = vmul.f32 1.0, %v7331
      %v7333 = vrcp.pop %v7330
      %v7334 = vmul.f32 1.0, %v7333
      %v7335 = vtanh.pop %v7223
      %v7336 = vtanh.pop %v7225
      %v7337 = vxor.u32 %v7305, 2147483648
      %v7338 = vxor.u32 %v7307, 2147483648
      %v7339 = vmul.f32 %v7337, 1.442695
      %v7340 = vpow.pop %v7339
      %v7341 = vmul.f32 %v7338, 1.442695
      %v7342 = vpow.pop %v7341
      %v7343 = vadd.f32 %v7340, 1.0
      %v7344 = vadd.f32 %v7342, 1.0
      %v7345 = vrcp.pop %v7343
      %v7346 = vmul.f32 1.0, %v7345
      %v7347 = vrcp.pop %v7344
      %v7348 = vmul.f32 1.0, %v7347
      %v7349 = vmul.f32 %v7332, %v5439
      %v7350 = vmul.f32 %v7334, %v5440
      %v7351 = vmul.f32 %v7320, %v7335
      %v7352 = vmul.f32 %v7322, %v7336
      %v7353 = vadd.f32 %v7349, %v7351
      %v7354 = vadd.f32 %v7350, %v7352
      %v7355 = vtanh.pop %v7353
      %v7356 = vtanh.pop %v7354
      %v7357 = vmul.f32 %v7346, %v7355
      %v7358 = vmul.f32 %v7348, %v7356
      %v7359 = vld [vmem:[#allocation14] sm:$0xff]
      %v7360 = vld [vmem:[#allocation14 + $0x10] sm:$0xff]
      %v7361 = vld [vmem:[#allocation14 + $0x18] sm:$0xff]
      %v7362 = vld [vmem:[#allocation14 + $0x20] sm:$0xff]
      %v7363 = vld [vmem:[#allocation14 + $0x30] sm:$0xff]
      %v7364 = vld [vmem:[#allocation14 + $0x38] sm:$0xff]
      %v7365 = vld [vmem:[#allocation14 + $0x40] sm:$0xff]
      %v7366 = vld [vmem:[#allocation14 + $0x50] sm:$0xff]
      %v7367 = vld [vmem:[#allocation14 + $0x58] sm:$0xff]
      %v7368 = vld [vmem:[#allocation14 + $0x60] sm:$0xff]
      %v7369 = vld [vmem:[#allocation14 + $0x70] sm:$0xff]
      %v7370 = vld [vmem:[#allocation14 + $0x78] sm:$0xff]
      %v7371 = vld [vmem:[#allocation14 + $0x80] sm:$0xff]
      %v7372 = vld [vmem:[#allocation14 + $0x90] sm:$0xff]
      %v7373 = vld [vmem:[#allocation14 + $0x98] sm:$0xff]
      %v7374 = vld [vmem:[#allocation14 + $0xa0] sm:$0xff]
      %v7375 = vld [vmem:[#allocation14 + $0xb0] sm:$0xff]
      %v7376 = vld [vmem:[#allocation14 + $0xb8] sm:$0xff]
      %v7377 = vld [vmem:[#allocation14 + $0xc0] sm:$0xff]
      %v7378 = vld [vmem:[#allocation14 + $0xd0] sm:$0xff]
      %v7379 = vld [vmem:[#allocation14 + $0xd8] sm:$0xff]
      %v7380 = vld [vmem:[#allocation14 + $0xe0] sm:$0xff]
      %v7381 = vld [vmem:[#allocation14 + $0xf0] sm:$0xff]
      %v7382 = vld [vmem:[#allocation14 + $0xf8] sm:$0xff]
      %v7383 = vld [vmem:[#allocation14 + $0x100] sm:$0xff]
      %v7384 = vld [vmem:[#allocation14 + $0x110] sm:$0xff]
      %v7385 = vld [vmem:[#allocation14 + $0x118] sm:$0xff]
      %v7386 = vld [vmem:[#allocation14 + $0x120] sm:$0xff]
      %v7387 = vld [vmem:[#allocation14 + $0x130] sm:$0xff]
      %v7388 = vld [vmem:[#allocation14 + $0x138] sm:$0xff]
      %v7389 = vld [vmem:[#allocation14 + $0x140] sm:$0xff]
      %v7390 = vld [vmem:[#allocation14 + $0x150] sm:$0xff]
      %v7391 = vld [vmem:[#allocation14 + $0x158] sm:$0xff]
      %v7392 = vld [vmem:[#allocation14 + $0x160] sm:$0xff]
      %v7393 = vld [vmem:[#allocation14 + $0x170] sm:$0xff]
      %v7394 = vld [vmem:[#allocation14 + $0x178] sm:$0xff]
      %v7395 = vld [vmem:[#allocation14 + $0x180] sm:$0xff]
      %v7396 = vld [vmem:[#allocation14 + $0x190] sm:$0xff]
      %v7397 = vld [vmem:[#allocation14 + $0x198] sm:$0xff]
      %v7398 = vld [vmem:[#allocation14 + $0x1a0] sm:$0xff]
      %v7399 = vld [vmem:[#allocation14 + $0x1b0] sm:$0xff]
      %v7400 = vld [vmem:[#allocation14 + $0x1b8] sm:$0xff]
      %v7401 = vld [vmem:[#allocation14 + $0x1c0] sm:$0xff]
      %v7402 = vld [vmem:[#allocation14 + $0x1d0] sm:$0xff]
      %v7403 = vld [vmem:[#allocation14 + $0x1d8] sm:$0xff]
      %v7404 = vld [vmem:[#allocation14 + $0x1e0] sm:$0xff]
      %v7405 = vld [vmem:[#allocation14 + $0x1f0] sm:$0xff]
      %v7406 = vld [vmem:[#allocation14 + $0x1f8] sm:$0xff]
      %v7407 = vld [vmem:[#allocation14 + $0x200] sm:$0xff]
      %v7408 = vld [vmem:[#allocation14 + $0x210] sm:$0xff]
      %v7409 = vld [vmem:[#allocation14 + $0x218] sm:$0xff]
      %v7410 = vld [vmem:[#allocation14 + $0x220] sm:$0xff]
      %v7411 = vld [vmem:[#allocation14 + $0x230] sm:$0xff]
      %v7412 = vld [vmem:[#allocation14 + $0x238] sm:$0xff]
      %v7413 = vld [vmem:[#allocation14 + $0x240] sm:$0xff]
      %v7414 = vld [vmem:[#allocation14 + $0x250] sm:$0xff]
      %v7415 = vld [vmem:[#allocation14 + $0x258] sm:$0xff]
      %v7416 = vld [vmem:[#allocation14 + $0x260] sm:$0xff]
      %v7417 = vld [vmem:[#allocation14 + $0x270] sm:$0xff]
      %v7418 = vld [vmem:[#allocation14 + $0x278] sm:$0xff]
      %v7419 = vld [vmem:[#allocation14 + $0x280] sm:$0xff]
      %v7420 = vld [vmem:[#allocation14 + $0x290] sm:$0xff]
      %v7421 = vld [vmem:[#allocation14 + $0x298] sm:$0xff]
      %v7422 = vld [vmem:[#allocation14 + $0x2a0] sm:$0xff]
      %v7423 = vld [vmem:[#allocation14 + $0x2b0] sm:$0xff]
      %v7424 = vld [vmem:[#allocation14 + $0x2b8] sm:$0xff]
      %v7425 = vld [vmem:[#allocation14 + $0x2c0] sm:$0xff]
      %v7426 = vld [vmem:[#allocation14 + $0x2d0] sm:$0xff]
      %v7427 = vld [vmem:[#allocation14 + $0x2d8] sm:$0xff]
      %v7428 = vld [vmem:[#allocation14 + $0x2e0] sm:$0xff]
      %v7429 = vld [vmem:[#allocation14 + $0x2f0] sm:$0xff]
      %v7430 = vld [vmem:[#allocation14 + $0x2f8] sm:$0xff]
      %v7431 = vld [vmem:[#allocation14 + $0x300] sm:$0xff]
      %v7432 = vld [vmem:[#allocation14 + $0x310] sm:$0xff]
      %v7433 = vld [vmem:[#allocation14 + $0x318] sm:$0xff]
      %v7434 = vld [vmem:[#allocation14 + $0x320] sm:$0xff]
      %v7435 = vld [vmem:[#allocation14 + $0x330] sm:$0xff]
      %v7436 = vld [vmem:[#allocation14 + $0x338] sm:$0xff]
      %v7437 = vld [vmem:[#allocation14 + $0x340] sm:$0xff]
      %v7438 = vld [vmem:[#allocation14 + $0x350] sm:$0xff]
      %v7439 = vld [vmem:[#allocation14 + $0x358] sm:$0xff]
      %v7440 = vld [vmem:[#allocation14 + $0x360] sm:$0xff]
      %v7441 = vld [vmem:[#allocation14 + $0x370] sm:$0xff]
      %v7442 = vld [vmem:[#allocation14 + $0x378] sm:$0xff]
      %v7443 = vld [vmem:[#allocation14 + $0x380] sm:$0xff]
      %v7444 = vld [vmem:[#allocation14 + $0x390] sm:$0xff]
      %v7445 = vld [vmem:[#allocation14 + $0x398] sm:$0xff]
      %v7446 = vld [vmem:[#allocation14 + $0x3a0] sm:$0xff]
      %v7447 = vld [vmem:[#allocation14 + $0x3b0] sm:$0xff]
      %v7448 = vld [vmem:[#allocation14 + $0x3b8] sm:$0xff]
      %v7449 = vld [vmem:[#allocation14 + $0x3c0] sm:$0xff]
      %v7450 = vld [vmem:[#allocation14 + $0x3d0] sm:$0xff]
      %v7451 = vld [vmem:[#allocation14 + $0x3d8] sm:$0xff]
      %v7452 = vld [vmem:[#allocation14 + $0x3e0] sm:$0xff]
      %v7453 = vld [vmem:[#allocation14 + $0x3f0] sm:$0xff]
      %v7454 = vld [vmem:[#allocation14 + $0x3f8] sm:$0xff]
      %v7455 = vld [vmem:[#allocation15] sm:$0xff]
      %v7457 = vlaneseq
      %v7458 = vshrl.u32 %v7457, 7
      %v7459 = vsub.s32 0, %v7458
      %v7460 = vrot.slane %v7455, %v7459
      %v7461 = vlaneseq
      %v7462 = vshrl.u32 %v7461, 7
      %v7463 = vsub.s32 1, %v7462
      %v7464 = vrot.slane %v7455, %v7463
      %v7465 = vlaneseq
      %v7466 = vshrl.u32 %v7465, 7
      %v7467 = vsub.s32 2, %v7466
      %v7468 = vrot.slane %v7455, %v7467
      %v7469 = vlaneseq
      %v7470 = vshrl.u32 %v7469, 7
      %v7471 = vsub.s32 3, %v7470
      %v7472 = vrot.slane %v7455, %v7471
      %v7473 = vlaneseq
      %v7474 = vshrl.u32 %v7473, 7
      %v7475 = vsub.s32 4, %v7474
      %v7476 = vrot.slane %v7455, %v7475
      %v7477 = vlaneseq
      %v7478 = vshrl.u32 %v7477, 7
      %v7479 = vsub.s32 5, %v7478
      %v7480 = vrot.slane %v7455, %v7479
      %v7481 = vlaneseq
      %v7482 = vshrl.u32 %v7481, 7
      %v7483 = vsub.s32 6, %v7482
      %v7484 = vrot.slane %v7455, %v7483
      %v7485 = vlaneseq
      %v7486 = vshrl.u32 %v7485, 7
      %v7487 = vsub.s32 7, %v7486
      %v7488 = vrot.slane %v7455, %v7487
      %v7593 = vunpack.c.l.b16 %v7359
      %v7594 = vunpack.c.h.b16 %v7359
      %v7595 = vunpack.c.l.b16 %v7360
      %v7596 = vunpack.c.h.b16 %v7360
      %v7597 = vunpack.c.l.b16 %v7361
      %v7598 = vunpack.c.h.b16 %v7361
      %v7599 = vunpack.c.l.b16 %v7362
      %v7600 = vunpack.c.h.b16 %v7362
      %v7601 = vunpack.c.l.b16 %v7363
      %v7602 = vunpack.c.h.b16 %v7363
      %v7603 = vunpack.c.l.b16 %v7364
      %v7604 = vunpack.c.h.b16 %v7364
      %v7605 = vunpack.c.l.b16 %v7365
      %v7606 = vunpack.c.h.b16 %v7365
      %v7607 = vunpack.c.l.b16 %v7366
      %v7608 = vunpack.c.h.b16 %v7366
      %v7609 = vunpack.c.l.b16 %v7367
      %v7610 = vunpack.c.h.b16 %v7367
      %v7611 = vunpack.c.l.b16 %v7368
      %v7612 = vunpack.c.h.b16 %v7368
      %v7613 = vunpack.c.l.b16 %v7369
      %v7614 = vunpack.c.h.b16 %v7369
      %v7615 = vunpack.c.l.b16 %v7370
      %v7616 = vunpack.c.h.b16 %v7370
      %v7617 = vunpack.c.l.b16 %v7371
      %v7618 = vunpack.c.h.b16 %v7371
      %v7619 = vunpack.c.l.b16 %v7372
      %v7620 = vunpack.c.h.b16 %v7372
      %v7621 = vunpack.c.l.b16 %v7373
      %v7622 = vunpack.c.h.b16 %v7373
      %v7623 = vunpack.c.l.b16 %v7374
      %v7624 = vunpack.c.h.b16 %v7374
      %v7625 = vunpack.c.l.b16 %v7375
      %v7626 = vunpack.c.h.b16 %v7375
      %v7627 = vunpack.c.l.b16 %v7376
      %v7628 = vunpack.c.h.b16 %v7376
      %v7629 = vunpack.c.l.b16 %v7377
      %v7630 = vunpack.c.h.b16 %v7377
      %v7631 = vunpack.c.l.b16 %v7378
      %v7632 = vunpack.c.h.b16 %v7378
      %v7633 = vunpack.c.l.b16 %v7379
      %v7634 = vunpack.c.h.b16 %v7379
      %v7635 = vunpack.c.l.b16 %v7380
      %v7636 = vunpack.c.h.b16 %v7380
      %v7637 = vunpack.c.l.b16 %v7381
      %v7638 = vunpack.c.h.b16 %v7381
      %v7639 = vunpack.c.l.b16 %v7382
      %v7640 = vunpack.c.h.b16 %v7382
      %v7641 = vunpack.c.l.b16 %v7383
      %v7642 = vunpack.c.h.b16 %v7383
      %v7643 = vunpack.c.l.b16 %v7384
      %v7644 = vunpack.c.h.b16 %v7384
      %v7645 = vunpack.c.l.b16 %v7385
      %v7646 = vunpack.c.h.b16 %v7385
      %v7647 = vunpack.c.l.b16 %v7386
      %v7648 = vunpack.c.h.b16 %v7386
      %v7649 = vunpack.c.l.b16 %v7387
      %v7650 = vunpack.c.h.b16 %v7387
      %v7651 = vunpack.c.l.b16 %v7388
      %v7652 = vunpack.c.h.b16 %v7388
      %v7653 = vunpack.c.l.b16 %v7389
      %v7654 = vunpack.c.h.b16 %v7389
      %v7655 = vunpack.c.l.b16 %v7390
      %v7656 = vunpack.c.h.b16 %v7390
      %v7657 = vunpack.c.l.b16 %v7391
      %v7658 = vunpack.c.h.b16 %v7391
      %v7659 = vunpack.c.l.b16 %v7392
      %v7660 = vunpack.c.h.b16 %v7392
      %v7661 = vunpack.c.l.b16 %v7393
      %v7662 = vunpack.c.h.b16 %v7393
      %v7663 = vunpack.c.l.b16 %v7394
      %v7664 = vunpack.c.h.b16 %v7394
      %v7665 = vunpack.c.l.b16 %v7395
      %v7666 = vunpack.c.h.b16 %v7395
      %v7667 = vunpack.c.l.b16 %v7396
      %v7668 = vunpack.c.h.b16 %v7396
      %v7669 = vunpack.c.l.b16 %v7397
      %v7670 = vunpack.c.h.b16 %v7397
      %v7671 = vunpack.c.l.b16 %v7398
      %v7672 = vunpack.c.h.b16 %v7398
      %v7673 = vunpack.c.l.b16 %v7399
      %v7674 = vunpack.c.h.b16 %v7399
      %v7675 = vunpack.c.l.b16 %v7400
      %v7676 = vunpack.c.h.b16 %v7400
      %v7677 = vunpack.c.l.b16 %v7401
      %v7678 = vunpack.c.h.b16 %v7401
      %v7679 = vunpack.c.l.b16 %v7402
      %v7680 = vunpack.c.h.b16 %v7402
      %v7681 = vunpack.c.l.b16 %v7403
      %v7682 = vunpack.c.h.b16 %v7403
      %v7683 = vunpack.c.l.b16 %v7404
      %v7684 = vunpack.c.h.b16 %v7404
      %v7685 = vunpack.c.l.b16 %v7405
      %v7686 = vunpack.c.h.b16 %v7405
      %v7687 = vunpack.c.l.b16 %v7406
      %v7688 = vunpack.c.h.b16 %v7406
      %v7689 = vunpack.c.l.b16 %v7407
      %v7690 = vunpack.c.h.b16 %v7407
      %v7691 = vunpack.c.l.b16 %v7408
      %v7692 = vunpack.c.h.b16 %v7408
      %v7693 = vunpack.c.l.b16 %v7409
      %v7694 = vunpack.c.h.b16 %v7409
      %v7695 = vunpack.c.l.b16 %v7410
      %v7696 = vunpack.c.h.b16 %v7410
      %v7697 = vunpack.c.l.b16 %v7411
      %v7698 = vunpack.c.h.b16 %v7411
      %v7699 = vunpack.c.l.b16 %v7412
      %v7700 = vunpack.c.h.b16 %v7412
      %v7701 = vunpack.c.l.b16 %v7413
      %v7702 = vunpack.c.h.b16 %v7413
      %v7703 = vunpack.c.l.b16 %v7414
      %v7704 = vunpack.c.h.b16 %v7414
      %v7705 = vunpack.c.l.b16 %v7415
      %v7706 = vunpack.c.h.b16 %v7415
      %v7707 = vunpack.c.l.b16 %v7416
      %v7708 = vunpack.c.h.b16 %v7416
      %v7709 = vunpack.c.l.b16 %v7417
      %v7710 = vunpack.c.h.b16 %v7417
      %v7711 = vunpack.c.l.b16 %v7418
      %v7712 = vunpack.c.h.b16 %v7418
      %v7713 = vunpack.c.l.b16 %v7419
      %v7714 = vunpack.c.h.b16 %v7419
      %v7715 = vunpack.c.l.b16 %v7420
      %v7716 = vunpack.c.h.b16 %v7420
      %v7717 = vunpack.c.l.b16 %v7421
      %v7718 = vunpack.c.h.b16 %v7421
      %v7719 = vunpack.c.l.b16 %v7422
      %v7720 = vunpack.c.h.b16 %v7422
      %v7721 = vunpack.c.l.b16 %v7423
      %v7722 = vunpack.c.h.b16 %v7423
      %v7723 = vunpack.c.l.b16 %v7424
      %v7724 = vunpack.c.h.b16 %v7424
      %v7725 = vunpack.c.l.b16 %v7425
      %v7726 = vunpack.c.h.b16 %v7425
      %v7727 = vunpack.c.l.b16 %v7426
      %v7728 = vunpack.c.h.b16 %v7426
      %v7729 = vunpack.c.l.b16 %v7427
      %v7730 = vunpack.c.h.b16 %v7427
      %v7731 = vunpack.c.l.b16 %v7428
      %v7732 = vunpack.c.h.b16 %v7428
      %v7733 = vunpack.c.l.b16 %v7429
      %v7734 = vunpack.c.h.b16 %v7429
      %v7735 = vunpack.c.l.b16 %v7430
      %v7736 = vunpack.c.h.b16 %v7430
      %v7737 = vunpack.c.l.b16 %v7431
      %v7738 = vunpack.c.h.b16 %v7431
      %v7739 = vunpack.c.l.b16 %v7432
      %v7740 = vunpack.c.h.b16 %v7432
      %v7741 = vunpack.c.l.b16 %v7433
      %v7742 = vunpack.c.h.b16 %v7433
      %v7743 = vunpack.c.l.b16 %v7434
      %v7744 = vunpack.c.h.b16 %v7434
      %v7745 = vunpack.c.l.b16 %v7435
      %v7746 = vunpack.c.h.b16 %v7435
      %v7747 = vunpack.c.l.b16 %v7436
      %v7748 = vunpack.c.h.b16 %v7436
      %v7749 = vunpack.c.l.b16 %v7437
      %v7750 = vunpack.c.h.b16 %v7437
      %v7751 = vunpack.c.l.b16 %v7438
      %v7752 = vunpack.c.h.b16 %v7438
      %v7753 = vunpack.c.l.b16 %v7439
      %v7754 = vunpack.c.h.b16 %v7439
      %v7755 = vunpack.c.l.b16 %v7440
      %v7756 = vunpack.c.h.b16 %v7440
      %v7757 = vunpack.c.l.b16 %v7441
      %v7758 = vunpack.c.h.b16 %v7441
      %v7759 = vunpack.c.l.b16 %v7442
      %v7760 = vunpack.c.h.b16 %v7442
      %v7761 = vunpack.c.l.b16 %v7443
      %v7762 = vunpack.c.h.b16 %v7443
      %v7763 = vunpack.c.l.b16 %v7444
      %v7764 = vunpack.c.h.b16 %v7444
      %v7765 = vunpack.c.l.b16 %v7445
      %v7766 = vunpack.c.h.b16 %v7445
      %v7767 = vunpack.c.l.b16 %v7446
      %v7768 = vunpack.c.h.b16 %v7446
      %v7769 = vunpack.c.l.b16 %v7447
      %v7770 = vunpack.c.h.b16 %v7447
      %v7771 = vunpack.c.l.b16 %v7448
      %v7772 = vunpack.c.h.b16 %v7448
      %v7773 = vunpack.c.l.b16 %v7449
      %v7774 = vunpack.c.h.b16 %v7449
      %v7775 = vunpack.c.l.b16 %v7450
      %v7776 = vunpack.c.h.b16 %v7450
      %v7777 = vunpack.c.l.b16 %v7451
      %v7778 = vunpack.c.h.b16 %v7451
      %v7779 = vunpack.c.l.b16 %v7452
      %v7780 = vunpack.c.h.b16 %v7452
      %v7781 = vunpack.c.l.b16 %v7453
      %v7782 = vunpack.c.h.b16 %v7453
      %v7783 = vunpack.c.l.b16 %v7454
      %v7784 = vunpack.c.h.b16 %v7454
      %v7785 = vpack.c.b16 %v7599, %v7593
      %v7786 = vpack.c.b16 %v7600, %v7594
      %v7787 = vpack.c.b16 %v7601, %v7595
      %v7788 = vpack.c.b16 %v7602, %v7596
      %v7789 = vpack.c.b16 %v7603, %v7597
      %v7790 = vpack.c.b16 %v7604, %v7598
      %v7791 = vpack.c.b16 %v7611, %v7605
      %v7792 = vpack.c.b16 %v7612, %v7606
      %v7793 = vpack.c.b16 %v7613, %v7607
      %v7794 = vpack.c.b16 %v7614, %v7608
      %v7795 = vpack.c.b16 %v7615, %v7609
      %v7796 = vpack.c.b16 %v7616, %v7610
      %v7797 = vpack.c.b16 %v7623, %v7617
      %v7798 = vpack.c.b16 %v7624, %v7618
      %v7799 = vpack.c.b16 %v7625, %v7619
      %v7800 = vpack.c.b16 %v7626, %v7620
      %v7801 = vpack.c.b16 %v7627, %v7621
      %v7802 = vpack.c.b16 %v7628, %v7622
      %v7803 = vpack.c.b16 %v7635, %v7629
      %v7804 = vpack.c.b16 %v7636, %v7630
      %v7805 = vpack.c.b16 %v7637, %v7631
      %v7806 = vpack.c.b16 %v7638, %v7632
      %v7807 = vpack.c.b16 %v7639, %v7633
      %v7808 = vpack.c.b16 %v7640, %v7634
      %v7809 = vpack.c.b16 %v7647, %v7641
      %v7810 = vpack.c.b16 %v7648, %v7642
      %v7811 = vpack.c.b16 %v7649, %v7643
      %v7812 = vpack.c.b16 %v7650, %v7644
      %v7813 = vpack.c.b16 %v7651, %v7645
      %v7814 = vpack.c.b16 %v7652, %v7646
      %v7815 = vpack.c.b16 %v7659, %v7653
      %v7816 = vpack.c.b16 %v7660, %v7654
      %v7817 = vpack.c.b16 %v7661, %v7655
      %v7818 = vpack.c.b16 %v7662, %v7656
      %v7819 = vpack.c.b16 %v7663, %v7657
      %v7820 = vpack.c.b16 %v7664, %v7658
      %v7821 = vpack.c.b16 %v7671, %v7665
      %v7822 = vpack.c.b16 %v7672, %v7666
      %v7823 = vpack.c.b16 %v7673, %v7667
      %v7824 = vpack.c.b16 %v7674, %v7668
      %v7825 = vpack.c.b16 %v7675, %v7669
      %v7826 = vpack.c.b16 %v7676, %v7670
      %v7827 = vpack.c.b16 %v7683, %v7677
      %v7828 = vpack.c.b16 %v7684, %v7678
      %v7829 = vpack.c.b16 %v7685, %v7679
      %v7830 = vpack.c.b16 %v7686, %v7680
      %v7831 = vpack.c.b16 %v7687, %v7681
      %v7832 = vpack.c.b16 %v7688, %v7682
      %v7833 = vpack.c.b16 %v7695, %v7689
      %v7834 = vpack.c.b16 %v7696, %v7690
      %v7835 = vpack.c.b16 %v7697, %v7691
      %v7836 = vpack.c.b16 %v7698, %v7692
      %v7837 = vpack.c.b16 %v7699, %v7693
      %v7838 = vpack.c.b16 %v7700, %v7694
      %v7839 = vpack.c.b16 %v7707, %v7701
      %v7840 = vpack.c.b16 %v7708, %v7702
      %v7841 = vpack.c.b16 %v7709, %v7703
      %v7842 = vpack.c.b16 %v7710, %v7704
      %v7843 = vpack.c.b16 %v7711, %v7705
      %v7844 = vpack.c.b16 %v7712, %v7706
      %v7845 = vpack.c.b16 %v7719, %v7713
      %v7846 = vpack.c.b16 %v7720, %v7714
      %v7847 = vpack.c.b16 %v7721, %v7715
      %v7848 = vpack.c.b16 %v7722, %v7716
      %v7849 = vpack.c.b16 %v7723, %v7717
      %v7850 = vpack.c.b16 %v7724, %v7718
      %v7851 = vpack.c.b16 %v7731, %v7725
      %v7852 = vpack.c.b16 %v7732, %v7726
      %v7853 = vpack.c.b16 %v7733, %v7727
      %v7854 = vpack.c.b16 %v7734, %v7728
      %v7855 = vpack.c.b16 %v7735, %v7729
      %v7856 = vpack.c.b16 %v7736, %v7730
      %v7857 = vpack.c.b16 %v7743, %v7737
      %v7858 = vpack.c.b16 %v7744, %v7738
      %v7859 = vpack.c.b16 %v7745, %v7739
      %v7860 = vpack.c.b16 %v7746, %v7740
      %v7861 = vpack.c.b16 %v7747, %v7741
      %v7862 = vpack.c.b16 %v7748, %v7742
      %v7863 = vpack.c.b16 %v7755, %v7749
      %v7864 = vpack.c.b16 %v7756, %v7750
      %v7865 = vpack.c.b16 %v7757, %v7751
      %v7866 = vpack.c.b16 %v7758, %v7752
      %v7867 = vpack.c.b16 %v7759, %v7753
      %v7868 = vpack.c.b16 %v7760, %v7754
      %v7869 = vpack.c.b16 %v7767, %v7761
      %v7870 = vpack.c.b16 %v7768, %v7762
      %v7871 = vpack.c.b16 %v7769, %v7763
      %v7872 = vpack.c.b16 %v7770, %v7764
      %v7873 = vpack.c.b16 %v7771, %v7765
      %v7874 = vpack.c.b16 %v7772, %v7766
      %v7875 = vpack.c.b16 %v7779, %v7773
      %v7876 = vpack.c.b16 %v7780, %v7774
      %v7877 = vpack.c.b16 %v7781, %v7775
      %v7878 = vpack.c.b16 %v7782, %v7776
      %v7879 = vpack.c.b16 %v7783, %v7777
      %v7880 = vpack.c.b16 %v7784, %v7778
      %7977 = vmatprep.subr.bf16.mxu0 %v7786
      %7978 = vmatpush1.bf16.msra.mxu0 %v7785
      %7979 = vmatprep.subr.bf16.mxu0 %v7792
      %7980 = vmatpush1.bf16.msra.mxu0 %v7791
      %7981 = vmatprep.subr.bf16.mxu0 %v7798
      %7982 = vmatpush1.bf16.msra.mxu0 %v7797
      %7983 = vmatprep.subr.bf16.mxu0 %v7804
      %7984 = vmatpush1.bf16.msra.mxu0 %v7803
      %7985 = vmatprep.subr.bf16.mxu0 %v7810
      %7986 = vmatpush1.bf16.msra.mxu0 %v7809
      %7987 = vmatprep.subr.bf16.mxu0 %v7816
      %7988 = vmatpush1.bf16.msra.mxu0 %v7815
      %7989 = vmatprep.subr.bf16.mxu0 %v7822
      %7990 = vmatpush1.bf16.msra.mxu0 %v7821
      %7991 = vmatprep.subr.bf16.mxu0 %v7828
      %7992 = vmatpush1.bf16.msra.mxu0 %v7827
      %7993 = vmatprep.subr.bf16.mxu0 %v7834
      %7994 = vmatpush1.bf16.msra.mxu0 %v7833
      %7995 = vmatprep.subr.bf16.mxu0 %v7840
      %7996 = vmatpush1.bf16.msra.mxu0 %v7839
      %7997 = vmatprep.subr.bf16.mxu0 %v7846
      %7998 = vmatpush1.bf16.msra.mxu0 %v7845
      %7999 = vmatprep.subr.bf16.mxu0 %v7852
      %8000 = vmatpush1.bf16.msra.mxu0 %v7851
      %8001 = vmatprep.subr.bf16.mxu0 %v7858
      %8002 = vmatpush1.bf16.msra.mxu0 %v7857
      %8003 = vmatprep.subr.bf16.mxu0 %v7864
      %8004 = vmatpush1.bf16.msra.mxu0 %v7863
      %8005 = vmatprep.subr.bf16.mxu0 %v7870
      %8006 = vmatpush1.bf16.msra.mxu0 %v7869
      %8007 = vmatprep.subr.bf16.mxu0 %v7876
      %8008 = vmatpush1.bf16.msra.mxu0 %v7875
      %8009 = vmatprep.mubr.bf16.mxu0 %v4671
      %8010 = vmatmul.mubr.bf16.gmra.mrb[0].mxu0 %v4670
      %v8011 = vpop.f32.mrb[0].mxu0
      %v8012 = vadd.f32 %v7460, %v8011
      %v8013 = vpop.f32.mrb[0].mxu0
      %v8014 = vadd.f32 %v7464, %v8013
      %v8015 = vpop.f32.mrb[0].mxu0
      %v8016 = vpop.f32.mrb[0].mxu0
      %8017 = vdwg.mxu0
      %8018 = vmatprep.subr.bf16.mxu0 %v7788
      %8019 = vmatpush1.bf16.msra.mxu0 %v7787
      %8020 = vmatprep.subr.bf16.mxu0 %v7794
      %8021 = vmatpush1.bf16.msra.mxu0 %v7793
      %8022 = vmatprep.subr.bf16.mxu0 %v7800
      %8023 = vmatpush1.bf16.msra.mxu0 %v7799
      %8024 = vmatprep.subr.bf16.mxu0 %v7806
      %8025 = vmatpush1.bf16.msra.mxu0 %v7805
      %8026 = vmatprep.subr.bf16.mxu0 %v7812
      %8027 = vmatpush1.bf16.msra.mxu0 %v7811
      %8028 = vmatprep.subr.bf16.mxu0 %v7818
      %8029 = vmatpush1.bf16.msra.mxu0 %v7817
      %8030 = vmatprep.subr.bf16.mxu0 %v7824
      %8031 = vmatpush1.bf16.msra.mxu0 %v7823
      %8032 = vmatprep.subr.bf16.mxu0 %v7830
      %8033 = vmatpush1.bf16.msra.mxu0 %v7829
      %8034 = vmatprep.subr.bf16.mxu0 %v7836
      %8035 = vmatpush1.bf16.msra.mxu0 %v7835
      %8036 = vmatprep.subr.bf16.mxu0 %v7842
      %8037 = vmatpush1.bf16.msra.mxu0 %v7841
      %8038 = vmatprep.subr.bf16.mxu0 %v7848
      %8039 = vmatpush1.bf16.msra.mxu0 %v7847
      %8040 = vmatprep.subr.bf16.mxu0 %v7854
      %8041 = vmatpush1.bf16.msra.mxu0 %v7853
      %8042 = vmatprep.subr.bf16.mxu0 %v7860
      %8043 = vmatpush1.bf16.msra.mxu0 %v7859
      %8044 = vmatprep.subr.bf16.mxu0 %v7866
      %8045 = vmatpush1.bf16.msra.mxu0 %v7865
      %8046 = vmatprep.subr.bf16.mxu0 %v7872
      %8047 = vmatpush1.bf16.msra.mxu0 %v7871
      %8048 = vmatprep.subr.bf16.mxu0 %v7878
      %8049 = vmatpush1.bf16.msra.mxu0 %v7877
      %8050 = vmatprep.mubr.bf16.mxu0 %v4671
      %8051 = vmatmul.mubr.bf16.gmra.mrb[0].mxu0 %v4670
      %v8052 = vpop.f32.mrb[0].mxu0
      %v8053 = vadd.f32 %v7476, %v8052
      %v8054 = vpop.f32.mrb[0].mxu0
      %v8055 = vadd.f32 %v7480, %v8054
      %v8056 = vpop.f32.mrb[0].mxu0
      %v8057 = vpop.f32.mrb[0].mxu0
      %8058 = vdwg.mxu0
      %8059 = vmatprep.subr.bf16.mxu0 %v7790
      %8060 = vmatpush1.bf16.msra.mxu0 %v7789
      %8061 = vmatprep.subr.bf16.mxu0 %v7796
      %8062 = vmatpush1.bf16.msra.mxu0 %v7795
      %8063 = vmatprep.subr.bf16.mxu0 %v7802
      %8064 = vmatpush1.bf16.msra.mxu0 %v7801
      %8065 = vmatprep.subr.bf16.mxu0 %v7808
      %8066 = vmatpush1.bf16.msra.mxu0 %v7807
      %8067 = vmatprep.subr.bf16.mxu0 %v7814
      %8068 = vmatpush1.bf16.msra.mxu0 %v7813
      %8069 = vmatprep.subr.bf16.mxu0 %v7820
      %8070 = vmatpush1.bf16.msra.mxu0 %v7819
      %8071 = vmatprep.subr.bf16.mxu0 %v7826
      %8072 = vmatpush1.bf16.msra.mxu0 %v7825
      %8073 = vmatprep.subr.bf16.mxu0 %v7832
      %8074 = vmatpush1.bf16.msra.mxu0 %v7831
      %8075 = vmatprep.subr.bf16.mxu0 %v7838
      %8076 = vmatpush1.bf16.msra.mxu0 %v7837
      %8077 = vmatprep.subr.bf16.mxu0 %v7844
      %8078 = vmatpush1.bf16.msra.mxu0 %v7843
      %8079 = vmatprep.subr.bf16.mxu0 %v7850
      %8080 = vmatpush1.bf16.msra.mxu0 %v7849
      %8081 = vmatprep.subr.bf16.mxu0 %v7856
      %8082 = vmatpush1.bf16.msra.mxu0 %v7855
      %8083 = vmatprep.subr.bf16.mxu0 %v7862
      %8084 = vmatpush1.bf16.msra.mxu0 %v7861
      %8085 = vmatprep.subr.bf16.mxu0 %v7868
      %8086 = vmatpush1.bf16.msra.mxu0 %v7867
      %8087 = vmatprep.subr.bf16.mxu0 %v7874
      %8088 = vmatpush1.bf16.msra.mxu0 %v7873
      %8089 = vmatprep.subr.bf16.mxu0 %v7880
      %8090 = vmatpush1.bf16.msra.mxu0 %v7879
      %8091 = vmatprep.mubr.bf16.mxu0 %v4671
      %8092 = vmatmul.mubr.bf16.gmra.mrb[0].mxu0 %v4670
      %v8093 = vpop.f32.mrb[0].mxu0
      %v8094 = vadd.f32 %v7484, %v8093
      %v8095 = vpop.f32.mrb[0].mxu0
      %v8096 = vadd.f32 %v7488, %v8095
      %v8097 = vpop.f32.mrb[0].mxu0
      %v8098 = vpop.f32.mrb[0].mxu0
      %8099 = vdwg.mxu0
      %v8100 = vxor.u32 %v8012, 2147483648
      %v8101 = vxor.u32 %v8014, 2147483648
      %v8102 = vmul.f32 %v8100, 1.442695
      %v8103 = vpow.pop %v8102
      %v8104 = vmul.f32 %v8101, 1.442695
      %v8105 = vpow.pop %v8104
      %v8106 = vadd.f32 %v8103, 1.0
      %v8107 = vadd.f32 %v8105, 1.0
      %v8108 = vrcp.pop %v8106
      %v8109 = vmul.f32 1.0, %v8108
      %v8110 = vrcp.pop %v8107
      %v8111 = vmul.f32 1.0, %v8110
      %v8112 = vtanh.pop %v8053
      %v8113 = vtanh.pop %v8055
      %v8114 = vxor.u32 %v8094, 2147483648
      %v8115 = vxor.u32 %v8096, 2147483648
      %v8116 = vmul.f32 %v8114, 1.442695
      %v8117 = vpow.pop %v8116
      %v8118 = vmul.f32 %v8115, 1.442695
      %v8119 = vpow.pop %v8118
      %v8120 = vadd.f32 %v8117, 1.0
      %v8121 = vadd.f32 %v8119, 1.0
      %v8122 = vrcp.pop %v8120
      %v8123 = vmul.f32 1.0, %v8122
      %v8124 = vrcp.pop %v8121
      %v8125 = vmul.f32 1.0, %v8124
      %v8126 = vmul.f32 %v8109, %v8112
      %v8127 = vmul.f32 %v8111, %v8113
      %v8128 = vtanh.pop %v8126
      %v8129 = vtanh.pop %v8127
      %v8130 = vmul.f32 %v8123, %v8128
      %v8131 = vmul.f32 %v8125, %v8129
      %v8132 = vpack.c.bf16 %v8130, %v8130
      %v8133 = vpack.c.bf16 %v8131, %v8131
      %v8134 = vld [vmem:[#allocation14] sm:$0xff]
      %v8135 = vld [vmem:[#allocation14 + $0x8] sm:$0xff]
      %v8136 = vld [vmem:[#allocation14 + $0x10] sm:$0xff]
      %v8137 = vld [vmem:[#allocation14 + $0x18] sm:$0xff]
      %v8138 = vld [vmem:[#allocation14 + $0x20] sm:$0xff]
      %v8139 = vld [vmem:[#allocation14 + $0x28] sm:$0xff]
      %v8140 = vld [vmem:[#allocation14 + $0x30] sm:$0xff]
      %v8141 = vld [vmem:[#allocation14 + $0x38] sm:$0xff]
      %v8142 = vld [vmem:[#allocation14 + $0x40] sm:$0xff]
      %v8143 = vld [vmem:[#allocation14 + $0x48] sm:$0xff]
      %v8144 = vld [vmem:[#allocation14 + $0x50] sm:$0xff]
      %v8145 = vld [vmem:[#allocation14 + $0x58] sm:$0xff]
      %v8146 = vld [vmem:[#allocation14 + $0x60] sm:$0xff]
      %v8147 = vld [vmem:[#allocation14 + $0x68] sm:$0xff]
      %v8148 = vld [vmem:[#allocation14 + $0x70] sm:$0xff]
      %v8149 = vld [vmem:[#allocation14 + $0x78] sm:$0xff]
      %v8150 = vld [vmem:[#allocation14 + $0x80] sm:$0xff]
      %v8151 = vld [vmem:[#allocation14 + $0x88] sm:$0xff]
      %v8152 = vld [vmem:[#allocation14 + $0x90] sm:$0xff]
      %v8153 = vld [vmem:[#allocation14 + $0x98] sm:$0xff]
      %v8154 = vld [vmem:[#allocation14 + $0xa0] sm:$0xff]
      %v8155 = vld [vmem:[#allocation14 + $0xa8] sm:$0xff]
      %v8156 = vld [vmem:[#allocation14 + $0xb0] sm:$0xff]
      %v8157 = vld [vmem:[#allocation14 + $0xb8] sm:$0xff]
      %v8158 = vld [vmem:[#allocation14 + $0xc0] sm:$0xff]
      %v8159 = vld [vmem:[#allocation14 + $0xc8] sm:$0xff]
      %v8160 = vld [vmem:[#allocation14 + $0xd0] sm:$0xff]
      %v8161 = vld [vmem:[#allocation14 + $0xd8] sm:$0xff]
      %v8162 = vld [vmem:[#allocation14 + $0xe0] sm:$0xff]
      %v8163 = vld [vmem:[#allocation14 + $0xe8] sm:$0xff]
      %v8164 = vld [vmem:[#allocation14 + $0xf0] sm:$0xff]
      %v8165 = vld [vmem:[#allocation14 + $0xf8] sm:$0xff]
      %v8166 = vld [vmem:[#allocation14 + $0x100] sm:$0xff]
      %v8167 = vld [vmem:[#allocation14 + $0x108] sm:$0xff]
      %v8168 = vld [vmem:[#allocation14 + $0x110] sm:$0xff]
      %v8169 = vld [vmem:[#allocation14 + $0x118] sm:$0xff]
      %v8170 = vld [vmem:[#allocation14 + $0x120] sm:$0xff]
      %v8171 = vld [vmem:[#allocation14 + $0x128] sm:$0xff]
      %v8172 = vld [vmem:[#allocation14 + $0x130] sm:$0xff]
      %v8173 = vld [vmem:[#allocation14 + $0x138] sm:$0xff]
      %v8174 = vld [vmem:[#allocation14 + $0x140] sm:$0xff]
      %v8175 = vld [vmem:[#allocation14 + $0x148] sm:$0xff]
      %v8176 = vld [vmem:[#allocation14 + $0x150] sm:$0xff]
      %v8177 = vld [vmem:[#allocation14 + $0x158] sm:$0xff]
      %v8178 = vld [vmem:[#allocation14 + $0x160] sm:$0xff]
      %v8179 = vld [vmem:[#allocation14 + $0x168] sm:$0xff]
      %v8180 = vld [vmem:[#allocation14 + $0x170] sm:$0xff]
      %v8181 = vld [vmem:[#allocation14 + $0x178] sm:$0xff]
      %v8182 = vld [vmem:[#allocation14 + $0x180] sm:$0xff]
      %v8183 = vld [vmem:[#allocation14 + $0x188] sm:$0xff]
      %v8184 = vld [vmem:[#allocation14 + $0x190] sm:$0xff]
      %v8185 = vld [vmem:[#allocation14 + $0x198] sm:$0xff]
      %v8186 = vld [vmem:[#allocation14 + $0x1a0] sm:$0xff]
      %v8187 = vld [vmem:[#allocation14 + $0x1a8] sm:$0xff]
      %v8188 = vld [vmem:[#allocation14 + $0x1b0] sm:$0xff]
      %v8189 = vld [vmem:[#allocation14 + $0x1b8] sm:$0xff]
      %v8190 = vld [vmem:[#allocation14 + $0x1c0] sm:$0xff]
      %v8191 = vld [vmem:[#allocation14 + $0x1c8] sm:$0xff]
      %v8192 = vld [vmem:[#allocation14 + $0x1d0] sm:$0xff]
      %v8193 = vld [vmem:[#allocation14 + $0x1d8] sm:$0xff]
      %v8194 = vld [vmem:[#allocation14 + $0x1e0] sm:$0xff]
      %v8195 = vld [vmem:[#allocation14 + $0x1e8] sm:$0xff]
      %v8196 = vld [vmem:[#allocation14 + $0x1f0] sm:$0xff]
      %v8197 = vld [vmem:[#allocation14 + $0x1f8] sm:$0xff]
      %v8198 = vld [vmem:[#allocation14 + $0x200] sm:$0xff]
      %v8199 = vld [vmem:[#allocation14 + $0x208] sm:$0xff]
      %v8200 = vld [vmem:[#allocation14 + $0x210] sm:$0xff]
      %v8201 = vld [vmem:[#allocation14 + $0x218] sm:$0xff]
      %v8202 = vld [vmem:[#allocation14 + $0x220] sm:$0xff]
      %v8203 = vld [vmem:[#allocation14 + $0x228] sm:$0xff]
      %v8204 = vld [vmem:[#allocation14 + $0x230] sm:$0xff]
      %v8205 = vld [vmem:[#allocation14 + $0x238] sm:$0xff]
      %v8206 = vld [vmem:[#allocation14 + $0x240] sm:$0xff]
      %v8207 = vld [vmem:[#allocation14 + $0x248] sm:$0xff]
      %v8208 = vld [vmem:[#allocation14 + $0x250] sm:$0xff]
      %v8209 = vld [vmem:[#allocation14 + $0x258] sm:$0xff]
      %v8210 = vld [vmem:[#allocation14 + $0x260] sm:$0xff]
      %v8211 = vld [vmem:[#allocation14 + $0x268] sm:$0xff]
      %v8212 = vld [vmem:[#allocation14 + $0x270] sm:$0xff]
      %v8213 = vld [vmem:[#allocation14 + $0x278] sm:$0xff]
      %v8214 = vld [vmem:[#allocation14 + $0x280] sm:$0xff]
      %v8215 = vld [vmem:[#allocation14 + $0x288] sm:$0xff]
      %v8216 = vld [vmem:[#allocation14 + $0x290] sm:$0xff]
      %v8217 = vld [vmem:[#allocation14 + $0x298] sm:$0xff]
      %v8218 = vld [vmem:[#allocation14 + $0x2a0] sm:$0xff]
      %v8219 = vld [vmem:[#allocation14 + $0x2a8] sm:$0xff]
      %v8220 = vld [vmem:[#allocation14 + $0x2b0] sm:$0xff]
      %v8221 = vld [vmem:[#allocation14 + $0x2b8] sm:$0xff]
      %v8222 = vld [vmem:[#allocation14 + $0x2c0] sm:$0xff]
      %v8223 = vld [vmem:[#allocation14 + $0x2c8] sm:$0xff]
      %v8224 = vld [vmem:[#allocation14 + $0x2d0] sm:$0xff]
      %v8225 = vld [vmem:[#allocation14 + $0x2d8] sm:$0xff]
      %v8226 = vld [vmem:[#allocation14 + $0x2e0] sm:$0xff]
      %v8227 = vld [vmem:[#allocation14 + $0x2e8] sm:$0xff]
      %v8228 = vld [vmem:[#allocation14 + $0x2f0] sm:$0xff]
      %v8229 = vld [vmem:[#allocation14 + $0x2f8] sm:$0xff]
      %v8230 = vld [vmem:[#allocation14 + $0x300] sm:$0xff]
      %v8231 = vld [vmem:[#allocation14 + $0x308] sm:$0xff]
      %v8232 = vld [vmem:[#allocation14 + $0x310] sm:$0xff]
      %v8233 = vld [vmem:[#allocation14 + $0x318] sm:$0xff]
      %v8234 = vld [vmem:[#allocation14 + $0x320] sm:$0xff]
      %v8235 = vld [vmem:[#allocation14 + $0x328] sm:$0xff]
      %v8236 = vld [vmem:[#allocation14 + $0x330] sm:$0xff]
      %v8237 = vld [vmem:[#allocation14 + $0x338] sm:$0xff]
      %v8238 = vld [vmem:[#allocation14 + $0x340] sm:$0xff]
      %v8239 = vld [vmem:[#allocation14 + $0x348] sm:$0xff]
      %v8240 = vld [vmem:[#allocation14 + $0x350] sm:$0xff]
      %v8241 = vld [vmem:[#allocation14 + $0x358] sm:$0xff]
      %v8242 = vld [vmem:[#allocation14 + $0x360] sm:$0xff]
      %v8243 = vld [vmem:[#allocation14 + $0x368] sm:$0xff]
      %v8244 = vld [vmem:[#allocation14 + $0x370] sm:$0xff]
      %v8245 = vld [vmem:[#allocation14 + $0x378] sm:$0xff]
      %v8246 = vld [vmem:[#allocation14 + $0x380] sm:$0xff]
      %v8247 = vld [vmem:[#allocation14 + $0x388] sm:$0xff]
      %v8248 = vld [vmem:[#allocation14 + $0x390] sm:$0xff]
      %v8249 = vld [vmem:[#allocation14 + $0x398] sm:$0xff]
      %v8250 = vld [vmem:[#allocation14 + $0x3a0] sm:$0xff]
      %v8251 = vld [vmem:[#allocation14 + $0x3a8] sm:$0xff]
      %v8252 = vld [vmem:[#allocation14 + $0x3b0] sm:$0xff]
      %v8253 = vld [vmem:[#allocation14 + $0x3b8] sm:$0xff]
      %v8254 = vld [vmem:[#allocation14 + $0x3c0] sm:$0xff]
      %v8255 = vld [vmem:[#allocation14 + $0x3c8] sm:$0xff]
      %v8256 = vld [vmem:[#allocation14 + $0x3d0] sm:$0xff]
      %v8257 = vld [vmem:[#allocation14 + $0x3d8] sm:$0xff]
      %v8258 = vld [vmem:[#allocation14 + $0x3e0] sm:$0xff]
      %v8259 = vld [vmem:[#allocation14 + $0x3e8] sm:$0xff]
      %v8260 = vld [vmem:[#allocation14 + $0x3f0] sm:$0xff]
      %v8261 = vld [vmem:[#allocation14 + $0x3f8] sm:$0xff]
      %v8262 = vld [vmem:[#allocation14 + $0x400] sm:$0xff]
      %v8263 = vld [vmem:[#allocation14 + $0x408] sm:$0xff]
      %v8264 = vld [vmem:[#allocation14 + $0x410] sm:$0xff]
      %v8265 = vld [vmem:[#allocation14 + $0x418] sm:$0xff]
      %v8266 = vld [vmem:[#allocation14 + $0x420] sm:$0xff]
      %v8267 = vld [vmem:[#allocation14 + $0x428] sm:$0xff]
      %v8268 = vld [vmem:[#allocation14 + $0x430] sm:$0xff]
      %v8269 = vld [vmem:[#allocation14 + $0x438] sm:$0xff]
      %v8270 = vld [vmem:[#allocation14 + $0x440] sm:$0xff]
      %v8271 = vld [vmem:[#allocation14 + $0x448] sm:$0xff]
      %v8272 = vld [vmem:[#allocation14 + $0x450] sm:$0xff]
      %v8273 = vld [vmem:[#allocation14 + $0x458] sm:$0xff]
      %v8274 = vld [vmem:[#allocation14 + $0x460] sm:$0xff]
      %v8275 = vld [vmem:[#allocation14 + $0x468] sm:$0xff]
      %v8276 = vld [vmem:[#allocation14 + $0x470] sm:$0xff]
      %v8277 = vld [vmem:[#allocation14 + $0x478] sm:$0xff]
      %v8278 = vld [vmem:[#allocation14 + $0x480] sm:$0xff]
      %v8279 = vld [vmem:[#allocation14 + $0x488] sm:$0xff]
      %v8280 = vld [vmem:[#allocation14 + $0x490] sm:$0xff]
      %v8281 = vld [vmem:[#allocation14 + $0x498] sm:$0xff]
      %v8282 = vld [vmem:[#allocation14 + $0x4a0] sm:$0xff]
      %v8283 = vld [vmem:[#allocation14 + $0x4a8] sm:$0xff]
      %v8284 = vld [vmem:[#allocation14 + $0x4b0] sm:$0xff]
      %v8285 = vld [vmem:[#allocation14 + $0x4b8] sm:$0xff]
      %v8286 = vld [vmem:[#allocation14 + $0x4c0] sm:$0xff]
      %v8287 = vld [vmem:[#allocation14 + $0x4c8] sm:$0xff]
      %v8288 = vld [vmem:[#allocation14 + $0x4d0] sm:$0xff]
      %v8289 = vld [vmem:[#allocation14 + $0x4d8] sm:$0xff]
      %v8290 = vld [vmem:[#allocation14 + $0x4e0] sm:$0xff]
      %v8291 = vld [vmem:[#allocation14 + $0x4e8] sm:$0xff]
      %v8292 = vld [vmem:[#allocation14 + $0x4f0] sm:$0xff]
      %v8293 = vld [vmem:[#allocation14 + $0x4f8] sm:$0xff]
      %v8294 = vld [vmem:[#allocation14 + $0x500] sm:$0xff]
      %v8295 = vld [vmem:[#allocation14 + $0x508] sm:$0xff]
      %v8296 = vld [vmem:[#allocation14 + $0x510] sm:$0xff]
      %v8297 = vld [vmem:[#allocation14 + $0x518] sm:$0xff]
      %v8298 = vld [vmem:[#allocation14 + $0x520] sm:$0xff]
      %v8299 = vld [vmem:[#allocation14 + $0x528] sm:$0xff]
      %v8300 = vld [vmem:[#allocation14 + $0x530] sm:$0xff]
      %v8301 = vld [vmem:[#allocation14 + $0x538] sm:$0xff]
      %v8302 = vld [vmem:[#allocation14 + $0x540] sm:$0xff]
      %v8303 = vld [vmem:[#allocation14 + $0x548] sm:$0xff]
      %v8304 = vld [vmem:[#allocation14 + $0x550] sm:$0xff]
      %v8305 = vld [vmem:[#allocation14 + $0x558] sm:$0xff]
      %v8306 = vld [vmem:[#allocation14 + $0x560] sm:$0xff]
      %v8307 = vld [vmem:[#allocation14 + $0x568] sm:$0xff]
      %v8308 = vld [vmem:[#allocation14 + $0x570] sm:$0xff]
      %v8309 = vld [vmem:[#allocation14 + $0x578] sm:$0xff]
      %v8310 = vld [vmem:[#allocation14 + $0x580] sm:$0xff]
      %v8311 = vld [vmem:[#allocation14 + $0x588] sm:$0xff]
      %v8312 = vld [vmem:[#allocation14 + $0x590] sm:$0xff]
      %v8313 = vld [vmem:[#allocation14 + $0x598] sm:$0xff]
      %v8314 = vld [vmem:[#allocation14 + $0x5a0] sm:$0xff]
      %v8315 = vld [vmem:[#allocation14 + $0x5a8] sm:$0xff]
      %v8316 = vld [vmem:[#allocation14 + $0x5b0] sm:$0xff]
      %v8317 = vld [vmem:[#allocation14 + $0x5b8] sm:$0xff]
      %v8318 = vld [vmem:[#allocation14 + $0x5c0] sm:$0xff]
      %v8319 = vld [vmem:[#allocation14 + $0x5c8] sm:$0xff]
      %v8320 = vld [vmem:[#allocation14 + $0x5d0] sm:$0xff]
      %v8321 = vld [vmem:[#allocation14 + $0x5d8] sm:$0xff]
      %v8322 = vld [vmem:[#allocation14 + $0x5e0] sm:$0xff]
      %v8323 = vld [vmem:[#allocation14 + $0x5e8] sm:$0xff]
      %v8324 = vld [vmem:[#allocation14 + $0x5f0] sm:$0xff]
      %v8325 = vld [vmem:[#allocation14 + $0x5f8] sm:$0xff]
      %v8326 = vld [vmem:[#allocation14 + $0x600] sm:$0xff]
      %v8327 = vld [vmem:[#allocation14 + $0x608] sm:$0xff]
      %v8328 = vld [vmem:[#allocation14 + $0x610] sm:$0xff]
      %v8329 = vld [vmem:[#allocation14 + $0x618] sm:$0xff]
      %v8330 = vld [vmem:[#allocation14 + $0x620] sm:$0xff]
      %v8331 = vld [vmem:[#allocation14 + $0x628] sm:$0xff]
      %v8332 = vld [vmem:[#allocation14 + $0x630] sm:$0xff]
      %v8333 = vld [vmem:[#allocation14 + $0x638] sm:$0xff]
      %v8334 = vld [vmem:[#allocation14 + $0x640] sm:$0xff]
      %v8335 = vld [vmem:[#allocation14 + $0x648] sm:$0xff]
      %v8336 = vld [vmem:[#allocation14 + $0x650] sm:$0xff]
      %v8337 = vld [vmem:[#allocation14 + $0x658] sm:$0xff]
      %v8338 = vld [vmem:[#allocation14 + $0x660] sm:$0xff]
      %v8339 = vld [vmem:[#allocation14 + $0x668] sm:$0xff]
      %v8340 = vld [vmem:[#allocation14 + $0x670] sm:$0xff]
      %v8341 = vld [vmem:[#allocation14 + $0x678] sm:$0xff]
      %v8342 = vld [vmem:[#allocation14 + $0x680] sm:$0xff]
      %v8343 = vld [vmem:[#allocation14 + $0x688] sm:$0xff]
      %v8344 = vld [vmem:[#allocation14 + $0x690] sm:$0xff]
      %v8345 = vld [vmem:[#allocation14 + $0x698] sm:$0xff]
      %v8346 = vld [vmem:[#allocation14 + $0x6a0] sm:$0xff]
      %v8347 = vld [vmem:[#allocation14 + $0x6a8] sm:$0xff]
      %v8348 = vld [vmem:[#allocation14 + $0x6b0] sm:$0xff]
      %v8349 = vld [vmem:[#allocation14 + $0x6b8] sm:$0xff]
      %v8350 = vld [vmem:[#allocation14 + $0x6c0] sm:$0xff]
      %v8351 = vld [vmem:[#allocation14 + $0x6c8] sm:$0xff]
      %v8352 = vld [vmem:[#allocation14 + $0x6d0] sm:$0xff]
      %v8353 = vld [vmem:[#allocation14 + $0x6d8] sm:$0xff]
      %v8354 = vld [vmem:[#allocation14 + $0x6e0] sm:$0xff]
      %v8355 = vld [vmem:[#allocation14 + $0x6e8] sm:$0xff]
      %v8356 = vld [vmem:[#allocation14 + $0x6f0] sm:$0xff]
      %v8357 = vld [vmem:[#allocation14 + $0x6f8] sm:$0xff]
      %v8358 = vld [vmem:[#allocation14 + $0x700] sm:$0xff]
      %v8359 = vld [vmem:[#allocation14 + $0x708] sm:$0xff]
      %v8360 = vld [vmem:[#allocation14 + $0x710] sm:$0xff]
      %v8361 = vld [vmem:[#allocation14 + $0x718] sm:$0xff]
      %v8362 = vld [vmem:[#allocation14 + $0x720] sm:$0xff]
      %v8363 = vld [vmem:[#allocation14 + $0x728] sm:$0xff]
      %v8364 = vld [vmem:[#allocation14 + $0x730] sm:$0xff]
      %v8365 = vld [vmem:[#allocation14 + $0x738] sm:$0xff]
      %v8366 = vld [vmem:[#allocation14 + $0x740] sm:$0xff]
      %v8367 = vld [vmem:[#allocation14 + $0x748] sm:$0xff]
      %v8368 = vld [vmem:[#allocation14 + $0x750] sm:$0xff]
      %v8369 = vld [vmem:[#allocation14 + $0x758] sm:$0xff]
      %v8370 = vld [vmem:[#allocation14 + $0x760] sm:$0xff]
      %v8371 = vld [vmem:[#allocation14 + $0x768] sm:$0xff]
      %v8372 = vld [vmem:[#allocation14 + $0x770] sm:$0xff]
      %v8373 = vld [vmem:[#allocation14 + $0x778] sm:$0xff]
      %v8374 = vld [vmem:[#allocation14 + $0x780] sm:$0xff]
      %v8375 = vld [vmem:[#allocation14 + $0x788] sm:$0xff]
      %v8376 = vld [vmem:[#allocation14 + $0x790] sm:$0xff]
      %v8377 = vld [vmem:[#allocation14 + $0x798] sm:$0xff]
      %v8378 = vld [vmem:[#allocation14 + $0x7a0] sm:$0xff]
      %v8379 = vld [vmem:[#allocation14 + $0x7a8] sm:$0xff]
      %v8380 = vld [vmem:[#allocation14 + $0x7b0] sm:$0xff]
      %v8381 = vld [vmem:[#allocation14 + $0x7b8] sm:$0xff]
      %v8382 = vld [vmem:[#allocation14 + $0x7c0] sm:$0xff]
      %v8383 = vld [vmem:[#allocation14 + $0x7c8] sm:$0xff]
      %v8384 = vld [vmem:[#allocation14 + $0x7d0] sm:$0xff]
      %v8385 = vld [vmem:[#allocation14 + $0x7d8] sm:$0xff]
      %v8386 = vld [vmem:[#allocation14 + $0x7e0] sm:$0xff]
      %v8387 = vld [vmem:[#allocation14 + $0x7e8] sm:$0xff]
      %v8388 = vld [vmem:[#allocation14 + $0x7f0] sm:$0xff]
      %v8389 = vld [vmem:[#allocation14 + $0x7f8] sm:$0xff]
      %v8646 = vunpack.c.l.b16 %v8134
      %v8647 = vunpack.c.h.b16 %v8134
      %v8648 = vunpack.c.l.b16 %v8135
      %v8649 = vunpack.c.h.b16 %v8135
      %v8650 = vunpack.c.l.b16 %v8136
      %v8651 = vunpack.c.h.b16 %v8136
      %v8652 = vunpack.c.l.b16 %v8137
      %v8653 = vunpack.c.h.b16 %v8137
      %v8654 = vunpack.c.l.b16 %v8138
      %v8655 = vunpack.c.h.b16 %v8138
      %v8656 = vunpack.c.l.b16 %v8139
      %v8657 = vunpack.c.h.b16 %v8139
      %v8658 = vunpack.c.l.b16 %v8140
      %v8659 = vunpack.c.h.b16 %v8140
      %v8660 = vunpack.c.l.b16 %v8141
      %v8661 = vunpack.c.h.b16 %v8141
      %v8662 = vunpack.c.l.b16 %v8142
      %v8663 = vunpack.c.h.b16 %v8142
      %v8664 = vunpack.c.l.b16 %v8143
      %v8665 = vunpack.c.h.b16 %v8143
      %v8666 = vunpack.c.l.b16 %v8144
      %v8667 = vunpack.c.h.b16 %v8144
      %v8668 = vunpack.c.l.b16 %v8145
      %v8669 = vunpack.c.h.b16 %v8145
      %v8670 = vunpack.c.l.b16 %v8146
      %v8671 = vunpack.c.h.b16 %v8146
      %v8672 = vunpack.c.l.b16 %v8147
      %v8673 = vunpack.c.h.b16 %v8147
      %v8674 = vunpack.c.l.b16 %v8148
      %v8675 = vunpack.c.h.b16 %v8148
      %v8676 = vunpack.c.l.b16 %v8149
      %v8677 = vunpack.c.h.b16 %v8149
      %v8678 = vunpack.c.l.b16 %v8150
      %v8679 = vunpack.c.h.b16 %v8150
      %v8680 = vunpack.c.l.b16 %v8151
      %v8681 = vunpack.c.h.b16 %v8151
      %v8682 = vunpack.c.l.b16 %v8152
      %v8683 = vunpack.c.h.b16 %v8152
      %v8684 = vunpack.c.l.b16 %v8153
      %v8685 = vunpack.c.h.b16 %v8153
      %v8686 = vunpack.c.l.b16 %v8154
      %v8687 = vunpack.c.h.b16 %v8154
      %v8688 = vunpack.c.l.b16 %v8155
      %v8689 = vunpack.c.h.b16 %v8155
      %v8690 = vunpack.c.l.b16 %v8156
      %v8691 = vunpack.c.h.b16 %v8156
      %v8692 = vunpack.c.l.b16 %v8157
      %v8693 = vunpack.c.h.b16 %v8157
      %v8694 = vunpack.c.l.b16 %v8158
      %v8695 = vunpack.c.h.b16 %v8158
      %v8696 = vunpack.c.l.b16 %v8159
      %v8697 = vunpack.c.h.b16 %v8159
      %v8698 = vunpack.c.l.b16 %v8160
      %v8699 = vunpack.c.h.b16 %v8160
      %v8700 = vunpack.c.l.b16 %v8161
      %v8701 = vunpack.c.h.b16 %v8161
      %v8702 = vunpack.c.l.b16 %v8162
      %v8703 = vunpack.c.h.b16 %v8162
      %v8704 = vunpack.c.l.b16 %v8163
      %v8705 = vunpack.c.h.b16 %v8163
      %v8706 = vunpack.c.l.b16 %v8164
      %v8707 = vunpack.c.h.b16 %v8164
      %v8708 = vunpack.c.l.b16 %v8165
      %v8709 = vunpack.c.h.b16 %v8165
      %v8710 = vunpack.c.l.b16 %v8166
      %v8711 = vunpack.c.h.b16 %v8166
      %v8712 = vunpack.c.l.b16 %v8167
      %v8713 = vunpack.c.h.b16 %v8167
      %v8714 = vunpack.c.l.b16 %v8168
      %v8715 = vunpack.c.h.b16 %v8168
      %v8716 = vunpack.c.l.b16 %v8169
      %v8717 = vunpack.c.h.b16 %v8169
      %v8718 = vunpack.c.l.b16 %v8170
      %v8719 = vunpack.c.h.b16 %v8170
      %v8720 = vunpack.c.l.b16 %v8171
      %v8721 = vunpack.c.h.b16 %v8171
      %v8722 = vunpack.c.l.b16 %v8172
      %v8723 = vunpack.c.h.b16 %v8172
      %v8724 = vunpack.c.l.b16 %v8173
      %v8725 = vunpack.c.h.b16 %v8173
      %v8726 = vunpack.c.l.b16 %v8174
      %v8727 = vunpack.c.h.b16 %v8174
      %v8728 = vunpack.c.l.b16 %v8175
      %v8729 = vunpack.c.h.b16 %v8175
      %v8730 = vunpack.c.l.b16 %v8176
      %v8731 = vunpack.c.h.b16 %v8176
      %v8732 = vunpack.c.l.b16 %v8177
      %v8733 = vunpack.c.h.b16 %v8177
      %v8734 = vunpack.c.l.b16 %v8178
      %v8735 = vunpack.c.h.b16 %v8178
      %v8736 = vunpack.c.l.b16 %v8179
      %v8737 = vunpack.c.h.b16 %v8179
      %v8738 = vunpack.c.l.b16 %v8180
      %v8739 = vunpack.c.h.b16 %v8180
      %v8740 = vunpack.c.l.b16 %v8181
      %v8741 = vunpack.c.h.b16 %v8181
      %v8742 = vunpack.c.l.b16 %v8182
      %v8743 = vunpack.c.h.b16 %v8182
      %v8744 = vunpack.c.l.b16 %v8183
      %v8745 = vunpack.c.h.b16 %v8183
      %v8746 = vunpack.c.l.b16 %v8184
      %v8747 = vunpack.c.h.b16 %v8184
      %v8748 = vunpack.c.l.b16 %v8185
      %v8749 = vunpack.c.h.b16 %v8185
      %v8750 = vunpack.c.l.b16 %v8186
      %v8751 = vunpack.c.h.b16 %v8186
      %v8752 = vunpack.c.l.b16 %v8187
      %v8753 = vunpack.c.h.b16 %v8187
      %v8754 = vunpack.c.l.b16 %v8188
      %v8755 = vunpack.c.h.b16 %v8188
      %v8756 = vunpack.c.l.b16 %v8189
      %v8757 = vunpack.c.h.b16 %v8189
      %v8758 = vunpack.c.l.b16 %v8190
      %v8759 = vunpack.c.h.b16 %v8190
      %v8760 = vunpack.c.l.b16 %v8191
      %v8761 = vunpack.c.h.b16 %v8191
      %v8762 = vunpack.c.l.b16 %v8192
      %v8763 = vunpack.c.h.b16 %v8192
      %v8764 = vunpack.c.l.b16 %v8193
      %v8765 = vunpack.c.h.b16 %v8193
      %v8766 = vunpack.c.l.b16 %v8194
      %v8767 = vunpack.c.h.b16 %v8194
      %v8768 = vunpack.c.l.b16 %v8195
      %v8769 = vunpack.c.h.b16 %v8195
      %v8770 = vunpack.c.l.b16 %v8196
      %v8771 = vunpack.c.h.b16 %v8196
      %v8772 = vunpack.c.l.b16 %v8197
      %v8773 = vunpack.c.h.b16 %v8197
      %v8774 = vunpack.c.l.b16 %v8198
      %v8775 = vunpack.c.h.b16 %v8198
      %v8776 = vunpack.c.l.b16 %v8199
      %v8777 = vunpack.c.h.b16 %v8199
      %v8778 = vunpack.c.l.b16 %v8200
      %v8779 = vunpack.c.h.b16 %v8200
      %v8780 = vunpack.c.l.b16 %v8201
      %v8781 = vunpack.c.h.b16 %v8201
      %v8782 = vunpack.c.l.b16 %v8202
      %v8783 = vunpack.c.h.b16 %v8202
      %v8784 = vunpack.c.l.b16 %v8203
      %v8785 = vunpack.c.h.b16 %v8203
      %v8786 = vunpack.c.l.b16 %v8204
      %v8787 = vunpack.c.h.b16 %v8204
      %v8788 = vunpack.c.l.b16 %v8205
      %v8789 = vunpack.c.h.b16 %v8205
      %v8790 = vunpack.c.l.b16 %v8206
      %v8791 = vunpack.c.h.b16 %v8206
      %v8792 = vunpack.c.l.b16 %v8207
      %v8793 = vunpack.c.h.b16 %v8207
      %v8794 = vunpack.c.l.b16 %v8208
      %v8795 = vunpack.c.h.b16 %v8208
      %v8796 = vunpack.c.l.b16 %v8209
      %v8797 = vunpack.c.h.b16 %v8209
      %v8798 = vunpack.c.l.b16 %v8210
      %v8799 = vunpack.c.h.b16 %v8210
      %v8800 = vunpack.c.l.b16 %v8211
      %v8801 = vunpack.c.h.b16 %v8211
      %v8802 = vunpack.c.l.b16 %v8212
      %v8803 = vunpack.c.h.b16 %v8212
      %v8804 = vunpack.c.l.b16 %v8213
      %v8805 = vunpack.c.h.b16 %v8213
      %v8806 = vunpack.c.l.b16 %v8214
      %v8807 = vunpack.c.h.b16 %v8214
      %v8808 = vunpack.c.l.b16 %v8215
      %v8809 = vunpack.c.h.b16 %v8215
      %v8810 = vunpack.c.l.b16 %v8216
      %v8811 = vunpack.c.h.b16 %v8216
      %v8812 = vunpack.c.l.b16 %v8217
      %v8813 = vunpack.c.h.b16 %v8217
      %v8814 = vunpack.c.l.b16 %v8218
      %v8815 = vunpack.c.h.b16 %v8218
      %v8816 = vunpack.c.l.b16 %v8219
      %v8817 = vunpack.c.h.b16 %v8219
      %v8818 = vunpack.c.l.b16 %v8220
      %v8819 = vunpack.c.h.b16 %v8220
      %v8820 = vunpack.c.l.b16 %v8221
      %v8821 = vunpack.c.h.b16 %v8221
      %v8822 = vunpack.c.l.b16 %v8222
      %v8823 = vunpack.c.h.b16 %v8222
      %v8824 = vunpack.c.l.b16 %v8223
      %v8825 = vunpack.c.h.b16 %v8223
      %v8826 = vunpack.c.l.b16 %v8224
      %v8827 = vunpack.c.h.b16 %v8224
      %v8828 = vunpack.c.l.b16 %v8225
      %v8829 = vunpack.c.h.b16 %v8225
      %v8830 = vunpack.c.l.b16 %v8226
      %v8831 = vunpack.c.h.b16 %v8226
      %v8832 = vunpack.c.l.b16 %v8227
      %v8833 = vunpack.c.h.b16 %v8227
      %v8834 = vunpack.c.l.b16 %v8228
      %v8835 = vunpack.c.h.b16 %v8228
      %v8836 = vunpack.c.l.b16 %v8229
      %v8837 = vunpack.c.h.b16 %v8229
      %v8838 = vunpack.c.l.b16 %v8230
      %v8839 = vunpack.c.h.b16 %v8230
      %v8840 = vunpack.c.l.b16 %v8231
      %v8841 = vunpack.c.h.b16 %v8231
      %v8842 = vunpack.c.l.b16 %v8232
      %v8843 = vunpack.c.h.b16 %v8232
      %v8844 = vunpack.c.l.b16 %v8233
      %v8845 = vunpack.c.h.b16 %v8233
      %v8846 = vunpack.c.l.b16 %v8234
      %v8847 = vunpack.c.h.b16 %v8234
      %v8848 = vunpack.c.l.b16 %v8235
      %v8849 = vunpack.c.h.b16 %v8235
      %v8850 = vunpack.c.l.b16 %v8236
      %v8851 = vunpack.c.h.b16 %v8236
      %v8852 = vunpack.c.l.b16 %v8237
      %v8853 = vunpack.c.h.b16 %v8237
      %v8854 = vunpack.c.l.b16 %v8238
      %v8855 = vunpack.c.h.b16 %v8238
      %v8856 = vunpack.c.l.b16 %v8239
      %v8857 = vunpack.c.h.b16 %v8239
      %v8858 = vunpack.c.l.b16 %v8240
      %v8859 = vunpack.c.h.b16 %v8240
      %v8860 = vunpack.c.l.b16 %v8241
      %v8861 = vunpack.c.h.b16 %v8241
      %v8862 = vunpack.c.l.b16 %v8242
      %v8863 = vunpack.c.h.b16 %v8242
      %v8864 = vunpack.c.l.b16 %v8243
      %v8865 = vunpack.c.h.b16 %v8243
      %v8866 = vunpack.c.l.b16 %v8244
      %v8867 = vunpack.c.h.b16 %v8244
      %v8868 = vunpack.c.l.b16 %v8245
      %v8869 = vunpack.c.h.b16 %v8245
      %v8870 = vunpack.c.l.b16 %v8246
      %v8871 = vunpack.c.h.b16 %v8246
      %v8872 = vunpack.c.l.b16 %v8247
      %v8873 = vunpack.c.h.b16 %v8247
      %v8874 = vunpack.c.l.b16 %v8248
      %v8875 = vunpack.c.h.b16 %v8248
      %v8876 = vunpack.c.l.b16 %v8249
      %v8877 = vunpack.c.h.b16 %v8249
      %v8878 = vunpack.c.l.b16 %v8250
      %v8879 = vunpack.c.h.b16 %v8250
      %v8880 = vunpack.c.l.b16 %v8251
      %v8881 = vunpack.c.h.b16 %v8251
      %v8882 = vunpack.c.l.b16 %v8252
      %v8883 = vunpack.c.h.b16 %v8252
      %v8884 = vunpack.c.l.b16 %v8253
      %v8885 = vunpack.c.h.b16 %v8253
      %v8886 = vunpack.c.l.b16 %v8254
      %v8887 = vunpack.c.h.b16 %v8254
      %v8888 = vunpack.c.l.b16 %v8255
      %v8889 = vunpack.c.h.b16 %v8255
      %v8890 = vunpack.c.l.b16 %v8256
      %v8891 = vunpack.c.h.b16 %v8256
      %v8892 = vunpack.c.l.b16 %v8257
      %v8893 = vunpack.c.h.b16 %v8257
      %v8894 = vunpack.c.l.b16 %v8258
      %v8895 = vunpack.c.h.b16 %v8258
      %v8896 = vunpack.c.l.b16 %v8259
      %v8897 = vunpack.c.h.b16 %v8259
      %v8898 = vunpack.c.l.b16 %v8260
      %v8899 = vunpack.c.h.b16 %v8260
      %v8900 = vunpack.c.l.b16 %v8261
      %v8901 = vunpack.c.h.b16 %v8261
      %v8902 = vunpack.c.l.b16 %v8262
      %v8903 = vunpack.c.h.b16 %v8262
      %v8904 = vunpack.c.l.b16 %v8263
      %v8905 = vunpack.c.h.b16 %v8263
      %v8906 = vunpack.c.l.b16 %v8264
      %v8907 = vunpack.c.h.b16 %v8264
      %v8908 = vunpack.c.l.b16 %v8265
      %v8909 = vunpack.c.h.b16 %v8265
      %v8910 = vunpack.c.l.b16 %v8266
      %v8911 = vunpack.c.h.b16 %v8266
      %v8912 = vunpack.c.l.b16 %v8267
      %v8913 = vunpack.c.h.b16 %v8267
      %v8914 = vunpack.c.l.b16 %v8268
      %v8915 = vunpack.c.h.b16 %v8268
      %v8916 = vunpack.c.l.b16 %v8269
      %v8917 = vunpack.c.h.b16 %v8269
      %v8918 = vunpack.c.l.b16 %v8270
      %v8919 = vunpack.c.h.b16 %v8270
      %v8920 = vunpack.c.l.b16 %v8271
      %v8921 = vunpack.c.h.b16 %v8271
      %v8922 = vunpack.c.l.b16 %v8272
      %v8923 = vunpack.c.h.b16 %v8272
      %v8924 = vunpack.c.l.b16 %v8273
      %v8925 = vunpack.c.h.b16 %v8273
      %v8926 = vunpack.c.l.b16 %v8274
      %v8927 = vunpack.c.h.b16 %v8274
      %v8928 = vunpack.c.l.b16 %v8275
      %v8929 = vunpack.c.h.b16 %v8275
      %v8930 = vunpack.c.l.b16 %v8276
      %v8931 = vunpack.c.h.b16 %v8276
      %v8932 = vunpack.c.l.b16 %v8277
      %v8933 = vunpack.c.h.b16 %v8277
      %v8934 = vunpack.c.l.b16 %v8278
      %v8935 = vunpack.c.h.b16 %v8278
      %v8936 = vunpack.c.l.b16 %v8279
      %v8937 = vunpack.c.h.b16 %v8279
      %v8938 = vunpack.c.l.b16 %v8280
      %v8939 = vunpack.c.h.b16 %v8280
      %v8940 = vunpack.c.l.b16 %v8281
      %v8941 = vunpack.c.h.b16 %v8281
      %v8942 = vunpack.c.l.b16 %v8282
      %v8943 = vunpack.c.h.b16 %v8282
      %v8944 = vunpack.c.l.b16 %v8283
      %v8945 = vunpack.c.h.b16 %v8283
      %v8946 = vunpack.c.l.b16 %v8284
      %v8947 = vunpack.c.h.b16 %v8284
      %v8948 = vunpack.c.l.b16 %v8285
      %v8949 = vunpack.c.h.b16 %v8285
      %v8950 = vunpack.c.l.b16 %v8286
      %v8951 = vunpack.c.h.b16 %v8286
      %v8952 = vunpack.c.l.b16 %v8287
      %v8953 = vunpack.c.h.b16 %v8287
      %v8954 = vunpack.c.l.b16 %v8288
      %v8955 = vunpack.c.h.b16 %v8288
      %v8956 = vunpack.c.l.b16 %v8289
      %v8957 = vunpack.c.h.b16 %v8289
      %v8958 = vunpack.c.l.b16 %v8290
      %v8959 = vunpack.c.h.b16 %v8290
      %v8960 = vunpack.c.l.b16 %v8291
      %v8961 = vunpack.c.h.b16 %v8291
      %v8962 = vunpack.c.l.b16 %v8292
      %v8963 = vunpack.c.h.b16 %v8292
      %v8964 = vunpack.c.l.b16 %v8293
      %v8965 = vunpack.c.h.b16 %v8293
      %v8966 = vunpack.c.l.b16 %v8294
      %v8967 = vunpack.c.h.b16 %v8294
      %v8968 = vunpack.c.l.b16 %v8295
      %v8969 = vunpack.c.h.b16 %v8295
      %v8970 = vunpack.c.l.b16 %v8296
      %v8971 = vunpack.c.h.b16 %v8296
      %v8972 = vunpack.c.l.b16 %v8297
      %v8973 = vunpack.c.h.b16 %v8297
      %v8974 = vunpack.c.l.b16 %v8298
      %v8975 = vunpack.c.h.b16 %v8298
      %v8976 = vunpack.c.l.b16 %v8299
      %v8977 = vunpack.c.h.b16 %v8299
      %v8978 = vunpack.c.l.b16 %v8300
      %v8979 = vunpack.c.h.b16 %v8300
      %v8980 = vunpack.c.l.b16 %v8301
      %v8981 = vunpack.c.h.b16 %v8301
      %v8982 = vunpack.c.l.b16 %v8302
      %v8983 = vunpack.c.h.b16 %v8302
      %v8984 = vunpack.c.l.b16 %v8303
      %v8985 = vunpack.c.h.b16 %v8303
      %v8986 = vunpack.c.l.b16 %v8304
      %v8987 = vunpack.c.h.b16 %v8304
      %v8988 = vunpack.c.l.b16 %v8305
      %v8989 = vunpack.c.h.b16 %v8305
      %v8990 = vunpack.c.l.b16 %v8306
      %v8991 = vunpack.c.h.b16 %v8306
      %v8992 = vunpack.c.l.b16 %v8307
      %v8993 = vunpack.c.h.b16 %v8307
      %v8994 = vunpack.c.l.b16 %v8308
      %v8995 = vunpack.c.h.b16 %v8308
      %v8996 = vunpack.c.l.b16 %v8309
      %v8997 = vunpack.c.h.b16 %v8309
      %v8998 = vunpack.c.l.b16 %v8310
      %v8999 = vunpack.c.h.b16 %v8310
      %v9000 = vunpack.c.l.b16 %v8311
      %v9001 = vunpack.c.h.b16 %v8311
      %v9002 = vunpack.c.l.b16 %v8312
      %v9003 = vunpack.c.h.b16 %v8312
      %v9004 = vunpack.c.l.b16 %v8313
      %v9005 = vunpack.c.h.b16 %v8313
      %v9006 = vunpack.c.l.b16 %v8314
      %v9007 = vunpack.c.h.b16 %v8314
      %v9008 = vunpack.c.l.b16 %v8315
      %v9009 = vunpack.c.h.b16 %v8315
      %v9010 = vunpack.c.l.b16 %v8316
      %v9011 = vunpack.c.h.b16 %v8316
      %v9012 = vunpack.c.l.b16 %v8317
      %v9013 = vunpack.c.h.b16 %v8317
      %v9014 = vunpack.c.l.b16 %v8318
      %v9015 = vunpack.c.h.b16 %v8318
      %v9016 = vunpack.c.l.b16 %v8319
      %v9017 = vunpack.c.h.b16 %v8319
      %v9018 = vunpack.c.l.b16 %v8320
      %v9019 = vunpack.c.h.b16 %v8320
      %v9020 = vunpack.c.l.b16 %v8321
      %v9021 = vunpack.c.h.b16 %v8321
      %v9022 = vunpack.c.l.b16 %v8322
      %v9023 = vunpack.c.h.b16 %v8322
      %v9024 = vunpack.c.l.b16 %v8323
      %v9025 = vunpack.c.h.b16 %v8323
      %v9026 = vunpack.c.l.b16 %v8324
      %v9027 = vunpack.c.h.b16 %v8324
      %v9028 = vunpack.c.l.b16 %v8325
      %v9029 = vunpack.c.h.b16 %v8325
      %v9030 = vunpack.c.l.b16 %v8326
      %v9031 = vunpack.c.h.b16 %v8326
      %v9032 = vunpack.c.l.b16 %v8327
      %v9033 = vunpack.c.h.b16 %v8327
      %v9034 = vunpack.c.l.b16 %v8328
      %v9035 = vunpack.c.h.b16 %v8328
      %v9036 = vunpack.c.l.b16 %v8329
      %v9037 = vunpack.c.h.b16 %v8329
      %v9038 = vunpack.c.l.b16 %v8330
      %v9039 = vunpack.c.h.b16 %v8330
      %v9040 = vunpack.c.l.b16 %v8331
      %v9041 = vunpack.c.h.b16 %v8331
      %v9042 = vunpack.c.l.b16 %v8332
      %v9043 = vunpack.c.h.b16 %v8332
      %v9044 = vunpack.c.l.b16 %v8333
      %v9045 = vunpack.c.h.b16 %v8333
      %v9046 = vunpack.c.l.b16 %v8334
      %v9047 = vunpack.c.h.b16 %v8334
      %v9048 = vunpack.c.l.b16 %v8335
      %v9049 = vunpack.c.h.b16 %v8335
      %v9050 = vunpack.c.l.b16 %v8336
      %v9051 = vunpack.c.h.b16 %v8336
      %v9052 = vunpack.c.l.b16 %v8337
      %v9053 = vunpack.c.h.b16 %v8337
      %v9054 = vunpack.c.l.b16 %v8338
      %v9055 = vunpack.c.h.b16 %v8338
      %v9056 = vunpack.c.l.b16 %v8339
      %v9057 = vunpack.c.h.b16 %v8339
      %v9058 = vunpack.c.l.b16 %v8340
      %v9059 = vunpack.c.h.b16 %v8340
      %v9060 = vunpack.c.l.b16 %v8341
      %v9061 = vunpack.c.h.b16 %v8341
      %v9062 = vunpack.c.l.b16 %v8342
      %v9063 = vunpack.c.h.b16 %v8342
      %v9064 = vunpack.c.l.b16 %v8343
      %v9065 = vunpack.c.h.b16 %v8343
      %v9066 = vunpack.c.l.b16 %v8344
      %v9067 = vunpack.c.h.b16 %v8344
      %v9068 = vunpack.c.l.b16 %v8345
      %v9069 = vunpack.c.h.b16 %v8345
      %v9070 = vunpack.c.l.b16 %v8346
      %v9071 = vunpack.c.h.b16 %v8346
      %v9072 = vunpack.c.l.b16 %v8347
      %v9073 = vunpack.c.h.b16 %v8347
      %v9074 = vunpack.c.l.b16 %v8348
      %v9075 = vunpack.c.h.b16 %v8348
      %v9076 = vunpack.c.l.b16 %v8349
      %v9077 = vunpack.c.h.b16 %v8349
      %v9078 = vunpack.c.l.b16 %v8350
      %v9079 = vunpack.c.h.b16 %v8350
      %v9080 = vunpack.c.l.b16 %v8351
      %v9081 = vunpack.c.h.b16 %v8351
      %v9082 = vunpack.c.l.b16 %v8352
      %v9083 = vunpack.c.h.b16 %v8352
      %v9084 = vunpack.c.l.b16 %v8353
      %v9085 = vunpack.c.h.b16 %v8353
      %v9086 = vunpack.c.l.b16 %v8354
      %v9087 = vunpack.c.h.b16 %v8354
      %v9088 = vunpack.c.l.b16 %v8355
      %v9089 = vunpack.c.h.b16 %v8355
      %v9090 = vunpack.c.l.b16 %v8356
      %v9091 = vunpack.c.h.b16 %v8356
      %v9092 = vunpack.c.l.b16 %v8357
      %v9093 = vunpack.c.h.b16 %v8357
      %v9094 = vunpack.c.l.b16 %v8358
      %v9095 = vunpack.c.h.b16 %v8358
      %v9096 = vunpack.c.l.b16 %v8359
      %v9097 = vunpack.c.h.b16 %v8359
      %v9098 = vunpack.c.l.b16 %v8360
      %v9099 = vunpack.c.h.b16 %v8360
      %v9100 = vunpack.c.l.b16 %v8361
      %v9101 = vunpack.c.h.b16 %v8361
      %v9102 = vunpack.c.l.b16 %v8362
      %v9103 = vunpack.c.h.b16 %v8362
      %v9104 = vunpack.c.l.b16 %v8363
      %v9105 = vunpack.c.h.b16 %v8363
      %v9106 = vunpack.c.l.b16 %v8364
      %v9107 = vunpack.c.h.b16 %v8364
      %v9108 = vunpack.c.l.b16 %v8365
      %v9109 = vunpack.c.h.b16 %v8365
      %v9110 = vunpack.c.l.b16 %v8366
      %v9111 = vunpack.c.h.b16 %v8366
      %v9112 = vunpack.c.l.b16 %v8367
      %v9113 = vunpack.c.h.b16 %v8367
      %v9114 = vunpack.c.l.b16 %v8368
      %v9115 = vunpack.c.h.b16 %v8368
      %v9116 = vunpack.c.l.b16 %v8369
      %v9117 = vunpack.c.h.b16 %v8369
      %v9118 = vunpack.c.l.b16 %v8370
      %v9119 = vunpack.c.h.b16 %v8370
      %v9120 = vunpack.c.l.b16 %v8371
      %v9121 = vunpack.c.h.b16 %v8371
      %v9122 = vunpack.c.l.b16 %v8372
      %v9123 = vunpack.c.h.b16 %v8372
      %v9124 = vunpack.c.l.b16 %v8373
      %v9125 = vunpack.c.h.b16 %v8373
      %v9126 = vunpack.c.l.b16 %v8374
      %v9127 = vunpack.c.h.b16 %v8374
      %v9128 = vunpack.c.l.b16 %v8375
      %v9129 = vunpack.c.h.b16 %v8375
      %v9130 = vunpack.c.l.b16 %v8376
      %v9131 = vunpack.c.h.b16 %v8376
      %v9132 = vunpack.c.l.b16 %v8377
      %v9133 = vunpack.c.h.b16 %v8377
      %v9134 = vunpack.c.l.b16 %v8378
      %v9135 = vunpack.c.h.b16 %v8378
      %v9136 = vunpack.c.l.b16 %v8379
      %v9137 = vunpack.c.h.b16 %v8379
      %v9138 = vunpack.c.l.b16 %v8380
      %v9139 = vunpack.c.h.b16 %v8380
      %v9140 = vunpack.c.l.b16 %v8381
      %v9141 = vunpack.c.h.b16 %v8381
      %v9142 = vunpack.c.l.b16 %v8382
      %v9143 = vunpack.c.h.b16 %v8382
      %v9144 = vunpack.c.l.b16 %v8383
      %v9145 = vunpack.c.h.b16 %v8383
      %v9146 = vunpack.c.l.b16 %v8384
      %v9147 = vunpack.c.h.b16 %v8384
      %v9148 = vunpack.c.l.b16 %v8385
      %v9149 = vunpack.c.h.b16 %v8385
      %v9150 = vunpack.c.l.b16 %v8386
      %v9151 = vunpack.c.h.b16 %v8386
      %v9152 = vunpack.c.l.b16 %v8387
      %v9153 = vunpack.c.h.b16 %v8387
      %v9154 = vunpack.c.l.b16 %v8388
      %v9155 = vunpack.c.h.b16 %v8388
      %v9156 = vunpack.c.l.b16 %v8389
      %v9157 = vunpack.c.h.b16 %v8389
      %v9158 = vpack.c.b16 %v8654, %v8646
      %v9159 = vpack.c.b16 %v8655, %v8647
      %v9160 = vpack.c.b16 %v8656, %v8648
      %v9161 = vpack.c.b16 %v8657, %v8649
      %v9162 = vpack.c.b16 %v8658, %v8650
      %v9163 = vpack.c.b16 %v8659, %v8651
      %v9164 = vpack.c.b16 %v8660, %v8652
      %v9165 = vpack.c.b16 %v8661, %v8653
      %v9166 = vpack.c.b16 %v8670, %v8662
      %v9167 = vpack.c.b16 %v8671, %v8663
      %v9168 = vpack.c.b16 %v8672, %v8664
      %v9169 = vpack.c.b16 %v8673, %v8665
      %v9170 = vpack.c.b16 %v8674, %v8666
      %v9171 = vpack.c.b16 %v8675, %v8667
      %v9172 = vpack.c.b16 %v8676, %v8668
      %v9173 = vpack.c.b16 %v8677, %v8669
      %v9174 = vpack.c.b16 %v8686, %v8678
      %v9175 = vpack.c.b16 %v8687, %v8679
      %v9176 = vpack.c.b16 %v8688, %v8680
      %v9177 = vpack.c.b16 %v8689, %v8681
      %v9178 = vpack.c.b16 %v8690, %v8682
      %v9179 = vpack.c.b16 %v8691, %v8683
      %v9180 = vpack.c.b16 %v8692, %v8684
      %v9181 = vpack.c.b16 %v8693, %v8685
      %v9182 = vpack.c.b16 %v8702, %v8694
      %v9183 = vpack.c.b16 %v8703, %v8695
      %v9184 = vpack.c.b16 %v8704, %v8696
      %v9185 = vpack.c.b16 %v8705, %v8697
      %v9186 = vpack.c.b16 %v8706, %v8698
      %v9187 = vpack.c.b16 %v8707, %v8699
      %v9188 = vpack.c.b16 %v8708, %v8700
      %v9189 = vpack.c.b16 %v8709, %v8701
      %v9190 = vpack.c.b16 %v8718, %v8710
      %v9191 = vpack.c.b16 %v8719, %v8711
      %v9192 = vpack.c.b16 %v8720, %v8712
      %v9193 = vpack.c.b16 %v8721, %v8713
      %v9194 = vpack.c.b16 %v8722, %v8714
      %v9195 = vpack.c.b16 %v8723, %v8715
      %v9196 = vpack.c.b16 %v8724, %v8716
      %v9197 = vpack.c.b16 %v8725, %v8717
      %v9198 = vpack.c.b16 %v8734, %v8726
      %v9199 = vpack.c.b16 %v8735, %v8727
      %v9200 = vpack.c.b16 %v8736, %v8728
      %v9201 = vpack.c.b16 %v8737, %v8729
      %v9202 = vpack.c.b16 %v8738, %v8730
      %v9203 = vpack.c.b16 %v8739, %v8731
      %v9204 = vpack.c.b16 %v8740, %v8732
      %v9205 = vpack.c.b16 %v8741, %v8733
      %v9206 = vpack.c.b16 %v8750, %v8742
      %v9207 = vpack.c.b16 %v8751, %v8743
      %v9208 = vpack.c.b16 %v8752, %v8744
      %v9209 = vpack.c.b16 %v8753, %v8745
      %v9210 = vpack.c.b16 %v8754, %v8746
      %v9211 = vpack.c.b16 %v8755, %v8747
      %v9212 = vpack.c.b16 %v8756, %v8748
      %v9213 = vpack.c.b16 %v8757, %v8749
      %v9214 = vpack.c.b16 %v8766, %v8758
      %v9215 = vpack.c.b16 %v8767, %v8759
      %v9216 = vpack.c.b16 %v8768, %v8760
      %v9217 = vpack.c.b16 %v8769, %v8761
      %v9218 = vpack.c.b16 %v8770, %v8762
      %v9219 = vpack.c.b16 %v8771, %v8763
      %v9220 = vpack.c.b16 %v8772, %v8764
      %v9221 = vpack.c.b16 %v8773, %v8765
      %v9222 = vpack.c.b16 %v8782, %v8774
      %v9223 = vpack.c.b16 %v8783, %v8775
      %v9224 = vpack.c.b16 %v8784, %v8776
      %v9225 = vpack.c.b16 %v8785, %v8777
      %v9226 = vpack.c.b16 %v8786, %v8778
      %v9227 = vpack.c.b16 %v8787, %v8779
      %v9228 = vpack.c.b16 %v8788, %v8780
      %v9229 = vpack.c.b16 %v8789, %v8781
      %v9230 = vpack.c.b16 %v8798, %v8790
      %v9231 = vpack.c.b16 %v8799, %v8791
      %v9232 = vpack.c.b16 %v8800, %v8792
      %v9233 = vpack.c.b16 %v8801, %v8793
      %v9234 = vpack.c.b16 %v8802, %v8794
      %v9235 = vpack.c.b16 %v8803, %v8795
      %v9236 = vpack.c.b16 %v8804, %v8796
      %v9237 = vpack.c.b16 %v8805, %v8797
      %v9238 = vpack.c.b16 %v8814, %v8806
      %v9239 = vpack.c.b16 %v8815, %v8807
      %v9240 = vpack.c.b16 %v8816, %v8808
      %v9241 = vpack.c.b16 %v8817, %v8809
      %v9242 = vpack.c.b16 %v8818, %v8810
      %v9243 = vpack.c.b16 %v8819, %v8811
      %v9244 = vpack.c.b16 %v8820, %v8812
      %v9245 = vpack.c.b16 %v8821, %v8813
      %v9246 = vpack.c.b16 %v8830, %v8822
      %v9247 = vpack.c.b16 %v8831, %v8823
      %v9248 = vpack.c.b16 %v8832, %v8824
      %v9249 = vpack.c.b16 %v8833, %v8825
      %v9250 = vpack.c.b16 %v8834, %v8826
      %v9251 = vpack.c.b16 %v8835, %v8827
      %v9252 = vpack.c.b16 %v8836, %v8828
      %v9253 = vpack.c.b16 %v8837, %v8829
      %v9254 = vpack.c.b16 %v8846, %v8838
      %v9255 = vpack.c.b16 %v8847, %v8839
      %v9256 = vpack.c.b16 %v8848, %v8840
      %v9257 = vpack.c.b16 %v8849, %v8841
      %v9258 = vpack.c.b16 %v8850, %v8842
      %v9259 = vpack.c.b16 %v8851, %v8843
      %v9260 = vpack.c.b16 %v8852, %v8844
      %v9261 = vpack.c.b16 %v8853, %v8845
      %v9262 = vpack.c.b16 %v8862, %v8854
      %v9263 = vpack.c.b16 %v8863, %v8855
      %v9264 = vpack.c.b16 %v8864, %v8856
      %v9265 = vpack.c.b16 %v8865, %v8857
      %v9266 = vpack.c.b16 %v8866, %v8858
      %v9267 = vpack.c.b16 %v8867, %v8859
      %v9268 = vpack.c.b16 %v8868, %v8860
      %v9269 = vpack.c.b16 %v8869, %v8861
      %v9270 = vpack.c.b16 %v8878, %v8870
      %v9271 = vpack.c.b16 %v8879, %v8871
      %v9272 = vpack.c.b16 %v8880, %v8872
      %v9273 = vpack.c.b16 %v8881, %v8873
      %v9274 = vpack.c.b16 %v8882, %v8874
      %v9275 = vpack.c.b16 %v8883, %v8875
      %v9276 = vpack.c.b16 %v8884, %v8876
      %v9277 = vpack.c.b16 %v8885, %v8877
      %v9278 = vpack.c.b16 %v8894, %v8886
      %v9279 = vpack.c.b16 %v8895, %v8887
      %v9280 = vpack.c.b16 %v8896, %v8888
      %v9281 = vpack.c.b16 %v8897, %v8889
      %v9282 = vpack.c.b16 %v8898, %v8890
      %v9283 = vpack.c.b16 %v8899, %v8891
      %v9284 = vpack.c.b16 %v8900, %v8892
      %v9285 = vpack.c.b16 %v8901, %v8893
      %v9286 = vpack.c.b16 %v8910, %v8902
      %v9287 = vpack.c.b16 %v8911, %v8903
      %v9288 = vpack.c.b16 %v8912, %v8904
      %v9289 = vpack.c.b16 %v8913, %v8905
      %v9290 = vpack.c.b16 %v8914, %v8906
      %v9291 = vpack.c.b16 %v8915, %v8907
      %v9292 = vpack.c.b16 %v8916, %v8908
      %v9293 = vpack.c.b16 %v8917, %v8909
      %v9294 = vpack.c.b16 %v8926, %v8918
      %v9295 = vpack.c.b16 %v8927, %v8919
      %v9296 = vpack.c.b16 %v8928, %v8920
      %v9297 = vpack.c.b16 %v8929, %v8921
      %v9298 = vpack.c.b16 %v8930, %v8922
      %v9299 = vpack.c.b16 %v8931, %v8923
      %v9300 = vpack.c.b16 %v8932, %v8924
      %v9301 = vpack.c.b16 %v8933, %v8925
      %v9302 = vpack.c.b16 %v8942, %v8934
      %v9303 = vpack.c.b16 %v8943, %v8935
      %v9304 = vpack.c.b16 %v8944, %v8936
      %v9305 = vpack.c.b16 %v8945, %v8937
      %v9306 = vpack.c.b16 %v8946, %v8938
      %v9307 = vpack.c.b16 %v8947, %v8939
      %v9308 = vpack.c.b16 %v8948, %v8940
      %v9309 = vpack.c.b16 %v8949, %v8941
      %v9310 = vpack.c.b16 %v8958, %v8950
      %v9311 = vpack.c.b16 %v8959, %v8951
      %v9312 = vpack.c.b16 %v8960, %v8952
      %v9313 = vpack.c.b16 %v8961, %v8953
      %v9314 = vpack.c.b16 %v8962, %v8954
      %v9315 = vpack.c.b16 %v8963, %v8955
      %v9316 = vpack.c.b16 %v8964, %v8956
      %v9317 = vpack.c.b16 %v8965, %v8957
      %v9318 = vpack.c.b16 %v8974, %v8966
      %v9319 = vpack.c.b16 %v8975, %v8967
      %v9320 = vpack.c.b16 %v8976, %v8968
      %v9321 = vpack.c.b16 %v8977, %v8969
      %v9322 = vpack.c.b16 %v8978, %v8970
      %v9323 = vpack.c.b16 %v8979, %v8971
      %v9324 = vpack.c.b16 %v8980, %v8972
      %v9325 = vpack.c.b16 %v8981, %v8973
      %v9326 = vpack.c.b16 %v8990, %v8982
      %v9327 = vpack.c.b16 %v8991, %v8983
      %v9328 = vpack.c.b16 %v8992, %v8984
      %v9329 = vpack.c.b16 %v8993, %v8985
      %v9330 = vpack.c.b16 %v8994, %v8986
      %v9331 = vpack.c.b16 %v8995, %v8987
      %v9332 = vpack.c.b16 %v8996, %v8988
      %v9333 = vpack.c.b16 %v8997, %v8989
      %v9334 = vpack.c.b16 %v9006, %v8998
      %v9335 = vpack.c.b16 %v9007, %v8999
      %v9336 = vpack.c.b16 %v9008, %v9000
      %v9337 = vpack.c.b16 %v9009, %v9001
      %v9338 = vpack.c.b16 %v9010, %v9002
      %v9339 = vpack.c.b16 %v9011, %v9003
      %v9340 = vpack.c.b16 %v9012, %v9004
      %v9341 = vpack.c.b16 %v9013, %v9005
      %v9342 = vpack.c.b16 %v9022, %v9014
      %v9343 = vpack.c.b16 %v9023, %v9015
      %v9344 = vpack.c.b16 %v9024, %v9016
      %v9345 = vpack.c.b16 %v9025, %v9017
      %v9346 = vpack.c.b16 %v9026, %v9018
      %v9347 = vpack.c.b16 %v9027, %v9019
      %v9348 = vpack.c.b16 %v9028, %v9020
      %v9349 = vpack.c.b16 %v9029, %v9021
      %v9350 = vpack.c.b16 %v9038, %v9030
      %v9351 = vpack.c.b16 %v9039, %v9031
      %v9352 = vpack.c.b16 %v9040, %v9032
      %v9353 = vpack.c.b16 %v9041, %v9033
      %v9354 = vpack.c.b16 %v9042, %v9034
      %v9355 = vpack.c.b16 %v9043, %v9035
      %v9356 = vpack.c.b16 %v9044, %v9036
      %v9357 = vpack.c.b16 %v9045, %v9037
      %v9358 = vpack.c.b16 %v9054, %v9046
      %v9359 = vpack.c.b16 %v9055, %v9047
      %v9360 = vpack.c.b16 %v9056, %v9048
      %v9361 = vpack.c.b16 %v9057, %v9049
      %v9362 = vpack.c.b16 %v9058, %v9050
      %v9363 = vpack.c.b16 %v9059, %v9051
      %v9364 = vpack.c.b16 %v9060, %v9052
      %v9365 = vpack.c.b16 %v9061, %v9053
      %v9366 = vpack.c.b16 %v9070, %v9062
      %v9367 = vpack.c.b16 %v9071, %v9063
      %v9368 = vpack.c.b16 %v9072, %v9064
      %v9369 = vpack.c.b16 %v9073, %v9065
      %v9370 = vpack.c.b16 %v9074, %v9066
      %v9371 = vpack.c.b16 %v9075, %v9067
      %v9372 = vpack.c.b16 %v9076, %v9068
      %v9373 = vpack.c.b16 %v9077, %v9069
      %v9374 = vpack.c.b16 %v9086, %v9078
      %v9375 = vpack.c.b16 %v9087, %v9079
      %v9376 = vpack.c.b16 %v9088, %v9080
      %v9377 = vpack.c.b16 %v9089, %v9081
      %v9378 = vpack.c.b16 %v9090, %v9082
      %v9379 = vpack.c.b16 %v9091, %v9083
      %v9380 = vpack.c.b16 %v9092, %v9084
      %v9381 = vpack.c.b16 %v9093, %v9085
      %v9382 = vpack.c.b16 %v9102, %v9094
      %v9383 = vpack.c.b16 %v9103, %v9095
      %v9384 = vpack.c.b16 %v9104, %v9096
      %v9385 = vpack.c.b16 %v9105, %v9097
      %v9386 = vpack.c.b16 %v9106, %v9098
      %v9387 = vpack.c.b16 %v9107, %v9099
      %v9388 = vpack.c.b16 %v9108, %v9100
      %v9389 = vpack.c.b16 %v9109, %v9101
      %v9390 = vpack.c.b16 %v9118, %v9110
      %v9391 = vpack.c.b16 %v9119, %v9111
      %v9392 = vpack.c.b16 %v9120, %v9112
      %v9393 = vpack.c.b16 %v9121, %v9113
      %v9394 = vpack.c.b16 %v9122, %v9114
      %v9395 = vpack.c.b16 %v9123, %v9115
      %v9396 = vpack.c.b16 %v9124, %v9116
      %v9397 = vpack.c.b16 %v9125, %v9117
      %v9398 = vpack.c.b16 %v9134, %v9126
      %v9399 = vpack.c.b16 %v9135, %v9127
      %v9400 = vpack.c.b16 %v9136, %v9128
      %v9401 = vpack.c.b16 %v9137, %v9129
      %v9402 = vpack.c.b16 %v9138, %v9130
      %v9403 = vpack.c.b16 %v9139, %v9131
      %v9404 = vpack.c.b16 %v9140, %v9132
      %v9405 = vpack.c.b16 %v9141, %v9133
      %v9406 = vpack.c.b16 %v9150, %v9142
      %v9407 = vpack.c.b16 %v9151, %v9143
      %v9408 = vpack.c.b16 %v9152, %v9144
      %v9409 = vpack.c.b16 %v9153, %v9145
      %v9410 = vpack.c.b16 %v9154, %v9146
      %v9411 = vpack.c.b16 %v9155, %v9147
      %v9412 = vpack.c.b16 %v9156, %v9148
      %v9413 = vpack.c.b16 %v9157, %v9149
      %9670 = vmatprep.subr.bf16.mxu0 %v9159
      %9671 = vmatpush1.bf16.msra.mxu0 %v9158
      %9672 = vmatprep.subr.bf16.mxu0 %v9167
      %9673 = vmatpush1.bf16.msra.mxu0 %v9166
      %9674 = vmatprep.subr.bf16.mxu0 %v9175
      %9675 = vmatpush1.bf16.msra.mxu0 %v9174
      %9676 = vmatprep.subr.bf16.mxu0 %v9183
      %9677 = vmatpush1.bf16.msra.mxu0 %v9182
      %9678 = vmatprep.subr.bf16.mxu0 %v9191
      %9679 = vmatpush1.bf16.msra.mxu0 %v9190
      %9680 = vmatprep.subr.bf16.mxu0 %v9199
      %9681 = vmatpush1.bf16.msra.mxu0 %v9198
      %9682 = vmatprep.subr.bf16.mxu0 %v9207
      %9683 = vmatpush1.bf16.msra.mxu0 %v9206
      %9684 = vmatprep.subr.bf16.mxu0 %v9215
      %9685 = vmatpush1.bf16.msra.mxu0 %v9214
      %9686 = vmatprep.subr.bf16.mxu0 %v9223
      %9687 = vmatpush1.bf16.msra.mxu0 %v9222
      %9688 = vmatprep.subr.bf16.mxu0 %v9231
      %9689 = vmatpush1.bf16.msra.mxu0 %v9230
      %9690 = vmatprep.subr.bf16.mxu0 %v9239
      %9691 = vmatpush1.bf16.msra.mxu0 %v9238
      %9692 = vmatprep.subr.bf16.mxu0 %v9247
      %9693 = vmatpush1.bf16.msra.mxu0 %v9246
      %9694 = vmatprep.subr.bf16.mxu0 %v9255
      %9695 = vmatpush1.bf16.msra.mxu0 %v9254
      %9696 = vmatprep.subr.bf16.mxu0 %v9263
      %9697 = vmatpush1.bf16.msra.mxu0 %v9262
      %9698 = vmatprep.subr.bf16.mxu0 %v9271
      %9699 = vmatpush1.bf16.msra.mxu0 %v9270
      %9700 = vmatprep.subr.bf16.mxu0 %v9279
      %9701 = vmatpush1.bf16.msra.mxu0 %v9278
      %9702 = vmatprep.mubr.bf16.mxu0 %v4669
      %9703 = vmatmul.mubr.bf16.gmra.mrb[0].mxu0 %v4668
      %v9704 = vpop.f32.mrb[0].mxu0
      %v9705 = vadd.f32 %v7460, %v9704
      %v9706 = vpop.f32.mrb[0].mxu0
      %v9707 = vadd.f32 %v7464, %v9706
      %v9708 = vpop.f32.mrb[0].mxu0
      %v9709 = vpop.f32.mrb[0].mxu0
      %9710 = vdwg.mxu0
      %9711 = vmatprep.subr.bf16.mxu0 %v9287
      %9712 = vmatpush1.bf16.msra.mxu0 %v9286
      %9713 = vmatprep.subr.bf16.mxu0 %v9295
      %9714 = vmatpush1.bf16.msra.mxu0 %v9294
      %9715 = vmatprep.subr.bf16.mxu0 %v9303
      %9716 = vmatpush1.bf16.msra.mxu0 %v9302
      %9717 = vmatprep.subr.bf16.mxu0 %v9311
      %9718 = vmatpush1.bf16.msra.mxu0 %v9310
      %9719 = vmatprep.subr.bf16.mxu0 %v9319
      %9720 = vmatpush1.bf16.msra.mxu0 %v9318
      %9721 = vmatprep.subr.bf16.mxu0 %v9327
      %9722 = vmatpush1.bf16.msra.mxu0 %v9326
      %9723 = vmatprep.subr.bf16.mxu0 %v9335
      %9724 = vmatpush1.bf16.msra.mxu0 %v9334
      %9725 = vmatprep.subr.bf16.mxu0 %v9343
      %9726 = vmatpush1.bf16.msra.mxu0 %v9342
      %9727 = vmatprep.subr.bf16.mxu0 %v9351
      %9728 = vmatpush1.bf16.msra.mxu0 %v9350
      %9729 = vmatprep.subr.bf16.mxu0 %v9359
      %9730 = vmatpush1.bf16.msra.mxu0 %v9358
      %9731 = vmatprep.subr.bf16.mxu0 %v9367
      %9732 = vmatpush1.bf16.msra.mxu0 %v9366
      %9733 = vmatprep.subr.bf16.mxu0 %v9375
      %9734 = vmatpush1.bf16.msra.mxu0 %v9374
      %9735 = vmatprep.subr.bf16.mxu0 %v9383
      %9736 = vmatpush1.bf16.msra.mxu0 %v9382
      %9737 = vmatprep.subr.bf16.mxu0 %v9391
      %9738 = vmatpush1.bf16.msra.mxu0 %v9390
      %9739 = vmatprep.subr.bf16.mxu0 %v9399
      %9740 = vmatpush1.bf16.msra.mxu0 %v9398
      %9741 = vmatprep.subr.bf16.mxu0 %v9407
      %9742 = vmatpush1.bf16.msra.mxu0 %v9406
      %9743 = vmatprep.mubr.bf16.mxu0 %v8133
      %9744 = vmatmul.mubr.bf16.gmra.mrb[0].mxu0 %v8132
      %v9745 = vpop.f32.mrb[0].mxu0
      %v9746 = vadd.f32 %v9705, %v9745
      %v9747 = vpop.f32.mrb[0].mxu0
      %v9748 = vadd.f32 %v9707, %v9747
      %v9749 = vpop.f32.mrb[0].mxu0
      %v9750 = vpop.f32.mrb[0].mxu0
      %9751 = vdwg.mxu0
      %9752 = vmatprep.subr.bf16.mxu0 %v9161
      %9753 = vmatpush1.bf16.msra.mxu0 %v9160
      %9754 = vmatprep.subr.bf16.mxu0 %v9169
      %9755 = vmatpush1.bf16.msra.mxu0 %v9168
      %9756 = vmatprep.subr.bf16.mxu0 %v9177
      %9757 = vmatpush1.bf16.msra.mxu0 %v9176
      %9758 = vmatprep.subr.bf16.mxu0 %v9185
      %9759 = vmatpush1.bf16.msra.mxu0 %v9184
      %9760 = vmatprep.subr.bf16.mxu0 %v9193
      %9761 = vmatpush1.bf16.msra.mxu0 %v9192
      %9762 = vmatprep.subr.bf16.mxu0 %v9201
      %9763 = vmatpush1.bf16.msra.mxu0 %v9200
      %9764 = vmatprep.subr.bf16.mxu0 %v9209
      %9765 = vmatpush1.bf16.msra.mxu0 %v9208
      %9766 = vmatprep.subr.bf16.mxu0 %v9217
      %9767 = vmatpush1.bf16.msra.mxu0 %v9216
      %9768 = vmatprep.subr.bf16.mxu0 %v9225
      %9769 = vmatpush1.bf16.msra.mxu0 %v9224
      %9770 = vmatprep.subr.bf16.mxu0 %v9233
      %9771 = vmatpush1.bf16.msra.mxu0 %v9232
      %9772 = vmatprep.subr.bf16.mxu0 %v9241
      %9773 = vmatpush1.bf16.msra.mxu0 %v9240
      %9774 = vmatprep.subr.bf16.mxu0 %v9249
      %9775 = vmatpush1.bf16.msra.mxu0 %v9248
      %9776 = vmatprep.subr.bf16.mxu0 %v9257
      %9777 = vmatpush1.bf16.msra.mxu0 %v9256
      %9778 = vmatprep.subr.bf16.mxu0 %v9265
      %9779 = vmatpush1.bf16.msra.mxu0 %v9264
      %9780 = vmatprep.subr.bf16.mxu0 %v9273
      %9781 = vmatpush1.bf16.msra.mxu0 %v9272
      %9782 = vmatprep.subr.bf16.mxu0 %v9281
      %9783 = vmatpush1.bf16.msra.mxu0 %v9280
      %9784 = vmatprep.mubr.bf16.mxu0 %v4669
      %9785 = vmatmul.mubr.bf16.gmra.mrb[0].mxu0 %v4668
      %v9786 = vpop.f32.mrb[0].mxu0
      %v9787 = vadd.f32 %v7468, %v9786
      %v9788 = vpop.f32.mrb[0].mxu0
      %v9789 = vadd.f32 %v7472, %v9788
      %v9790 = vpop.f32.mrb[0].mxu0
      %v9791 = vpop.f32.mrb[0].mxu0
      %9792 = vdwg.mxu0
      %9793 = vmatprep.subr.bf16.mxu0 %v9289
      %9794 = vmatpush1.bf16.msra.mxu0 %v9288
      %9795 = vmatprep.subr.bf16.mxu0 %v9297
      %9796 = vmatpush1.bf16.msra.mxu0 %v9296
      %9797 = vmatprep.subr.bf16.mxu0 %v9305
      %9798 = vmatpush1.bf16.msra.mxu0 %v9304
      %9799 = vmatprep.subr.bf16.mxu0 %v9313
      %9800 = vmatpush1.bf16.msra.mxu0 %v9312
      %9801 = vmatprep.subr.bf16.mxu0 %v9321
      %9802 = vmatpush1.bf16.msra.mxu0 %v9320
      %9803 = vmatprep.subr.bf16.mxu0 %v9329
      %9804 = vmatpush1.bf16.msra.mxu0 %v9328
      %9805 = vmatprep.subr.bf16.mxu0 %v9337
      %9806 = vmatpush1.bf16.msra.mxu0 %v9336
      %9807 = vmatprep.subr.bf16.mxu0 %v9345
      %9808 = vmatpush1.bf16.msra.mxu0 %v9344
      %9809 = vmatprep.subr.bf16.mxu0 %v9353
      %9810 = vmatpush1.bf16.msra.mxu0 %v9352
      %9811 = vmatprep.subr.bf16.mxu0 %v9361
      %9812 = vmatpush1.bf16.msra.mxu0 %v9360
      %9813 = vmatprep.subr.bf16.mxu0 %v9369
      %9814 = vmatpush1.bf16.msra.mxu0 %v9368
      %9815 = vmatprep.subr.bf16.mxu0 %v9377
      %9816 = vmatpush1.bf16.msra.mxu0 %v9376
      %9817 = vmatprep.subr.bf16.mxu0 %v9385
      %9818 = vmatpush1.bf16.msra.mxu0 %v9384
      %9819 = vmatprep.subr.bf16.mxu0 %v9393
      %9820 = vmatpush1.bf16.msra.mxu0 %v9392
      %9821 = vmatprep.subr.bf16.mxu0 %v9401
      %9822 = vmatpush1.bf16.msra.mxu0 %v9400
      %9823 = vmatprep.subr.bf16.mxu0 %v9409
      %9824 = vmatpush1.bf16.msra.mxu0 %v9408
      %9825 = vmatprep.mubr.bf16.mxu0 %v8133
      %9826 = vmatmul.mubr.bf16.gmra.mrb[0].mxu0 %v8132
      %v9827 = vpop.f32.mrb[0].mxu0
      %v9828 = vadd.f32 %v9787, %v9827
      %v9829 = vpop.f32.mrb[0].mxu0
      %v9830 = vadd.f32 %v9789, %v9829
      %v9831 = vpop.f32.mrb[0].mxu0
      %v9832 = vpop.f32.mrb[0].mxu0
      %9833 = vdwg.mxu0
      %9834 = vmatprep.subr.bf16.mxu0 %v9163
      %9835 = vmatpush1.bf16.msra.mxu0 %v9162
      %9836 = vmatprep.subr.bf16.mxu0 %v9171
      %9837 = vmatpush1.bf16.msra.mxu0 %v9170
      %9838 = vmatprep.subr.bf16.mxu0 %v9179
      %9839 = vmatpush1.bf16.msra.mxu0 %v9178
      %9840 = vmatprep.subr.bf16.mxu0 %v9187
      %9841 = vmatpush1.bf16.msra.mxu0 %v9186
      %9842 = vmatprep.subr.bf16.mxu0 %v9195
      %9843 = vmatpush1.bf16.msra.mxu0 %v9194
      %9844 = vmatprep.subr.bf16.mxu0 %v9203
      %9845 = vmatpush1.bf16.msra.mxu0 %v9202
      %9846 = vmatprep.subr.bf16.mxu0 %v9211
      %9847 = vmatpush1.bf16.msra.mxu0 %v9210
      %9848 = vmatprep.subr.bf16.mxu0 %v9219
      %9849 = vmatpush1.bf16.msra.mxu0 %v9218
      %9850 = vmatprep.subr.bf16.mxu0 %v9227
      %9851 = vmatpush1.bf16.msra.mxu0 %v9226
      %9852 = vmatprep.subr.bf16.mxu0 %v9235
      %9853 = vmatpush1.bf16.msra.mxu0 %v9234
      %9854 = vmatprep.subr.bf16.mxu0 %v9243
      %9855 = vmatpush1.bf16.msra.mxu0 %v9242
      %9856 = vmatprep.subr.bf16.mxu0 %v9251
      %9857 = vmatpush1.bf16.msra.mxu0 %v9250
      %9858 = vmatprep.subr.bf16.mxu0 %v9259
      %9859 = vmatpush1.bf16.msra.mxu0 %v9258
      %9860 = vmatprep.subr.bf16.mxu0 %v9267
      %9861 = vmatpush1.bf16.msra.mxu0 %v9266
      %9862 = vmatprep.subr.bf16.mxu0 %v9275
      %9863 = vmatpush1.bf16.msra.mxu0 %v9274
      %9864 = vmatprep.subr.bf16.mxu0 %v9283
      %9865 = vmatpush1.bf16.msra.mxu0 %v9282
      %9866 = vmatprep.mubr.bf16.mxu0 %v4669
      %9867 = vmatmul.mubr.bf16.gmra.mrb[0].mxu0 %v4668
      %v9868 = vpop.f32.mrb[0].mxu0
      %v9869 = vadd.f32 %v7476, %v9868
      %v9870 = vpop.f32.mrb[0].mxu0
      %v9871 = vadd.f32 %v7480, %v9870
      %v9872 = vpop.f32.mrb[0].mxu0
      %v9873 = vpop.f32.mrb[0].mxu0
      %9874 = vdwg.mxu0
      %9875 = vmatprep.subr.bf16.mxu0 %v9291
      %9876 = vmatpush1.bf16.msra.mxu0 %v9290
      %9877 = vmatprep.subr.bf16.mxu0 %v9299
      %9878 = vmatpush1.bf16.msra.mxu0 %v9298
      %9879 = vmatprep.subr.bf16.mxu0 %v9307
      %9880 = vmatpush1.bf16.msra.mxu0 %v9306
      %9881 = vmatprep.subr.bf16.mxu0 %v9315
      %9882 = vmatpush1.bf16.msra.mxu0 %v9314
      %9883 = vmatprep.subr.bf16.mxu0 %v9323
      %9884 = vmatpush1.bf16.msra.mxu0 %v9322
      %9885 = vmatprep.subr.bf16.mxu0 %v9331
      %9886 = vmatpush1.bf16.msra.mxu0 %v9330
      %9887 = vmatprep.subr.bf16.mxu0 %v9339
      %9888 = vmatpush1.bf16.msra.mxu0 %v9338
      %9889 = vmatprep.subr.bf16.mxu0 %v9347
      %9890 = vmatpush1.bf16.msra.mxu0 %v9346
      %9891 = vmatprep.subr.bf16.mxu0 %v9355
      %9892 = vmatpush1.bf16.msra.mxu0 %v9354
      %9893 = vmatprep.subr.bf16.mxu0 %v9363
      %9894 = vmatpush1.bf16.msra.mxu0 %v9362
      %9895 = vmatprep.subr.bf16.mxu0 %v9371
      %9896 = vmatpush1.bf16.msra.mxu0 %v9370
      %9897 = vmatprep.subr.bf16.mxu0 %v9379
      %9898 = vmatpush1.bf16.msra.mxu0 %v9378
      %9899 = vmatprep.subr.bf16.mxu0 %v9387
      %9900 = vmatpush1.bf16.msra.mxu0 %v9386
      %9901 = vmatprep.subr.bf16.mxu0 %v9395
      %9902 = vmatpush1.bf16.msra.mxu0 %v9394
      %9903 = vmatprep.subr.bf16.mxu0 %v9403
      %9904 = vmatpush1.bf16.msra.mxu0 %v9402
      %9905 = vmatprep.subr.bf16.mxu0 %v9411
      %9906 = vmatpush1.bf16.msra.mxu0 %v9410
      %9907 = vmatprep.mubr.bf16.mxu0 %v8133
      %9908 = vmatmul.mubr.bf16.gmra.mrb[0].mxu0 %v8132
      %v9909 = vpop.f32.mrb[0].mxu0
      %v9910 = vadd.f32 %v9869, %v9909
      %v9911 = vpop.f32.mrb[0].mxu0
      %v9912 = vadd.f32 %v9871, %v9911
      %v9913 = vpop.f32.mrb[0].mxu0
      %v9914 = vpop.f32.mrb[0].mxu0
      %9915 = vdwg.mxu0
      %9916 = vmatprep.subr.bf16.mxu0 %v9165
      %9917 = vmatpush1.bf16.msra.mxu0 %v9164
      %9918 = vmatprep.subr.bf16.mxu0 %v9173
      %9919 = vmatpush1.bf16.msra.mxu0 %v9172
      %9920 = vmatprep.subr.bf16.mxu0 %v9181
      %9921 = vmatpush1.bf16.msra.mxu0 %v9180
      %9922 = vmatprep.subr.bf16.mxu0 %v9189
      %9923 = vmatpush1.bf16.msra.mxu0 %v9188
      %9924 = vmatprep.subr.bf16.mxu0 %v9197
      %9925 = vmatpush1.bf16.msra.mxu0 %v9196
      %9926 = vmatprep.subr.bf16.mxu0 %v9205
      %9927 = vmatpush1.bf16.msra.mxu0 %v9204
      %9928 = vmatprep.subr.bf16.mxu0 %v9213
      %9929 = vmatpush1.bf16.msra.mxu0 %v9212
      %9930 = vmatprep.subr.bf16.mxu0 %v9221
      %9931 = vmatpush1.bf16.msra.mxu0 %v9220
      %9932 = vmatprep.subr.bf16.mxu0 %v9229
      %9933 = vmatpush1.bf16.msra.mxu0 %v9228
      %9934 = vmatprep.subr.bf16.mxu0 %v9237
      %9935 = vmatpush1.bf16.msra.mxu0 %v9236
      %9936 = vmatprep.subr.bf16.mxu0 %v9245
      %9937 = vmatpush1.bf16.msra.mxu0 %v9244
      %9938 = vmatprep.subr.bf16.mxu0 %v9253
      %9939 = vmatpush1.bf16.msra.mxu0 %v9252
      %9940 = vmatprep.subr.bf16.mxu0 %v9261
      %9941 = vmatpush1.bf16.msra.mxu0 %v9260
      %9942 = vmatprep.subr.bf16.mxu0 %v9269
      %9943 = vmatpush1.bf16.msra.mxu0 %v9268
      %9944 = vmatprep.subr.bf16.mxu0 %v9277
      %9945 = vmatpush1.bf16.msra.mxu0 %v9276
      %9946 = vmatprep.subr.bf16.mxu0 %v9285
      %9947 = vmatpush1.bf16.msra.mxu0 %v9284
      %9948 = vmatprep.mubr.bf16.mxu0 %v4669
      %9949 = vmatmul.mubr.bf16.gmra.mrb[0].mxu0 %v4668
      %v9950 = vpop.f32.mrb[0].mxu0
      %v9951 = vadd.f32 %v7484, %v9950
      %v9952 = vpop.f32.mrb[0].mxu0
      %v9953 = vadd.f32 %v7488, %v9952
      %v9954 = vpop.f32.mrb[0].mxu0
      %v9955 = vpop.f32.mrb[0].mxu0
      %9956 = vdwg.mxu0
      %9957 = vmatprep.subr.bf16.mxu0 %v9293
      %9958 = vmatpush1.bf16.msra.mxu0 %v9292
      %9959 = vmatprep.subr.bf16.mxu0 %v9301
      %9960 = vmatpush1.bf16.msra.mxu0 %v9300
      %9961 = vmatprep.subr.bf16.mxu0 %v9309
      %9962 = vmatpush1.bf16.msra.mxu0 %v9308
      %9963 = vmatprep.subr.bf16.mxu0 %v9317
      %9964 = vmatpush1.bf16.msra.mxu0 %v9316
      %9965 = vmatprep.subr.bf16.mxu0 %v9325
      %9966 = vmatpush1.bf16.msra.mxu0 %v9324
      %9967 = vmatprep.subr.bf16.mxu0 %v9333
      %9968 = vmatpush1.bf16.msra.mxu0 %v9332
      %9969 = vmatprep.subr.bf16.mxu0 %v9341
      %9970 = vmatpush1.bf16.msra.mxu0 %v9340
      %9971 = vmatprep.subr.bf16.mxu0 %v9349
      %9972 = vmatpush1.bf16.msra.mxu0 %v9348
      %9973 = vmatprep.subr.bf16.mxu0 %v9357
      %9974 = vmatpush1.bf16.msra.mxu0 %v9356
      %9975 = vmatprep.subr.bf16.mxu0 %v9365
      %9976 = vmatpush1.bf16.msra.mxu0 %v9364
      %9977 = vmatprep.subr.bf16.mxu0 %v9373
      %9978 = vmatpush1.bf16.msra.mxu0 %v9372
      %9979 = vmatprep.subr.bf16.mxu0 %v9381
      %9980 = vmatpush1.bf16.msra.mxu0 %v9380
      %9981 = vmatprep.subr.bf16.mxu0 %v9389
      %9982 = vmatpush1.bf16.msra.mxu0 %v9388
      %9983 = vmatprep.subr.bf16.mxu0 %v9397
      %9984 = vmatpush1.bf16.msra.mxu0 %v9396
      %9985 = vmatprep.subr.bf16.mxu0 %v9405
      %9986 = vmatpush1.bf16.msra.mxu0 %v9404
      %9987 = vmatprep.subr.bf16.mxu0 %v9413
      %9988 = vmatpush1.bf16.msra.mxu0 %v9412
      %9989 = vmatprep.mubr.bf16.mxu0 %v8133
      %9990 = vmatmul.mubr.bf16.gmra.mrb[0].mxu0 %v8132
      %v9991 = vpop.f32.mrb[0].mxu0
      %v9992 = vadd.f32 %v9951, %v9991
      %v9993 = vpop.f32.mrb[0].mxu0
      %v9994 = vadd.f32 %v9953, %v9993
      %v9995 = vpop.f32.mrb[0].mxu0
      %v9996 = vpop.f32.mrb[0].mxu0
      %9997 = vdwg.mxu0
      %v9998 = vxor.u32 %v9746, 2147483648
      %v9999 = vxor.u32 %v9748, 2147483648
      %v10000 = vmul.f32 %v9998, 1.442695
      %v10001 = vpow.pop %v10000
      %v10002 = vmul.f32 %v9999, 1.442695
      %v10003 = vpow.pop %v10002
      %v10004 = vadd.f32 %v10001, 1.0
      %v10005 = vadd.f32 %v10003, 1.0
      %v10006 = vrcp.pop %v10004
      %v10007 = vmul.f32 1.0, %v10006
      %v10008 = vrcp.pop %v10005
      %v10009 = vmul.f32 1.0, %v10008
      %v10010 = vxor.u32 %v9828, 2147483648
      %v10011 = vxor.u32 %v9830, 2147483648
      %v10012 = vmul.f32 %v10010, 1.442695
      %v10013 = vpow.pop %v10012
      %v10014 = vmul.f32 %v10011, 1.442695
      %v10015 = vpow.pop %v10014
      %v10016 = vadd.f32 %v10013, 1.0
      %v10017 = vadd.f32 %v10015, 1.0
      %v10018 = vrcp.pop %v10016
      %v10019 = vmul.f32 1.0, %v10018
      %v10020 = vrcp.pop %v10017
      %v10021 = vmul.f32 1.0, %v10020
      %v10022 = vtanh.pop %v9910
      %v10023 = vtanh.pop %v9912
      %v10024 = vxor.u32 %v9992, 2147483648
      %v10025 = vxor.u32 %v9994, 2147483648
      %v10026 = vmul.f32 %v10024, 1.442695
      %v10027 = vpow.pop %v10026
      %v10028 = vmul.f32 %v10025, 1.442695
      %v10029 = vpow.pop %v10028
      %v10030 = vadd.f32 %v10027, 1.0
      %v10031 = vadd.f32 %v10029, 1.0
      %v10032 = vrcp.pop %v10030
      %v10033 = vmul.f32 1.0, %v10032
      %v10034 = vrcp.pop %v10031
      %v10035 = vmul.f32 1.0, %v10034
      %v10036 = vmul.f32 %v10019, %v8126
      %v10037 = vmul.f32 %v10021, %v8127
      %v10038 = vmul.f32 %v10007, %v10022
      %v10039 = vmul.f32 %v10009, %v10023
      %v10040 = vadd.f32 %v10036, %v10038
      %v10041 = vadd.f32 %v10037, %v10039
      %v10042 = vtanh.pop %v10040
      %v10043 = vtanh.pop %v10041
      %v10044 = vmul.f32 %v10033, %v10042
      %v10045 = vmul.f32 %v10035, %v10043
      %v10046 = vpack.c.bf16 %v7357, %v7357
      %v10047 = vpack.c.bf16 %v7358, %v7358
      %v10048 = vpack.c.bf16 %v10044, %v10044
      %v10049 = vpack.c.bf16 %v10045, %v10045
      %v10050 = vld [vmem:[#allocation17] sm:$0xf]
      %v10051 = vld [vmem:[#allocation17 + $0x4] sm:$0xf]
      %v10052 = vld [vmem:[#allocation17 + $0x8] sm:$0xf]
      %v10053 = vld [vmem:[#allocation17 + $0xc] sm:$0xf]
      %v10054 = vld [vmem:[#allocation17 + $0x10] sm:$0xf]
      %v10055 = vld [vmem:[#allocation17 + $0x14] sm:$0xf]
      %v10056 = vld [vmem:[#allocation17 + $0x18] sm:$0xf]
      %v10057 = vld [vmem:[#allocation17 + $0x1c] sm:$0xf]
      %v10058 = vld [vmem:[#allocation17 + $0x20] sm:$0xf]
      %v10059 = vld [vmem:[#allocation17 + $0x24] sm:$0xf]
      %v10060 = vld [vmem:[#allocation17 + $0x28] sm:$0xf]
      %v10061 = vld [vmem:[#allocation17 + $0x2c] sm:$0xf]
      %v10062 = vld [vmem:[#allocation17 + $0x30] sm:$0xf]
      %v10063 = vld [vmem:[#allocation17 + $0x34] sm:$0xf]
      %v10064 = vld [vmem:[#allocation17 + $0x38] sm:$0xf]
      %v10065 = vld [vmem:[#allocation17 + $0x3c] sm:$0xf]
      %v10066 = vld [vmem:[#allocation17 + $0x40] sm:$0xf]
      %v10067 = vld [vmem:[#allocation17 + $0x44] sm:$0xf]
      %v10068 = vld [vmem:[#allocation17 + $0x48] sm:$0xf]
      %v10069 = vld [vmem:[#allocation17 + $0x4c] sm:$0xf]
      %v10070 = vld [vmem:[#allocation17 + $0x50] sm:$0xf]
      %v10071 = vld [vmem:[#allocation17 + $0x54] sm:$0xf]
      %v10072 = vld [vmem:[#allocation17 + $0x58] sm:$0xf]
      %v10073 = vld [vmem:[#allocation17 + $0x5c] sm:$0xf]
      %v10074 = vld [vmem:[#allocation17 + $0x60] sm:$0xf]
      %v10075 = vld [vmem:[#allocation17 + $0x64] sm:$0xf]
      %v10076 = vld [vmem:[#allocation17 + $0x68] sm:$0xf]
      %v10077 = vld [vmem:[#allocation17 + $0x6c] sm:$0xf]
      %v10078 = vld [vmem:[#allocation17 + $0x70] sm:$0xf]
      %v10079 = vld [vmem:[#allocation17 + $0x74] sm:$0xf]
      %v10080 = vld [vmem:[#allocation17 + $0x78] sm:$0xf]
      %v10081 = vld [vmem:[#allocation17 + $0x7c] sm:$0xf]
      %v10082 = vld [vmem:[#allocation17 + $0x80] sm:$0xf]
      %v10083 = vld [vmem:[#allocation17 + $0x84] sm:$0xf]
      %v10084 = vld [vmem:[#allocation17 + $0x88] sm:$0xf]
      %v10085 = vld [vmem:[#allocation17 + $0x8c] sm:$0xf]
      %v10086 = vld [vmem:[#allocation17 + $0x90] sm:$0xf]
      %v10087 = vld [vmem:[#allocation17 + $0x94] sm:$0xf]
      %v10088 = vld [vmem:[#allocation17 + $0x98] sm:$0xf]
      %v10089 = vld [vmem:[#allocation17 + $0x9c] sm:$0xf]
      %v10090 = vld [vmem:[#allocation17 + $0xa0] sm:$0xf]
      %v10091 = vld [vmem:[#allocation17 + $0xa4] sm:$0xf]
      %v10092 = vld [vmem:[#allocation17 + $0xa8] sm:$0xf]
      %v10093 = vld [vmem:[#allocation17 + $0xac] sm:$0xf]
      %v10094 = vld [vmem:[#allocation17 + $0xb0] sm:$0xf]
      %v10095 = vld [vmem:[#allocation17 + $0xb4] sm:$0xf]
      %v10096 = vld [vmem:[#allocation17 + $0xb8] sm:$0xf]
      %v10097 = vld [vmem:[#allocation17 + $0xbc] sm:$0xf]
      %v10098 = vld [vmem:[#allocation17 + $0xc0] sm:$0xf]
      %v10099 = vld [vmem:[#allocation17 + $0xc4] sm:$0xf]
      %v10100 = vld [vmem:[#allocation17 + $0xc8] sm:$0xf]
      %v10101 = vld [vmem:[#allocation17 + $0xcc] sm:$0xf]
      %v10102 = vld [vmem:[#allocation17 + $0xd0] sm:$0xf]
      %v10103 = vld [vmem:[#allocation17 + $0xd4] sm:$0xf]
      %v10104 = vld [vmem:[#allocation17 + $0xd8] sm:$0xf]
      %v10105 = vld [vmem:[#allocation17 + $0xdc] sm:$0xf]
      %v10106 = vld [vmem:[#allocation17 + $0xe0] sm:$0xf]
      %v10107 = vld [vmem:[#allocation17 + $0xe4] sm:$0xf]
      %v10108 = vld [vmem:[#allocation17 + $0xe8] sm:$0xf]
      %v10109 = vld [vmem:[#allocation17 + $0xec] sm:$0xf]
      %v10110 = vld [vmem:[#allocation17 + $0xf0] sm:$0xf]
      %v10111 = vld [vmem:[#allocation17 + $0xf4] sm:$0xf]
      %v10112 = vld [vmem:[#allocation17 + $0xf8] sm:$0xf]
      %v10113 = vld [vmem:[#allocation17 + $0xfc] sm:$0xf]
      %v10114 = vld [vmem:[#allocation17 + $0x100] sm:$0xf]
      %v10115 = vld [vmem:[#allocation17 + $0x104] sm:$0xf]
      %v10116 = vld [vmem:[#allocation17 + $0x108] sm:$0xf]
      %v10117 = vld [vmem:[#allocation17 + $0x10c] sm:$0xf]
      %v10118 = vld [vmem:[#allocation17 + $0x110] sm:$0xf]
      %v10119 = vld [vmem:[#allocation17 + $0x114] sm:$0xf]
      %v10120 = vld [vmem:[#allocation17 + $0x118] sm:$0xf]
      %v10121 = vld [vmem:[#allocation17 + $0x11c] sm:$0xf]
      %v10122 = vld [vmem:[#allocation17 + $0x120] sm:$0xf]
      %v10123 = vld [vmem:[#allocation17 + $0x124] sm:$0xf]
      %v10124 = vld [vmem:[#allocation17 + $0x128] sm:$0xf]
      %v10125 = vld [vmem:[#allocation17 + $0x12c] sm:$0xf]
      %v10126 = vld [vmem:[#allocation17 + $0x130] sm:$0xf]
      %v10127 = vld [vmem:[#allocation17 + $0x134] sm:$0xf]
      %v10128 = vld [vmem:[#allocation17 + $0x138] sm:$0xf]
      %v10129 = vld [vmem:[#allocation17 + $0x13c] sm:$0xf]
      %v10130 = vld [vmem:[#allocation17 + $0x140] sm:$0xf]
      %v10131 = vld [vmem:[#allocation17 + $0x144] sm:$0xf]
      %v10132 = vld [vmem:[#allocation17 + $0x148] sm:$0xf]
      %v10133 = vld [vmem:[#allocation17 + $0x14c] sm:$0xf]
      %v10134 = vld [vmem:[#allocation17 + $0x150] sm:$0xf]
      %v10135 = vld [vmem:[#allocation17 + $0x154] sm:$0xf]
      %v10136 = vld [vmem:[#allocation17 + $0x158] sm:$0xf]
      %v10137 = vld [vmem:[#allocation17 + $0x15c] sm:$0xf]
      %v10138 = vld [vmem:[#allocation17 + $0x160] sm:$0xf]
      %v10139 = vld [vmem:[#allocation17 + $0x164] sm:$0xf]
      %v10140 = vld [vmem:[#allocation17 + $0x168] sm:$0xf]
      %v10141 = vld [vmem:[#allocation17 + $0x16c] sm:$0xf]
      %v10142 = vld [vmem:[#allocation17 + $0x170] sm:$0xf]
      %v10143 = vld [vmem:[#allocation17 + $0x174] sm:$0xf]
      %v10144 = vld [vmem:[#allocation17 + $0x178] sm:$0xf]
      %v10145 = vld [vmem:[#allocation17 + $0x17c] sm:$0xf]
      %v10146 = vld [vmem:[#allocation17 + $0x180] sm:$0xf]
      %v10147 = vld [vmem:[#allocation17 + $0x184] sm:$0xf]
      %v10148 = vld [vmem:[#allocation17 + $0x188] sm:$0xf]
      %v10149 = vld [vmem:[#allocation17 + $0x18c] sm:$0xf]
      %v10150 = vld [vmem:[#allocation17 + $0x190] sm:$0xf]
      %v10151 = vld [vmem:[#allocation17 + $0x194] sm:$0xf]
      %v10152 = vld [vmem:[#allocation17 + $0x198] sm:$0xf]
      %v10153 = vld [vmem:[#allocation17 + $0x19c] sm:$0xf]
      %v10154 = vld [vmem:[#allocation17 + $0x1a0] sm:$0xf]
      %v10155 = vld [vmem:[#allocation17 + $0x1a4] sm:$0xf]
      %v10156 = vld [vmem:[#allocation17 + $0x1a8] sm:$0xf]
      %v10157 = vld [vmem:[#allocation17 + $0x1ac] sm:$0xf]
      %v10158 = vld [vmem:[#allocation17 + $0x1b0] sm:$0xf]
      %v10159 = vld [vmem:[#allocation17 + $0x1b4] sm:$0xf]
      %v10160 = vld [vmem:[#allocation17 + $0x1b8] sm:$0xf]
      %v10161 = vld [vmem:[#allocation17 + $0x1bc] sm:$0xf]
      %v10162 = vld [vmem:[#allocation17 + $0x1c0] sm:$0xf]
      %v10163 = vld [vmem:[#allocation17 + $0x1c4] sm:$0xf]
      %v10164 = vld [vmem:[#allocation17 + $0x1c8] sm:$0xf]
      %v10165 = vld [vmem:[#allocation17 + $0x1cc] sm:$0xf]
      %v10166 = vld [vmem:[#allocation17 + $0x1d0] sm:$0xf]
      %v10167 = vld [vmem:[#allocation17 + $0x1d4] sm:$0xf]
      %v10168 = vld [vmem:[#allocation17 + $0x1d8] sm:$0xf]
      %v10169 = vld [vmem:[#allocation17 + $0x1dc] sm:$0xf]
      %v10170 = vld [vmem:[#allocation17 + $0x1e0] sm:$0xf]
      %v10171 = vld [vmem:[#allocation17 + $0x1e4] sm:$0xf]
      %v10172 = vld [vmem:[#allocation17 + $0x1e8] sm:$0xf]
      %v10173 = vld [vmem:[#allocation17 + $0x1ec] sm:$0xf]
      %v10174 = vld [vmem:[#allocation17 + $0x1f0] sm:$0xf]
      %v10175 = vld [vmem:[#allocation17 + $0x1f4] sm:$0xf]
      %v10176 = vld [vmem:[#allocation17 + $0x1f8] sm:$0xf]
      %v10177 = vld [vmem:[#allocation17 + $0x1fc] sm:$0xf]
      %v10178 = vld [vmem:[#allocation18] sm:$0x1]
      %v10180 = vlaneseq
      %v10181 = vshrl.u32 %v10180, 7
      %v10182 = vsub.s32 0, %v10181
      %v10183 = vrot.slane %v10178, %v10182
      %v10313 = vunpack.c.l.b16 %v10050
      %v10314 = vunpack.c.l.b16 %v10051
      %v10315 = vunpack.c.l.b16 %v10052
      %v10316 = vunpack.c.l.b16 %v10053
      %v10317 = vunpack.c.l.b16 %v10054
      %v10318 = vunpack.c.l.b16 %v10055
      %v10319 = vunpack.c.l.b16 %v10056
      %v10320 = vunpack.c.l.b16 %v10057
      %v10321 = vunpack.c.l.b16 %v10058
      %v10322 = vunpack.c.l.b16 %v10059
      %v10323 = vunpack.c.l.b16 %v10060
      %v10324 = vunpack.c.l.b16 %v10061
      %v10325 = vunpack.c.l.b16 %v10062
      %v10326 = vunpack.c.l.b16 %v10063
      %v10327 = vunpack.c.l.b16 %v10064
      %v10328 = vunpack.c.l.b16 %v10065
      %v10329 = vunpack.c.l.b16 %v10066
      %v10330 = vunpack.c.l.b16 %v10067
      %v10331 = vunpack.c.l.b16 %v10068
      %v10332 = vunpack.c.l.b16 %v10069
      %v10333 = vunpack.c.l.b16 %v10070
      %v10334 = vunpack.c.l.b16 %v10071
      %v10335 = vunpack.c.l.b16 %v10072
      %v10336 = vunpack.c.l.b16 %v10073
      %v10337 = vunpack.c.l.b16 %v10074
      %v10338 = vunpack.c.l.b16 %v10075
      %v10339 = vunpack.c.l.b16 %v10076
      %v10340 = vunpack.c.l.b16 %v10077
      %v10341 = vunpack.c.l.b16 %v10078
      %v10342 = vunpack.c.l.b16 %v10079
      %v10343 = vunpack.c.l.b16 %v10080
      %v10344 = vunpack.c.l.b16 %v10081
      %v10345 = vunpack.c.l.b16 %v10082
      %v10346 = vunpack.c.l.b16 %v10083
      %v10347 = vunpack.c.l.b16 %v10084
      %v10348 = vunpack.c.l.b16 %v10085
      %v10349 = vunpack.c.l.b16 %v10086
      %v10350 = vunpack.c.l.b16 %v10087
      %v10351 = vunpack.c.l.b16 %v10088
      %v10352 = vunpack.c.l.b16 %v10089
      %v10353 = vunpack.c.l.b16 %v10090
      %v10354 = vunpack.c.l.b16 %v10091
      %v10355 = vunpack.c.l.b16 %v10092
      %v10356 = vunpack.c.l.b16 %v10093
      %v10357 = vunpack.c.l.b16 %v10094
      %v10358 = vunpack.c.l.b16 %v10095
      %v10359 = vunpack.c.l.b16 %v10096
      %v10360 = vunpack.c.l.b16 %v10097
      %v10361 = vunpack.c.l.b16 %v10098
      %v10362 = vunpack.c.l.b16 %v10099
      %v10363 = vunpack.c.l.b16 %v10100
      %v10364 = vunpack.c.l.b16 %v10101
      %v10365 = vunpack.c.l.b16 %v10102
      %v10366 = vunpack.c.l.b16 %v10103
      %v10367 = vunpack.c.l.b16 %v10104
      %v10368 = vunpack.c.l.b16 %v10105
      %v10369 = vunpack.c.l.b16 %v10106
      %v10370 = vunpack.c.l.b16 %v10107
      %v10371 = vunpack.c.l.b16 %v10108
      %v10372 = vunpack.c.l.b16 %v10109
      %v10373 = vunpack.c.l.b16 %v10110
      %v10374 = vunpack.c.l.b16 %v10111
      %v10375 = vunpack.c.l.b16 %v10112
      %v10376 = vunpack.c.l.b16 %v10113
      %v10377 = vunpack.c.l.b16 %v10114
      %v10378 = vunpack.c.l.b16 %v10115
      %v10379 = vunpack.c.l.b16 %v10116
      %v10380 = vunpack.c.l.b16 %v10117
      %v10381 = vunpack.c.l.b16 %v10118
      %v10382 = vunpack.c.l.b16 %v10119
      %v10383 = vunpack.c.l.b16 %v10120
      %v10384 = vunpack.c.l.b16 %v10121
      %v10385 = vunpack.c.l.b16 %v10122
      %v10386 = vunpack.c.l.b16 %v10123
      %v10387 = vunpack.c.l.b16 %v10124
      %v10388 = vunpack.c.l.b16 %v10125
      %v10389 = vunpack.c.l.b16 %v10126
      %v10390 = vunpack.c.l.b16 %v10127
      %v10391 = vunpack.c.l.b16 %v10128
      %v10392 = vunpack.c.l.b16 %v10129
      %v10393 = vunpack.c.l.b16 %v10130
      %v10394 = vunpack.c.l.b16 %v10131
      %v10395 = vunpack.c.l.b16 %v10132
      %v10396 = vunpack.c.l.b16 %v10133
      %v10397 = vunpack.c.l.b16 %v10134
      %v10398 = vunpack.c.l.b16 %v10135
      %v10399 = vunpack.c.l.b16 %v10136
      %v10400 = vunpack.c.l.b16 %v10137
      %v10401 = vunpack.c.l.b16 %v10138
      %v10402 = vunpack.c.l.b16 %v10139
      %v10403 = vunpack.c.l.b16 %v10140
      %v10404 = vunpack.c.l.b16 %v10141
      %v10405 = vunpack.c.l.b16 %v10142
      %v10406 = vunpack.c.l.b16 %v10143
      %v10407 = vunpack.c.l.b16 %v10144
      %v10408 = vunpack.c.l.b16 %v10145
      %v10409 = vunpack.c.l.b16 %v10146
      %v10410 = vunpack.c.l.b16 %v10147
      %v10411 = vunpack.c.l.b16 %v10148
      %v10412 = vunpack.c.l.b16 %v10149
      %v10413 = vunpack.c.l.b16 %v10150
      %v10414 = vunpack.c.l.b16 %v10151
      %v10415 = vunpack.c.l.b16 %v10152
      %v10416 = vunpack.c.l.b16 %v10153
      %v10417 = vunpack.c.l.b16 %v10154
      %v10418 = vunpack.c.l.b16 %v10155
      %v10419 = vunpack.c.l.b16 %v10156
      %v10420 = vunpack.c.l.b16 %v10157
      %v10421 = vunpack.c.l.b16 %v10158
      %v10422 = vunpack.c.l.b16 %v10159
      %v10423 = vunpack.c.l.b16 %v10160
      %v10424 = vunpack.c.l.b16 %v10161
      %v10425 = vunpack.c.l.b16 %v10162
      %v10426 = vunpack.c.l.b16 %v10163
      %v10427 = vunpack.c.l.b16 %v10164
      %v10428 = vunpack.c.l.b16 %v10165
      %v10429 = vunpack.c.l.b16 %v10166
      %v10430 = vunpack.c.l.b16 %v10167
      %v10431 = vunpack.c.l.b16 %v10168
      %v10432 = vunpack.c.l.b16 %v10169
      %v10433 = vunpack.c.l.b16 %v10170
      %v10434 = vunpack.c.l.b16 %v10171
      %v10435 = vunpack.c.l.b16 %v10172
      %v10436 = vunpack.c.l.b16 %v10173
      %v10437 = vunpack.c.l.b16 %v10174
      %v10438 = vunpack.c.l.b16 %v10175
      %v10439 = vunpack.c.l.b16 %v10176
      %v10440 = vunpack.c.l.b16 %v10177
      %v10441 = vpack.c.b16 %v10314, %v10313
      %v10442 = vpack.c.b16 %v10316, %v10315
      %v10443 = vpack.c.b16 %v10318, %v10317
      %v10444 = vpack.c.b16 %v10320, %v10319
      %v10445 = vpack.c.b16 %v10322, %v10321
      %v10446 = vpack.c.b16 %v10324, %v10323
      %v10447 = vpack.c.b16 %v10326, %v10325
      %v10448 = vpack.c.b16 %v10328, %v10327
      %v10449 = vpack.c.b16 %v10330, %v10329
      %v10450 = vpack.c.b16 %v10332, %v10331
      %v10451 = vpack.c.b16 %v10334, %v10333
      %v10452 = vpack.c.b16 %v10336, %v10335
      %v10453 = vpack.c.b16 %v10338, %v10337
      %v10454 = vpack.c.b16 %v10340, %v10339
      %v10455 = vpack.c.b16 %v10342, %v10341
      %v10456 = vpack.c.b16 %v10344, %v10343
      %v10457 = vpack.c.b16 %v10346, %v10345
      %v10458 = vpack.c.b16 %v10348, %v10347
      %v10459 = vpack.c.b16 %v10350, %v10349
      %v10460 = vpack.c.b16 %v10352, %v10351
      %v10461 = vpack.c.b16 %v10354, %v10353
      %v10462 = vpack.c.b16 %v10356, %v10355
      %v10463 = vpack.c.b16 %v10358, %v10357
      %v10464 = vpack.c.b16 %v10360, %v10359
      %v10465 = vpack.c.b16 %v10362, %v10361
      %v10466 = vpack.c.b16 %v10364, %v10363
      %v10467 = vpack.c.b16 %v10366, %v10365
      %v10468 = vpack.c.b16 %v10368, %v10367
      %v10469 = vpack.c.b16 %v10370, %v10369
      %v10470 = vpack.c.b16 %v10372, %v10371
      %v10471 = vpack.c.b16 %v10374, %v10373
      %v10472 = vpack.c.b16 %v10376, %v10375
      %v10473 = vpack.c.b16 %v10378, %v10377
      %v10474 = vpack.c.b16 %v10380, %v10379
      %v10475 = vpack.c.b16 %v10382, %v10381
      %v10476 = vpack.c.b16 %v10384, %v10383
      %v10477 = vpack.c.b16 %v10386, %v10385
      %v10478 = vpack.c.b16 %v10388, %v10387
      %v10479 = vpack.c.b16 %v10390, %v10389
      %v10480 = vpack.c.b16 %v10392, %v10391
      %v10481 = vpack.c.b16 %v10394, %v10393
      %v10482 = vpack.c.b16 %v10396, %v10395
      %v10483 = vpack.c.b16 %v10398, %v10397
      %v10484 = vpack.c.b16 %v10400, %v10399
      %v10485 = vpack.c.b16 %v10402, %v10401
      %v10486 = vpack.c.b16 %v10404, %v10403
      %v10487 = vpack.c.b16 %v10406, %v10405
      %v10488 = vpack.c.b16 %v10408, %v10407
      %v10489 = vpack.c.b16 %v10410, %v10409
      %v10490 = vpack.c.b16 %v10412, %v10411
      %v10491 = vpack.c.b16 %v10414, %v10413
      %v10492 = vpack.c.b16 %v10416, %v10415
      %v10493 = vpack.c.b16 %v10418, %v10417
      %v10494 = vpack.c.b16 %v10420, %v10419
      %v10495 = vpack.c.b16 %v10422, %v10421
      %v10496 = vpack.c.b16 %v10424, %v10423
      %v10497 = vpack.c.b16 %v10426, %v10425
      %v10498 = vpack.c.b16 %v10428, %v10427
      %v10499 = vpack.c.b16 %v10430, %v10429
      %v10500 = vpack.c.b16 %v10432, %v10431
      %v10501 = vpack.c.b16 %v10434, %v10433
      %v10502 = vpack.c.b16 %v10436, %v10435
      %v10503 = vpack.c.b16 %v10438, %v10437
      %v10504 = vpack.c.b16 %v10440, %v10439
      %10569 = vmatprep.subr.bf16.mxu0 0
      %10570 = vmatpush1.bf16.msra.mxu0 %v10441
      %10571 = vmatprep.subr.bf16.mxu0 0
      %10572 = vmatpush1.bf16.msra.mxu0 %v10442
      %10573 = vmatprep.subr.bf16.mxu0 0
      %10574 = vmatpush1.bf16.msra.mxu0 %v10443
      %10575 = vmatprep.subr.bf16.mxu0 0
      %10576 = vmatpush1.bf16.msra.mxu0 %v10444
      %10577 = vmatprep.subr.bf16.mxu0 0
      %10578 = vmatpush1.bf16.msra.mxu0 %v10445
      %10579 = vmatprep.subr.bf16.mxu0 0
      %10580 = vmatpush1.bf16.msra.mxu0 %v10446
      %10581 = vmatprep.subr.bf16.mxu0 0
      %10582 = vmatpush1.bf16.msra.mxu0 %v10447
      %10583 = vmatprep.subr.bf16.mxu0 0
      %10584 = vmatpush1.bf16.msra.mxu0 %v10448
      %10585 = vmatprep.subr.bf16.mxu0 0
      %10586 = vmatpush1.bf16.msra.mxu0 %v10449
      %10587 = vmatprep.subr.bf16.mxu0 0
      %10588 = vmatpush1.bf16.msra.mxu0 %v10450
      %10589 = vmatprep.subr.bf16.mxu0 0
      %10590 = vmatpush1.bf16.msra.mxu0 %v10451
      %10591 = vmatprep.subr.bf16.mxu0 0
      %10592 = vmatpush1.bf16.msra.mxu0 %v10452
      %10593 = vmatprep.subr.bf16.mxu0 0
      %10594 = vmatpush1.bf16.msra.mxu0 %v10453
      %10595 = vmatprep.subr.bf16.mxu0 0
      %10596 = vmatpush1.bf16.msra.mxu0 %v10454
      %10597 = vmatprep.subr.bf16.mxu0 0
      %10598 = vmatpush1.bf16.msra.mxu0 %v10455
      %10599 = vmatprep.subr.bf16.mxu0 0
      %10600 = vmatpush1.bf16.msra.mxu0 %v10456
      %10601 = vmatprep.mubr.bf16.mxu0 %v4669
      %10602 = vmatmul.mubr.bf16.gmra.mrb[0].mxu0 %v4668
      %v10603 = vpop.f32.mrb[0].mxu0
      %v10604 = vadd.f32 %v10183, %v10603
      %v10605 = vpop.f32.mrb[0].mxu0
      %v10606 = vpop.f32.mrb[0].mxu0
      %v10607 = vpop.f32.mrb[0].mxu0
      %10608 = vdwg.mxu0
      %10609 = vmatprep.subr.bf16.mxu0 0
      %10610 = vmatpush1.bf16.msra.mxu0 %v10457
      %10611 = vmatprep.subr.bf16.mxu0 0
      %10612 = vmatpush1.bf16.msra.mxu0 %v10458
      %10613 = vmatprep.subr.bf16.mxu0 0
      %10614 = vmatpush1.bf16.msra.mxu0 %v10459
      %10615 = vmatprep.subr.bf16.mxu0 0
      %10616 = vmatpush1.bf16.msra.mxu0 %v10460
      %10617 = vmatprep.subr.bf16.mxu0 0
      %10618 = vmatpush1.bf16.msra.mxu0 %v10461
      %10619 = vmatprep.subr.bf16.mxu0 0
      %10620 = vmatpush1.bf16.msra.mxu0 %v10462
      %10621 = vmatprep.subr.bf16.mxu0 0
      %10622 = vmatpush1.bf16.msra.mxu0 %v10463
      %10623 = vmatprep.subr.bf16.mxu0 0
      %10624 = vmatpush1.bf16.msra.mxu0 %v10464
      %10625 = vmatprep.subr.bf16.mxu0 0
      %10626 = vmatpush1.bf16.msra.mxu0 %v10465
      %10627 = vmatprep.subr.bf16.mxu0 0
      %10628 = vmatpush1.bf16.msra.mxu0 %v10466
      %10629 = vmatprep.subr.bf16.mxu0 0
      %10630 = vmatpush1.bf16.msra.mxu0 %v10467
      %10631 = vmatprep.subr.bf16.mxu0 0
      %10632 = vmatpush1.bf16.msra.mxu0 %v10468
      %10633 = vmatprep.subr.bf16.mxu0 0
      %10634 = vmatpush1.bf16.msra.mxu0 %v10469
      %10635 = vmatprep.subr.bf16.mxu0 0
      %10636 = vmatpush1.bf16.msra.mxu0 %v10470
      %10637 = vmatprep.subr.bf16.mxu0 0
      %10638 = vmatpush1.bf16.msra.mxu0 %v10471
      %10639 = vmatprep.subr.bf16.mxu0 0
      %10640 = vmatpush1.bf16.msra.mxu0 %v10472
      %10641 = vmatprep.mubr.bf16.mxu0 %v10047
      %10642 = vmatmul.mubr.bf16.gmra.mrb[0].mxu0 %v10046
      %v10643 = vpop.f32.mrb[0].mxu0
      %v10644 = vadd.f32 %v10604, %v10643
      %v10645 = vpop.f32.mrb[0].mxu0
      %v10646 = vpop.f32.mrb[0].mxu0
      %v10647 = vpop.f32.mrb[0].mxu0
      %10648 = vdwg.mxu0
      %10649 = vmatprep.subr.bf16.mxu0 0
      %10650 = vmatpush1.bf16.msra.mxu0 %v10473
      %10651 = vmatprep.subr.bf16.mxu0 0
      %10652 = vmatpush1.bf16.msra.mxu0 %v10474
      %10653 = vmatprep.subr.bf16.mxu0 0
      %10654 = vmatpush1.bf16.msra.mxu0 %v10475
      %10655 = vmatprep.subr.bf16.mxu0 0
      %10656 = vmatpush1.bf16.msra.mxu0 %v10476
      %10657 = vmatprep.subr.bf16.mxu0 0
      %10658 = vmatpush1.bf16.msra.mxu0 %v10477
      %10659 = vmatprep.subr.bf16.mxu0 0
      %10660 = vmatpush1.bf16.msra.mxu0 %v10478
      %10661 = vmatprep.subr.bf16.mxu0 0
      %10662 = vmatpush1.bf16.msra.mxu0 %v10479
      %10663 = vmatprep.subr.bf16.mxu0 0
      %10664 = vmatpush1.bf16.msra.mxu0 %v10480
      %10665 = vmatprep.subr.bf16.mxu0 0
      %10666 = vmatpush1.bf16.msra.mxu0 %v10481
      %10667 = vmatprep.subr.bf16.mxu0 0
      %10668 = vmatpush1.bf16.msra.mxu0 %v10482
      %10669 = vmatprep.subr.bf16.mxu0 0
      %10670 = vmatpush1.bf16.msra.mxu0 %v10483
      %10671 = vmatprep.subr.bf16.mxu0 0
      %10672 = vmatpush1.bf16.msra.mxu0 %v10484
      %10673 = vmatprep.subr.bf16.mxu0 0
      %10674 = vmatpush1.bf16.msra.mxu0 %v10485
      %10675 = vmatprep.subr.bf16.mxu0 0
      %10676 = vmatpush1.bf16.msra.mxu0 %v10486
      %10677 = vmatprep.subr.bf16.mxu0 0
      %10678 = vmatpush1.bf16.msra.mxu0 %v10487
      %10679 = vmatprep.subr.bf16.mxu0 0
      %10680 = vmatpush1.bf16.msra.mxu0 %v10488
      %10681 = vmatprep.mubr.bf16.mxu0 %v4671
      %10682 = vmatmul.mubr.bf16.gmra.mrb[0].mxu0 %v4670
      %v10683 = vpop.f32.mrb[0].mxu0
      %v10684 = vadd.f32 %v10644, %v10683
      %v10685 = vpop.f32.mrb[0].mxu0
      %v10686 = vpop.f32.mrb[0].mxu0
      %v10687 = vpop.f32.mrb[0].mxu0
      %10688 = vdwg.mxu0
      %10689 = vmatprep.subr.bf16.mxu0 0
      %10690 = vmatpush1.bf16.msra.mxu0 %v10489
      %10691 = vmatprep.subr.bf16.mxu0 0
      %10692 = vmatpush1.bf16.msra.mxu0 %v10490
      %10693 = vmatprep.subr.bf16.mxu0 0
      %10694 = vmatpush1.bf16.msra.mxu0 %v10491
      %10695 = vmatprep.subr.bf16.mxu0 0
      %10696 = vmatpush1.bf16.msra.mxu0 %v10492
      %10697 = vmatprep.subr.bf16.mxu0 0
      %10698 = vmatpush1.bf16.msra.mxu0 %v10493
      %10699 = vmatprep.subr.bf16.mxu0 0
      %10700 = vmatpush1.bf16.msra.mxu0 %v10494
      %10701 = vmatprep.subr.bf16.mxu0 0
      %10702 = vmatpush1.bf16.msra.mxu0 %v10495
      %10703 = vmatprep.subr.bf16.mxu0 0
      %10704 = vmatpush1.bf16.msra.mxu0 %v10496
      %10705 = vmatprep.subr.bf16.mxu0 0
      %10706 = vmatpush1.bf16.msra.mxu0 %v10497
      %10707 = vmatprep.subr.bf16.mxu0 0
      %10708 = vmatpush1.bf16.msra.mxu0 %v10498
      %10709 = vmatprep.subr.bf16.mxu0 0
      %10710 = vmatpush1.bf16.msra.mxu0 %v10499
      %10711 = vmatprep.subr.bf16.mxu0 0
      %10712 = vmatpush1.bf16.msra.mxu0 %v10500
      %10713 = vmatprep.subr.bf16.mxu0 0
      %10714 = vmatpush1.bf16.msra.mxu0 %v10501
      %10715 = vmatprep.subr.bf16.mxu0 0
      %10716 = vmatpush1.bf16.msra.mxu0 %v10502
      %10717 = vmatprep.subr.bf16.mxu0 0
      %10718 = vmatpush1.bf16.msra.mxu0 %v10503
      %10719 = vmatprep.subr.bf16.mxu0 0
      %10720 = vmatpush1.bf16.msra.mxu0 %v10504
      %10721 = vmatprep.mubr.bf16.mxu0 %v10049
      %10722 = vmatmul.mubr.bf16.gmra.mrb[0].mxu0 %v10048
      %v10723 = vpop.f32.mrb[0].mxu0
      %v10724 = vadd.f32 %v10684, %v10723
      %v10725 = vpop.f32.mrb[0].mxu0
      %v10726 = vpop.f32.mrb[0].mxu0
      %v10727 = vpop.f32.mrb[0].mxu0
      %10728 = vdwg.mxu0
      %10729 = vst [vmem:[#allocation20] sm:$0xff] %v10724
    $region89: #{tpu_custom_call.1} parent=1 // pred_fallthru
      _
    // Predicated region
    $region90: #{tpu_custom_call.1} parent=1 // pred_check
      _
    $region91: #{tpu_custom_call.1} parent=1 // pred_check_branch
      %10731 = sbr.rel (0) target = $region93
    $region92: #{tpu_custom_call.1} parent=1 // pred_region
      %s10733 = ssub.s32 128, 128
      %10734 = vsyncadd [#allocation5], %s10733
      %s10736 = sshll.u32 [#allocation20], 4
      %s10737 = int_to_ptr.vmem [resolvable:$true] %s10736
      %10739 = dma.vmem_to_hbm [thread:$0]  %s10737, 128, %s10, [#allocation5]
    $region93: #{tpu_custom_call.1} parent=1 // pred_fallthru
      _
    // Predicated region
    $region94: #{tpu_custom_call.1} parent=1 // pred_check
      _
    $region95: #{tpu_custom_call.1} parent=1 // pred_check_branch
      %10741 = sbr.rel (0) target = $region97
    $region96: #{tpu_custom_call.1} parent=1 // pred_region
      %10742 = dma.done [#allocation5], 128
    $region97: #{tpu_custom_call.1} parent=1 // pred_fallthru
      _
    %10743 = vsyncpa [#allocation4], 1
    %10744 = vsyncpa [#allocation7], 1
    %10745 = vsyncpa [#allocation10], 1
    %10746 = vsyncpa [#allocation13], 1
    %10747 = vsyncpa [#allocation16], 1
    %10748 = vsyncpa [#allocation19], 1
    %10749 = vsyncpa [#allocation5], 1

</llo_original>
